<compile_context>
chip_gen: v7x
topology: tpu7x:2x2x1
jax: 0.10.0
libtpu: 0.0.40
codegen_flags: <defaults>
</compile_context>

<pallas_src>
import functools
import math

import jax
import jax.numpy as jnp
from jax.experimental import pallas as pl
from jax.experimental.pallas import tpu as pltpu

EPS = 1e-6  # onmt.modules.LayerNorm eps


def _layer_norm(x, g, b):
    # onmt LayerNorm: (x - mean) / (unbiased_std + eps) * a_2 + b_2
    d = x.shape[-1]
    mu = jnp.mean(x, axis=-1, keepdims=True)
    diff = x - mu
    var = jnp.sum(diff * diff, axis=-1, keepdims=True) * (1.0 / (d - 1))  # torch.std unbiased
    # Exact divide (not approx reciprocal): keeps per-norm error ~1e-7 instead
    # of ~1e-3 compounding over the layer stack.
    return diff / (jnp.sqrt(var) + EPS) * g + b


def _stack_kernel(batch_tile, seq_len, head_count, ffn_chunk,
                  x_ref, ln1g_ref, ln1b_ref,
                  wqkv_ref, bqkv_ref, wo_ref, bo_ref,
                  ln2g_ref, ln2b_ref, w1_ref, b1_ref, w2_ref, b2_ref,
                  out_ref, mb_ref, ctx_ref):
    """Grid = (batch_tile_idx, layer_idx).  One step applies one transformer
    block to one batch tile; activations are carried across the sequential
    layer axis in the mb_ref VMEM scratch."""
    layer = pl.program_id(1)
    last_layer = pl.num_programs(1) - 1

    Bt, S, H = batch_tile, seq_len, head_count
    rows, D = mb_ref.shape
    dph = D // H
    Hff = w1_ref.shape[1]

    # Load the input activations only at the first layer of each batch tile.
    @pl.when(layer == 0)
    def _():
        mb_ref[...] = x_ref[...]

    x = mb_ref[...]                                             # (rows, D) f32

    # ---- shared pre-attention LayerNorm ----
    xn = _layer_norm(x, ln1g_ref[...], ln1b_ref[...]).astype(jnp.bfloat16)

    # ---- fused QKV projection (bf16 MXU operands, f32 accumulation) ----
    # 1/sqrt(head_dim) query scale is folded into wqkv/bqkv columns [:D].
    # Cast the resident qkv activation to bf16 immediately.
    qkv = (jnp.dot(xn, wqkv_ref[...], preferred_element_type=jnp.float32)
           + bqkv_ref[...]).astype(jnp.bfloat16)                # (rows, 3D)

    # ---- per-head scaled dot-product attention ----
    # Heads stay a static loop of 3-D einsums (single leading batch dim — the
    # dot_general form Mosaic lowers); each head's context is stored straight
    # into the ctx_ref VMEM scratch, so there is no concatenate relayout chain
    # and only one head's (Bt, S, S) f32 score block needs to be live.
    # TODO(synk): use a heads-batched einsum ('bqhd,bkhd->bhqk') once
    # multi-batch-dim dot_general lowers on TPU, and block the KV axis with an
    # online-softmax (flash) accumulator for long sequences.
    for h in range(H):
        qh = qkv[:, h * dph:(h + 1) * dph].reshape(Bt, S, dph)
        kh = qkv[:, D + h * dph:D + (h + 1) * dph].reshape(Bt, S, dph)
        vh = qkv[:, 2 * D + h * dph:2 * D + (h + 1) * dph].reshape(Bt, S, dph)
        scores = jnp.einsum('bqd,bkd->bqk', qh, kh,
                            preferred_element_type=jnp.float32)  # (Bt,S,S) f32
        m = jnp.max(scores, axis=-1, keepdims=True)
        p = jnp.exp(scores - m)
        attn = (p * pl.reciprocal(jnp.sum(p, axis=-1, keepdims=True),
                                  approx=True)).astype(jnp.bfloat16)
        # attention dropout: identity (eval mode)
        ctx_h = jnp.einsum('bqk,bkd->bqd', attn, vh,
                           preferred_element_type=jnp.float32)   # (Bt,S,dph)
        ctx_ref[:, pl.ds(h * dph, dph)] = (
            ctx_h.reshape(rows, dph).astype(jnp.bfloat16))

    attn_out = jnp.dot(ctx_ref[...], wo_ref[...],
                       preferred_element_type=jnp.float32) + bo_ref[...]
    # memory_bank = dropout(tmp) + memory_bank   (dropout = identity)
    x = attn_out + x

    # ---- PositionwiseFeedForward (shared module), hidden dim blocked ----
    yn = _layer_norm(x, ln2g_ref[...], ln2b_ref[...]).astype(jnp.bfloat16)
    ffn_acc = None
    for c in range(Hff // ffn_chunk):
        w1c = w1_ref[:, pl.ds(c * ffn_chunk, ffn_chunk)]
        b1c = b1_ref[:, pl.ds(c * ffn_chunk, ffn_chunk)]
        inter = jnp.maximum(
            jnp.dot(yn, w1c, preferred_element_type=jnp.float32) + b1c,
            0.0).astype(jnp.bfloat16)              # relu + dropout_1 (identity)
        part = jnp.dot(inter, w2_ref[pl.ds(c * ffn_chunk, ffn_chunk), :],
                       preferred_element_type=jnp.float32)
        ffn_acc = part if ffn_acc is None else ffn_acc + part
    x = ffn_acc + b2_ref[...] + x
    mb_ref[...] = x

    # ---- final shared LayerNorm fused into the last layer step ----
    @pl.when(layer == last_layer)
    def _():
        out_ref[...] = _layer_norm(x, ln1g_ref[...], ln1b_ref[...])


# ---------------- tiling / budget helpers ----------------

def _pick_batch_tile(B, S, target_rows=512, min_tiles=2):
    """Smallest divisor Bt of B whose flattened (Bt*S, D) row block reaches
    ~target_rows GEMM rows, subject to rows % 8 == 0 (the (8,128) BlockSpec
    constraint) and, when possible, keeping >= min_tiles batch tiles so the
    'parallel' batch axis can shard across v7x's two TensorCores."""
    cands = [bt for bt in range(1, B + 1)
             if B % bt == 0 and ((bt * S) % 8 == 0 or bt == B)]
    viable = [bt for bt in cands if B // bt >= min_tiles] or cands
    for bt in viable:
        if bt * S >= target_rows:
            return bt
    return viable[-1]


def _pick_ffn_chunk(Hff):
    for c in (512, 256, 128):
        if Hff % c == 0:
            return c
    return Hff


def _vmem_limit_bytes(frac=0.85):
    """Generation-aware VMEM budget: ~85% of physical capacity
    (≈54 MiB on v7x, ≈110 MiB on v5e/v6e), with a conservative fallback."""
    try:
        cap = int(pltpu.get_tpu_info().vmem_capacity_bytes)
        return int(cap * frac)
    except Exception:
        return 64 * 1024 * 1024


# ---------------- wrapper ----------------

def multi_layer_self_attention(x, params, head_count):
    """Mirrors MultiLayerSelfAttention.forward -> (layer_norm(memory_bank), None)."""
    B, S, D = x.shape
    L = params['wqkv'].shape[0]
    Hff = params['w1'].shape[1]
    Bt = _pick_batch_tile(B, S)
    rows = Bt * S
    ffn_chunk = _pick_ffn_chunk(Hff)
    x_flat = x.reshape(B * S, D)

    kernel = functools.partial(_stack_kernel, Bt, S, head_count, ffn_chunk)

    def run(single_buffer_consts):
        # Constant-index operands only need one VMEM buffer (Pallas
        # double-buffers every input by default).
        kw = dict(pipeline_mode=pl.Buffered(1)) if single_buffer_consts else {}

        def const(shape):
            return pl.BlockSpec(shape, lambda bt, l: (0,) * len(shape), **kw)

        def per_layer(shape):
            # Per-layer weights: streamed along the layer axis, default
            # double-buffering so the next layer's weights prefetch under
            # the current layer's compute.
            return pl.BlockSpec((None,) + shape,
                                lambda bt, l: (l,) + (0,) * len(shape))

        grid_spec = pltpu.PrefetchScalarGridSpec(
            num_scalar_prefetch=0,
            grid=(B // Bt, L),                    # (parallel batch tiles, sequential layers)
            in_specs=[
                pl.BlockSpec((rows, D), lambda bt, l: (bt, 0), **kw),  # x (flattened rows)
                const((1, D)), const((1, D)),                    # shared LayerNorm gamma/beta
                per_layer((D, 3 * D)), per_layer((1, 3 * D)),    # fused QKV weight / bias
                per_layer((D, D)), per_layer((1, D)),            # output projection
                const((1, D)), const((1, D)),                    # FFN LayerNorm gamma/beta
                const((D, Hff)), const((1, Hff)),                # FFN w1 / b1
                const((Hff, D)), const((1, D)),                  # FFN w2 / b2
            ],
            out_specs=pl.BlockSpec((rows, D), lambda bt, l: (bt, 0)),
            scratch_shapes=[pltpu.VMEM((rows, D), jnp.float32),    # resident activations
                            pltpu.VMEM((rows, D), jnp.bfloat16)],  # per-head context
        )
        return pl.pallas_call(
            kernel,
            out_shape=jax.ShapeDtypeStruct((B * S, D), jnp.float32),
            grid_spec=grid_spec,
            compiler_params=pltpu.CompilerParams(
                dimension_semantics=("parallel", "arbitrary"),
                vmem_limit_bytes=_vmem_limit_bytes()),
        )(x_flat, params['ln_g'], params['ln_b'],
          params['wqkv'], params['bqkv'], params['wo'], params['bo'],
          params['ffn_ln_g'], params['ffn_ln_b'],
          params['w1'], params['b1'], params['w2'], params['b2'])

    try:
        out_flat = run(single_buffer_consts=True)
    except Exception:
        # Fall back to default double-buffering if this Pallas version rejects
        # pipeline_mode=pl.Buffered(1).
        out_flat = run(single_buffer_consts=False)
    return out_flat.reshape(B, S, D), None


# ---------------- deterministic synthetic parameter init ----------------

def _dense(key, fan_in, fan_out):
    scale = 1.0 / math.sqrt(fan_in)
    kw, kb = jax.random.split(key)
    w = jax.random.uniform(kw, (fan_in, fan_out), jnp.float32, -scale, scale)
    b = jax.random.uniform(kb, (1, fan_out), jnp.float32, -scale, scale)
    return w, b


def init_params(key, n_layer, size, head_count, ffn_hidden=2048):
    dph = size // head_count
    q_scale = 1.0 / math.sqrt(dph)
    wqkv, bqkv, wo, bo = [], [], [], []
    for i in range(n_layer):
        lk = jax.random.fold_in(key, i)
        wq, bq = _dense(jax.random.fold_in(lk, 0), size, size)
        wk, bk = _dense(jax.random.fold_in(lk, 1), size, size)
        wv, bv = _dense(jax.random.fold_in(lk, 2), size, size)
        wo_i, bo_i = _dense(jax.random.fold_in(lk, 3), size, size)
        # Fold the 1/sqrt(head_dim) query scale into the fused QKV weight/bias.
        wqkv.append(jnp.concatenate([wq * q_scale, wk, wv], axis=1))
        bqkv.append(jnp.concatenate([bq * q_scale, bk, bv], axis=1))
        wo.append(wo_i)
        bo.append(bo_i)
    fk = jax.random.fold_in(key, 1000)
    w1, b1 = _dense(jax.random.fold_in(fk, 0), size, ffn_hidden)
    w2, b2 = _dense(jax.random.fold_in(fk, 1), ffn_hidden, size)
    return dict(
        ln_g=jnp.ones((1, size), jnp.float32),
        ln_b=jnp.zeros((1, size), jnp.float32),
        wqkv=jnp.stack(wqkv).astype(jnp.bfloat16),   # (L, D, 3D)
        bqkv=jnp.stack(bqkv),                        # (L, 1, 3D) f32
        wo=jnp.stack(wo).astype(jnp.bfloat16),       # (L, D, D)
        bo=jnp.stack(bo),                            # (L, 1, D) f32
        ffn_ln_g=jnp.ones((1, size), jnp.float32),
        ffn_ln_b=jnp.zeros((1, size), jnp.float32),
        w1=w1.astype(jnp.bfloat16), b1=b1,
        w2=w2.astype(jnp.bfloat16), b2=b2,
    )


# ---------------- pure-JAX f32 reference (correctness guard) ----------------

def _reference(x, params, head_count):
    B, S, D = x.shape
    L = params['wqkv'].shape[0]
    H = head_count
    dph = D // H

    def ln(v, g, b):
        mu = jnp.mean(v, -1, keepdims=True)
        diff = v - mu
        var = jnp.sum(diff * diff, -1, keepdims=True) / (D - 1)
        return diff / (jnp.sqrt(var) + EPS) * g + b

    def mm(a, w):
        return jnp.dot(a, w.astype(jnp.float32), precision='highest')

    mb = x.reshape(B * S, D)
    for l in range(L):
        xn = ln(mb, params['ln_g'], params['ln_b'])
        qkv = mm(xn, params['wqkv'][l]) + params['bqkv'][l]
        ctx = []
        for h in range(H):
            q = qkv[:, h * dph:(h + 1) * dph].reshape(B, S, dph)
            k = qkv[:, D + h * dph:D + (h + 1) * dph].reshape(B, S, dph)
            v = qkv[:, 2 * D + h * dph:2 * D + (h + 1) * dph].reshape(B, S, dph)
            s = jnp.einsum('bqd,bkd->bqk', q, k, precision='highest')
            a = jax.nn.softmax(s, axis=-1)
            ctx.append(jnp.einsum('bqk,bkd->bqd', a, v,
                                  precision='highest').reshape(B * S, dph))
        ctx = jnp.concatenate(ctx, axis=-1)
        mb = mm(ctx, params['wo'][l]) + params['bo'][l] + mb
        yn = ln(mb, params['ffn_ln_g'], params['ffn_ln_b'])
        inter = jax.nn.relu(mm(yn, params['w1']) + params['b1'])
        mb = mm(inter, params['w2']) + params['b2'] + mb
    return ln(mb, params['ln_g'], params['ln_b']).reshape(B, S, D)


if __name__ == "__main__":
    n_layer, head_count, size = 2, 4, 128
    B, S = 2, 16

    key = jax.random.PRNGKey(0)
    params = init_params(key, n_layer, size, head_count)
    memory_bank = jax.random.normal(jax.random.fold_in(key, 999),
                                    (B, S, size), jnp.float32)

    out, attn = multi_layer_self_attention(memory_bank, params, head_count)
    jax.block_until_ready(out)

    assert out.shape == (B, S, size) and attn is None
    assert bool(jnp.all(jnp.isfinite(out)))
    # bf16 MXU operands + approx softmax reciprocal vs f32 reference: loose
    # tolerance, still catches wiring/layout bugs (those show up as O(1) diffs).
    ref = _reference(memory_bank, params, head_count)
    max_err = float(jnp.max(jnp.abs(out - ref)))
    assert max_err < 2.5e-1, f"max |kernel - reference| = {max_err}"
    print("KERNEL_OK")
</pallas_src>

<mosaic_0001>
module attributes {stable_mosaic.version = 11 : i64} {
  func.func @_stack_kernel(%arg0: i32, %arg1: i32, %arg2: memref<16x128xf32, #tpu.memory_space<vmem>>, %arg3: memref<1x128xf32, #tpu.memory_space<vmem>>, %arg4: memref<1x128xf32, #tpu.memory_space<vmem>>, %arg5: memref<1x128x384xbf16, #tpu.memory_space<vmem>>, %arg6: memref<1x1x384xf32, #tpu.memory_space<vmem>>, %arg7: memref<1x128x128xbf16, #tpu.memory_space<vmem>>, %arg8: memref<1x1x128xf32, #tpu.memory_space<vmem>>, %arg9: memref<1x128xf32, #tpu.memory_space<vmem>>, %arg10: memref<1x128xf32, #tpu.memory_space<vmem>>, %arg11: memref<128x2048xbf16, #tpu.memory_space<vmem>>, %arg12: memref<1x2048xf32, #tpu.memory_space<vmem>>, %arg13: memref<2048x128xbf16, #tpu.memory_space<vmem>>, %arg14: memref<1x128xf32, #tpu.memory_space<vmem>>, %arg15: memref<16x128xf32, #tpu.memory_space<vmem>>, %arg16: memref<16x128xf32, #tpu.memory_space<vmem>>, %arg17: memref<16x128xbf16, #tpu.memory_space<vmem>>) attributes {dimension_semantics = [#tpu.dimension_semantics<parallel>, #tpu.dimension_semantics<arbitrary>], iteration_bounds = array<i64: 2, 2>, scalar_prefetch = 0 : i64, scratch_operands = 2 : i64, tpu.core_type = #tpu.core_type<tc>, window_params = [{pipeline_mode = #tpu.pipeline_mode<synchronous>, transform_indices = @transform_0, window_bounds = array<i64: 16, 128>}, {pipeline_mode = #tpu.pipeline_mode<synchronous>, transform_indices = @transform_1, window_bounds = array<i64: 1, 128>}, {pipeline_mode = #tpu.pipeline_mode<synchronous>, transform_indices = @transform_2, window_bounds = array<i64: 1, 128>}, {transform_indices = @transform_3, window_bounds = array<i64: 1, 128, 384>}, {transform_indices = @transform_4, window_bounds = array<i64: 1, 1, 384>}, {transform_indices = @transform_5, window_bounds = array<i64: 1, 128, 128>}, {transform_indices = @transform_6, window_bounds = array<i64: 1, 1, 128>}, {pipeline_mode = #tpu.pipeline_mode<synchronous>, transform_indices = @transform_7, window_bounds = array<i64: 1, 128>}, {pipeline_mode = #tpu.pipeline_mode<synchronous>, transform_indices = @transform_8, window_bounds = array<i64: 1, 128>}, {pipeline_mode = #tpu.pipeline_mode<synchronous>, transform_indices = @transform_9, window_bounds = array<i64: 128, 2048>}, {pipeline_mode = #tpu.pipeline_mode<synchronous>, transform_indices = @transform_10, window_bounds = array<i64: 1, 2048>}, {pipeline_mode = #tpu.pipeline_mode<synchronous>, transform_indices = @transform_11, window_bounds = array<i64: 2048, 128>}, {pipeline_mode = #tpu.pipeline_mode<synchronous>, transform_indices = @transform_12, window_bounds = array<i64: 1, 128>}, {transform_indices = @transform_13, window_bounds = array<i64: 16, 128>}]} {
    %c0_i32 = arith.constant 0 : i32
    %0 = arith.cmpi eq, %arg1, %c0_i32 : i32
    %1 = arith.extui %0 : i1 to i32
    %c0_i32_0 = arith.constant 0 : i32
    %2 = arith.cmpi ne, %1, %c0_i32_0 : i32
    scf.if %2 {
      %c0_94 = arith.constant 0 : index
      %c0_95 = arith.constant 0 : index
      %206 = vector.load %arg2[%c0_94, %c0_95] : memref<16x128xf32, #tpu.memory_space<vmem>>, vector<16x128xf32>
      %c0_96 = arith.constant 0 : index
      %c0_97 = arith.constant 0 : index
      %207 = vector.load %arg16[%c0_96, %c0_97] : memref<16x128xf32, #tpu.memory_space<vmem>>, vector<16x128xf32>
      tpu.vector_store %arg16[%c0_96, %c0_97], %206 {strides = array<i32>} : memref<16x128xf32, #tpu.memory_space<vmem>>, vector<16x128xf32>,
    } else {
    }
    %c0 = arith.constant 0 : index
    %c0_1 = arith.constant 0 : index
    %3 = vector.load %arg16[%c0, %c0_1] : memref<16x128xf32, #tpu.memory_space<vmem>>, vector<16x128xf32>
    %c0_2 = arith.constant 0 : index
    %c0_3 = arith.constant 0 : index
    %4 = vector.load %arg3[%c0_2, %c0_3] : memref<1x128xf32, #tpu.memory_space<vmem>>, vector<1x128xf32>
    %c0_4 = arith.constant 0 : index
    %c0_5 = arith.constant 0 : index
    %5 = vector.load %arg4[%c0_4, %c0_5] : memref<1x128xf32, #tpu.memory_space<vmem>>, vector<1x128xf32>
    %cst = arith.constant dense<0.000000e+00> : vector<16xf32>
    %6 = vector.multi_reduction <add>, %3, %cst [1] : vector<16x128xf32> to vector<16xf32>
    %7 = vector.shape_cast %6 : vector<16xf32> to vector<16x1xf32>
    %cst_6 = arith.constant 1.280000e+02 : f32
    %8 = vector.broadcast %cst_6 : f32 to vector<16x1xf32>
    %9 = arith.divf %7, %8 : vector<16x1xf32>
    %10 = vector.broadcast %9 : vector<16x1xf32> to vector<16x128xf32>
    %11 = arith.subf %3, %10 : vector<16x128xf32>
    %12 = arith.mulf %11, %11 : vector<16x128xf32>
    %cst_7 = arith.constant dense<0.000000e+00> : vector<16xf32>
    %13 = vector.multi_reduction <add>, %12, %cst_7 [1] : vector<16x128xf32> to vector<16xf32>
    %14 = vector.shape_cast %13 : vector<16xf32> to vector<16x1xf32>
    %cst_8 = arith.constant 0.00787401571 : f32
    %15 = vector.broadcast %cst_8 : f32 to vector<16x1xf32>
    %16 = arith.mulf %14, %15 : vector<16x1xf32>
    %17 = math.sqrt %16 : vector<16x1xf32>
    %cst_9 = arith.constant 9.99999997E-7 : f32
    %18 = vector.broadcast %cst_9 : f32 to vector<16x1xf32>
    %19 = arith.addf %17, %18 : vector<16x1xf32>
    %20 = vector.broadcast %19 : vector<16x1xf32> to vector<16x128xf32>
    %21 = arith.divf %11, %20 : vector<16x128xf32>
    %22 = vector.broadcast %4 : vector<1x128xf32> to vector<16x128xf32>
    %23 = arith.mulf %21, %22 : vector<16x128xf32>
    %24 = vector.broadcast %5 : vector<1x128xf32> to vector<16x128xf32>
    %25 = arith.addf %23, %24 : vector<16x128xf32>
    %26 = arith.truncf %25 : vector<16x128xf32> to vector<16x128xbf16>
    %c0_10 = arith.constant 0 : index
    %c0_11 = arith.constant 0 : index
    %c0_12 = arith.constant 0 : index
    %27 = vector.load %arg5[%c0_10, %c0_11, %c0_12] : memref<1x128x384xbf16, #tpu.memory_space<vmem>>, vector<1x128x384xbf16>
    %28 = vector.shape_cast %27 : vector<1x128x384xbf16> to vector<128x384xbf16>
    %cst_13 = arith.constant dense<0.000000e+00> : vector<16x384xf32>
    %29 = tpu.matmul %26, %28, %cst_13 {dimension_numbers = #tpu.dot_dimension_numbers<[1], [0], [0], [1], [0, 0, 1, 1], [], []>} : vector<16x128xbf16>, vector<128x384xbf16>, vector<16x384xf32> -> vector<16x384xf32>
    %c0_14 = arith.constant 0 : index
    %c0_15 = arith.constant 0 : index
    %c0_16 = arith.constant 0 : index
    %30 = vector.load %arg6[%c0_14, %c0_15, %c0_16] : memref<1x1x384xf32, #tpu.memory_space<vmem>>, vector<1x1x384xf32>
    %31 = vector.shape_cast %30 : vector<1x1x384xf32> to vector<1x384xf32>
    %32 = vector.broadcast %31 : vector<1x384xf32> to vector<16x384xf32>
    %33 = arith.addf %29, %32 : vector<16x384xf32>
    %34 = arith.truncf %33 : vector<16x384xf32> to vector<16x384xbf16>
    %35 = vector.extract_strided_slice %34 {offsets = [0, 0], sizes = [16, 32], strides = [1, 1]} : vector<16x384xbf16> to vector<16x32xbf16>
    %36 = vector.shape_cast %35 : vector<16x32xbf16> to vector<1x16x32xbf16>
    %37 = vector.extract_strided_slice %34 {offsets = [0, 128], sizes = [16, 32], strides = [1, 1]} : vector<16x384xbf16> to vector<16x32xbf16>
    %38 = vector.shape_cast %37 : vector<16x32xbf16> to vector<1x16x32xbf16>
    %39 = vector.extract_strided_slice %34 {offsets = [0, 256], sizes = [16, 32], strides = [1, 1]} : vector<16x384xbf16> to vector<16x32xbf16>
    %40 = vector.shape_cast %39 : vector<16x32xbf16> to vector<1x16x32xbf16>
    "tpu.trace_start"() <{level = 10 : i32, message = "bqd,bkd->bqk"}> : () -> ()
    %cst_17 = arith.constant dense<0.000000e+00> : vector<1x16x16xf32>
    %41 = tpu.matmul %36, %38, %cst_17 {dimension_numbers = #tpu.dot_dimension_numbers<[2], [2], [1], [1], [0, 0, 0, 1, 1, 1], [0], [0]>} : vector<1x16x32xbf16>, vector<1x16x32xbf16>, vector<1x16x16xf32> -> vector<1x16x16xf32>
    "tpu.trace_stop"() : () -> ()
    %cst_18 = arith.constant dense<0xFF800000> : vector<1x16xf32>
    %42 = vector.multi_reduction <maximumf>, %41, %cst_18 [2] : vector<1x16x16xf32> to vector<1x16xf32>
    %43 = vector.shape_cast %42 : vector<1x16xf32> to vector<1x16x1xf32>
    %44 = vector.broadcast %43 : vector<1x16x1xf32> to vector<1x16x16xf32>
    %45 = arith.subf %41, %44 : vector<1x16x16xf32>
    %46 = math.exp %45 : vector<1x16x16xf32>
    %cst_19 = arith.constant dense<0.000000e+00> : vector<1x16xf32>
    %47 = vector.multi_reduction <add>, %46, %cst_19 [2] : vector<1x16x16xf32> to vector<1x16xf32>
    %48 = vector.shape_cast %47 : vector<1x16xf32> to vector<1x16x1xf32>
    %49 = tpu.reciprocal %48 {approx = true} : vector<1x16x1xf32> -> vector<1x16x1xf32>
    %50 = vector.broadcast %49 : vector<1x16x1xf32> to vector<1x16x16xf32>
    %51 = arith.mulf %46, %50 : vector<1x16x16xf32>
    %52 = arith.truncf %51 : vector<1x16x16xf32> to vector<1x16x16xbf16>
    "tpu.trace_start"() <{level = 10 : i32, message = "bqk,bkd->bqd"}> : () -> ()
    %cst_20 = arith.constant dense<0.000000e+00> : vector<1x16x32xf32>
    %53 = tpu.matmul %52, %40, %cst_20 {dimension_numbers = #tpu.dot_dimension_numbers<[2], [1], [1], [2], [0, 0, 0, 1, 1, 2], [0], [0]>} : vector<1x16x16xbf16>, vector<1x16x32xbf16>, vector<1x16x32xf32> -> vector<1x16x32xf32>
    "tpu.trace_stop"() : () -> ()
    %54 = vector.shape_cast %53 : vector<1x16x32xf32> to vector<16x32xf32>
    %55 = arith.truncf %54 : vector<16x32xf32> to vector<16x32xbf16>
    %c0_21 = arith.constant 0 : index
    %c0_22 = arith.constant 0 : index
    %56 = vector.load %arg17[%c0_21, %c0_22] : memref<16x128xbf16, #tpu.memory_space<vmem>>, vector<16x32xbf16>
    tpu.vector_store %arg17[%c0_21, %c0_22], %55 {strides = array<i32>} : memref<16x128xbf16, #tpu.memory_space<vmem>>, vector<16x32xbf16>,
    %57 = vector.extract_strided_slice %34 {offsets = [0, 32], sizes = [16, 32], strides = [1, 1]} : vector<16x384xbf16> to vector<16x32xbf16>
    %58 = vector.shape_cast %57 : vector<16x32xbf16> to vector<1x16x32xbf16>
    %59 = vector.extract_strided_slice %34 {offsets = [0, 160], sizes = [16, 32], strides = [1, 1]} : vector<16x384xbf16> to vector<16x32xbf16>
    %60 = vector.shape_cast %59 : vector<16x32xbf16> to vector<1x16x32xbf16>
    %61 = vector.extract_strided_slice %34 {offsets = [0, 288], sizes = [16, 32], strides = [1, 1]} : vector<16x384xbf16> to vector<16x32xbf16>
    %62 = vector.shape_cast %61 : vector<16x32xbf16> to vector<1x16x32xbf16>
    "tpu.trace_start"() <{level = 10 : i32, message = "bqd,bkd->bqk"}> : () -> ()
    %cst_23 = arith.constant dense<0.000000e+00> : vector<1x16x16xf32>
    %63 = tpu.matmul %58, %60, %cst_23 {dimension_numbers = #tpu.dot_dimension_numbers<[2], [2], [1], [1], [0, 0, 0, 1, 1, 1], [0], [0]>} : vector<1x16x32xbf16>, vector<1x16x32xbf16>, vector<1x16x16xf32> -> vector<1x16x16xf32>
    "tpu.trace_stop"() : () -> ()
    %cst_24 = arith.constant dense<0xFF800000> : vector<1x16xf32>
    %64 = vector.multi_reduction <maximumf>, %63, %cst_24 [2] : vector<1x16x16xf32> to vector<1x16xf32>
    %65 = vector.shape_cast %64 : vector<1x16xf32> to vector<1x16x1xf32>
    %66 = vector.broadcast %65 : vector<1x16x1xf32> to vector<1x16x16xf32>
    %67 = arith.subf %63, %66 : vector<1x16x16xf32>
    %68 = math.exp %67 : vector<1x16x16xf32>
    %cst_25 = arith.constant dense<0.000000e+00> : vector<1x16xf32>
    %69 = vector.multi_reduction <add>, %68, %cst_25 [2] : vector<1x16x16xf32> to vector<1x16xf32>
    %70 = vector.shape_cast %69 : vector<1x16xf32> to vector<1x16x1xf32>
    %71 = tpu.reciprocal %70 {approx = true} : vector<1x16x1xf32> -> vector<1x16x1xf32>
    %72 = vector.broadcast %71 : vector<1x16x1xf32> to vector<1x16x16xf32>
    %73 = arith.mulf %68, %72 : vector<1x16x16xf32>
    %74 = arith.truncf %73 : vector<1x16x16xf32> to vector<1x16x16xbf16>
    "tpu.trace_start"() <{level = 10 : i32, message = "bqk,bkd->bqd"}> : () -> ()
    %cst_26 = arith.constant dense<0.000000e+00> : vector<1x16x32xf32>
    %75 = tpu.matmul %74, %62, %cst_26 {dimension_numbers = #tpu.dot_dimension_numbers<[2], [1], [1], [2], [0, 0, 0, 1, 1, 2], [0], [0]>} : vector<1x16x16xbf16>, vector<1x16x32xbf16>, vector<1x16x32xf32> -> vector<1x16x32xf32>
    "tpu.trace_stop"() : () -> ()
    %76 = vector.shape_cast %75 : vector<1x16x32xf32> to vector<16x32xf32>
    %77 = arith.truncf %76 : vector<16x32xf32> to vector<16x32xbf16>
    %c0_27 = arith.constant 0 : index
    %c32 = arith.constant 32 : index
    %78 = vector.load %arg17[%c0_27, %c32] : memref<16x128xbf16, #tpu.memory_space<vmem>>, vector<16x32xbf16>
    tpu.vector_store %arg17[%c0_27, %c32], %77 {strides = array<i32>} : memref<16x128xbf16, #tpu.memory_space<vmem>>, vector<16x32xbf16>,
    %79 = vector.extract_strided_slice %34 {offsets = [0, 64], sizes = [16, 32], strides = [1, 1]} : vector<16x384xbf16> to vector<16x32xbf16>
    %80 = vector.shape_cast %79 : vector<16x32xbf16> to vector<1x16x32xbf16>
    %81 = vector.extract_strided_slice %34 {offsets = [0, 192], sizes = [16, 32], strides = [1, 1]} : vector<16x384xbf16> to vector<16x32xbf16>
    %82 = vector.shape_cast %81 : vector<16x32xbf16> to vector<1x16x32xbf16>
    %83 = vector.extract_strided_slice %34 {offsets = [0, 320], sizes = [16, 32], strides = [1, 1]} : vector<16x384xbf16> to vector<16x32xbf16>
    %84 = vector.shape_cast %83 : vector<16x32xbf16> to vector<1x16x32xbf16>
    "tpu.trace_start"() <{level = 10 : i32, message = "bqd,bkd->bqk"}> : () -> ()
    %cst_28 = arith.constant dense<0.000000e+00> : vector<1x16x16xf32>
    %85 = tpu.matmul %80, %82, %cst_28 {dimension_numbers = #tpu.dot_dimension_numbers<[2], [2], [1], [1], [0, 0, 0, 1, 1, 1], [0], [0]>} : vector<1x16x32xbf16>, vector<1x16x32xbf16>, vector<1x16x16xf32> -> vector<1x16x16xf32>
    "tpu.trace_stop"() : () -> ()
    %cst_29 = arith.constant dense<0xFF800000> : vector<1x16xf32>
    %86 = vector.multi_reduction <maximumf>, %85, %cst_29 [2] : vector<1x16x16xf32> to vector<1x16xf32>
    %87 = vector.shape_cast %86 : vector<1x16xf32> to vector<1x16x1xf32>
    %88 = vector.broadcast %87 : vector<1x16x1xf32> to vector<1x16x16xf32>
    %89 = arith.subf %85, %88 : vector<1x16x16xf32>
    %90 = math.exp %89 : vector<1x16x16xf32>
    %cst_30 = arith.constant dense<0.000000e+00> : vector<1x16xf32>
    %91 = vector.multi_reduction <add>, %90, %cst_30 [2] : vector<1x16x16xf32> to vector<1x16xf32>
    %92 = vector.shape_cast %91 : vector<1x16xf32> to vector<1x16x1xf32>
    %93 = tpu.reciprocal %92 {approx = true} : vector<1x16x1xf32> -> vector<1x16x1xf32>
    %94 = vector.broadcast %93 : vector<1x16x1xf32> to vector<1x16x16xf32>
    %95 = arith.mulf %90, %94 : vector<1x16x16xf32>
    %96 = arith.truncf %95 : vector<1x16x16xf32> to vector<1x16x16xbf16>
    "tpu.trace_start"() <{level = 10 : i32, message = "bqk,bkd->bqd"}> : () -> ()
    %cst_31 = arith.constant dense<0.000000e+00> : vector<1x16x32xf32>
    %97 = tpu.matmul %96, %84, %cst_31 {dimension_numbers = #tpu.dot_dimension_numbers<[2], [1], [1], [2], [0, 0, 0, 1, 1, 2], [0], [0]>} : vector<1x16x16xbf16>, vector<1x16x32xbf16>, vector<1x16x32xf32> -> vector<1x16x32xf32>
    "tpu.trace_stop"() : () -> ()
    %98 = vector.shape_cast %97 : vector<1x16x32xf32> to vector<16x32xf32>
    %99 = arith.truncf %98 : vector<16x32xf32> to vector<16x32xbf16>
    %c0_32 = arith.constant 0 : index
    %c64 = arith.constant 64 : index
    %100 = vector.load %arg17[%c0_32, %c64] : memref<16x128xbf16, #tpu.memory_space<vmem>>, vector<16x32xbf16>
    tpu.vector_store %arg17[%c0_32, %c64], %99 {strides = array<i32>} : memref<16x128xbf16, #tpu.memory_space<vmem>>, vector<16x32xbf16>,
    %101 = vector.extract_strided_slice %34 {offsets = [0, 96], sizes = [16, 32], strides = [1, 1]} : vector<16x384xbf16> to vector<16x32xbf16>
    %102 = vector.shape_cast %101 : vector<16x32xbf16> to vector<1x16x32xbf16>
    %103 = vector.extract_strided_slice %34 {offsets = [0, 224], sizes = [16, 32], strides = [1, 1]} : vector<16x384xbf16> to vector<16x32xbf16>
    %104 = vector.shape_cast %103 : vector<16x32xbf16> to vector<1x16x32xbf16>
    %105 = vector.extract_strided_slice %34 {offsets = [0, 352], sizes = [16, 32], strides = [1, 1]} : vector<16x384xbf16> to vector<16x32xbf16>
    %106 = vector.shape_cast %105 : vector<16x32xbf16> to vector<1x16x32xbf16>
    "tpu.trace_start"() <{level = 10 : i32, message = "bqd,bkd->bqk"}> : () -> ()
    %cst_33 = arith.constant dense<0.000000e+00> : vector<1x16x16xf32>
    %107 = tpu.matmul %102, %104, %cst_33 {dimension_numbers = #tpu.dot_dimension_numbers<[2], [2], [1], [1], [0, 0, 0, 1, 1, 1], [0], [0]>} : vector<1x16x32xbf16>, vector<1x16x32xbf16>, vector<1x16x16xf32> -> vector<1x16x16xf32>
    "tpu.trace_stop"() : () -> ()
    %cst_34 = arith.constant dense<0xFF800000> : vector<1x16xf32>
    %108 = vector.multi_reduction <maximumf>, %107, %cst_34 [2] : vector<1x16x16xf32> to vector<1x16xf32>
    %109 = vector.shape_cast %108 : vector<1x16xf32> to vector<1x16x1xf32>
    %110 = vector.broadcast %109 : vector<1x16x1xf32> to vector<1x16x16xf32>
    %111 = arith.subf %107, %110 : vector<1x16x16xf32>
    %112 = math.exp %111 : vector<1x16x16xf32>
    %cst_35 = arith.constant dense<0.000000e+00> : vector<1x16xf32>
    %113 = vector.multi_reduction <add>, %112, %cst_35 [2] : vector<1x16x16xf32> to vector<1x16xf32>
    %114 = vector.shape_cast %113 : vector<1x16xf32> to vector<1x16x1xf32>
    %115 = tpu.reciprocal %114 {approx = true} : vector<1x16x1xf32> -> vector<1x16x1xf32>
    %116 = vector.broadcast %115 : vector<1x16x1xf32> to vector<1x16x16xf32>
    %117 = arith.mulf %112, %116 : vector<1x16x16xf32>
    %118 = arith.truncf %117 : vector<1x16x16xf32> to vector<1x16x16xbf16>
    "tpu.trace_start"() <{level = 10 : i32, message = "bqk,bkd->bqd"}> : () -> ()
    %cst_36 = arith.constant dense<0.000000e+00> : vector<1x16x32xf32>
    %119 = tpu.matmul %118, %106, %cst_36 {dimension_numbers = #tpu.dot_dimension_numbers<[2], [1], [1], [2], [0, 0, 0, 1, 1, 2], [0], [0]>} : vector<1x16x16xbf16>, vector<1x16x32xbf16>, vector<1x16x32xf32> -> vector<1x16x32xf32>
    "tpu.trace_stop"() : () -> ()
    %120 = vector.shape_cast %119 : vector<1x16x32xf32> to vector<16x32xf32>
    %121 = arith.truncf %120 : vector<16x32xf32> to vector<16x32xbf16>
    %c0_37 = arith.constant 0 : index
    %c96 = arith.constant 96 : index
    %122 = vector.load %arg17[%c0_37, %c96] : memref<16x128xbf16, #tpu.memory_space<vmem>>, vector<16x32xbf16>
    tpu.vector_store %arg17[%c0_37, %c96], %121 {strides = array<i32>} : memref<16x128xbf16, #tpu.memory_space<vmem>>, vector<16x32xbf16>,
    %c0_38 = arith.constant 0 : index
    %c0_39 = arith.constant 0 : index
    %123 = vector.load %arg17[%c0_38, %c0_39] : memref<16x128xbf16, #tpu.memory_space<vmem>>, vector<16x128xbf16>
    %c0_40 = arith.constant 0 : index
    %c0_41 = arith.constant 0 : index
    %c0_42 = arith.constant 0 : index
    %124 = vector.load %arg7[%c0_40, %c0_41, %c0_42] : memref<1x128x128xbf16, #tpu.memory_space<vmem>>, vector<1x128x128xbf16>
    %125 = vector.shape_cast %124 : vector<1x128x128xbf16> to vector<128x128xbf16>
    %cst_43 = arith.constant dense<0.000000e+00> : vector<16x128xf32>
    %126 = tpu.matmul %123, %125, %cst_43 {dimension_numbers = #tpu.dot_dimension_numbers<[1], [0], [0], [1], [0, 0, 1, 1], [], []>} : vector<16x128xbf16>, vector<128x128xbf16>, vector<16x128xf32> -> vector<16x128xf32>
    %c0_44 = arith.constant 0 : index
    %c0_45 = arith.constant 0 : index
    %c0_46 = arith.constant 0 : index
    %127 = vector.load %arg8[%c0_44, %c0_45, %c0_46] : memref<1x1x128xf32, #tpu.memory_space<vmem>>, vector<1x1x128xf32>
    %128 = vector.shape_cast %127 : vector<1x1x128xf32> to vector<1x128xf32>
    %129 = vector.broadcast %128 : vector<1x128xf32> to vector<16x128xf32>
    %130 = arith.addf %126, %129 : vector<16x128xf32>
    %131 = arith.addf %130, %3 : vector<16x128xf32>
    %c0_47 = arith.constant 0 : index
    %c0_48 = arith.constant 0 : index
    %132 = vector.load %arg9[%c0_47, %c0_48] : memref<1x128xf32, #tpu.memory_space<vmem>>, vector<1x128xf32>
    %c0_49 = arith.constant 0 : index
    %c0_50 = arith.constant 0 : index
    %133 = vector.load %arg10[%c0_49, %c0_50] : memref<1x128xf32, #tpu.memory_space<vmem>>, vector<1x128xf32>
    %cst_51 = arith.constant dense<0.000000e+00> : vector<16xf32>
    %134 = vector.multi_reduction <add>, %131, %cst_51 [1] : vector<16x128xf32> to vector<16xf32>
    %135 = vector.shape_cast %134 : vector<16xf32> to vector<16x1xf32>
    %cst_52 = arith.constant 1.280000e+02 : f32
    %136 = vector.broadcast %cst_52 : f32 to vector<16x1xf32>
    %137 = arith.divf %135, %136 : vector<16x1xf32>
    %138 = vector.broadcast %137 : vector<16x1xf32> to vector<16x128xf32>
    %139 = arith.subf %131, %138 : vector<16x128xf32>
    %140 = arith.mulf %139, %139 : vector<16x128xf32>
    %cst_53 = arith.constant dense<0.000000e+00> : vector<16xf32>
    %141 = vector.multi_reduction <add>, %140, %cst_53 [1] : vector<16x128xf32> to vector<16xf32>
    %142 = vector.shape_cast %141 : vector<16xf32> to vector<16x1xf32>
    %cst_54 = arith.constant 0.00787401571 : f32
    %143 = vector.broadcast %cst_54 : f32 to vector<16x1xf32>
    %144 = arith.mulf %142, %143 : vector<16x1xf32>
    %145 = math.sqrt %144 : vector<16x1xf32>
    %cst_55 = arith.constant 9.99999997E-7 : f32
    %146 = vector.broadcast %cst_55 : f32 to vector<16x1xf32>
    %147 = arith.addf %145, %146 : vector<16x1xf32>
    %148 = vector.broadcast %147 : vector<16x1xf32> to vector<16x128xf32>
    %149 = arith.divf %139, %148 : vector<16x128xf32>
    %150 = vector.broadcast %132 : vector<1x128xf32> to vector<16x128xf32>
    %151 = arith.mulf %149, %150 : vector<16x128xf32>
    %152 = vector.broadcast %133 : vector<1x128xf32> to vector<16x128xf32>
    %153 = arith.addf %151, %152 : vector<16x128xf32>
    %154 = arith.truncf %153 : vector<16x128xf32> to vector<16x128xbf16>
    %c0_56 = arith.constant 0 : index
    %c0_57 = arith.constant 0 : index
    %155 = vector.load %arg11[%c0_56, %c0_57] : memref<128x2048xbf16, #tpu.memory_space<vmem>>, vector<128x512xbf16>
    %c0_58 = arith.constant 0 : index
    %c0_59 = arith.constant 0 : index
    %156 = vector.load %arg12[%c0_58, %c0_59] : memref<1x2048xf32, #tpu.memory_space<vmem>>, vector<1x512xf32>
    %cst_60 = arith.constant dense<0.000000e+00> : vector<16x512xf32>
    %157 = tpu.matmul %154, %155, %cst_60 {dimension_numbers = #tpu.dot_dimension_numbers<[1], [0], [0], [1], [0, 0, 1, 1], [], []>} : vector<16x128xbf16>, vector<128x512xbf16>, vector<16x512xf32> -> vector<16x512xf32>
    %158 = vector.broadcast %156 : vector<1x512xf32> to vector<16x512xf32>
    %159 = arith.addf %157, %158 : vector<16x512xf32>
    %cst_61 = arith.constant 0.000000e+00 : f32
    %160 = vector.broadcast %cst_61 : f32 to vector<16x512xf32>
    %161 = arith.maximumf %159, %160 : vector<16x512xf32>
    %162 = arith.truncf %161 : vector<16x512xf32> to vector<16x512xbf16>
    %c0_62 = arith.constant 0 : index
    %c0_63 = arith.constant 0 : index
    %163 = vector.load %arg13[%c0_62, %c0_63] : memref<2048x128xbf16, #tpu.memory_space<vmem>>, vector<512x128xbf16>
    %cst_64 = arith.constant dense<0.000000e+00> : vector<16x128xf32>
    %164 = tpu.matmul %162, %163, %cst_64 {dimension_numbers = #tpu.dot_dimension_numbers<[1], [0], [0], [1], [0, 0, 1, 1], [], []>} : vector<16x512xbf16>, vector<512x128xbf16>, vector<16x128xf32> -> vector<16x128xf32>
    %c0_65 = arith.constant 0 : index
    %c512 = arith.constant 512 : index
    %165 = vector.load %arg11[%c0_65, %c512] : memref<128x2048xbf16, #tpu.memory_space<vmem>>, vector<128x512xbf16>
    %c0_66 = arith.constant 0 : index
    %c512_67 = arith.constant 512 : index
    %166 = vector.load %arg12[%c0_66, %c512_67] : memref<1x2048xf32, #tpu.memory_space<vmem>>, vector<1x512xf32>
    %cst_68 = arith.constant dense<0.000000e+00> : vector<16x512xf32>
    %167 = tpu.matmul %154, %165, %cst_68 {dimension_numbers = #tpu.dot_dimension_numbers<[1], [0], [0], [1], [0, 0, 1, 1], [], []>} : vector<16x128xbf16>, vector<128x512xbf16>, vector<16x512xf32> -> vector<16x512xf32>
    %168 = vector.broadcast %166 : vector<1x512xf32> to vector<16x512xf32>
    %169 = arith.addf %167, %168 : vector<16x512xf32>
    %cst_69 = arith.constant 0.000000e+00 : f32
    %170 = vector.broadcast %cst_69 : f32 to vector<16x512xf32>
    %171 = arith.maximumf %169, %170 : vector<16x512xf32>
    %172 = arith.truncf %171 : vector<16x512xf32> to vector<16x512xbf16>
    %c512_70 = arith.constant 512 : index
    %c0_71 = arith.constant 0 : index
    %173 = vector.load %arg13[%c512_70, %c0_71] : memref<2048x128xbf16, #tpu.memory_space<vmem>>, vector<512x128xbf16>
    %cst_72 = arith.constant dense<0.000000e+00> : vector<16x128xf32>
    %174 = tpu.matmul %172, %173, %cst_72 {dimension_numbers = #tpu.dot_dimension_numbers<[1], [0], [0], [1], [0, 0, 1, 1], [], []>} : vector<16x512xbf16>, vector<512x128xbf16>, vector<16x128xf32> -> vector<16x128xf32>
    %175 = arith.addf %164, %174 : vector<16x128xf32>
    %c0_73 = arith.constant 0 : index
    %c1024 = arith.constant 1024 : index
    %176 = vector.load %arg11[%c0_73, %c1024] : memref<128x2048xbf16, #tpu.memory_space<vmem>>, vector<128x512xbf16>
    %c0_74 = arith.constant 0 : index
    %c1024_75 = arith.constant 1024 : index
    %177 = vector.load %arg12[%c0_74, %c1024_75] : memref<1x2048xf32, #tpu.memory_space<vmem>>, vector<1x512xf32>
    %cst_76 = arith.constant dense<0.000000e+00> : vector<16x512xf32>
    %178 = tpu.matmul %154, %176, %cst_76 {dimension_numbers = #tpu.dot_dimension_numbers<[1], [0], [0], [1], [0, 0, 1, 1], [], []>} : vector<16x128xbf16>, vector<128x512xbf16>, vector<16x512xf32> -> vector<16x512xf32>
    %179 = vector.broadcast %177 : vector<1x512xf32> to vector<16x512xf32>
    %180 = arith.addf %178, %179 : vector<16x512xf32>
    %cst_77 = arith.constant 0.000000e+00 : f32
    %181 = vector.broadcast %cst_77 : f32 to vector<16x512xf32>
    %182 = arith.maximumf %180, %181 : vector<16x512xf32>
    %183 = arith.truncf %182 : vector<16x512xf32> to vector<16x512xbf16>
    %c1024_78 = arith.constant 1024 : index
    %c0_79 = arith.constant 0 : index
    %184 = vector.load %arg13[%c1024_78, %c0_79] : memref<2048x128xbf16, #tpu.memory_space<vmem>>, vector<512x128xbf16>
    %cst_80 = arith.constant dense<0.000000e+00> : vector<16x128xf32>
    %185 = tpu.matmul %183, %184, %cst_80 {dimension_numbers = #tpu.dot_dimension_numbers<[1], [0], [0], [1], [0, 0, 1, 1], [], []>} : vector<16x512xbf16>, vector<512x128xbf16>, vector<16x128xf32> -> vector<16x128xf32>
    %186 = arith.addf %175, %185 : vector<16x128xf32>
    %c0_81 = arith.constant 0 : index
    %c1536 = arith.constant 1536 : index
    %187 = vector.load %arg11[%c0_81, %c1536] : memref<128x2048xbf16, #tpu.memory_space<vmem>>, vector<128x512xbf16>
    %c0_82 = arith.constant 0 : index
    %c1536_83 = arith.constant 1536 : index
    %188 = vector.load %arg12[%c0_82, %c1536_83] : memref<1x2048xf32, #tpu.memory_space<vmem>>, vector<1x512xf32>
    %cst_84 = arith.constant dense<0.000000e+00> : vector<16x512xf32>
    %189 = tpu.matmul %154, %187, %cst_84 {dimension_numbers = #tpu.dot_dimension_numbers<[1], [0], [0], [1], [0, 0, 1, 1], [], []>} : vector<16x128xbf16>, vector<128x512xbf16>, vector<16x512xf32> -> vector<16x512xf32>
    %190 = vector.broadcast %188 : vector<1x512xf32> to vector<16x512xf32>
    %191 = arith.addf %189, %190 : vector<16x512xf32>
    %cst_85 = arith.constant 0.000000e+00 : f32
    %192 = vector.broadcast %cst_85 : f32 to vector<16x512xf32>
    %193 = arith.maximumf %191, %192 : vector<16x512xf32>
    %194 = arith.truncf %193 : vector<16x512xf32> to vector<16x512xbf16>
    %c1536_86 = arith.constant 1536 : index
    %c0_87 = arith.constant 0 : index
    %195 = vector.load %arg13[%c1536_86, %c0_87] : memref<2048x128xbf16, #tpu.memory_space<vmem>>, vector<512x128xbf16>
    %cst_88 = arith.constant dense<0.000000e+00> : vector<16x128xf32>
    %196 = tpu.matmul %194, %195, %cst_88 {dimension_numbers = #tpu.dot_dimension_numbers<[1], [0], [0], [1], [0, 0, 1, 1], [], []>} : vector<16x512xbf16>, vector<512x128xbf16>, vector<16x128xf32> -> vector<16x128xf32>
    %197 = arith.addf %186, %196 : vector<16x128xf32>
    %c0_89 = arith.constant 0 : index
    %c0_90 = arith.constant 0 : index
    %198 = vector.load %arg14[%c0_89, %c0_90] : memref<1x128xf32, #tpu.memory_space<vmem>>, vector<1x128xf32>
    %199 = vector.broadcast %198 : vector<1x128xf32> to vector<16x128xf32>
    %200 = arith.addf %197, %199 : vector<16x128xf32>
    %201 = arith.addf %200, %131 : vector<16x128xf32>
    %c0_91 = arith.constant 0 : index
    %c0_92 = arith.constant 0 : index
    %202 = vector.load %arg16[%c0_91, %c0_92] : memref<16x128xf32, #tpu.memory_space<vmem>>, vector<16x128xf32>
    tpu.vector_store %arg16[%c0_91, %c0_92], %201 {strides = array<i32>} : memref<16x128xf32, #tpu.memory_space<vmem>>, vector<16x128xf32>,
    %c1_i32 = arith.constant 1 : i32
    %203 = arith.cmpi eq, %arg1, %c1_i32 : i32
    %204 = arith.extui %203 : i1 to i32
    %c0_i32_93 = arith.constant 0 : i32
    %205 = arith.cmpi ne, %204, %c0_i32_93 : i32
    scf.if %205 {
      %c0_94 = arith.constant 0 : index
      %c0_95 = arith.constant 0 : index
      %206 = vector.load %arg3[%c0_94, %c0_95] : memref<1x128xf32, #tpu.memory_space<vmem>>, vector<1x128xf32>
      %c0_96 = arith.constant 0 : index
      %c0_97 = arith.constant 0 : index
      %207 = vector.load %arg4[%c0_96, %c0_97] : memref<1x128xf32, #tpu.memory_space<vmem>>, vector<1x128xf32>
      %cst_98 = arith.constant dense<0.000000e+00> : vector<16xf32>
      %208 = vector.multi_reduction <add>, %201, %cst_98 [1] : vector<16x128xf32> to vector<16xf32>
      %209 = vector.shape_cast %208 : vector<16xf32> to vector<16x1xf32>
      %cst_99 = arith.constant 1.280000e+02 : f32
      %210 = vector.broadcast %cst_99 : f32 to vector<16x1xf32>
      %211 = arith.divf %209, %210 : vector<16x1xf32>
      %212 = vector.broadcast %211 : vector<16x1xf32> to vector<16x128xf32>
      %213 = arith.subf %201, %212 : vector<16x128xf32>
      %214 = arith.mulf %213, %213 : vector<16x128xf32>
      %cst_100 = arith.constant dense<0.000000e+00> : vector<16xf32>
      %215 = vector.multi_reduction <add>, %214, %cst_100 [1] : vector<16x128xf32> to vector<16xf32>
      %216 = vector.shape_cast %215 : vector<16xf32> to vector<16x1xf32>
      %cst_101 = arith.constant 0.00787401571 : f32
      %217 = vector.broadcast %cst_101 : f32 to vector<16x1xf32>
      %218 = arith.mulf %216, %217 : vector<16x1xf32>
      %219 = math.sqrt %218 : vector<16x1xf32>
      %cst_102 = arith.constant 9.99999997E-7 : f32
      %220 = vector.broadcast %cst_102 : f32 to vector<16x1xf32>
      %221 = arith.addf %219, %220 : vector<16x1xf32>
      %222 = vector.broadcast %221 : vector<16x1xf32> to vector<16x128xf32>
      %223 = arith.divf %213, %222 : vector<16x128xf32>
      %224 = vector.broadcast %206 : vector<1x128xf32> to vector<16x128xf32>
      %225 = arith.mulf %223, %224 : vector<16x128xf32>
      %226 = vector.broadcast %207 : vector<1x128xf32> to vector<16x128xf32>
      %227 = arith.addf %225, %226 : vector<16x128xf32>
      %c0_103 = arith.constant 0 : index
      %c0_104 = arith.constant 0 : index
      %228 = vector.load %arg15[%c0_103, %c0_104] : memref<16x128xf32, #tpu.memory_space<vmem>>, vector<16x128xf32>
      tpu.vector_store %arg15[%c0_103, %c0_104], %227 {strides = array<i32>} : memref<16x128xf32, #tpu.memory_space<vmem>>, vector<16x128xf32>,
    } else {
    }
    return
  }
  func.func @transform_0(%arg0: i32, %arg1: i32) -> (i32, i32) {
    %c0_i32 = arith.constant 0 : i32
    %c0_i32_0 = arith.constant 0 : i32
    return %arg0, %c0_i32 : i32, i32
  }
  func.func @transform_1(%arg0: i32, %arg1: i32) -> (i32, i32) {
    %c0_i32 = arith.constant 0 : i32
    %c0_i32_0 = arith.constant 0 : i32
    %c0_i32_1 = arith.constant 0 : i32
    return %c0_i32, %c0_i32_0 : i32, i32
  }
  func.func @transform_2(%arg0: i32, %arg1: i32) -> (i32, i32) {
    %c0_i32 = arith.constant 0 : i32
    %c0_i32_0 = arith.constant 0 : i32
    %c0_i32_1 = arith.constant 0 : i32
    return %c0_i32, %c0_i32_0 : i32, i32
  }
  func.func @transform_3(%arg0: i32, %arg1: i32) -> (i32, i32, i32) {
    %c0_i32 = arith.constant 0 : i32
    %c0_i32_0 = arith.constant 0 : i32
    %c0_i32_1 = arith.constant 0 : i32
    return %arg1, %c0_i32, %c0_i32_0 : i32, i32, i32
  }
  func.func @transform_4(%arg0: i32, %arg1: i32) -> (i32, i32, i32) {
    %c0_i32 = arith.constant 0 : i32
    %c0_i32_0 = arith.constant 0 : i32
    %c0_i32_1 = arith.constant 0 : i32
    return %arg1, %c0_i32, %c0_i32_0 : i32, i32, i32
  }
  func.func @transform_5(%arg0: i32, %arg1: i32) -> (i32, i32, i32) {
    %c0_i32 = arith.constant 0 : i32
    %c0_i32_0 = arith.constant 0 : i32
    %c0_i32_1 = arith.constant 0 : i32
    return %arg1, %c0_i32, %c0_i32_0 : i32, i32, i32
  }
  func.func @transform_6(%arg0: i32, %arg1: i32) -> (i32, i32, i32) {
    %c0_i32 = arith.constant 0 : i32
    %c0_i32_0 = arith.constant 0 : i32
    %c0_i32_1 = arith.constant 0 : i32
    return %arg1, %c0_i32, %c0_i32_0 : i32, i32, i32
  }
  func.func @transform_7(%arg0: i32, %arg1: i32) -> (i32, i32) {
    %c0_i32 = arith.constant 0 : i32
    %c0_i32_0 = arith.constant 0 : i32
    %c0_i32_1 = arith.constant 0 : i32
    return %c0_i32, %c0_i32_0 : i32, i32
  }
  func.func @transform_8(%arg0: i32, %arg1: i32) -> (i32, i32) {
    %c0_i32 = arith.constant 0 : i32
    %c0_i32_0 = arith.constant 0 : i32
    %c0_i32_1 = arith.constant 0 : i32
    return %c0_i32, %c0_i32_0 : i32, i32
  }
  func.func @transform_9(%arg0: i32, %arg1: i32) -> (i32, i32) {
    %c0_i32 = arith.constant 0 : i32
    %c0_i32_0 = arith.constant 0 : i32
    %c0_i32_1 = arith.constant 0 : i32
    return %c0_i32, %c0_i32_0 : i32, i32
  }
  func.func @transform_10(%arg0: i32, %arg1: i32) -> (i32, i32) {
    %c0_i32 = arith.constant 0 : i32
    %c0_i32_0 = arith.constant 0 : i32
    %c0_i32_1 = arith.constant 0 : i32
    return %c0_i32, %c0_i32_0 : i32, i32
  }
  func.func @transform_11(%arg0: i32, %arg1: i32) -> (i32, i32) {
    %c0_i32 = arith.constant 0 : i32
    %c0_i32_0 = arith.constant 0 : i32
    %c0_i32_1 = arith.constant 0 : i32
    return %c0_i32, %c0_i32_0 : i32, i32
  }
  func.func @transform_12(%arg0: i32, %arg1: i32) -> (i32, i32) {
    %c0_i32 = arith.constant 0 : i32
    %c0_i32_0 = arith.constant 0 : i32
    %c0_i32_1 = arith.constant 0 : i32
    return %c0_i32, %c0_i32_0 : i32, i32
  }
  func.func @transform_13(%arg0: i32, %arg1: i32) -> (i32, i32) {
    %c0_i32 = arith.constant 0 : i32
    %c0_i32_0 = arith.constant 0 : i32
    return %arg0, %c0_i32 : i32, i32
  }
}

module attributes {stable_mosaic.version = 11 : i64} {
  func.func @_stack_kernel(%arg0: i32, %arg1: i32, %arg2: memref<16x128xf32, #tpu.memory_space<vmem>>, %arg3: memref<1x128xf32, #tpu.memory_space<vmem>>, %arg4: memref<1x128xf32, #tpu.memory_space<vmem>>, %arg5: memref<1x128x384xbf16, #tpu.memory_space<vmem>>, %arg6: memref<1x1x384xf32, #tpu.memory_space<vmem>>, %arg7: memref<1x128x128xbf16, #tpu.memory_space<vmem>>, %arg8: memref<1x1x128xf32, #tpu.memory_space<vmem>>, %arg9: memref<1x128xf32, #tpu.memory_space<vmem>>, %arg10: memref<1x128xf32, #tpu.memory_space<vmem>>, %arg11: memref<128x2048xbf16, #tpu.memory_space<vmem>>, %arg12: memref<1x2048xf32, #tpu.memory_space<vmem>>, %arg13: memref<2048x128xbf16, #tpu.memory_space<vmem>>, %arg14: memref<1x128xf32, #tpu.memory_space<vmem>>, %arg15: memref<16x128xf32, #tpu.memory_space<vmem>>, %arg16: memref<16x128xf32, #tpu.memory_space<vmem>>, %arg17: memref<16x128xbf16, #tpu.memory_space<vmem>>) attributes {dimension_semantics = [#tpu.dimension_semantics<parallel>, #tpu.dimension_semantics<arbitrary>], iteration_bounds = array<i64: 2, 2>, scalar_prefetch = 0 : i64, scratch_operands = 2 : i64, tpu.core_type = #tpu.core_type<tc>, window_params = [{transform_indices = @transform_0, window_bounds = array<i64: 16, 128>}, {pipeline_mode = #tpu.pipeline_mode<synchronous>, transform_indices = @transform_1, window_bounds = array<i64: 1, 128>}, {pipeline_mode = #tpu.pipeline_mode<synchronous>, transform_indices = @transform_2, window_bounds = array<i64: 1, 128>}, {transform_indices = @transform_3, window_bounds = array<i64: 1, 128, 384>}, {transform_indices = @transform_4, window_bounds = array<i64: 1, 1, 384>}, {transform_indices = @transform_5, window_bounds = array<i64: 1, 128, 128>}, {transform_indices = @transform_6, window_bounds = array<i64: 1, 1, 128>}, {pipeline_mode = #tpu.pipeline_mode<synchronous>, transform_indices = @transform_7, window_bounds = array<i64: 1, 128>}, {pipeline_mode = #tpu.pipeline_mode<synchronous>, transform_indices = @transform_8, window_bounds = array<i64: 1, 128>}, {pipeline_mode = #tpu.pipeline_mode<synchronous>, transform_indices = @transform_9, window_bounds = array<i64: 128, 2048>}, {pipeline_mode = #tpu.pipeline_mode<synchronous>, transform_indices = @transform_10, window_bounds = array<i64: 1, 2048>}, {pipeline_mode = #tpu.pipeline_mode<synchronous>, transform_indices = @transform_11, window_bounds = array<i64: 2048, 128>}, {pipeline_mode = #tpu.pipeline_mode<synchronous>, transform_indices = @transform_12, window_bounds = array<i64: 1, 128>}, {transform_indices = @transform_13, window_bounds = array<i64: 16, 128>}]} {
    %c0_i32 = arith.constant 0 : i32
    %0 = arith.cmpi eq, %arg1, %c0_i32 : i32
    %1 = arith.extui %0 : i1 to i32
    %c0_i32_0 = arith.constant 0 : i32
    %2 = arith.cmpi ne, %1, %c0_i32_0 : i32
    scf.if %2 {
      %c0_94 = arith.constant 0 : index
      %c0_95 = arith.constant 0 : index
      %206 = vector.load %arg2[%c0_94, %c0_95] : memref<16x128xf32, #tpu.memory_space<vmem>>, vector<16x128xf32>
      %c0_96 = arith.constant 0 : index
      %c0_97 = arith.constant 0 : index
      %207 = vector.load %arg16[%c0_96, %c0_97] : memref<16x128xf32, #tpu.memory_space<vmem>>, vector<16x128xf32>
      tpu.vector_store %arg16[%c0_96, %c0_97], %206 {strides = array<i32>} : memref<16x128xf32, #tpu.memory_space<vmem>>, vector<16x128xf32>,
    } else {
    }
    %c0 = arith.constant 0 : index
    %c0_1 = arith.constant 0 : index
    %3 = vector.load %arg16[%c0, %c0_1] : memref<16x128xf32, #tpu.memory_space<vmem>>, vector<16x128xf32>
    %c0_2 = arith.constant 0 : index
    %c0_3 = arith.constant 0 : index
    %4 = vector.load %arg3[%c0_2, %c0_3] : memref<1x128xf32, #tpu.memory_space<vmem>>, vector<1x128xf32>
    %c0_4 = arith.constant 0 : index
    %c0_5 = arith.constant 0 : index
    %5 = vector.load %arg4[%c0_4, %c0_5] : memref<1x128xf32, #tpu.memory_space<vmem>>, vector<1x128xf32>
    %cst = arith.constant dense<0.000000e+00> : vector<16xf32>
    %6 = vector.multi_reduction <add>, %3, %cst [1] : vector<16x128xf32> to vector<16xf32>
    %7 = vector.shape_cast %6 : vector<16xf32> to vector<16x1xf32>
    %cst_6 = arith.constant 1.280000e+02 : f32
    %8 = vector.broadcast %cst_6 : f32 to vector<16x1xf32>
    %9 = arith.divf %7, %8 : vector<16x1xf32>
    %10 = vector.broadcast %9 : vector<16x1xf32> to vector<16x128xf32>
    %11 = arith.subf %3, %10 : vector<16x128xf32>
    %12 = arith.mulf %11, %11 : vector<16x128xf32>
    %cst_7 = arith.constant dense<0.000000e+00> : vector<16xf32>
    %13 = vector.multi_reduction <add>, %12, %cst_7 [1] : vector<16x128xf32> to vector<16xf32>
    %14 = vector.shape_cast %13 : vector<16xf32> to vector<16x1xf32>
    %cst_8 = arith.constant 0.00787401571 : f32
    %15 = vector.broadcast %cst_8 : f32 to vector<16x1xf32>
    %16 = arith.mulf %14, %15 : vector<16x1xf32>
    %17 = math.sqrt %16 : vector<16x1xf32>
    %cst_9 = arith.constant 9.99999997E-7 : f32
    %18 = vector.broadcast %cst_9 : f32 to vector<16x1xf32>
    %19 = arith.addf %17, %18 : vector<16x1xf32>
    %20 = vector.broadcast %19 : vector<16x1xf32> to vector<16x128xf32>
    %21 = arith.divf %11, %20 : vector<16x128xf32>
    %22 = vector.broadcast %4 : vector<1x128xf32> to vector<16x128xf32>
    %23 = arith.mulf %21, %22 : vector<16x128xf32>
    %24 = vector.broadcast %5 : vector<1x128xf32> to vector<16x128xf32>
    %25 = arith.addf %23, %24 : vector<16x128xf32>
    %26 = arith.truncf %25 : vector<16x128xf32> to vector<16x128xbf16>
    %c0_10 = arith.constant 0 : index
    %c0_11 = arith.constant 0 : index
    %c0_12 = arith.constant 0 : index
    %27 = vector.load %arg5[%c0_10, %c0_11, %c0_12] : memref<1x128x384xbf16, #tpu.memory_space<vmem>>, vector<1x128x384xbf16>
    %28 = vector.shape_cast %27 : vector<1x128x384xbf16> to vector<128x384xbf16>
    %cst_13 = arith.constant dense<0.000000e+00> : vector<16x384xf32>
    %29 = tpu.matmul %26, %28, %cst_13 {dimension_numbers = #tpu.dot_dimension_numbers<[1], [0], [0], [1], [0, 0, 1, 1], [], []>} : vector<16x128xbf16>, vector<128x384xbf16>, vector<16x384xf32> -> vector<16x384xf32>
    %c0_14 = arith.constant 0 : index
    %c0_15 = arith.constant 0 : index
    %c0_16 = arith.constant 0 : index
    %30 = vector.load %arg6[%c0_14, %c0_15, %c0_16] : memref<1x1x384xf32, #tpu.memory_space<vmem>>, vector<1x1x384xf32>
    %31 = vector.shape_cast %30 : vector<1x1x384xf32> to vector<1x384xf32>
    %32 = vector.broadcast %31 : vector<1x384xf32> to vector<16x384xf32>
    %33 = arith.addf %29, %32 : vector<16x384xf32>
    %34 = arith.truncf %33 : vector<16x384xf32> to vector<16x384xbf16>
    %35 = vector.extract_strided_slice %34 {offsets = [0, 0], sizes = [16, 32], strides = [1, 1]} : vector<16x384xbf16> to vector<16x32xbf16>
    %36 = vector.shape_cast %35 : vector<16x32xbf16> to vector<1x16x32xbf16>
    %37 = vector.extract_strided_slice %34 {offsets = [0, 128], sizes = [16, 32], strides = [1, 1]} : vector<16x384xbf16> to vector<16x32xbf16>
    %38 = vector.shape_cast %37 : vector<16x32xbf16> to vector<1x16x32xbf16>
    %39 = vector.extract_strided_slice %34 {offsets = [0, 256], sizes = [16, 32], strides = [1, 1]} : vector<16x384xbf16> to vector<16x32xbf16>
    %40 = vector.shape_cast %39 : vector<16x32xbf16> to vector<1x16x32xbf16>
    "tpu.trace_start"() <{level = 10 : i32, message = "bqd,bkd->bqk"}> : () -> ()
    %cst_17 = arith.constant dense<0.000000e+00> : vector<1x16x16xf32>
    %41 = tpu.matmul %36, %38, %cst_17 {dimension_numbers = #tpu.dot_dimension_numbers<[2], [2], [1], [1], [0, 0, 0, 1, 1, 1], [0], [0]>} : vector<1x16x32xbf16>, vector<1x16x32xbf16>, vector<1x16x16xf32> -> vector<1x16x16xf32>
    "tpu.trace_stop"() : () -> ()
    %cst_18 = arith.constant dense<0xFF800000> : vector<1x16xf32>
    %42 = vector.multi_reduction <maximumf>, %41, %cst_18 [2] : vector<1x16x16xf32> to vector<1x16xf32>
    %43 = vector.shape_cast %42 : vector<1x16xf32> to vector<1x16x1xf32>
    %44 = vector.broadcast %43 : vector<1x16x1xf32> to vector<1x16x16xf32>
    %45 = arith.subf %41, %44 : vector<1x16x16xf32>
    %46 = math.exp %45 : vector<1x16x16xf32>
    %cst_19 = arith.constant dense<0.000000e+00> : vector<1x16xf32>
    %47 = vector.multi_reduction <add>, %46, %cst_19 [2] : vector<1x16x16xf32> to vector<1x16xf32>
    %48 = vector.shape_cast %47 : vector<1x16xf32> to vector<1x16x1xf32>
    %49 = tpu.reciprocal %48 {approx = true} : vector<1x16x1xf32> -> vector<1x16x1xf32>
    %50 = vector.broadcast %49 : vector<1x16x1xf32> to vector<1x16x16xf32>
    %51 = arith.mulf %46, %50 : vector<1x16x16xf32>
    %52 = arith.truncf %51 : vector<1x16x16xf32> to vector<1x16x16xbf16>
    "tpu.trace_start"() <{level = 10 : i32, message = "bqk,bkd->bqd"}> : () -> ()
    %cst_20 = arith.constant dense<0.000000e+00> : vector<1x16x32xf32>
    %53 = tpu.matmul %52, %40, %cst_20 {dimension_numbers = #tpu.dot_dimension_numbers<[2], [1], [1], [2], [0, 0, 0, 1, 1, 2], [0], [0]>} : vector<1x16x16xbf16>, vector<1x16x32xbf16>, vector<1x16x32xf32> -> vector<1x16x32xf32>
    "tpu.trace_stop"() : () -> ()
    %54 = vector.shape_cast %53 : vector<1x16x32xf32> to vector<16x32xf32>
    %55 = arith.truncf %54 : vector<16x32xf32> to vector<16x32xbf16>
    %c0_21 = arith.constant 0 : index
    %c0_22 = arith.constant 0 : index
    %56 = vector.load %arg17[%c0_21, %c0_22] : memref<16x128xbf16, #tpu.memory_space<vmem>>, vector<16x32xbf16>
    tpu.vector_store %arg17[%c0_21, %c0_22], %55 {strides = array<i32>} : memref<16x128xbf16, #tpu.memory_space<vmem>>, vector<16x32xbf16>,
    %57 = vector.extract_strided_slice %34 {offsets = [0, 32], sizes = [16, 32], strides = [1, 1]} : vector<16x384xbf16> to vector<16x32xbf16>
    %58 = vector.shape_cast %57 : vector<16x32xbf16> to vector<1x16x32xbf16>
    %59 = vector.extract_strided_slice %34 {offsets = [0, 160], sizes = [16, 32], strides = [1, 1]} : vector<16x384xbf16> to vector<16x32xbf16>
    %60 = vector.shape_cast %59 : vector<16x32xbf16> to vector<1x16x32xbf16>
    %61 = vector.extract_strided_slice %34 {offsets = [0, 288], sizes = [16, 32], strides = [1, 1]} : vector<16x384xbf16> to vector<16x32xbf16>
    %62 = vector.shape_cast %61 : vector<16x32xbf16> to vector<1x16x32xbf16>
    "tpu.trace_start"() <{level = 10 : i32, message = "bqd,bkd->bqk"}> : () -> ()
    %cst_23 = arith.constant dense<0.000000e+00> : vector<1x16x16xf32>
    %63 = tpu.matmul %58, %60, %cst_23 {dimension_numbers = #tpu.dot_dimension_numbers<[2], [2], [1], [1], [0, 0, 0, 1, 1, 1], [0], [0]>} : vector<1x16x32xbf16>, vector<1x16x32xbf16>, vector<1x16x16xf32> -> vector<1x16x16xf32>
    "tpu.trace_stop"() : () -> ()
    %cst_24 = arith.constant dense<0xFF800000> : vector<1x16xf32>
    %64 = vector.multi_reduction <maximumf>, %63, %cst_24 [2] : vector<1x16x16xf32> to vector<1x16xf32>
    %65 = vector.shape_cast %64 : vector<1x16xf32> to vector<1x16x1xf32>
    %66 = vector.broadcast %65 : vector<1x16x1xf32> to vector<1x16x16xf32>
    %67 = arith.subf %63, %66 : vector<1x16x16xf32>
    %68 = math.exp %67 : vector<1x16x16xf32>
    %cst_25 = arith.constant dense<0.000000e+00> : vector<1x16xf32>
    %69 = vector.multi_reduction <add>, %68, %cst_25 [2] : vector<1x16x16xf32> to vector<1x16xf32>
    %70 = vector.shape_cast %69 : vector<1x16xf32> to vector<1x16x1xf32>
    %71 = tpu.reciprocal %70 {approx = true} : vector<1x16x1xf32> -> vector<1x16x1xf32>
    %72 = vector.broadcast %71 : vector<1x16x1xf32> to vector<1x16x16xf32>
    %73 = arith.mulf %68, %72 : vector<1x16x16xf32>
    %74 = arith.truncf %73 : vector<1x16x16xf32> to vector<1x16x16xbf16>
    "tpu.trace_start"() <{level = 10 : i32, message = "bqk,bkd->bqd"}> : () -> ()
    %cst_26 = arith.constant dense<0.000000e+00> : vector<1x16x32xf32>
    %75 = tpu.matmul %74, %62, %cst_26 {dimension_numbers = #tpu.dot_dimension_numbers<[2], [1], [1], [2], [0, 0, 0, 1, 1, 2], [0], [0]>} : vector<1x16x16xbf16>, vector<1x16x32xbf16>, vector<1x16x32xf32> -> vector<1x16x32xf32>
    "tpu.trace_stop"() : () -> ()
    %76 = vector.shape_cast %75 : vector<1x16x32xf32> to vector<16x32xf32>
    %77 = arith.truncf %76 : vector<16x32xf32> to vector<16x32xbf16>
    %c0_27 = arith.constant 0 : index
    %c32 = arith.constant 32 : index
    %78 = vector.load %arg17[%c0_27, %c32] : memref<16x128xbf16, #tpu.memory_space<vmem>>, vector<16x32xbf16>
    tpu.vector_store %arg17[%c0_27, %c32], %77 {strides = array<i32>} : memref<16x128xbf16, #tpu.memory_space<vmem>>, vector<16x32xbf16>,
    %79 = vector.extract_strided_slice %34 {offsets = [0, 64], sizes = [16, 32], strides = [1, 1]} : vector<16x384xbf16> to vector<16x32xbf16>
    %80 = vector.shape_cast %79 : vector<16x32xbf16> to vector<1x16x32xbf16>
    %81 = vector.extract_strided_slice %34 {offsets = [0, 192], sizes = [16, 32], strides = [1, 1]} : vector<16x384xbf16> to vector<16x32xbf16>
    %82 = vector.shape_cast %81 : vector<16x32xbf16> to vector<1x16x32xbf16>
    %83 = vector.extract_strided_slice %34 {offsets = [0, 320], sizes = [16, 32], strides = [1, 1]} : vector<16x384xbf16> to vector<16x32xbf16>
    %84 = vector.shape_cast %83 : vector<16x32xbf16> to vector<1x16x32xbf16>
    "tpu.trace_start"() <{level = 10 : i32, message = "bqd,bkd->bqk"}> : () -> ()
    %cst_28 = arith.constant dense<0.000000e+00> : vector<1x16x16xf32>
    %85 = tpu.matmul %80, %82, %cst_28 {dimension_numbers = #tpu.dot_dimension_numbers<[2], [2], [1], [1], [0, 0, 0, 1, 1, 1], [0], [0]>} : vector<1x16x32xbf16>, vector<1x16x32xbf16>, vector<1x16x16xf32> -> vector<1x16x16xf32>
    "tpu.trace_stop"() : () -> ()
    %cst_29 = arith.constant dense<0xFF800000> : vector<1x16xf32>
    %86 = vector.multi_reduction <maximumf>, %85, %cst_29 [2] : vector<1x16x16xf32> to vector<1x16xf32>
    %87 = vector.shape_cast %86 : vector<1x16xf32> to vector<1x16x1xf32>
    %88 = vector.broadcast %87 : vector<1x16x1xf32> to vector<1x16x16xf32>
    %89 = arith.subf %85, %88 : vector<1x16x16xf32>
    %90 = math.exp %89 : vector<1x16x16xf32>
    %cst_30 = arith.constant dense<0.000000e+00> : vector<1x16xf32>
    %91 = vector.multi_reduction <add>, %90, %cst_30 [2] : vector<1x16x16xf32> to vector<1x16xf32>
    %92 = vector.shape_cast %91 : vector<1x16xf32> to vector<1x16x1xf32>
    %93 = tpu.reciprocal %92 {approx = true} : vector<1x16x1xf32> -> vector<1x16x1xf32>
    %94 = vector.broadcast %93 : vector<1x16x1xf32> to vector<1x16x16xf32>
    %95 = arith.mulf %90, %94 : vector<1x16x16xf32>
    %96 = arith.truncf %95 : vector<1x16x16xf32> to vector<1x16x16xbf16>
    "tpu.trace_start"() <{level = 10 : i32, message = "bqk,bkd->bqd"}> : () -> ()
    %cst_31 = arith.constant dense<0.000000e+00> : vector<1x16x32xf32>
    %97 = tpu.matmul %96, %84, %cst_31 {dimension_numbers = #tpu.dot_dimension_numbers<[2], [1], [1], [2], [0, 0, 0, 1, 1, 2], [0], [0]>} : vector<1x16x16xbf16>, vector<1x16x32xbf16>, vector<1x16x32xf32> -> vector<1x16x32xf32>
    "tpu.trace_stop"() : () -> ()
    %98 = vector.shape_cast %97 : vector<1x16x32xf32> to vector<16x32xf32>
    %99 = arith.truncf %98 : vector<16x32xf32> to vector<16x32xbf16>
    %c0_32 = arith.constant 0 : index
    %c64 = arith.constant 64 : index
    %100 = vector.load %arg17[%c0_32, %c64] : memref<16x128xbf16, #tpu.memory_space<vmem>>, vector<16x32xbf16>
    tpu.vector_store %arg17[%c0_32, %c64], %99 {strides = array<i32>} : memref<16x128xbf16, #tpu.memory_space<vmem>>, vector<16x32xbf16>,
    %101 = vector.extract_strided_slice %34 {offsets = [0, 96], sizes = [16, 32], strides = [1, 1]} : vector<16x384xbf16> to vector<16x32xbf16>
    %102 = vector.shape_cast %101 : vector<16x32xbf16> to vector<1x16x32xbf16>
    %103 = vector.extract_strided_slice %34 {offsets = [0, 224], sizes = [16, 32], strides = [1, 1]} : vector<16x384xbf16> to vector<16x32xbf16>
    %104 = vector.shape_cast %103 : vector<16x32xbf16> to vector<1x16x32xbf16>
    %105 = vector.extract_strided_slice %34 {offsets = [0, 352], sizes = [16, 32], strides = [1, 1]} : vector<16x384xbf16> to vector<16x32xbf16>
    %106 = vector.shape_cast %105 : vector<16x32xbf16> to vector<1x16x32xbf16>
    "tpu.trace_start"() <{level = 10 : i32, message = "bqd,bkd->bqk"}> : () -> ()
    %cst_33 = arith.constant dense<0.000000e+00> : vector<1x16x16xf32>
    %107 = tpu.matmul %102, %104, %cst_33 {dimension_numbers = #tpu.dot_dimension_numbers<[2], [2], [1], [1], [0, 0, 0, 1, 1, 1], [0], [0]>} : vector<1x16x32xbf16>, vector<1x16x32xbf16>, vector<1x16x16xf32> -> vector<1x16x16xf32>
    "tpu.trace_stop"() : () -> ()
    %cst_34 = arith.constant dense<0xFF800000> : vector<1x16xf32>
    %108 = vector.multi_reduction <maximumf>, %107, %cst_34 [2] : vector<1x16x16xf32> to vector<1x16xf32>
    %109 = vector.shape_cast %108 : vector<1x16xf32> to vector<1x16x1xf32>
    %110 = vector.broadcast %109 : vector<1x16x1xf32> to vector<1x16x16xf32>
    %111 = arith.subf %107, %110 : vector<1x16x16xf32>
    %112 = math.exp %111 : vector<1x16x16xf32>
    %cst_35 = arith.constant dense<0.000000e+00> : vector<1x16xf32>
    %113 = vector.multi_reduction <add>, %112, %cst_35 [2] : vector<1x16x16xf32> to vector<1x16xf32>
    %114 = vector.shape_cast %113 : vector<1x16xf32> to vector<1x16x1xf32>
    %115 = tpu.reciprocal %114 {approx = true} : vector<1x16x1xf32> -> vector<1x16x1xf32>
    %116 = vector.broadcast %115 : vector<1x16x1xf32> to vector<1x16x16xf32>
    %117 = arith.mulf %112, %116 : vector<1x16x16xf32>
    %118 = arith.truncf %117 : vector<1x16x16xf32> to vector<1x16x16xbf16>
    "tpu.trace_start"() <{level = 10 : i32, message = "bqk,bkd->bqd"}> : () -> ()
    %cst_36 = arith.constant dense<0.000000e+00> : vector<1x16x32xf32>
    %119 = tpu.matmul %118, %106, %cst_36 {dimension_numbers = #tpu.dot_dimension_numbers<[2], [1], [1], [2], [0, 0, 0, 1, 1, 2], [0], [0]>} : vector<1x16x16xbf16>, vector<1x16x32xbf16>, vector<1x16x32xf32> -> vector<1x16x32xf32>
    "tpu.trace_stop"() : () -> ()
    %120 = vector.shape_cast %119 : vector<1x16x32xf32> to vector<16x32xf32>
    %121 = arith.truncf %120 : vector<16x32xf32> to vector<16x32xbf16>
    %c0_37 = arith.constant 0 : index
    %c96 = arith.constant 96 : index
    %122 = vector.load %arg17[%c0_37, %c96] : memref<16x128xbf16, #tpu.memory_space<vmem>>, vector<16x32xbf16>
    tpu.vector_store %arg17[%c0_37, %c96], %121 {strides = array<i32>} : memref<16x128xbf16, #tpu.memory_space<vmem>>, vector<16x32xbf16>,
    %c0_38 = arith.constant 0 : index
    %c0_39 = arith.constant 0 : index
    %123 = vector.load %arg17[%c0_38, %c0_39] : memref<16x128xbf16, #tpu.memory_space<vmem>>, vector<16x128xbf16>
    %c0_40 = arith.constant 0 : index
    %c0_41 = arith.constant 0 : index
    %c0_42 = arith.constant 0 : index
    %124 = vector.load %arg7[%c0_40, %c0_41, %c0_42] : memref<1x128x128xbf16, #tpu.memory_space<vmem>>, vector<1x128x128xbf16>
    %125 = vector.shape_cast %124 : vector<1x128x128xbf16> to vector<128x128xbf16>
    %cst_43 = arith.constant dense<0.000000e+00> : vector<16x128xf32>
    %126 = tpu.matmul %123, %125, %cst_43 {dimension_numbers = #tpu.dot_dimension_numbers<[1], [0], [0], [1], [0, 0, 1, 1], [], []>} : vector<16x128xbf16>, vector<128x128xbf16>, vector<16x128xf32> -> vector<16x128xf32>
    %c0_44 = arith.constant 0 : index
    %c0_45 = arith.constant 0 : index
    %c0_46 = arith.constant 0 : index
    %127 = vector.load %arg8[%c0_44, %c0_45, %c0_46] : memref<1x1x128xf32, #tpu.memory_space<vmem>>, vector<1x1x128xf32>
    %128 = vector.shape_cast %127 : vector<1x1x128xf32> to vector<1x128xf32>
    %129 = vector.broadcast %128 : vector<1x128xf32> to vector<16x128xf32>
    %130 = arith.addf %126, %129 : vector<16x128xf32>
    %131 = arith.addf %130, %3 : vector<16x128xf32>
    %c0_47 = arith.constant 0 : index
    %c0_48 = arith.constant 0 : index
    %132 = vector.load %arg9[%c0_47, %c0_48] : memref<1x128xf32, #tpu.memory_space<vmem>>, vector<1x128xf32>
    %c0_49 = arith.constant 0 : index
    %c0_50 = arith.constant 0 : index
    %133 = vector.load %arg10[%c0_49, %c0_50] : memref<1x128xf32, #tpu.memory_space<vmem>>, vector<1x128xf32>
    %cst_51 = arith.constant dense<0.000000e+00> : vector<16xf32>
    %134 = vector.multi_reduction <add>, %131, %cst_51 [1] : vector<16x128xf32> to vector<16xf32>
    %135 = vector.shape_cast %134 : vector<16xf32> to vector<16x1xf32>
    %cst_52 = arith.constant 1.280000e+02 : f32
    %136 = vector.broadcast %cst_52 : f32 to vector<16x1xf32>
    %137 = arith.divf %135, %136 : vector<16x1xf32>
    %138 = vector.broadcast %137 : vector<16x1xf32> to vector<16x128xf32>
    %139 = arith.subf %131, %138 : vector<16x128xf32>
    %140 = arith.mulf %139, %139 : vector<16x128xf32>
    %cst_53 = arith.constant dense<0.000000e+00> : vector<16xf32>
    %141 = vector.multi_reduction <add>, %140, %cst_53 [1] : vector<16x128xf32> to vector<16xf32>
    %142 = vector.shape_cast %141 : vector<16xf32> to vector<16x1xf32>
    %cst_54 = arith.constant 0.00787401571 : f32
    %143 = vector.broadcast %cst_54 : f32 to vector<16x1xf32>
    %144 = arith.mulf %142, %143 : vector<16x1xf32>
    %145 = math.sqrt %144 : vector<16x1xf32>
    %cst_55 = arith.constant 9.99999997E-7 : f32
    %146 = vector.broadcast %cst_55 : f32 to vector<16x1xf32>
    %147 = arith.addf %145, %146 : vector<16x1xf32>
    %148 = vector.broadcast %147 : vector<16x1xf32> to vector<16x128xf32>
    %149 = arith.divf %139, %148 : vector<16x128xf32>
    %150 = vector.broadcast %132 : vector<1x128xf32> to vector<16x128xf32>
    %151 = arith.mulf %149, %150 : vector<16x128xf32>
    %152 = vector.broadcast %133 : vector<1x128xf32> to vector<16x128xf32>
    %153 = arith.addf %151, %152 : vector<16x128xf32>
    %154 = arith.truncf %153 : vector<16x128xf32> to vector<16x128xbf16>
    %c0_56 = arith.constant 0 : index
    %c0_57 = arith.constant 0 : index
    %155 = vector.load %arg11[%c0_56, %c0_57] : memref<128x2048xbf16, #tpu.memory_space<vmem>>, vector<128x512xbf16>
    %c0_58 = arith.constant 0 : index
    %c0_59 = arith.constant 0 : index
    %156 = vector.load %arg12[%c0_58, %c0_59] : memref<1x2048xf32, #tpu.memory_space<vmem>>, vector<1x512xf32>
    %cst_60 = arith.constant dense<0.000000e+00> : vector<16x512xf32>
    %157 = tpu.matmul %154, %155, %cst_60 {dimension_numbers = #tpu.dot_dimension_numbers<[1], [0], [0], [1], [0, 0, 1, 1], [], []>} : vector<16x128xbf16>, vector<128x512xbf16>, vector<16x512xf32> -> vector<16x512xf32>
    %158 = vector.broadcast %156 : vector<1x512xf32> to vector<16x512xf32>
    %159 = arith.addf %157, %158 : vector<16x512xf32>
    %cst_61 = arith.constant 0.000000e+00 : f32
    %160 = vector.broadcast %cst_61 : f32 to vector<16x512xf32>
    %161 = arith.maximumf %159, %160 : vector<16x512xf32>
    %162 = arith.truncf %161 : vector<16x512xf32> to vector<16x512xbf16>
    %c0_62 = arith.constant 0 : index
    %c0_63 = arith.constant 0 : index
    %163 = vector.load %arg13[%c0_62, %c0_63] : memref<2048x128xbf16, #tpu.memory_space<vmem>>, vector<512x128xbf16>
    %cst_64 = arith.constant dense<0.000000e+00> : vector<16x128xf32>
    %164 = tpu.matmul %162, %163, %cst_64 {dimension_numbers = #tpu.dot_dimension_numbers<[1], [0], [0], [1], [0, 0, 1, 1], [], []>} : vector<16x512xbf16>, vector<512x128xbf16>, vector<16x128xf32> -> vector<16x128xf32>
    %c0_65 = arith.constant 0 : index
    %c512 = arith.constant 512 : index
    %165 = vector.load %arg11[%c0_65, %c512] : memref<128x2048xbf16, #tpu.memory_space<vmem>>, vector<128x512xbf16>
    %c0_66 = arith.constant 0 : index
    %c512_67 = arith.constant 512 : index
    %166 = vector.load %arg12[%c0_66, %c512_67] : memref<1x2048xf32, #tpu.memory_space<vmem>>, vector<1x512xf32>
    %cst_68 = arith.constant dense<0.000000e+00> : vector<16x512xf32>
    %167 = tpu.matmul %154, %165, %cst_68 {dimension_numbers = #tpu.dot_dimension_numbers<[1], [0], [0], [1], [0, 0, 1, 1], [], []>} : vector<16x128xbf16>, vector<128x512xbf16>, vector<16x512xf32> -> vector<16x512xf32>
    %168 = vector.broadcast %166 : vector<1x512xf32> to vector<16x512xf32>
    %169 = arith.addf %167, %168 : vector<16x512xf32>
    %cst_69 = arith.constant 0.000000e+00 : f32
    %170 = vector.broadcast %cst_69 : f32 to vector<16x512xf32>
    %171 = arith.maximumf %169, %170 : vector<16x512xf32>
    %172 = arith.truncf %171 : vector<16x512xf32> to vector<16x512xbf16>
    %c512_70 = arith.constant 512 : index
    %c0_71 = arith.constant 0 : index
    %173 = vector.load %arg13[%c512_70, %c0_71] : memref<2048x128xbf16, #tpu.memory_space<vmem>>, vector<512x128xbf16>
    %cst_72 = arith.constant dense<0.000000e+00> : vector<16x128xf32>
    %174 = tpu.matmul %172, %173, %cst_72 {dimension_numbers = #tpu.dot_dimension_numbers<[1], [0], [0], [1], [0, 0, 1, 1], [], []>} : vector<16x512xbf16>, vector<512x128xbf16>, vector<16x128xf32> -> vector<16x128xf32>
    %175 = arith.addf %164, %174 : vector<16x128xf32>
    %c0_73 = arith.constant 0 : index
    %c1024 = arith.constant 1024 : index
    %176 = vector.load %arg11[%c0_73, %c1024] : memref<128x2048xbf16, #tpu.memory_space<vmem>>, vector<128x512xbf16>
    %c0_74 = arith.constant 0 : index
    %c1024_75 = arith.constant 1024 : index
    %177 = vector.load %arg12[%c0_74, %c1024_75] : memref<1x2048xf32, #tpu.memory_space<vmem>>, vector<1x512xf32>
    %cst_76 = arith.constant dense<0.000000e+00> : vector<16x512xf32>
    %178 = tpu.matmul %154, %176, %cst_76 {dimension_numbers = #tpu.dot_dimension_numbers<[1], [0], [0], [1], [0, 0, 1, 1], [], []>} : vector<16x128xbf16>, vector<128x512xbf16>, vector<16x512xf32> -> vector<16x512xf32>
    %179 = vector.broadcast %177 : vector<1x512xf32> to vector<16x512xf32>
    %180 = arith.addf %178, %179 : vector<16x512xf32>
    %cst_77 = arith.constant 0.000000e+00 : f32
    %181 = vector.broadcast %cst_77 : f32 to vector<16x512xf32>
    %182 = arith.maximumf %180, %181 : vector<16x512xf32>
    %183 = arith.truncf %182 : vector<16x512xf32> to vector<16x512xbf16>
    %c1024_78 = arith.constant 1024 : index
    %c0_79 = arith.constant 0 : index
    %184 = vector.load %arg13[%c1024_78, %c0_79] : memref<2048x128xbf16, #tpu.memory_space<vmem>>, vector<512x128xbf16>
    %cst_80 = arith.constant dense<0.000000e+00> : vector<16x128xf32>
    %185 = tpu.matmul %183, %184, %cst_80 {dimension_numbers = #tpu.dot_dimension_numbers<[1], [0], [0], [1], [0, 0, 1, 1], [], []>} : vector<16x512xbf16>, vector<512x128xbf16>, vector<16x128xf32> -> vector<16x128xf32>
    %186 = arith.addf %175, %185 : vector<16x128xf32>
    %c0_81 = arith.constant 0 : index
    %c1536 = arith.constant 1536 : index
    %187 = vector.load %arg11[%c0_81, %c1536] : memref<128x2048xbf16, #tpu.memory_space<vmem>>, vector<128x512xbf16>
    %c0_82 = arith.constant 0 : index
    %c1536_83 = arith.constant 1536 : index
    %188 = vector.load %arg12[%c0_82, %c1536_83] : memref<1x2048xf32, #tpu.memory_space<vmem>>, vector<1x512xf32>
    %cst_84 = arith.constant dense<0.000000e+00> : vector<16x512xf32>
    %189 = tpu.matmul %154, %187, %cst_84 {dimension_numbers = #tpu.dot_dimension_numbers<[1], [0], [0], [1], [0, 0, 1, 1], [], []>} : vector<16x128xbf16>, vector<128x512xbf16>, vector<16x512xf32> -> vector<16x512xf32>
    %190 = vector.broadcast %188 : vector<1x512xf32> to vector<16x512xf32>
    %191 = arith.addf %189, %190 : vector<16x512xf32>
    %cst_85 = arith.constant 0.000000e+00 : f32
    %192 = vector.broadcast %cst_85 : f32 to vector<16x512xf32>
    %193 = arith.maximumf %191, %192 : vector<16x512xf32>
    %194 = arith.truncf %193 : vector<16x512xf32> to vector<16x512xbf16>
    %c1536_86 = arith.constant 1536 : index
    %c0_87 = arith.constant 0 : index
    %195 = vector.load %arg13[%c1536_86, %c0_87] : memref<2048x128xbf16, #tpu.memory_space<vmem>>, vector<512x128xbf16>
    %cst_88 = arith.constant dense<0.000000e+00> : vector<16x128xf32>
    %196 = tpu.matmul %194, %195, %cst_88 {dimension_numbers = #tpu.dot_dimension_numbers<[1], [0], [0], [1], [0, 0, 1, 1], [], []>} : vector<16x512xbf16>, vector<512x128xbf16>, vector<16x128xf32> -> vector<16x128xf32>
    %197 = arith.addf %186, %196 : vector<16x128xf32>
    %c0_89 = arith.constant 0 : index
    %c0_90 = arith.constant 0 : index
    %198 = vector.load %arg14[%c0_89, %c0_90] : memref<1x128xf32, #tpu.memory_space<vmem>>, vector<1x128xf32>
    %199 = vector.broadcast %198 : vector<1x128xf32> to vector<16x128xf32>
    %200 = arith.addf %197, %199 : vector<16x128xf32>
    %201 = arith.addf %200, %131 : vector<16x128xf32>
    %c0_91 = arith.constant 0 : index
    %c0_92 = arith.constant 0 : index
    %202 = vector.load %arg16[%c0_91, %c0_92] : memref<16x128xf32, #tpu.memory_space<vmem>>, vector<16x128xf32>
    tpu.vector_store %arg16[%c0_91, %c0_92], %201 {strides = array<i32>} : memref<16x128xf32, #tpu.memory_space<vmem>>, vector<16x128xf32>,
    %c1_i32 = arith.constant 1 : i32
    %203 = arith.cmpi eq, %arg1, %c1_i32 : i32
    %204 = arith.extui %203 : i1 to i32
    %c0_i32_93 = arith.constant 0 : i32
    %205 = arith.cmpi ne, %204, %c0_i32_93 : i32
    scf.if %205 {
      %c0_94 = arith.constant 0 : index
      %c0_95 = arith.constant 0 : index
      %206 = vector.load %arg3[%c0_94, %c0_95] : memref<1x128xf32, #tpu.memory_space<vmem>>, vector<1x128xf32>
      %c0_96 = arith.constant 0 : index
      %c0_97 = arith.constant 0 : index
      %207 = vector.load %arg4[%c0_96, %c0_97] : memref<1x128xf32, #tpu.memory_space<vmem>>, vector<1x128xf32>
      %cst_98 = arith.constant dense<0.000000e+00> : vector<16xf32>
      %208 = vector.multi_reduction <add>, %201, %cst_98 [1] : vector<16x128xf32> to vector<16xf32>
      %209 = vector.shape_cast %208 : vector<16xf32> to vector<16x1xf32>
      %cst_99 = arith.constant 1.280000e+02 : f32
      %210 = vector.broadcast %cst_99 : f32 to vector<16x1xf32>
      %211 = arith.divf %209, %210 : vector<16x1xf32>
      %212 = vector.broadcast %211 : vector<16x1xf32> to vector<16x128xf32>
      %213 = arith.subf %201, %212 : vector<16x128xf32>
      %214 = arith.mulf %213, %213 : vector<16x128xf32>
      %cst_100 = arith.constant dense<0.000000e+00> : vector<16xf32>
      %215 = vector.multi_reduction <add>, %214, %cst_100 [1] : vector<16x128xf32> to vector<16xf32>
      %216 = vector.shape_cast %215 : vector<16xf32> to vector<16x1xf32>
      %cst_101 = arith.constant 0.00787401571 : f32
      %217 = vector.broadcast %cst_101 : f32 to vector<16x1xf32>
      %218 = arith.mulf %216, %217 : vector<16x1xf32>
      %219 = math.sqrt %218 : vector<16x1xf32>
      %cst_102 = arith.constant 9.99999997E-7 : f32
      %220 = vector.broadcast %cst_102 : f32 to vector<16x1xf32>
      %221 = arith.addf %219, %220 : vector<16x1xf32>
      %222 = vector.broadcast %221 : vector<16x1xf32> to vector<16x128xf32>
      %223 = arith.divf %213, %222 : vector<16x128xf32>
      %224 = vector.broadcast %206 : vector<1x128xf32> to vector<16x128xf32>
      %225 = arith.mulf %223, %224 : vector<16x128xf32>
      %226 = vector.broadcast %207 : vector<1x128xf32> to vector<16x128xf32>
      %227 = arith.addf %225, %226 : vector<16x128xf32>
      %c0_103 = arith.constant 0 : index
      %c0_104 = arith.constant 0 : index
      %228 = vector.load %arg15[%c0_103, %c0_104] : memref<16x128xf32, #tpu.memory_space<vmem>>, vector<16x128xf32>
      tpu.vector_store %arg15[%c0_103, %c0_104], %227 {strides = array<i32>} : memref<16x128xf32, #tpu.memory_space<vmem>>, vector<16x128xf32>,
    } else {
    }
    return
  }
  func.func @transform_0(%arg0: i32, %arg1: i32) -> (i32, i32) {
    %c0_i32 = arith.constant 0 : i32
    %c0_i32_0 = arith.constant 0 : i32
    return %arg0, %c0_i32 : i32, i32
  }
  func.func @transform_1(%arg0: i32, %arg1: i32) -> (i32, i32) {
    %c0_i32 = arith.constant 0 : i32
    %c0_i32_0 = arith.constant 0 : i32
    %c0_i32_1 = arith.constant 0 : i32
    return %c0_i32, %c0_i32_0 : i32, i32
  }
  func.func @transform_2(%arg0: i32, %arg1: i32) -> (i32, i32) {
    %c0_i32 = arith.constant 0 : i32
    %c0_i32_0 = arith.constant 0 : i32
    %c0_i32_1 = arith.constant 0 : i32
    return %c0_i32, %c0_i32_0 : i32, i32
  }
  func.func @transform_3(%arg0: i32, %arg1: i32) -> (i32, i32, i32) {
    %c0_i32 = arith.constant 0 : i32
    %c0_i32_0 = arith.constant 0 : i32
    %c0_i32_1 = arith.constant 0 : i32
    return %arg1, %c0_i32, %c0_i32_0 : i32, i32, i32
  }
  func.func @transform_4(%arg0: i32, %arg1: i32) -> (i32, i32, i32) {
    %c0_i32 = arith.constant 0 : i32
    %c0_i32_0 = arith.constant 0 : i32
    %c0_i32_1 = arith.constant 0 : i32
    return %arg1, %c0_i32, %c0_i32_0 : i32, i32, i32
  }
  func.func @transform_5(%arg0: i32, %arg1: i32) -> (i32, i32, i32) {
    %c0_i32 = arith.constant 0 : i32
    %c0_i32_0 = arith.constant 0 : i32
    %c0_i32_1 = arith.constant 0 : i32
    return %arg1, %c0_i32, %c0_i32_0 : i32, i32, i32
  }
  func.func @transform_6(%arg0: i32, %arg1: i32) -> (i32, i32, i32) {
    %c0_i32 = arith.constant 0 : i32
    %c0_i32_0 = arith.constant 0 : i32
    %c0_i32_1 = arith.constant 0 : i32
    return %arg1, %c0_i32, %c0_i32_0 : i32, i32, i32
  }
  func.func @transform_7(%arg0: i32, %arg1: i32) -> (i32, i32) {
    %c0_i32 = arith.constant 0 : i32
    %c0_i32_0 = arith.constant 0 : i32
    %c0_i32_1 = arith.constant 0 : i32
    return %c0_i32, %c0_i32_0 : i32, i32
  }
  func.func @transform_8(%arg0: i32, %arg1: i32) -> (i32, i32) {
    %c0_i32 = arith.constant 0 : i32
    %c0_i32_0 = arith.constant 0 : i32
    %c0_i32_1 = arith.constant 0 : i32
    return %c0_i32, %c0_i32_0 : i32, i32
  }
  func.func @transform_9(%arg0: i32, %arg1: i32) -> (i32, i32) {
    %c0_i32 = arith.constant 0 : i32
    %c0_i32_0 = arith.constant 0 : i32
    %c0_i32_1 = arith.constant 0 : i32
    return %c0_i32, %c0_i32_0 : i32, i32
  }
  func.func @transform_10(%arg0: i32, %arg1: i32) -> (i32, i32) {
    %c0_i32 = arith.constant 0 : i32
    %c0_i32_0 = arith.constant 0 : i32
    %c0_i32_1 = arith.constant 0 : i32
    return %c0_i32, %c0_i32_0 : i32, i32
  }
  func.func @transform_11(%arg0: i32, %arg1: i32) -> (i32, i32) {
    %c0_i32 = arith.constant 0 : i32
    %c0_i32_0 = arith.constant 0 : i32
    %c0_i32_1 = arith.constant 0 : i32
    return %c0_i32, %c0_i32_0 : i32, i32
  }
  func.func @transform_12(%arg0: i32, %arg1: i32) -> (i32, i32) {
    %c0_i32 = arith.constant 0 : i32
    %c0_i32_0 = arith.constant 0 : i32
    %c0_i32_1 = arith.constant 0 : i32
    return %c0_i32, %c0_i32_0 : i32, i32
  }
  func.func @transform_13(%arg0: i32, %arg1: i32) -> (i32, i32) {
    %c0_i32 = arith.constant 0 : i32
    %c0_i32_0 = arith.constant 0 : i32
    return %arg0, %c0_i32 : i32, i32
  }
}

</mosaic_0001>

<llo_original>
// kernel: tpu_custom_call.1
$region0: #{tpu_custom_call.1}
  #allocation0 [shape = 'u32[]', space=smem, size = 0x4, offset = 0x4, fixed_abs, tag = 'smem constant byte address 0x4 - core index']
  #allocation1 [shape = 'u32[144,128]{1,0:T(1,128)}', space=vmem, size = 0x12000, scoped, tag = 'internal scratch']
  #allocation2 [shape = 'f32[16,128]{1,0:T(8,128)}', space=vmem, size = 0x2000, scoped, tag = 'scratch operand']
  #allocation3 [shape = 'bf16[16,128]{1,0:T(16,128)(2,1)}', space=vmem, size = 0x1000, scoped, tag = 'scratch operand']
  %s0 = inlined_call_operand.hbm [shape: f32[32,128], index: 0, kind: input, shape index: {}]
  %s1 = inlined_call_operand.hbm [shape: f32[1,128], index: 1, kind: input, shape index: {}]
  %s2 = inlined_call_operand.hbm [shape: f32[1,128], index: 2, kind: input, shape index: {}]
  %s3 = inlined_call_operand.hbm [shape: bf16[2,128,384], index: 3, kind: input, shape index: {}]
  %s4 = inlined_call_operand.hbm [shape: f32[2,1,384], index: 4, kind: input, shape index: {}]
  %s5 = inlined_call_operand.hbm [shape: bf16[2,128,128], index: 5, kind: input, shape index: {}]
  %s6 = inlined_call_operand.hbm [shape: f32[2,1,128], index: 6, kind: input, shape index: {}]
  %s7 = inlined_call_operand.hbm [shape: f32[1,128], index: 7, kind: input, shape index: {}]
  %s8 = inlined_call_operand.hbm [shape: f32[1,128], index: 8, kind: input, shape index: {}]
  %s9 = inlined_call_operand.hbm [shape: bf16[128,2048], index: 9, kind: input, shape index: {}]
  %s10 = inlined_call_operand.hbm [shape: f32[1,2048], index: 10, kind: input, shape index: {}]
  %s11 = inlined_call_operand.hbm [shape: bf16[2048,128], index: 11, kind: input, shape index: {}]
  %s12 = inlined_call_operand.hbm [shape: f32[1,128], index: 12, kind: input, shape index: {}]
  %s13 = inlined_call_operand.hbm [shape: f32[32,128], index: 13, kind: output, shape index: {}]
  %s14 = sld [smem:[#allocation0]]
  $region145: #{tpu_custom_call.1} parent=0
    _
  %s16 = ssub.s32 1, %s14
  %s17 = scalar_select 0, %s16, %s14
  $region1: #{tpu_custom_call.1} parent=0
    #allocation4 [shape = 'u8[8192]{0}', space=vmem, size = 0x2000, scoped, tag = 'input window, operand 0, single buffered']
    #allocation5 [shape = 's32[2]{0}', space=sflag, size = 0x8, scoped, tag = 'scoped memory for tpu_custom_call.1']
    #allocation6 [shape = 's32[2]{0}', space=sflag, size = 0x8, scoped, tag = 'scoped memory for tpu_custom_call.1']
    #allocation7 [shape = 'u8[512]{0}', space=vmem, size = 0x400, scoped, tag = 'input window, operand 1, single buffered']
    #allocation8 [shape = 's32[1]{0}', space=sflag, size = 0x4, scoped, tag = 'scoped memory for tpu_custom_call.1']
    #allocation9 [shape = 'u8[512]{0}', space=vmem, size = 0x400, scoped, tag = 'input window, operand 2, single buffered']
    #allocation10 [shape = 'u8[196608]{0}', space=vmem, size = 0x30000, scoped, tag = 'input window, operand 3']
    #allocation11 [shape = 's32[2]{0}', space=sflag, size = 0x8, scoped, tag = 'scoped memory for tpu_custom_call.1']
    #allocation12 [shape = 'u8[3072]{0}', space=vmem, size = 0xc00, scoped, tag = 'input window, operand 4']
    #allocation13 [shape = 'u8[65536]{0}', space=vmem, size = 0x10000, scoped, tag = 'input window, operand 5']
    #allocation14 [shape = 's32[2]{0}', space=sflag, size = 0x8, scoped, tag = 'scoped memory for tpu_custom_call.1']
    #allocation15 [shape = 'u8[1024]{0}', space=vmem, size = 0x400, scoped, tag = 'input window, operand 6']
    #allocation16 [shape = 'u8[512]{0}', space=vmem, size = 0x400, scoped, tag = 'input window, operand 7, single buffered']
    #allocation17 [shape = 's32[1]{0}', space=sflag, size = 0x4, scoped, tag = 'scoped memory for tpu_custom_call.1']
    #allocation18 [shape = 'u8[512]{0}', space=vmem, size = 0x400, scoped, tag = 'input window, operand 8, single buffered']
    #allocation19 [shape = 'u8[524288]{0}', space=vmem, size = 0x80000, scoped, tag = 'input window, operand 9, single buffered']
    #allocation20 [shape = 's32[1]{0}', space=sflag, size = 0x4, scoped, tag = 'scoped memory for tpu_custom_call.1']
    #allocation21 [shape = 'u8[8192]{0}', space=vmem, size = 0x2000, scoped, tag = 'input window, operand 10, single buffered']
    #allocation22 [shape = 'u8[524288]{0}', space=vmem, size = 0x80000, scoped, tag = 'input window, operand 11, single buffered']
    #allocation23 [shape = 's32[1]{0}', space=sflag, size = 0x4, scoped, tag = 'scoped memory for tpu_custom_call.1']
    #allocation24 [shape = 'u8[512]{0}', space=vmem, size = 0x400, scoped, tag = 'input window, operand 12, single buffered']
    #allocation25 [shape = 'u8[16384]{0}', space=vmem, size = 0x4000, scoped, tag = 'output window, operand 0']
    %18 = vsyncpa [#allocation5], 0
    %19 = vsyncpa [#allocation8], 0
    %20 = vsyncpa [#allocation11], 0
    %s21 = scalar_lea.sflag [#allocation11], 1
    %22 = vsyncpa %s21, 0
    %23 = vsyncpa [#allocation14], 0
    %s24 = scalar_lea.sflag [#allocation14], 1
    %25 = vsyncpa %s24, 0
    %26 = vsyncpa [#allocation17], 0
    %27 = vsyncpa [#allocation20], 0
    %28 = vsyncpa [#allocation23], 0
    %29 = vsyncpa [#allocation6], 0
    %s30 = scalar_lea.sflag [#allocation6], 1
    %31 = vsyncpa %s30, 0
    loop: start=0, step=1, limit=6
    $region2: #{tpu_custom_call.1} parent=1 // loop_pre_header
      _
    $region3: #{tpu_custom_call.1} parent=1 // loop_header
      %s33 = sphi 0, %s37
      %p34 = scmp.ge.s32.totalorder %s33, 6
      %s40 = sphi 0, %s52
      %s41 = sphi 0, %s48
      %s42 = sphi 0, %s40
      %s43 = sphi 0, %s41
      %s44 = sphi 0, %s42
      %s45 = sphi 0, %s43
      %s55 = sphi 0, %s57
      %s58 = sphi 0, %s55
      %s59 = sphi 0, %s58
      %s75 = sphi 0, %s59
      %s79 = sphi 0, %s79
      %s81 = sphi 0, %s79
      %s82 = sphi 0, %s81
      %s96 = sphi 0, %s82
      %s100 = sphi 0, %s100
      %s102 = sphi 0, %s100
      %s103 = sphi 0, %s102
      %s117 = sphi 0, %s103
      %s123 = sphi 0, %s125
      %s126 = sphi 0, %s123
      %s127 = sphi 0, %s126
      %s143 = sphi 0, %s127
      %s149 = sphi 0, %s151
      %s152 = sphi 0, %s149
      %s153 = sphi 0, %s152
      %s169 = sphi 0, %s153
      %s175 = sphi 0, %s177
      %s178 = sphi 0, %s175
      %s179 = sphi 0, %s178
      %s195 = sphi 0, %s179
      %s201 = sphi 0, %s203
      %s204 = sphi 0, %s201
      %s205 = sphi 0, %s204
      %s221 = sphi 0, %s205
      %s225 = sphi 0, %s225
      %s227 = sphi 0, %s225
      %s228 = sphi 0, %s227
      %s242 = sphi 0, %s228
      %s246 = sphi 0, %s246
      %s248 = sphi 0, %s246
      %s249 = sphi 0, %s248
      %s263 = sphi 0, %s249
      %s267 = sphi 0, %s267
      %s269 = sphi 0, %s267
      %s270 = sphi 0, %s269
      %s284 = sphi 0, %s270
      %s288 = sphi 0, %s288
      %s290 = sphi 0, %s288
      %s291 = sphi 0, %s290
      %s305 = sphi 0, %s291
      %s309 = sphi 0, %s309
      %s311 = sphi 0, %s309
      %s312 = sphi 0, %s311
      %s326 = sphi 0, %s312
      %s330 = sphi 0, %s330
      %s332 = sphi 0, %s330
      %s333 = sphi 0, %s332
      %s347 = sphi 0, %s333
      %s353 = sphi 0, %s355
      %s356 = sphi 0, %s353
      %s357 = sphi 0, %s356
      %s373 = sphi 0, %s357
    $region4: #{tpu_custom_call.1} parent=1 // loop_header_branch
      %36 = sbr.rel (%p34) target = $region8
    $region5: #{tpu_custom_call.1} parent=1 // loop_body
      %s38 = ssub.s32 %s33, 1
      %s39 = ssub.s32 %s33, 2
      %s46 = sadd.s32 1, %s41
      %p47 = scmp.ge.s32.totalorder %s46, 2
      %s48 = scalar_select %p47, 0, %s46
      %s49 = sadd.s32 1, %s40
      %s50 = scalar_select %p47, %s49, %s40
      %p51 = scmp.ge.s32.totalorder %s50, 2
      %s52 = scalar_select %p51, 0, %s50
      %s53 = ssub.s32 %s40, %s52
      %p54 = scmp.eq.s32.totalorder %s53, 0
      %s56 = sadd.s32 %s55, 1
      %s57 = scalar_select %p54, %s55, %s56
      %p60 = pneg %p54
      %p61 = scmp.eq.s32.totalorder %s33, 3
      %p62 = por %p60, %p61
      %p63 = scmp.ne.s32.totalorder %s55, %s58
      %p64 = scmp.eq.s32.totalorder %s33, 0
      %p65 = por %p63, %p64
      %p66 = scmp.ne.s32.totalorder %s55, %s58
      %p67 = scmp.eq.s32.totalorder %s38, 3
      %p68 = por %p66, %p67
      %p69 = scmp.ne.s32.totalorder %s58, %s59
      %p70 = scmp.eq.s32.totalorder %s38, 0
      %p71 = por %p69, %p70
      %p72 = scmp.ne.s32.totalorder %s58, %s59
      %p73 = scmp.eq.s32.totalorder %s39, 3
      %p74 = por %p72, %p73
      %p76 = scmp.ne.s32.totalorder %s59, %s75
      %p77 = scmp.eq.s32.totalorder %s39, 0
      %p78 = por %p76, %p77
      %s80 = sadd.s32 %s79, 1
      %p83 = scmp.eq.s32.totalorder %s33, 3
      %p84 = scmp.ne.s32.totalorder %s79, %s81
      %p85 = scmp.eq.s32.totalorder %s33, 0
      %p86 = por %p84, %p85
      %p87 = scmp.ne.s32.totalorder %s79, %s81
      %p88 = scmp.eq.s32.totalorder %s38, 3
      %p89 = por %p87, %p88
      %p90 = scmp.ne.s32.totalorder %s81, %s82
      %p91 = scmp.eq.s32.totalorder %s38, 0
      %p92 = por %p90, %p91
      %p93 = scmp.ne.s32.totalorder %s81, %s82
      %p94 = scmp.eq.s32.totalorder %s39, 3
      %p95 = por %p93, %p94
      %p97 = scmp.ne.s32.totalorder %s82, %s96
      %p98 = scmp.eq.s32.totalorder %s39, 0
      %p99 = por %p97, %p98
      %s101 = sadd.s32 %s100, 1
      %p104 = scmp.eq.s32.totalorder %s33, 3
      %p105 = scmp.ne.s32.totalorder %s100, %s102
      %p106 = scmp.eq.s32.totalorder %s33, 0
      %p107 = por %p105, %p106
      %p108 = scmp.ne.s32.totalorder %s100, %s102
      %p109 = scmp.eq.s32.totalorder %s38, 3
      %p110 = por %p108, %p109
      %p111 = scmp.ne.s32.totalorder %s102, %s103
      %p112 = scmp.eq.s32.totalorder %s38, 0
      %p113 = por %p111, %p112
      %p114 = scmp.ne.s32.totalorder %s102, %s103
      %p115 = scmp.eq.s32.totalorder %s39, 3
      %p116 = por %p114, %p115
      %p118 = scmp.ne.s32.totalorder %s103, %s117
      %p119 = scmp.eq.s32.totalorder %s39, 0
      %p120 = por %p118, %p119
      %s121 = ssub.s32 %s41, %s48
      %p122 = scmp.eq.s32.totalorder %s121, 0
      %s124 = sadd.s32 %s123, 1
      %s125 = scalar_select %p122, %s123, %s124
      %p128 = pneg %p122
      %p129 = scmp.eq.s32.totalorder %s33, 3
      %p130 = por %p128, %p129
      %p131 = scmp.ne.s32.totalorder %s123, %s126
      %p132 = scmp.eq.s32.totalorder %s33, 0
      %p133 = por %p131, %p132
      %p134 = scmp.ne.s32.totalorder %s123, %s126
      %p135 = scmp.eq.s32.totalorder %s38, 3
      %p136 = por %p134, %p135
      %p137 = scmp.ne.s32.totalorder %s126, %s127
      %p138 = scmp.eq.s32.totalorder %s38, 0
      %p139 = por %p137, %p138
      %p140 = scmp.ne.s32.totalorder %s126, %s127
      %p141 = scmp.eq.s32.totalorder %s39, 3
      %p142 = por %p140, %p141
      %p144 = scmp.ne.s32.totalorder %s127, %s143
      %p145 = scmp.eq.s32.totalorder %s39, 0
      %p146 = por %p144, %p145
      %s147 = ssub.s32 %s41, %s48
      %p148 = scmp.eq.s32.totalorder %s147, 0
      %s150 = sadd.s32 %s149, 1
      %s151 = scalar_select %p148, %s149, %s150
      %p154 = pneg %p148
      %p155 = scmp.eq.s32.totalorder %s33, 3
      %p156 = por %p154, %p155
      %p157 = scmp.ne.s32.totalorder %s149, %s152
      %p158 = scmp.eq.s32.totalorder %s33, 0
      %p159 = por %p157, %p158
      %p160 = scmp.ne.s32.totalorder %s149, %s152
      %p161 = scmp.eq.s32.totalorder %s38, 3
      %p162 = por %p160, %p161
      %p163 = scmp.ne.s32.totalorder %s152, %s153
      %p164 = scmp.eq.s32.totalorder %s38, 0
      %p165 = por %p163, %p164
      %p166 = scmp.ne.s32.totalorder %s152, %s153
      %p167 = scmp.eq.s32.totalorder %s39, 3
      %p168 = por %p166, %p167
      %p170 = scmp.ne.s32.totalorder %s153, %s169
      %p171 = scmp.eq.s32.totalorder %s39, 0
      %p172 = por %p170, %p171
      %s173 = ssub.s32 %s41, %s48
      %p174 = scmp.eq.s32.totalorder %s173, 0
      %s176 = sadd.s32 %s175, 1
      %s177 = scalar_select %p174, %s175, %s176
      %p180 = pneg %p174
      %p181 = scmp.eq.s32.totalorder %s33, 3
      %p182 = por %p180, %p181
      %p183 = scmp.ne.s32.totalorder %s175, %s178
      %p184 = scmp.eq.s32.totalorder %s33, 0
      %p185 = por %p183, %p184
      %p186 = scmp.ne.s32.totalorder %s175, %s178
      %p187 = scmp.eq.s32.totalorder %s38, 3
      %p188 = por %p186, %p187
      %p189 = scmp.ne.s32.totalorder %s178, %s179
      %p190 = scmp.eq.s32.totalorder %s38, 0
      %p191 = por %p189, %p190
      %p192 = scmp.ne.s32.totalorder %s178, %s179
      %p193 = scmp.eq.s32.totalorder %s39, 3
      %p194 = por %p192, %p193
      %p196 = scmp.ne.s32.totalorder %s179, %s195
      %p197 = scmp.eq.s32.totalorder %s39, 0
      %p198 = por %p196, %p197
      %s199 = ssub.s32 %s41, %s48
      %p200 = scmp.eq.s32.totalorder %s199, 0
      %s202 = sadd.s32 %s201, 1
      %s203 = scalar_select %p200, %s201, %s202
      %p206 = pneg %p200
      %p207 = scmp.eq.s32.totalorder %s33, 3
      %p208 = por %p206, %p207
      %p209 = scmp.ne.s32.totalorder %s201, %s204
      %p210 = scmp.eq.s32.totalorder %s33, 0
      %p211 = por %p209, %p210
      %p212 = scmp.ne.s32.totalorder %s201, %s204
      %p213 = scmp.eq.s32.totalorder %s38, 3
      %p214 = por %p212, %p213
      %p215 = scmp.ne.s32.totalorder %s204, %s205
      %p216 = scmp.eq.s32.totalorder %s38, 0
      %p217 = por %p215, %p216
      %p218 = scmp.ne.s32.totalorder %s204, %s205
      %p219 = scmp.eq.s32.totalorder %s39, 3
      %p220 = por %p218, %p219
      %p222 = scmp.ne.s32.totalorder %s205, %s221
      %p223 = scmp.eq.s32.totalorder %s39, 0
      %p224 = por %p222, %p223
      %s226 = sadd.s32 %s225, 1
      %p229 = scmp.eq.s32.totalorder %s33, 3
      %p230 = scmp.ne.s32.totalorder %s225, %s227
      %p231 = scmp.eq.s32.totalorder %s33, 0
      %p232 = por %p230, %p231
      %p233 = scmp.ne.s32.totalorder %s225, %s227
      %p234 = scmp.eq.s32.totalorder %s38, 3
      %p235 = por %p233, %p234
      %p236 = scmp.ne.s32.totalorder %s227, %s228
      %p237 = scmp.eq.s32.totalorder %s38, 0
      %p238 = por %p236, %p237
      %p239 = scmp.ne.s32.totalorder %s227, %s228
      %p240 = scmp.eq.s32.totalorder %s39, 3
      %p241 = por %p239, %p240
      %p243 = scmp.ne.s32.totalorder %s228, %s242
      %p244 = scmp.eq.s32.totalorder %s39, 0
      %p245 = por %p243, %p244
      %s247 = sadd.s32 %s246, 1
      %p250 = scmp.eq.s32.totalorder %s33, 3
      %p251 = scmp.ne.s32.totalorder %s246, %s248
      %p252 = scmp.eq.s32.totalorder %s33, 0
      %p253 = por %p251, %p252
      %p254 = scmp.ne.s32.totalorder %s246, %s248
      %p255 = scmp.eq.s32.totalorder %s38, 3
      %p256 = por %p254, %p255
      %p257 = scmp.ne.s32.totalorder %s248, %s249
      %p258 = scmp.eq.s32.totalorder %s38, 0
      %p259 = por %p257, %p258
      %p260 = scmp.ne.s32.totalorder %s248, %s249
      %p261 = scmp.eq.s32.totalorder %s39, 3
      %p262 = por %p260, %p261
      %p264 = scmp.ne.s32.totalorder %s249, %s263
      %p265 = scmp.eq.s32.totalorder %s39, 0
      %p266 = por %p264, %p265
      %s268 = sadd.s32 %s267, 1
      %p271 = scmp.eq.s32.totalorder %s33, 3
      %p272 = scmp.ne.s32.totalorder %s267, %s269
      %p273 = scmp.eq.s32.totalorder %s33, 0
      %p274 = por %p272, %p273
      %p275 = scmp.ne.s32.totalorder %s267, %s269
      %p276 = scmp.eq.s32.totalorder %s38, 3
      %p277 = por %p275, %p276
      %p278 = scmp.ne.s32.totalorder %s269, %s270
      %p279 = scmp.eq.s32.totalorder %s38, 0
      %p280 = por %p278, %p279
      %p281 = scmp.ne.s32.totalorder %s269, %s270
      %p282 = scmp.eq.s32.totalorder %s39, 3
      %p283 = por %p281, %p282
      %p285 = scmp.ne.s32.totalorder %s270, %s284
      %p286 = scmp.eq.s32.totalorder %s39, 0
      %p287 = por %p285, %p286
      %s289 = sadd.s32 %s288, 1
      %p292 = scmp.eq.s32.totalorder %s33, 3
      %p293 = scmp.ne.s32.totalorder %s288, %s290
      %p294 = scmp.eq.s32.totalorder %s33, 0
      %p295 = por %p293, %p294
      %p296 = scmp.ne.s32.totalorder %s288, %s290
      %p297 = scmp.eq.s32.totalorder %s38, 3
      %p298 = por %p296, %p297
      %p299 = scmp.ne.s32.totalorder %s290, %s291
      %p300 = scmp.eq.s32.totalorder %s38, 0
      %p301 = por %p299, %p300
      %p302 = scmp.ne.s32.totalorder %s290, %s291
      %p303 = scmp.eq.s32.totalorder %s39, 3
      %p304 = por %p302, %p303
      %p306 = scmp.ne.s32.totalorder %s291, %s305
      %p307 = scmp.eq.s32.totalorder %s39, 0
      %p308 = por %p306, %p307
      %s310 = sadd.s32 %s309, 1
      %p313 = scmp.eq.s32.totalorder %s33, 3
      %p314 = scmp.ne.s32.totalorder %s309, %s311
      %p315 = scmp.eq.s32.totalorder %s33, 0
      %p316 = por %p314, %p315
      %p317 = scmp.ne.s32.totalorder %s309, %s311
      %p318 = scmp.eq.s32.totalorder %s38, 3
      %p319 = por %p317, %p318
      %p320 = scmp.ne.s32.totalorder %s311, %s312
      %p321 = scmp.eq.s32.totalorder %s38, 0
      %p322 = por %p320, %p321
      %p323 = scmp.ne.s32.totalorder %s311, %s312
      %p324 = scmp.eq.s32.totalorder %s39, 3
      %p325 = por %p323, %p324
      %p327 = scmp.ne.s32.totalorder %s312, %s326
      %p328 = scmp.eq.s32.totalorder %s39, 0
      %p329 = por %p327, %p328
      %s331 = sadd.s32 %s330, 1
      %p334 = scmp.eq.s32.totalorder %s33, 3
      %p335 = scmp.ne.s32.totalorder %s330, %s332
      %p336 = scmp.eq.s32.totalorder %s33, 0
      %p337 = por %p335, %p336
      %p338 = scmp.ne.s32.totalorder %s330, %s332
      %p339 = scmp.eq.s32.totalorder %s38, 3
      %p340 = por %p338, %p339
      %p341 = scmp.ne.s32.totalorder %s332, %s333
      %p342 = scmp.eq.s32.totalorder %s38, 0
      %p343 = por %p341, %p342
      %p344 = scmp.ne.s32.totalorder %s332, %s333
      %p345 = scmp.eq.s32.totalorder %s39, 3
      %p346 = por %p344, %p345
      %p348 = scmp.ne.s32.totalorder %s333, %s347
      %p349 = scmp.eq.s32.totalorder %s39, 0
      %p350 = por %p348, %p349
      %s351 = ssub.s32 %s40, %s52
      %p352 = scmp.eq.s32.totalorder %s351, 0
      %s354 = sadd.s32 %s353, 1
      %s355 = scalar_select %p352, %s353, %s354
      %p358 = pneg %p352
      %p359 = scmp.eq.s32.totalorder %s33, 3
      %p360 = por %p358, %p359
      %p361 = scmp.ne.s32.totalorder %s353, %s356
      %p362 = scmp.eq.s32.totalorder %s33, 0
      %p363 = por %p361, %p362
      %p364 = scmp.ne.s32.totalorder %s353, %s356
      %p365 = scmp.eq.s32.totalorder %s38, 3
      %p366 = por %p364, %p365
      %p367 = scmp.ne.s32.totalorder %s356, %s357
      %p368 = scmp.eq.s32.totalorder %s38, 0
      %p369 = por %p367, %p368
      %p370 = scmp.ne.s32.totalorder %s356, %s357
      %p371 = scmp.eq.s32.totalorder %s39, 3
      %p372 = por %p370, %p371
      %p374 = scmp.ne.s32.totalorder %s357, %s373
      %p375 = scmp.eq.s32.totalorder %s39, 0
      %p376 = por %p374, %p375
      %p377 = scmp.le.s32.totalorder 1, %s33
      %p378 = scmp.lt.s32.totalorder %s33, 5
      %p379 = pnand %p377, %p378
      %p380 = pneg %p379
      // Predicated region
      $region9: #{tpu_custom_call.1} parent=5 // pred_check
        _
      $region10: #{tpu_custom_call.1} parent=5 // pred_check_branch
        %382 = sbr.rel (%p379) target = $region12
      $region11: #{tpu_custom_call.1} parent=5 // pred_region
        %s383 = ssub.s32 %s33, 1
        // Predicated region
        $region13: #{tpu_custom_call.1} parent=11 // pred_check
          %p384 = pneg %p71
        $region14: #{tpu_custom_call.1} parent=11 // pred_check_branch
          %386 = sbr.rel (%p384) target = $region16
        $region15: #{tpu_custom_call.1} parent=11 // pred_region
          %s387 = smul.u32 2, %s42
          %s389 = ssub.s32 256, 256
          %390 = vsyncadd [#allocation5], %s389
          %s391 = smul.addr %s387, 128
          %s392 = scalar_lea.hbm %s0, %s391
          %s393 = sshll.u32 [#allocation4], 4
          %s394 = int_to_ptr.vmem [resolvable:$true] %s393
          %399 = dma.hbm_to_vmem [thread:$0]  %s392, 256, %s394, [#allocation5], 128, 128, 8
        $region16: #{tpu_custom_call.1} parent=11 // pred_fallthru
          _
        // Predicated region
        $region17: #{tpu_custom_call.1} parent=11 // pred_check
          %p400 = pneg %p92
        $region18: #{tpu_custom_call.1} parent=11 // pred_check_branch
          %402 = sbr.rel (%p400) target = $region20
        $region19: #{tpu_custom_call.1} parent=11 // pred_region
          %s404 = ssub.s32 16, 16
          %405 = vsyncadd [#allocation8], %s404
          %s407 = sshll.u32 [#allocation7], 4
          %s408 = int_to_ptr.vmem [resolvable:$true] %s407
          %410 = dma.hbm_to_vmem [thread:$0]  %s1, 16, %s408, [#allocation8]
        $region20: #{tpu_custom_call.1} parent=11 // pred_fallthru
          _
        // Predicated region
        $region21: #{tpu_custom_call.1} parent=11 // pred_check
          %p411 = pneg %p113
        $region22: #{tpu_custom_call.1} parent=11 // pred_check_branch
          %413 = sbr.rel (%p411) target = $region24
        $region23: #{tpu_custom_call.1} parent=11 // pred_region
          %s415 = ssub.s32 16, 16
          %416 = vsyncadd [#allocation8], %s415
          %s418 = sshll.u32 [#allocation9], 4
          %s419 = int_to_ptr.vmem [resolvable:$true] %s418
          %421 = dma.hbm_to_vmem [thread:$0]  %s2, 16, %s419, [#allocation8]
        $region24: #{tpu_custom_call.1} parent=11 // pred_fallthru
          _
        // Predicated region
        $region25: #{tpu_custom_call.1} parent=11 // pred_check
          %p422 = pneg %p238
        $region26: #{tpu_custom_call.1} parent=11 // pred_check_branch
          %424 = sbr.rel (%p422) target = $region28
        $region27: #{tpu_custom_call.1} parent=11 // pred_region
          %s426 = ssub.s32 16, 16
          %427 = vsyncadd [#allocation17], %s426
          %s429 = sshll.u32 [#allocation16], 4
          %s430 = int_to_ptr.vmem [resolvable:$true] %s429
          %432 = dma.hbm_to_vmem [thread:$0]  %s7, 16, %s430, [#allocation17]
        $region28: #{tpu_custom_call.1} parent=11 // pred_fallthru
          _
        // Predicated region
        $region29: #{tpu_custom_call.1} parent=11 // pred_check
          %p433 = pneg %p259
        $region30: #{tpu_custom_call.1} parent=11 // pred_check_branch
          %435 = sbr.rel (%p433) target = $region32
        $region31: #{tpu_custom_call.1} parent=11 // pred_region
          %s437 = ssub.s32 16, 16
          %438 = vsyncadd [#allocation17], %s437
          %s440 = sshll.u32 [#allocation18], 4
          %s441 = int_to_ptr.vmem [resolvable:$true] %s440
          %443 = dma.hbm_to_vmem [thread:$0]  %s8, 16, %s441, [#allocation17]
        $region32: #{tpu_custom_call.1} parent=11 // pred_fallthru
          _
        // Predicated region
        $region33: #{tpu_custom_call.1} parent=11 // pred_check
          %p444 = pneg %p280
        $region34: #{tpu_custom_call.1} parent=11 // pred_check_branch
          %446 = sbr.rel (%p444) target = $region36
        $region35: #{tpu_custom_call.1} parent=11 // pred_region
          %s448 = ssub.s32 16384, 16384
          %449 = vsyncadd [#allocation20], %s448
          %s450 = sshll.u32 [#allocation19], 4
          %s451 = int_to_ptr.vmem [resolvable:$true] %s450
          %456 = dma.hbm_to_vmem [thread:$0]  %s9, 16384, %s451, [#allocation20], 1024, 1024, 64
        $region36: #{tpu_custom_call.1} parent=11 // pred_fallthru
          _
        // Predicated region
        $region37: #{tpu_custom_call.1} parent=11 // pred_check
          %p457 = pneg %p301
        $region38: #{tpu_custom_call.1} parent=11 // pred_check_branch
          %459 = sbr.rel (%p457) target = $region40
        $region39: #{tpu_custom_call.1} parent=11 // pred_region
          %s461 = ssub.s32 256, 256
          %462 = vsyncadd [#allocation20], %s461
          %s464 = sshll.u32 [#allocation21], 4
          %s465 = int_to_ptr.vmem [resolvable:$true] %s464
          %467 = dma.hbm_to_vmem [thread:$0]  %s10, 256, %s465, [#allocation20]
        $region40: #{tpu_custom_call.1} parent=11 // pred_fallthru
          _
        // Predicated region
        $region41: #{tpu_custom_call.1} parent=11 // pred_check
          %p468 = pneg %p322
        $region42: #{tpu_custom_call.1} parent=11 // pred_check_branch
          %470 = sbr.rel (%p468) target = $region44
        $region43: #{tpu_custom_call.1} parent=11 // pred_region
          %s472 = ssub.s32 16384, 16384
          %473 = vsyncadd [#allocation23], %s472
          %s474 = sshll.u32 [#allocation22], 4
          %s475 = int_to_ptr.vmem [resolvable:$true] %s474
          %480 = dma.hbm_to_vmem [thread:$0]  %s11, 16384, %s475, [#allocation23], 64, 64, 4
        $region44: #{tpu_custom_call.1} parent=11 // pred_fallthru
          _
        // Predicated region
        $region45: #{tpu_custom_call.1} parent=11 // pred_check
          %p481 = pneg %p343
        $region46: #{tpu_custom_call.1} parent=11 // pred_check_branch
          %483 = sbr.rel (%p481) target = $region48
        $region47: #{tpu_custom_call.1} parent=11 // pred_region
          %s485 = ssub.s32 16, 16
          %486 = vsyncadd [#allocation23], %s485
          %s488 = sshll.u32 [#allocation24], 4
          %s489 = int_to_ptr.vmem [resolvable:$true] %s488
          %491 = dma.hbm_to_vmem [thread:$0]  %s12, 16, %s489, [#allocation23]
        $region48: #{tpu_custom_call.1} parent=11 // pred_fallthru
          _
      $region12: #{tpu_custom_call.1} parent=5 // pred_fallthru
        _
      %p492 = scmp.lt.s32.totalorder %s33, 4
      // Predicated region
      $region49: #{tpu_custom_call.1} parent=5 // pred_check
        %p493 = pneg %p492
      $region50: #{tpu_custom_call.1} parent=5 // pred_check_branch
        %495 = sbr.rel (%p493) target = $region52
      $region51: #{tpu_custom_call.1} parent=5 // pred_region
        // Predicated region
        $region53: #{tpu_custom_call.1} parent=51 // pred_check
          %p496 = pneg %p133
        $region54: #{tpu_custom_call.1} parent=51 // pred_check_branch
          %498 = sbr.rel (%p496) target = $region56
        $region55: #{tpu_custom_call.1} parent=51 // pred_region
          %s499 = sand.u32 %s33, 1
          %s500 = scalar_lea.sflag [#allocation11], %s499
          %s501 = sand.u32 %s123, 1
          %s502 = smul.addr %s501, 192
          %s503 = scalar_lea.vmem [#allocation10], %s502
          %s505 = ssub.s32 3072, 3072
          %506 = vsyncadd %s500, %s505
          %s507 = smul.addr %s41, 48
          %s508 = smul.addr %s507, 64
          %s509 = scalar_lea.hbm %s3, %s508
          %s510 = sshll.u32 %s503, 4
          %s511 = int_to_ptr.vmem [resolvable:$true] %s510
          %516 = dma.hbm_to_vmem [thread:$0]  %s509, 3072, %s511, %s500, 192, 192, 12
        $region56: #{tpu_custom_call.1} parent=51 // pred_fallthru
          _
        // Predicated region
        $region57: #{tpu_custom_call.1} parent=51 // pred_check
          %p517 = pneg %p159
        $region58: #{tpu_custom_call.1} parent=51 // pred_check_branch
          %519 = sbr.rel (%p517) target = $region60
        $region59: #{tpu_custom_call.1} parent=51 // pred_region
          %s520 = sand.u32 %s33, 1
          %s521 = scalar_lea.sflag [#allocation11], %s520
          %s522 = sand.u32 %s149, 1
          %s523 = smul.addr %s522, 3
          %s524 = scalar_lea.vmem [#allocation12], %s523
          %s526 = ssub.s32 48, 48
          %527 = vsyncadd %s521, %s526
          %s528 = smul.addr %s41, 3
          %s529 = smul.addr %s528, 16
          %s530 = scalar_lea.hbm %s4, %s529
          %s532 = sshll.u32 %s524, 4
          %s533 = int_to_ptr.vmem [resolvable:$true] %s532
          %535 = dma.hbm_to_vmem [thread:$0]  %s530, 48, %s533, %s521
        $region60: #{tpu_custom_call.1} parent=51 // pred_fallthru
          _
        // Predicated region
        $region61: #{tpu_custom_call.1} parent=51 // pred_check
          %p536 = pneg %p185
        $region62: #{tpu_custom_call.1} parent=51 // pred_check_branch
          %538 = sbr.rel (%p536) target = $region64
        $region63: #{tpu_custom_call.1} parent=51 // pred_region
          %s539 = sand.u32 %s33, 1
          %s540 = scalar_lea.sflag [#allocation14], %s539
          %s541 = sand.u32 %s175, 1
          %s542 = smul.addr %s541, 64
          %s543 = scalar_lea.vmem [#allocation13], %s542
          %s545 = ssub.s32 1024, 1024
          %546 = vsyncadd %s540, %s545
          %s547 = smul.addr %s41, 16
          %s548 = smul.addr %s547, 64
          %s549 = scalar_lea.hbm %s5, %s548
          %s550 = sshll.u32 %s543, 4
          %s551 = int_to_ptr.vmem [resolvable:$true] %s550
          %556 = dma.hbm_to_vmem [thread:$0]  %s549, 1024, %s551, %s540, 64, 64, 4
        $region64: #{tpu_custom_call.1} parent=51 // pred_fallthru
          _
        // Predicated region
        $region65: #{tpu_custom_call.1} parent=51 // pred_check
          %p557 = pneg %p211
        $region66: #{tpu_custom_call.1} parent=51 // pred_check_branch
          %559 = sbr.rel (%p557) target = $region68
        $region67: #{tpu_custom_call.1} parent=51 // pred_region
          %s560 = sand.u32 %s33, 1
          %s561 = scalar_lea.sflag [#allocation14], %s560
          %s562 = sand.u32 %s201, 1
          %s563 = scalar_lea.vmem [#allocation15], %s562
          %s565 = ssub.s32 16, 16
          %566 = vsyncadd %s561, %s565
          %s567 = smul.addr %s41, 16
          %s568 = scalar_lea.hbm %s6, %s567
          %s570 = sshll.u32 %s563, 4
          %s571 = int_to_ptr.vmem [resolvable:$true] %s570
          %573 = dma.hbm_to_vmem [thread:$0]  %s568, 16, %s571, %s561
        $region68: #{tpu_custom_call.1} parent=51 // pred_fallthru
          _
      $region52: #{tpu_custom_call.1} parent=5 // pred_fallthru
        _
      %p574 = scmp.le.s32.totalorder 1, %s33
      %p575 = scmp.lt.s32.totalorder %s33, 5
      %p576 = pnand %p574, %p575
      %p577 = pneg %p576
      // Predicated region
      $region69: #{tpu_custom_call.1} parent=5 // pred_check
        _
      $region70: #{tpu_custom_call.1} parent=5 // pred_check_branch
        %579 = sbr.rel (%p576) target = $region72
      $region71: #{tpu_custom_call.1} parent=5 // pred_region
        %s580 = ssub.s32 %s33, 1
        // Predicated region
        $region73: #{tpu_custom_call.1} parent=71 // pred_check
          %p581 = pneg %p71
        $region74: #{tpu_custom_call.1} parent=71 // pred_check_branch
          %583 = sbr.rel (%p581) target = $region76
        $region75: #{tpu_custom_call.1} parent=71 // pred_region
          %584 = dma.done [#allocation5], 256
        $region76: #{tpu_custom_call.1} parent=71 // pred_fallthru
          _
        // Predicated region
        $region77: #{tpu_custom_call.1} parent=71 // pred_check
          %p585 = pneg %p92
        $region78: #{tpu_custom_call.1} parent=71 // pred_check_branch
          %587 = sbr.rel (%p585) target = $region80
        $region79: #{tpu_custom_call.1} parent=71 // pred_region
          %588 = dma.done [#allocation8], 16
        $region80: #{tpu_custom_call.1} parent=71 // pred_fallthru
          _
        // Predicated region
        $region81: #{tpu_custom_call.1} parent=71 // pred_check
          %p589 = pneg %p113
        $region82: #{tpu_custom_call.1} parent=71 // pred_check_branch
          %591 = sbr.rel (%p589) target = $region84
        $region83: #{tpu_custom_call.1} parent=71 // pred_region
          %592 = dma.done [#allocation8], 16
        $region84: #{tpu_custom_call.1} parent=71 // pred_fallthru
          _
        %s593 = sand.u32 %s38, 1
        %s594 = scalar_lea.sflag [#allocation11], %s593
        %s595 = sand.u32 %s126, 1
        %s596 = smul.addr %s595, 192
        %s597 = scalar_lea.vmem [#allocation10], %s596
        // Predicated region
        $region85: #{tpu_custom_call.1} parent=71 // pred_check
          %p598 = pneg %p139
        $region86: #{tpu_custom_call.1} parent=71 // pred_check_branch
          %600 = sbr.rel (%p598) target = $region88
        $region87: #{tpu_custom_call.1} parent=71 // pred_region
          %601 = dma.done %s594, 3072
        $region88: #{tpu_custom_call.1} parent=71 // pred_fallthru
          _
        %s602 = sand.u32 %s38, 1
        %s603 = scalar_lea.sflag [#allocation11], %s602
        %s604 = sand.u32 %s152, 1
        %s605 = smul.addr %s604, 3
        %s606 = scalar_lea.vmem [#allocation12], %s605
        // Predicated region
        $region89: #{tpu_custom_call.1} parent=71 // pred_check
          %p607 = pneg %p165
        $region90: #{tpu_custom_call.1} parent=71 // pred_check_branch
          %609 = sbr.rel (%p607) target = $region92
        $region91: #{tpu_custom_call.1} parent=71 // pred_region
          %610 = dma.done %s603, 48
        $region92: #{tpu_custom_call.1} parent=71 // pred_fallthru
          _
        %s611 = sand.u32 %s38, 1
        %s612 = scalar_lea.sflag [#allocation14], %s611
        %s613 = sand.u32 %s178, 1
        %s614 = smul.addr %s613, 64
        %s615 = scalar_lea.vmem [#allocation13], %s614
        // Predicated region
        $region93: #{tpu_custom_call.1} parent=71 // pred_check
          %p616 = pneg %p191
        $region94: #{tpu_custom_call.1} parent=71 // pred_check_branch
          %618 = sbr.rel (%p616) target = $region96
        $region95: #{tpu_custom_call.1} parent=71 // pred_region
          %619 = dma.done %s612, 1024
        $region96: #{tpu_custom_call.1} parent=71 // pred_fallthru
          _
        %s620 = sand.u32 %s38, 1
        %s621 = scalar_lea.sflag [#allocation14], %s620
        %s622 = sand.u32 %s204, 1
        %s623 = scalar_lea.vmem [#allocation15], %s622
        // Predicated region
        $region97: #{tpu_custom_call.1} parent=71 // pred_check
          %p624 = pneg %p217
        $region98: #{tpu_custom_call.1} parent=71 // pred_check_branch
          %626 = sbr.rel (%p624) target = $region100
        $region99: #{tpu_custom_call.1} parent=71 // pred_region
          %627 = dma.done %s621, 16
        $region100: #{tpu_custom_call.1} parent=71 // pred_fallthru
          _
        // Predicated region
        $region101: #{tpu_custom_call.1} parent=71 // pred_check
          %p628 = pneg %p238
        $region102: #{tpu_custom_call.1} parent=71 // pred_check_branch
          %630 = sbr.rel (%p628) target = $region104
        $region103: #{tpu_custom_call.1} parent=71 // pred_region
          %631 = dma.done [#allocation17], 16
        $region104: #{tpu_custom_call.1} parent=71 // pred_fallthru
          _
        // Predicated region
        $region105: #{tpu_custom_call.1} parent=71 // pred_check
          %p632 = pneg %p259
        $region106: #{tpu_custom_call.1} parent=71 // pred_check_branch
          %634 = sbr.rel (%p632) target = $region108
        $region107: #{tpu_custom_call.1} parent=71 // pred_region
          %635 = dma.done [#allocation17], 16
        $region108: #{tpu_custom_call.1} parent=71 // pred_fallthru
          _
        // Predicated region
        $region109: #{tpu_custom_call.1} parent=71 // pred_check
          %p636 = pneg %p280
        $region110: #{tpu_custom_call.1} parent=71 // pred_check_branch
          %638 = sbr.rel (%p636) target = $region112
        $region111: #{tpu_custom_call.1} parent=71 // pred_region
          %639 = dma.done [#allocation20], 16384
        $region112: #{tpu_custom_call.1} parent=71 // pred_fallthru
          _
        // Predicated region
        $region113: #{tpu_custom_call.1} parent=71 // pred_check
          %p640 = pneg %p301
        $region114: #{tpu_custom_call.1} parent=71 // pred_check_branch
          %642 = sbr.rel (%p640) target = $region116
        $region115: #{tpu_custom_call.1} parent=71 // pred_region
          %643 = dma.done [#allocation20], 256
        $region116: #{tpu_custom_call.1} parent=71 // pred_fallthru
          _
        // Predicated region
        $region117: #{tpu_custom_call.1} parent=71 // pred_check
          %p644 = pneg %p322
        $region118: #{tpu_custom_call.1} parent=71 // pred_check_branch
          %646 = sbr.rel (%p644) target = $region120
        $region119: #{tpu_custom_call.1} parent=71 // pred_region
          %647 = dma.done [#allocation23], 16384
        $region120: #{tpu_custom_call.1} parent=71 // pred_fallthru
          _
        // Predicated region
        $region121: #{tpu_custom_call.1} parent=71 // pred_check
          %p648 = pneg %p343
        $region122: #{tpu_custom_call.1} parent=71 // pred_check_branch
          %650 = sbr.rel (%p648) target = $region124
        $region123: #{tpu_custom_call.1} parent=71 // pred_region
          %651 = dma.done [#allocation23], 16
        $region124: #{tpu_custom_call.1} parent=71 // pred_fallthru
          _
        %p652 = pneg %p71
        %p653 = pneg %p68
        %p654 = pneg %p92
        %p655 = pneg %p89
        %p656 = pneg %p113
        %p657 = pneg %p110
        %s658 = sand.u32 %s38, 1
        %s659 = scalar_lea.sflag [#allocation11], %s658
        %s660 = sand.u32 %s126, 1
        %s661 = smul.addr %s660, 192
        %s662 = scalar_lea.vmem [#allocation10], %s661
        %p663 = pneg %p139
        %p664 = pneg %p136
        %s665 = sand.u32 %s38, 1
        %s666 = scalar_lea.sflag [#allocation11], %s665
        %s667 = sand.u32 %s152, 1
        %s668 = smul.addr %s667, 3
        %s669 = scalar_lea.vmem [#allocation12], %s668
        %p670 = pneg %p165
        %p671 = pneg %p162
        %s672 = sand.u32 %s38, 1
        %s673 = scalar_lea.sflag [#allocation14], %s672
        %s674 = sand.u32 %s178, 1
        %s675 = smul.addr %s674, 64
        %s676 = scalar_lea.vmem [#allocation13], %s675
        %p677 = pneg %p191
        %p678 = pneg %p188
        %s679 = sand.u32 %s38, 1
        %s680 = scalar_lea.sflag [#allocation14], %s679
        %s681 = sand.u32 %s204, 1
        %s682 = scalar_lea.vmem [#allocation15], %s681
        %p683 = pneg %p217
        %p684 = pneg %p214
        %p685 = pneg %p238
        %p686 = pneg %p235
        %p687 = pneg %p259
        %p688 = pneg %p256
        %p689 = pneg %p280
        %p690 = pneg %p277
        %p691 = pneg %p301
        %p692 = pneg %p298
        %p693 = pneg %p322
        %p694 = pneg %p319
        %p695 = pneg %p343
        %p696 = pneg %p340
        %p697 = pneg %p369
        %p698 = pneg %p366
        %s699 = sand.u32 %s356, 1
        %s700 = scalar_lea.sflag [#allocation6], %s699
        %s701 = sand.u32 %s356, 1
        %s702 = smul.addr %s701, 16
        %s703 = scalar_lea.vmem [#allocation25], %s702
        %s704 = smul.u32 2, %s42
        %s705 = smul.u32 2, %s42
        %p707 = scmp.eq.s32.totalorder %s43, 0
        // Predicated region
        $region125: #{tpu_custom_call.1} parent=71 // pred_check
          %p708 = pneg %p707
        $region126: #{tpu_custom_call.1} parent=71 // pred_check_branch
          %710 = sbr.rel (%p708) target = $region128
        $region127: #{tpu_custom_call.1} parent=71 // pred_region
          %v711 = vld [vmem:[#allocation4] sm:$0xff]
          %v712 = vld [vmem:[#allocation4 + $0x8] sm:$0xff]
          %713 = vst [vmem:[#allocation2] sm:$0xff] %v711
          %714 = vst [vmem:[#allocation2 + $0x8] sm:$0xff] %v712
        $region128: #{tpu_custom_call.1} parent=71 // pred_fallthru
          _
        %v715 = vld [vmem:[#allocation2] sm:$0xff]
        %v716 = vld [vmem:[#allocation2 + $0x8] sm:$0xff]
        %v717 = vld [vmem:[#allocation7] sm:$0x1]
        %v718 = vld [vmem:[#allocation9] sm:$0x1]
        %719 = vadd.xlane.f32.xlu0 %v715
        %v720 = vpop.xlane.xlu0 %719
        %721 = vadd.xlane.f32.xlu0 %v716
        %v722 = vpop.xlane.xlu0 %721
        %v723 = vrcp.pop 128.0
        %v724 = vmul.f32 %v720, %v723
        %v725 = vmul.f32 %v722, %v723
        %v726 = vsub.f32 %v715, %v724
        %v727 = vsub.f32 %v716, %v725
        %v728 = vmul.f32 %v726, %v726
        %v729 = vmul.f32 %v727, %v727
        %730 = vadd.xlane.f32.xlu0 %v728
        %v731 = vpop.xlane.xlu0 %730
        %732 = vadd.xlane.f32.xlu0 %v729
        %v733 = vpop.xlane.xlu0 %732
        %v734 = vmul.f32 %v731, 0.007874016
        %v735 = vmul.f32 %v733, 0.007874016
        %v736 = vrsqrt.pop %v734
        %v737 = vmul.f32 %v734, %v736
        %vm738 = vcmp.eq.f32.partialorder %v734, inf
        %v739 = vsel %vm738, %v734, %v737
        %vm740 = vcmp.eq.f32.partialorder %v734, 0.0
        %v741 = vand.u32 %v734, 2147483648
        %v742 = vsel %vm740, %v741, %v739
        %v743 = vrsqrt.pop %v735
        %v744 = vmul.f32 %v735, %v743
        %vm745 = vcmp.eq.f32.partialorder %v735, inf
        %v746 = vsel %vm745, %v735, %v744
        %vm747 = vcmp.eq.f32.partialorder %v735, 0.0
        %v748 = vand.u32 %v735, 2147483648
        %v749 = vsel %vm747, %v748, %v746
        %v750 = vadd.f32 %v742, 1e-06
        %v751 = vadd.f32 %v749, 1e-06
        %v752 = vrcp.pop %v750
        %v753 = vmul.f32 %v726, %v752
        %v754 = vrcp.pop %v751
        %v755 = vmul.f32 %v727, %v754
        %v757 = vlaneseq
        %v758 = vshrl.u32 %v757, 7
        %v759 = vsub.s32 0, %v758
        %v760 = vrot.slane %v717, %v759
        %v762 = vmul.f32 %v753, %v760
        %v763 = vmul.f32 %v755, %v760
        %v765 = vlaneseq
        %v766 = vshrl.u32 %v765, 7
        %v767 = vsub.s32 0, %v766
        %v768 = vrot.slane %v718, %v767
        %v770 = vadd.f32 %v762, %v768
        %v771 = vadd.f32 %v763, %v768
        %v772 = vpack.c.bf16 %v771, %v770
        %v773 = vld [vmem:[%s597] sm:$0xff]
        %v774 = vld [vmem:[%s597 + $0x8] sm:$0xf]
        %v775 = vld [vmem:[%s597 + $0xc] sm:$0xff]
        %v776 = vld [vmem:[%s597 + $0x14] sm:$0xf]
        %v777 = vld [vmem:[%s597 + $0x18] sm:$0xff]
        %v778 = vld [vmem:[%s597 + $0x20] sm:$0xf]
        %v779 = vld [vmem:[%s597 + $0x24] sm:$0xff]
        %v780 = vld [vmem:[%s597 + $0x2c] sm:$0xf]
        %v781 = vld [vmem:[%s597 + $0x30] sm:$0xff]
        %v782 = vld [vmem:[%s597 + $0x38] sm:$0xf]
        %v783 = vld [vmem:[%s597 + $0x3c] sm:$0xff]
        %v784 = vld [vmem:[%s597 + $0x44] sm:$0xf]
        %v785 = vld [vmem:[%s597 + $0x48] sm:$0xff]
        %v786 = vld [vmem:[%s597 + $0x50] sm:$0xf]
        %v787 = vld [vmem:[%s597 + $0x54] sm:$0xff]
        %v788 = vld [vmem:[%s597 + $0x5c] sm:$0xf]
        %v789 = vld [vmem:[%s597 + $0x60] sm:$0xff]
        %v790 = vld [vmem:[%s597 + $0x68] sm:$0xf]
        %v791 = vld [vmem:[%s597 + $0x6c] sm:$0xff]
        %v792 = vld [vmem:[%s597 + $0x74] sm:$0xf]
        %v793 = vld [vmem:[%s597 + $0x78] sm:$0xff]
        %v794 = vld [vmem:[%s597 + $0x80] sm:$0xf]
        %v795 = vld [vmem:[%s597 + $0x84] sm:$0xff]
        %v796 = vld [vmem:[%s597 + $0x8c] sm:$0xf]
        %v797 = vld [vmem:[%s597 + $0x90] sm:$0xff]
        %v798 = vld [vmem:[%s597 + $0x98] sm:$0xf]
        %v799 = vld [vmem:[%s597 + $0x9c] sm:$0xff]
        %v800 = vld [vmem:[%s597 + $0xa4] sm:$0xf]
        %v801 = vld [vmem:[%s597 + $0xa8] sm:$0xff]
        %v802 = vld [vmem:[%s597 + $0xb0] sm:$0xf]
        %v803 = vld [vmem:[%s597 + $0xb4] sm:$0xff]
        %v804 = vld [vmem:[%s597 + $0xbc] sm:$0xf]
        %v805 = vld [vmem:[%s606] sm:$0x7]
        %v807 = vlaneseq
        %v808 = vshrl.u32 %v807, 7
        %v809 = vsub.s32 0, %v808
        %v810 = vrot.slane %v805, %v809
        %v811 = vlaneseq
        %v812 = vshrl.u32 %v811, 7
        %v813 = vsub.s32 1, %v812
        %v814 = vrot.slane %v805, %v813
        %v815 = vlaneseq
        %v816 = vshrl.u32 %v815, 7
        %v817 = vsub.s32 2, %v816
        %v818 = vrot.slane %v805, %v817
        %v854 = vunpack.c.l.b16 %v773
        %v855 = vunpack.c.h.b16 %v773
        %v856 = vunpack.c.l.b16 %v774
        %v857 = vunpack.c.l.b16 %v775
        %v858 = vunpack.c.h.b16 %v775
        %v859 = vunpack.c.l.b16 %v776
        %v860 = vunpack.c.l.b16 %v777
        %v861 = vunpack.c.h.b16 %v777
        %v862 = vunpack.c.l.b16 %v778
        %v863 = vunpack.c.l.b16 %v779
        %v864 = vunpack.c.h.b16 %v779
        %v865 = vunpack.c.l.b16 %v780
        %v866 = vunpack.c.l.b16 %v781
        %v867 = vunpack.c.h.b16 %v781
        %v868 = vunpack.c.l.b16 %v782
        %v869 = vunpack.c.l.b16 %v783
        %v870 = vunpack.c.h.b16 %v783
        %v871 = vunpack.c.l.b16 %v784
        %v872 = vunpack.c.l.b16 %v785
        %v873 = vunpack.c.h.b16 %v785
        %v874 = vunpack.c.l.b16 %v786
        %v875 = vunpack.c.l.b16 %v787
        %v876 = vunpack.c.h.b16 %v787
        %v877 = vunpack.c.l.b16 %v788
        %v878 = vunpack.c.l.b16 %v789
        %v879 = vunpack.c.h.b16 %v789
        %v880 = vunpack.c.l.b16 %v790
        %v881 = vunpack.c.l.b16 %v791
        %v882 = vunpack.c.h.b16 %v791
        %v883 = vunpack.c.l.b16 %v792
        %v884 = vunpack.c.l.b16 %v793
        %v885 = vunpack.c.h.b16 %v793
        %v886 = vunpack.c.l.b16 %v794
        %v887 = vunpack.c.l.b16 %v795
        %v888 = vunpack.c.h.b16 %v795
        %v889 = vunpack.c.l.b16 %v796
        %v890 = vunpack.c.l.b16 %v797
        %v891 = vunpack.c.h.b16 %v797
        %v892 = vunpack.c.l.b16 %v798
        %v893 = vunpack.c.l.b16 %v799
        %v894 = vunpack.c.h.b16 %v799
        %v895 = vunpack.c.l.b16 %v800
        %v896 = vunpack.c.l.b16 %v801
        %v897 = vunpack.c.h.b16 %v801
        %v898 = vunpack.c.l.b16 %v802
        %v899 = vunpack.c.l.b16 %v803
        %v900 = vunpack.c.h.b16 %v803
        %v901 = vunpack.c.l.b16 %v804
        %v902 = vpack.c.b16 %v857, %v854
        %v903 = vpack.c.b16 %v858, %v855
        %v904 = vpack.c.b16 %v859, %v856
        %v905 = vpack.c.b16 %v863, %v860
        %v906 = vpack.c.b16 %v864, %v861
        %v907 = vpack.c.b16 %v865, %v862
        %v908 = vpack.c.b16 %v869, %v866
        %v909 = vpack.c.b16 %v870, %v867
        %v910 = vpack.c.b16 %v871, %v868
        %v911 = vpack.c.b16 %v875, %v872
        %v912 = vpack.c.b16 %v876, %v873
        %v913 = vpack.c.b16 %v877, %v874
        %v914 = vpack.c.b16 %v881, %v878
        %v915 = vpack.c.b16 %v882, %v879
        %v916 = vpack.c.b16 %v883, %v880
        %v917 = vpack.c.b16 %v887, %v884
        %v918 = vpack.c.b16 %v888, %v885
        %v919 = vpack.c.b16 %v889, %v886
        %v920 = vpack.c.b16 %v893, %v890
        %v921 = vpack.c.b16 %v894, %v891
        %v922 = vpack.c.b16 %v895, %v892
        %v923 = vpack.c.b16 %v899, %v896
        %v924 = vpack.c.b16 %v900, %v897
        %v925 = vpack.c.b16 %v901, %v898
        %950 = vmatprep.subr.bf16.mxu0 %v903
        %951 = vmatpush1.bf16.msra.mxu0 %v902
        %952 = vmatprep.subr.bf16.mxu0 %v906
        %953 = vmatpush1.bf16.msra.mxu0 %v905
        %954 = vmatprep.subr.bf16.mxu0 %v909
        %955 = vmatpush1.bf16.msra.mxu0 %v908
        %956 = vmatprep.subr.bf16.mxu0 %v912
        %957 = vmatpush1.bf16.msra.mxu0 %v911
        %958 = vmatprep.subr.bf16.mxu0 %v915
        %959 = vmatpush1.bf16.msra.mxu0 %v914
        %960 = vmatprep.subr.bf16.mxu0 %v918
        %961 = vmatpush1.bf16.msra.mxu0 %v917
        %962 = vmatprep.subr.bf16.mxu0 %v921
        %963 = vmatpush1.bf16.msra.mxu0 %v920
        %964 = vmatprep.subr.bf16.mxu0 %v924
        %965 = vmatpush1.bf16.msra.mxu0 %v923
        %966 = vmatprep.subr.bf16.mxu0 0
        %967 = vmatpush1.bf16.msra.mxu0 0
        %968 = vmatprep.subr.bf16.mxu0 0
        %969 = vmatpush1.bf16.msra.mxu0 0
        %970 = vmatprep.subr.bf16.mxu0 0
        %971 = vmatpush1.bf16.msra.mxu0 0
        %972 = vmatprep.subr.bf16.mxu0 0
        %973 = vmatpush1.bf16.msra.mxu0 0
        %974 = vmatprep.subr.bf16.mxu0 0
        %975 = vmatpush1.bf16.msra.mxu0 0
        %976 = vmatprep.subr.bf16.mxu0 0
        %977 = vmatpush1.bf16.msra.mxu0 0
        %978 = vmatprep.subr.bf16.mxu0 0
        %979 = vmatpush1.bf16.msra.mxu0 0
        %980 = vmatprep.subr.bf16.mxu0 0
        %981 = vmatpush1.bf16.msra.mxu0 0
        %982 = vmatprep.mubr.bf16.mxu0 0
        %983 = vmatmul.mubr.bf16.gmra.mrb[0].mxu0 %v772
        %v984 = vpop.f32.mrb[0].mxu0
        %v985 = vadd.f32 %v810, %v984
        %v986 = vpop.f32.mrb[0].mxu0
        %v987 = vadd.f32 %v814, %v986
        %v988 = vpop.f32.mrb[0].mxu0
        %v989 = vadd.f32 %v810, %v988
        %v990 = vpop.f32.mrb[0].mxu0
        %v991 = vadd.f32 %v814, %v990
        %992 = vdwg.mxu0
        %993 = vmatprep.subr.bf16.mxu0 0
        %994 = vmatpush1.bf16.msra.mxu0 %v904
        %995 = vmatprep.subr.bf16.mxu0 0
        %996 = vmatpush1.bf16.msra.mxu0 %v907
        %997 = vmatprep.subr.bf16.mxu0 0
        %998 = vmatpush1.bf16.msra.mxu0 %v910
        %999 = vmatprep.subr.bf16.mxu0 0
        %1000 = vmatpush1.bf16.msra.mxu0 %v913
        %1001 = vmatprep.subr.bf16.mxu0 0
        %1002 = vmatpush1.bf16.msra.mxu0 %v916
        %1003 = vmatprep.subr.bf16.mxu0 0
        %1004 = vmatpush1.bf16.msra.mxu0 %v919
        %1005 = vmatprep.subr.bf16.mxu0 0
        %1006 = vmatpush1.bf16.msra.mxu0 %v922
        %1007 = vmatprep.subr.bf16.mxu0 0
        %1008 = vmatpush1.bf16.msra.mxu0 %v925
        %1009 = vmatprep.subr.bf16.mxu0 0
        %1010 = vmatpush1.bf16.msra.mxu0 0
        %1011 = vmatprep.subr.bf16.mxu0 0
        %1012 = vmatpush1.bf16.msra.mxu0 0
        %1013 = vmatprep.subr.bf16.mxu0 0
        %1014 = vmatpush1.bf16.msra.mxu0 0
        %1015 = vmatprep.subr.bf16.mxu0 0
        %1016 = vmatpush1.bf16.msra.mxu0 0
        %1017 = vmatprep.subr.bf16.mxu0 0
        %1018 = vmatpush1.bf16.msra.mxu0 0
        %1019 = vmatprep.subr.bf16.mxu0 0
        %1020 = vmatpush1.bf16.msra.mxu0 0
        %1021 = vmatprep.subr.bf16.mxu0 0
        %1022 = vmatpush1.bf16.msra.mxu0 0
        %1023 = vmatprep.subr.bf16.mxu0 0
        %1024 = vmatpush1.bf16.msra.mxu0 0
        %1025 = vmatprep.mubr.bf16.mxu0 0
        %1026 = vmatmul.mubr.bf16.gmra.mrb[0].mxu0 %v772
        %v1027 = vpop.f32.mrb[0].mxu0
        %v1028 = vadd.f32 %v818, %v1027
        %v1029 = vpop.f32.mrb[0].mxu0
        %v1030 = vpop.f32.mrb[0].mxu0
        %v1031 = vadd.f32 %v818, %v1030
        %v1032 = vpop.f32.mrb[0].mxu0
        %1033 = vdwg.mxu0
        %v1034 = vpack.c.bf16 %v989, %v985
        %v1035 = vpack.c.bf16 %v991, %v987
        %v1036 = vpack.c.bf16 %v1031, %v1028
        %vm1037 = vcmask 261120
        %v1039 = vsel %vm1037, %v1034, 0
        %v1042 = vsel %vm1037, %v1035, 0
        %1044 = vmatprep.subr.bf16.mxu0 0
        %1045 = vmatpush1.bf16.xpose.msra.mxu0 %v1042
        %1046 = vmatprep.subr.bf16.mxu0 0
        %1047 = vmatpush1.bf16.xpose.msra.mxu0 0
        %1048 = vmatprep.subr.bf16.mxu0 0
        %1049 = vmatpush1.bf16.xpose.msra.mxu0 0
        %1050 = vmatprep.subr.bf16.mxu0 0
        %1051 = vmatpush1.bf16.xpose.msra.mxu0 0
        %1052 = vmatprep.subr.bf16.mxu0 0
        %1053 = vmatpush1.bf16.xpose.msra.mxu0 0
        %1054 = vmatprep.subr.bf16.mxu0 0
        %1055 = vmatpush1.bf16.xpose.msra.mxu0 0
        %1056 = vmatprep.subr.bf16.mxu0 0
        %1057 = vmatpush1.bf16.xpose.msra.mxu0 0
        %1058 = vmatprep.subr.bf16.mxu0 0
        %1059 = vmatpush1.bf16.xpose.msra.mxu0 0
        %1060 = vmatprep.subr.bf16.mxu0 0
        %1061 = vmatpush1.bf16.xpose.msra.mxu0 0
        %1062 = vmatprep.subr.bf16.mxu0 0
        %1063 = vmatpush1.bf16.xpose.msra.mxu0 0
        %1064 = vmatprep.subr.bf16.mxu0 0
        %1065 = vmatpush1.bf16.xpose.msra.mxu0 0
        %1066 = vmatprep.subr.bf16.mxu0 0
        %1067 = vmatpush1.bf16.xpose.msra.mxu0 0
        %1068 = vmatprep.subr.bf16.mxu0 0
        %1069 = vmatpush1.bf16.xpose.msra.mxu0 0
        %1070 = vmatprep.subr.bf16.mxu0 0
        %1071 = vmatpush1.bf16.xpose.msra.mxu0 0
        %1072 = vmatprep.subr.bf16.mxu0 0
        %1073 = vmatpush1.bf16.xpose.msra.mxu0 0
        %1074 = vmatprep.subr.bf16.mxu0 0
        %1075 = vmatpush1.bf16.xpose.msra.mxu0 0
        %1076 = vmatprep.mubr.bf16.mxu0 0
        %1077 = vmatmul.mubr.bf16.gmra.mrb[0].mxu0 %v1039
        %v1078 = vpop.f32.mrb[0].mxu0
        %v1079 = vadd.f32 0.0, %v1078
        %v1080 = vpop.f32.mrb[0].mxu0
        %v1081 = vpop.f32.mrb[0].mxu0
        %v1082 = vadd.f32 0.0, %v1081
        %v1083 = vpop.f32.mrb[0].mxu0
        %1084 = vdwg.mxu0
        %vm1085 = vcmask 130048
        %v1086 = vsel %vm1085, %v1079, -inf
        %1087 = vmax.xlane.f32.xlu0 %v1086
        %v1088 = vpop.xlane.xlu0 %1087
        %v1089 = vsel %vm1085, %v1082, -inf
        %1090 = vmax.xlane.f32.xlu0 %v1089
        %v1091 = vpop.xlane.xlu0 %1090
        %v1092 = vsub.f32 %v1079, %v1088
        %v1093 = vsub.f32 %v1082, %v1091
        %v1094 = vmul.f32 %v1092, 1.442695
        %v1095 = vpow.pop %v1094
        %v1096 = vmul.f32 %v1093, 1.442695
        %v1097 = vpow.pop %v1096
        %v1098 = vsel %vm1085, %v1095, 0.0
        %1099 = vadd.xlane.f32.xlu0 %v1098
        %v1100 = vpop.xlane.xlu0 %1099
        %v1101 = vsel %vm1085, %v1097, 0.0
        %1102 = vadd.xlane.f32.xlu0 %v1101
        %v1103 = vpop.xlane.xlu0 %1102
        %v1104 = vrcp.pop %v1100
        %v1105 = vrcp.pop %v1103
        %v1106 = vmul.f32 %v1095, %v1104
        %v1107 = vmul.f32 %v1097, %v1105
        %v1108 = vpack.c.bf16 %v1107, %v1106
        %v1110 = vsel %vm1085, %v1108, 0
        %1112 = vmatprep.subr.bf16.mxu0 0
        %1113 = vmatpush1.bf16.msra.mxu0 %v1036
        %1114 = vmatprep.subr.bf16.mxu0 0
        %1115 = vmatpush1.bf16.msra.mxu0 0
        %1116 = vmatprep.subr.bf16.mxu0 0
        %1117 = vmatpush1.bf16.msra.mxu0 0
        %1118 = vmatprep.subr.bf16.mxu0 0
        %1119 = vmatpush1.bf16.msra.mxu0 0
        %1120 = vmatprep.subr.bf16.mxu0 0
        %1121 = vmatpush1.bf16.msra.mxu0 0
        %1122 = vmatprep.subr.bf16.mxu0 0
        %1123 = vmatpush1.bf16.msra.mxu0 0
        %1124 = vmatprep.subr.bf16.mxu0 0
        %1125 = vmatpush1.bf16.msra.mxu0 0
        %1126 = vmatprep.subr.bf16.mxu0 0
        %1127 = vmatpush1.bf16.msra.mxu0 0
        %1128 = vmatprep.subr.bf16.mxu0 0
        %1129 = vmatpush1.bf16.msra.mxu0 0
        %1130 = vmatprep.subr.bf16.mxu0 0
        %1131 = vmatpush1.bf16.msra.mxu0 0
        %1132 = vmatprep.subr.bf16.mxu0 0
        %1133 = vmatpush1.bf16.msra.mxu0 0
        %1134 = vmatprep.subr.bf16.mxu0 0
        %1135 = vmatpush1.bf16.msra.mxu0 0
        %1136 = vmatprep.subr.bf16.mxu0 0
        %1137 = vmatpush1.bf16.msra.mxu0 0
        %1138 = vmatprep.subr.bf16.mxu0 0
        %1139 = vmatpush1.bf16.msra.mxu0 0
        %1140 = vmatprep.subr.bf16.mxu0 0
        %1141 = vmatpush1.bf16.msra.mxu0 0
        %1142 = vmatprep.subr.bf16.mxu0 0
        %1143 = vmatpush1.bf16.msra.mxu0 0
        %1144 = vmatprep.mubr.bf16.mxu0 0
        %1145 = vmatmul.mubr.bf16.gmra.mrb[0].mxu0 %v1110
        %v1146 = vpop.f32.mrb[0].mxu0
        %v1147 = vadd.f32 0.0, %v1146
        %v1148 = vpop.f32.mrb[0].mxu0
        %v1149 = vpop.f32.mrb[0].mxu0
        %v1150 = vadd.f32 0.0, %v1149
        %v1151 = vpop.f32.mrb[0].mxu0
        %1152 = vdwg.mxu0
        %v1153 = vpack.c.bf16 %v1150, %v1147
        %1154 = vst.msk [vmem:[#allocation3] sm:$0xff] %vm1037, %v1153
        %1156 = vrot.lane.b32.xlu0 %v1034, 96
        %v1157 = vpop.permute.xlu0 %1156
        %1159 = vrot.lane.b32.xlu0 %v1035, 96
        %v1160 = vpop.permute.xlu0 %1159
        %v1162 = vsel %vm1037, %v1157, 0
        %v1165 = vsel %vm1037, %v1160, 0
        %1167 = vmatprep.subr.bf16.mxu0 0
        %1168 = vmatpush1.bf16.xpose.msra.mxu0 %v1165
        %1169 = vmatprep.subr.bf16.mxu0 0
        %1170 = vmatpush1.bf16.xpose.msra.mxu0 0
        %1171 = vmatprep.subr.bf16.mxu0 0
        %1172 = vmatpush1.bf16.xpose.msra.mxu0 0
        %1173 = vmatprep.subr.bf16.mxu0 0
        %1174 = vmatpush1.bf16.xpose.msra.mxu0 0
        %1175 = vmatprep.subr.bf16.mxu0 0
        %1176 = vmatpush1.bf16.xpose.msra.mxu0 0
        %1177 = vmatprep.subr.bf16.mxu0 0
        %1178 = vmatpush1.bf16.xpose.msra.mxu0 0
        %1179 = vmatprep.subr.bf16.mxu0 0
        %1180 = vmatpush1.bf16.xpose.msra.mxu0 0
        %1181 = vmatprep.subr.bf16.mxu0 0
        %1182 = vmatpush1.bf16.xpose.msra.mxu0 0
        %1183 = vmatprep.subr.bf16.mxu0 0
        %1184 = vmatpush1.bf16.xpose.msra.mxu0 0
        %1185 = vmatprep.subr.bf16.mxu0 0
        %1186 = vmatpush1.bf16.xpose.msra.mxu0 0
        %1187 = vmatprep.subr.bf16.mxu0 0
        %1188 = vmatpush1.bf16.xpose.msra.mxu0 0
        %1189 = vmatprep.subr.bf16.mxu0 0
        %1190 = vmatpush1.bf16.xpose.msra.mxu0 0
        %1191 = vmatprep.subr.bf16.mxu0 0
        %1192 = vmatpush1.bf16.xpose.msra.mxu0 0
        %1193 = vmatprep.subr.bf16.mxu0 0
        %1194 = vmatpush1.bf16.xpose.msra.mxu0 0
        %1195 = vmatprep.subr.bf16.mxu0 0
        %1196 = vmatpush1.bf16.xpose.msra.mxu0 0
        %1197 = vmatprep.subr.bf16.mxu0 0
        %1198 = vmatpush1.bf16.xpose.msra.mxu0 0
        %1199 = vmatprep.mubr.bf16.mxu0 0
        %1200 = vmatmul.mubr.bf16.gmra.mrb[0].mxu0 %v1162
        %v1201 = vpop.f32.mrb[0].mxu0
        %v1202 = vadd.f32 0.0, %v1201
        %v1203 = vpop.f32.mrb[0].mxu0
        %v1204 = vpop.f32.mrb[0].mxu0
        %v1205 = vadd.f32 0.0, %v1204
        %v1206 = vpop.f32.mrb[0].mxu0
        %1207 = vdwg.mxu0
        %v1208 = vsel %vm1085, %v1202, -inf
        %1209 = vmax.xlane.f32.xlu0 %v1208
        %v1210 = vpop.xlane.xlu0 %1209
        %v1211 = vsel %vm1085, %v1205, -inf
        %1212 = vmax.xlane.f32.xlu0 %v1211
        %v1213 = vpop.xlane.xlu0 %1212
        %v1214 = vsub.f32 %v1202, %v1210
        %v1215 = vsub.f32 %v1205, %v1213
        %v1216 = vmul.f32 %v1214, 1.442695
        %v1217 = vpow.pop %v1216
        %v1218 = vmul.f32 %v1215, 1.442695
        %v1219 = vpow.pop %v1218
        %v1220 = vsel %vm1085, %v1217, 0.0
        %1221 = vadd.xlane.f32.xlu0 %v1220
        %v1222 = vpop.xlane.xlu0 %1221
        %v1223 = vsel %vm1085, %v1219, 0.0
        %1224 = vadd.xlane.f32.xlu0 %v1223
        %v1225 = vpop.xlane.xlu0 %1224
        %v1226 = vrcp.pop %v1222
        %v1227 = vrcp.pop %v1225
        %v1228 = vmul.f32 %v1217, %v1226
        %v1229 = vmul.f32 %v1219, %v1227
        %v1230 = vpack.c.bf16 %v1229, %v1228
        %1232 = vrot.lane.b32.xlu0 %v1036, 96
        %v1233 = vpop.permute.xlu0 %1232
        %v1236 = vsel %vm1085, %v1230, 0
        %1238 = vmatprep.subr.bf16.mxu0 0
        %1239 = vmatpush1.bf16.msra.mxu0 %v1233
        %1240 = vmatprep.subr.bf16.mxu0 0
        %1241 = vmatpush1.bf16.msra.mxu0 0
        %1242 = vmatprep.subr.bf16.mxu0 0
        %1243 = vmatpush1.bf16.msra.mxu0 0
        %1244 = vmatprep.subr.bf16.mxu0 0
        %1245 = vmatpush1.bf16.msra.mxu0 0
        %1246 = vmatprep.subr.bf16.mxu0 0
        %1247 = vmatpush1.bf16.msra.mxu0 0
        %1248 = vmatprep.subr.bf16.mxu0 0
        %1249 = vmatpush1.bf16.msra.mxu0 0
        %1250 = vmatprep.subr.bf16.mxu0 0
        %1251 = vmatpush1.bf16.msra.mxu0 0
        %1252 = vmatprep.subr.bf16.mxu0 0
        %1253 = vmatpush1.bf16.msra.mxu0 0
        %1254 = vmatprep.subr.bf16.mxu0 0
        %1255 = vmatpush1.bf16.msra.mxu0 0
        %1256 = vmatprep.subr.bf16.mxu0 0
        %1257 = vmatpush1.bf16.msra.mxu0 0
        %1258 = vmatprep.subr.bf16.mxu0 0
        %1259 = vmatpush1.bf16.msra.mxu0 0
        %1260 = vmatprep.subr.bf16.mxu0 0
        %1261 = vmatpush1.bf16.msra.mxu0 0
        %1262 = vmatprep.subr.bf16.mxu0 0
        %1263 = vmatpush1.bf16.msra.mxu0 0
        %1264 = vmatprep.subr.bf16.mxu0 0
        %1265 = vmatpush1.bf16.msra.mxu0 0
        %1266 = vmatprep.subr.bf16.mxu0 0
        %1267 = vmatpush1.bf16.msra.mxu0 0
        %1268 = vmatprep.subr.bf16.mxu0 0
        %1269 = vmatpush1.bf16.msra.mxu0 0
        %1270 = vmatprep.mubr.bf16.mxu0 0
        %1271 = vmatmul.mubr.bf16.gmra.mrb[0].mxu0 %v1236
        %v1272 = vpop.f32.mrb[0].mxu0
        %v1273 = vadd.f32 0.0, %v1272
        %v1274 = vpop.f32.mrb[0].mxu0
        %v1275 = vpop.f32.mrb[0].mxu0
        %v1276 = vadd.f32 0.0, %v1275
        %v1277 = vpop.f32.mrb[0].mxu0
        %1278 = vdwg.mxu0
        %v1279 = vpack.c.bf16 %v1276, %v1273
        %1281 = vrot.lane.b32.xlu0 %v1279, 32
        %v1282 = vpop.permute.xlu0 %1281
        %vm1284 = vcmask 523520
        %1285 = vst.msk [vmem:[#allocation3] sm:$0xff] %vm1284, %v1282
        %1286 = vrot.lane.b32.xlu0 %v1034, 64
        %v1287 = vpop.permute.xlu0 %1286
        %1288 = vrot.lane.b32.xlu0 %v1035, 64
        %v1289 = vpop.permute.xlu0 %1288
        %v1291 = vsel %vm1037, %v1287, 0
        %v1294 = vsel %vm1037, %v1289, 0
        %1296 = vmatprep.subr.bf16.mxu0 0
        %1297 = vmatpush1.bf16.xpose.msra.mxu0 %v1294
        %1298 = vmatprep.subr.bf16.mxu0 0
        %1299 = vmatpush1.bf16.xpose.msra.mxu0 0
        %1300 = vmatprep.subr.bf16.mxu0 0
        %1301 = vmatpush1.bf16.xpose.msra.mxu0 0
        %1302 = vmatprep.subr.bf16.mxu0 0
        %1303 = vmatpush1.bf16.xpose.msra.mxu0 0
        %1304 = vmatprep.subr.bf16.mxu0 0
        %1305 = vmatpush1.bf16.xpose.msra.mxu0 0
        %1306 = vmatprep.subr.bf16.mxu0 0
        %1307 = vmatpush1.bf16.xpose.msra.mxu0 0
        %1308 = vmatprep.subr.bf16.mxu0 0
        %1309 = vmatpush1.bf16.xpose.msra.mxu0 0
        %1310 = vmatprep.subr.bf16.mxu0 0
        %1311 = vmatpush1.bf16.xpose.msra.mxu0 0
        %1312 = vmatprep.subr.bf16.mxu0 0
        %1313 = vmatpush1.bf16.xpose.msra.mxu0 0
        %1314 = vmatprep.subr.bf16.mxu0 0
        %1315 = vmatpush1.bf16.xpose.msra.mxu0 0
        %1316 = vmatprep.subr.bf16.mxu0 0
        %1317 = vmatpush1.bf16.xpose.msra.mxu0 0
        %1318 = vmatprep.subr.bf16.mxu0 0
        %1319 = vmatpush1.bf16.xpose.msra.mxu0 0
        %1320 = vmatprep.subr.bf16.mxu0 0
        %1321 = vmatpush1.bf16.xpose.msra.mxu0 0
        %1322 = vmatprep.subr.bf16.mxu0 0
        %1323 = vmatpush1.bf16.xpose.msra.mxu0 0
        %1324 = vmatprep.subr.bf16.mxu0 0
        %1325 = vmatpush1.bf16.xpose.msra.mxu0 0
        %1326 = vmatprep.subr.bf16.mxu0 0
        %1327 = vmatpush1.bf16.xpose.msra.mxu0 0
        %1328 = vmatprep.mubr.bf16.mxu0 0
        %1329 = vmatmul.mubr.bf16.gmra.mrb[0].mxu0 %v1291
        %v1330 = vpop.f32.mrb[0].mxu0
        %v1331 = vadd.f32 0.0, %v1330
        %v1332 = vpop.f32.mrb[0].mxu0
        %v1333 = vpop.f32.mrb[0].mxu0
        %v1334 = vadd.f32 0.0, %v1333
        %v1335 = vpop.f32.mrb[0].mxu0
        %1336 = vdwg.mxu0
        %v1337 = vsel %vm1085, %v1331, -inf
        %1338 = vmax.xlane.f32.xlu0 %v1337
        %v1339 = vpop.xlane.xlu0 %1338
        %v1340 = vsel %vm1085, %v1334, -inf
        %1341 = vmax.xlane.f32.xlu0 %v1340
        %v1342 = vpop.xlane.xlu0 %1341
        %v1343 = vsub.f32 %v1331, %v1339
        %v1344 = vsub.f32 %v1334, %v1342
        %v1345 = vmul.f32 %v1343, 1.442695
        %v1346 = vpow.pop %v1345
        %v1347 = vmul.f32 %v1344, 1.442695
        %v1348 = vpow.pop %v1347
        %v1349 = vsel %vm1085, %v1346, 0.0
        %1350 = vadd.xlane.f32.xlu0 %v1349
        %v1351 = vpop.xlane.xlu0 %1350
        %v1352 = vsel %vm1085, %v1348, 0.0
        %1353 = vadd.xlane.f32.xlu0 %v1352
        %v1354 = vpop.xlane.xlu0 %1353
        %v1355 = vrcp.pop %v1351
        %v1356 = vrcp.pop %v1354
        %v1357 = vmul.f32 %v1346, %v1355
        %v1358 = vmul.f32 %v1348, %v1356
        %v1359 = vpack.c.bf16 %v1358, %v1357
        %1360 = vrot.lane.b32.xlu0 %v1036, 64
        %v1361 = vpop.permute.xlu0 %1360
        %v1364 = vsel %vm1085, %v1359, 0
        %1366 = vmatprep.subr.bf16.mxu0 0
        %1367 = vmatpush1.bf16.msra.mxu0 %v1361
        %1368 = vmatprep.subr.bf16.mxu0 0
        %1369 = vmatpush1.bf16.msra.mxu0 0
        %1370 = vmatprep.subr.bf16.mxu0 0
        %1371 = vmatpush1.bf16.msra.mxu0 0
        %1372 = vmatprep.subr.bf16.mxu0 0
        %1373 = vmatpush1.bf16.msra.mxu0 0
        %1374 = vmatprep.subr.bf16.mxu0 0
        %1375 = vmatpush1.bf16.msra.mxu0 0
        %1376 = vmatprep.subr.bf16.mxu0 0
        %1377 = vmatpush1.bf16.msra.mxu0 0
        %1378 = vmatprep.subr.bf16.mxu0 0
        %1379 = vmatpush1.bf16.msra.mxu0 0
        %1380 = vmatprep.subr.bf16.mxu0 0
        %1381 = vmatpush1.bf16.msra.mxu0 0
        %1382 = vmatprep.subr.bf16.mxu0 0
        %1383 = vmatpush1.bf16.msra.mxu0 0
        %1384 = vmatprep.subr.bf16.mxu0 0
        %1385 = vmatpush1.bf16.msra.mxu0 0
        %1386 = vmatprep.subr.bf16.mxu0 0
        %1387 = vmatpush1.bf16.msra.mxu0 0
        %1388 = vmatprep.subr.bf16.mxu0 0
        %1389 = vmatpush1.bf16.msra.mxu0 0
        %1390 = vmatprep.subr.bf16.mxu0 0
        %1391 = vmatpush1.bf16.msra.mxu0 0
        %1392 = vmatprep.subr.bf16.mxu0 0
        %1393 = vmatpush1.bf16.msra.mxu0 0
        %1394 = vmatprep.subr.bf16.mxu0 0
        %1395 = vmatpush1.bf16.msra.mxu0 0
        %1396 = vmatprep.subr.bf16.mxu0 0
        %1397 = vmatpush1.bf16.msra.mxu0 0
        %1398 = vmatprep.mubr.bf16.mxu0 0
        %1399 = vmatmul.mubr.bf16.gmra.mrb[0].mxu0 %v1364
        %v1400 = vpop.f32.mrb[0].mxu0
        %v1401 = vadd.f32 0.0, %v1400
        %v1402 = vpop.f32.mrb[0].mxu0
        %v1403 = vpop.f32.mrb[0].mxu0
        %v1404 = vadd.f32 0.0, %v1403
        %v1405 = vpop.f32.mrb[0].mxu0
        %1406 = vdwg.mxu0
        %v1407 = vpack.c.bf16 %v1404, %v1401
        %1409 = vrot.lane.b32.xlu0 %v1407, 64
        %v1410 = vpop.permute.xlu0 %1409
        %vm1412 = vcmask 785920
        %1413 = vst.msk [vmem:[#allocation3] sm:$0xff] %vm1412, %v1410
        %1414 = vrot.lane.b32.xlu0 %v1034, 32
        %v1415 = vpop.permute.xlu0 %1414
        %1416 = vrot.lane.b32.xlu0 %v1035, 32
        %v1417 = vpop.permute.xlu0 %1416
        %v1419 = vsel %vm1037, %v1415, 0
        %v1422 = vsel %vm1037, %v1417, 0
        %1424 = vmatprep.subr.bf16.mxu0 0
        %1425 = vmatpush1.bf16.xpose.msra.mxu0 %v1422
        %1426 = vmatprep.subr.bf16.mxu0 0
        %1427 = vmatpush1.bf16.xpose.msra.mxu0 0
        %1428 = vmatprep.subr.bf16.mxu0 0
        %1429 = vmatpush1.bf16.xpose.msra.mxu0 0
        %1430 = vmatprep.subr.bf16.mxu0 0
        %1431 = vmatpush1.bf16.xpose.msra.mxu0 0
        %1432 = vmatprep.subr.bf16.mxu0 0
        %1433 = vmatpush1.bf16.xpose.msra.mxu0 0
        %1434 = vmatprep.subr.bf16.mxu0 0
        %1435 = vmatpush1.bf16.xpose.msra.mxu0 0
        %1436 = vmatprep.subr.bf16.mxu0 0
        %1437 = vmatpush1.bf16.xpose.msra.mxu0 0
        %1438 = vmatprep.subr.bf16.mxu0 0
        %1439 = vmatpush1.bf16.xpose.msra.mxu0 0
        %1440 = vmatprep.subr.bf16.mxu0 0
        %1441 = vmatpush1.bf16.xpose.msra.mxu0 0
        %1442 = vmatprep.subr.bf16.mxu0 0
        %1443 = vmatpush1.bf16.xpose.msra.mxu0 0
        %1444 = vmatprep.subr.bf16.mxu0 0
        %1445 = vmatpush1.bf16.xpose.msra.mxu0 0
        %1446 = vmatprep.subr.bf16.mxu0 0
        %1447 = vmatpush1.bf16.xpose.msra.mxu0 0
        %1448 = vmatprep.subr.bf16.mxu0 0
        %1449 = vmatpush1.bf16.xpose.msra.mxu0 0
        %1450 = vmatprep.subr.bf16.mxu0 0
        %1451 = vmatpush1.bf16.xpose.msra.mxu0 0
        %1452 = vmatprep.subr.bf16.mxu0 0
        %1453 = vmatpush1.bf16.xpose.msra.mxu0 0
        %1454 = vmatprep.subr.bf16.mxu0 0
        %1455 = vmatpush1.bf16.xpose.msra.mxu0 0
        %1456 = vmatprep.mubr.bf16.mxu0 0
        %1457 = vmatmul.mubr.bf16.gmra.mrb[0].mxu0 %v1419
        %v1458 = vpop.f32.mrb[0].mxu0
        %v1459 = vadd.f32 0.0, %v1458
        %v1460 = vpop.f32.mrb[0].mxu0
        %v1461 = vpop.f32.mrb[0].mxu0
        %v1462 = vadd.f32 0.0, %v1461
        %v1463 = vpop.f32.mrb[0].mxu0
        %1464 = vdwg.mxu0
        %v1465 = vsel %vm1085, %v1459, -inf
        %1466 = vmax.xlane.f32.xlu0 %v1465
        %v1467 = vpop.xlane.xlu0 %1466
        %v1468 = vsel %vm1085, %v1462, -inf
        %1469 = vmax.xlane.f32.xlu0 %v1468
        %v1470 = vpop.xlane.xlu0 %1469
        %v1471 = vsub.f32 %v1459, %v1467
        %v1472 = vsub.f32 %v1462, %v1470
        %v1473 = vmul.f32 %v1471, 1.442695
        %v1474 = vpow.pop %v1473
        %v1475 = vmul.f32 %v1472, 1.442695
        %v1476 = vpow.pop %v1475
        %v1477 = vsel %vm1085, %v1474, 0.0
        %1478 = vadd.xlane.f32.xlu0 %v1477
        %v1479 = vpop.xlane.xlu0 %1478
        %v1480 = vsel %vm1085, %v1476, 0.0
        %1481 = vadd.xlane.f32.xlu0 %v1480
        %v1482 = vpop.xlane.xlu0 %1481
        %v1483 = vrcp.pop %v1479
        %v1484 = vrcp.pop %v1482
        %v1485 = vmul.f32 %v1474, %v1483
        %v1486 = vmul.f32 %v1476, %v1484
        %v1487 = vpack.c.bf16 %v1486, %v1485
        %1488 = vrot.lane.b32.xlu0 %v1036, 32
        %v1489 = vpop.permute.xlu0 %1488
        %v1492 = vsel %vm1085, %v1487, 0
        %1494 = vmatprep.subr.bf16.mxu0 0
        %1495 = vmatpush1.bf16.msra.mxu0 %v1489
        %1496 = vmatprep.subr.bf16.mxu0 0
        %1497 = vmatpush1.bf16.msra.mxu0 0
        %1498 = vmatprep.subr.bf16.mxu0 0
        %1499 = vmatpush1.bf16.msra.mxu0 0
        %1500 = vmatprep.subr.bf16.mxu0 0
        %1501 = vmatpush1.bf16.msra.mxu0 0
        %1502 = vmatprep.subr.bf16.mxu0 0
        %1503 = vmatpush1.bf16.msra.mxu0 0
        %1504 = vmatprep.subr.bf16.mxu0 0
        %1505 = vmatpush1.bf16.msra.mxu0 0
        %1506 = vmatprep.subr.bf16.mxu0 0
        %1507 = vmatpush1.bf16.msra.mxu0 0
        %1508 = vmatprep.subr.bf16.mxu0 0
        %1509 = vmatpush1.bf16.msra.mxu0 0
        %1510 = vmatprep.subr.bf16.mxu0 0
        %1511 = vmatpush1.bf16.msra.mxu0 0
        %1512 = vmatprep.subr.bf16.mxu0 0
        %1513 = vmatpush1.bf16.msra.mxu0 0
        %1514 = vmatprep.subr.bf16.mxu0 0
        %1515 = vmatpush1.bf16.msra.mxu0 0
        %1516 = vmatprep.subr.bf16.mxu0 0
        %1517 = vmatpush1.bf16.msra.mxu0 0
        %1518 = vmatprep.subr.bf16.mxu0 0
        %1519 = vmatpush1.bf16.msra.mxu0 0
        %1520 = vmatprep.subr.bf16.mxu0 0
        %1521 = vmatpush1.bf16.msra.mxu0 0
        %1522 = vmatprep.subr.bf16.mxu0 0
        %1523 = vmatpush1.bf16.msra.mxu0 0
        %1524 = vmatprep.subr.bf16.mxu0 0
        %1525 = vmatpush1.bf16.msra.mxu0 0
        %1526 = vmatprep.mubr.bf16.mxu0 0
        %1527 = vmatmul.mubr.bf16.gmra.mrb[0].mxu0 %v1492
        %v1528 = vpop.f32.mrb[0].mxu0
        %v1529 = vadd.f32 0.0, %v1528
        %v1530 = vpop.f32.mrb[0].mxu0
        %v1531 = vpop.f32.mrb[0].mxu0
        %v1532 = vadd.f32 0.0, %v1531
        %v1533 = vpop.f32.mrb[0].mxu0
        %1534 = vdwg.mxu0
        %v1535 = vpack.c.bf16 %v1532, %v1529
        %1537 = vrot.lane.b32.xlu0 %v1535, 96
        %v1538 = vpop.permute.xlu0 %1537
        %vm1540 = vcmask 1048320
        %1541 = vst.msk [vmem:[#allocation3] sm:$0xff] %vm1540, %v1538
        %v1542 = vld [vmem:[#allocation3] sm:$0xff]
        %v1543 = vld [vmem:[%s615] sm:$0xf]
        %v1544 = vld [vmem:[%s615 + $0x4] sm:$0xf]
        %v1545 = vld [vmem:[%s615 + $0x8] sm:$0xf]
        %v1546 = vld [vmem:[%s615 + $0xc] sm:$0xf]
        %v1547 = vld [vmem:[%s615 + $0x10] sm:$0xf]
        %v1548 = vld [vmem:[%s615 + $0x14] sm:$0xf]
        %v1549 = vld [vmem:[%s615 + $0x18] sm:$0xf]
        %v1550 = vld [vmem:[%s615 + $0x1c] sm:$0xf]
        %v1551 = vld [vmem:[%s615 + $0x20] sm:$0xf]
        %v1552 = vld [vmem:[%s615 + $0x24] sm:$0xf]
        %v1553 = vld [vmem:[%s615 + $0x28] sm:$0xf]
        %v1554 = vld [vmem:[%s615 + $0x2c] sm:$0xf]
        %v1555 = vld [vmem:[%s615 + $0x30] sm:$0xf]
        %v1556 = vld [vmem:[%s615 + $0x34] sm:$0xf]
        %v1557 = vld [vmem:[%s615 + $0x38] sm:$0xf]
        %v1558 = vld [vmem:[%s615 + $0x3c] sm:$0xf]
        %v1559 = vld [vmem:[%s623] sm:$0x1]
        %v1561 = vlaneseq
        %v1562 = vshrl.u32 %v1561, 7
        %v1563 = vsub.s32 0, %v1562
        %v1564 = vrot.slane %v1559, %v1563
        %v1582 = vunpack.c.l.b16 %v1543
        %v1583 = vunpack.c.l.b16 %v1544
        %v1584 = vunpack.c.l.b16 %v1545
        %v1585 = vunpack.c.l.b16 %v1546
        %v1586 = vunpack.c.l.b16 %v1547
        %v1587 = vunpack.c.l.b16 %v1548
        %v1588 = vunpack.c.l.b16 %v1549
        %v1589 = vunpack.c.l.b16 %v1550
        %v1590 = vunpack.c.l.b16 %v1551
        %v1591 = vunpack.c.l.b16 %v1552
        %v1592 = vunpack.c.l.b16 %v1553
        %v1593 = vunpack.c.l.b16 %v1554
        %v1594 = vunpack.c.l.b16 %v1555
        %v1595 = vunpack.c.l.b16 %v1556
        %v1596 = vunpack.c.l.b16 %v1557
        %v1597 = vunpack.c.l.b16 %v1558
        %v1598 = vpack.c.b16 %v1583, %v1582
        %v1599 = vpack.c.b16 %v1585, %v1584
        %v1600 = vpack.c.b16 %v1587, %v1586
        %v1601 = vpack.c.b16 %v1589, %v1588
        %v1602 = vpack.c.b16 %v1591, %v1590
        %v1603 = vpack.c.b16 %v1593, %v1592
        %v1604 = vpack.c.b16 %v1595, %v1594
        %v1605 = vpack.c.b16 %v1597, %v1596
        %1614 = vmatprep.subr.bf16.mxu0 0
        %1615 = vmatpush1.bf16.msra.mxu0 %v1598
        %1616 = vmatprep.subr.bf16.mxu0 0
        %1617 = vmatpush1.bf16.msra.mxu0 %v1599
        %1618 = vmatprep.subr.bf16.mxu0 0
        %1619 = vmatpush1.bf16.msra.mxu0 %v1600
        %1620 = vmatprep.subr.bf16.mxu0 0
        %1621 = vmatpush1.bf16.msra.mxu0 %v1601
        %1622 = vmatprep.subr.bf16.mxu0 0
        %1623 = vmatpush1.bf16.msra.mxu0 %v1602
        %1624 = vmatprep.subr.bf16.mxu0 0
        %1625 = vmatpush1.bf16.msra.mxu0 %v1603
        %1626 = vmatprep.subr.bf16.mxu0 0
        %1627 = vmatpush1.bf16.msra.mxu0 %v1604
        %1628 = vmatprep.subr.bf16.mxu0 0
        %1629 = vmatpush1.bf16.msra.mxu0 %v1605
        %1630 = vmatprep.subr.bf16.mxu0 0
        %1631 = vmatpush1.bf16.msra.mxu0 0
        %1632 = vmatprep.subr.bf16.mxu0 0
        %1633 = vmatpush1.bf16.msra.mxu0 0
        %1634 = vmatprep.subr.bf16.mxu0 0
        %1635 = vmatpush1.bf16.msra.mxu0 0
        %1636 = vmatprep.subr.bf16.mxu0 0
        %1637 = vmatpush1.bf16.msra.mxu0 0
        %1638 = vmatprep.subr.bf16.mxu0 0
        %1639 = vmatpush1.bf16.msra.mxu0 0
        %1640 = vmatprep.subr.bf16.mxu0 0
        %1641 = vmatpush1.bf16.msra.mxu0 0
        %1642 = vmatprep.subr.bf16.mxu0 0
        %1643 = vmatpush1.bf16.msra.mxu0 0
        %1644 = vmatprep.subr.bf16.mxu0 0
        %1645 = vmatpush1.bf16.msra.mxu0 0
        %1646 = vmatprep.mubr.bf16.mxu0 0
        %1647 = vmatmul.mubr.bf16.gmra.mrb[0].mxu0 %v1542
        %v1648 = vpop.f32.mrb[0].mxu0
        %v1649 = vadd.f32 %v1564, %v1648
        %v1650 = vpop.f32.mrb[0].mxu0
        %v1651 = vpop.f32.mrb[0].mxu0
        %v1652 = vadd.f32 %v1564, %v1651
        %v1653 = vpop.f32.mrb[0].mxu0
        %1654 = vdwg.mxu0
        %v1655 = vadd.f32 %v1649, %v715
        %v1656 = vadd.f32 %v1652, %v716
        %v1657 = vld [vmem:[#allocation16] sm:$0x1]
        %v1658 = vld [vmem:[#allocation18] sm:$0x1]
        %1659 = vadd.xlane.f32.xlu0 %v1655
        %v1660 = vpop.xlane.xlu0 %1659
        %1661 = vadd.xlane.f32.xlu0 %v1656
        %v1662 = vpop.xlane.xlu0 %1661
        %v1663 = vmul.f32 %v1660, %v723
        %v1664 = vmul.f32 %v1662, %v723
        %v1665 = vsub.f32 %v1655, %v1663
        %v1666 = vsub.f32 %v1656, %v1664
        %v1667 = vmul.f32 %v1665, %v1665
        %v1668 = vmul.f32 %v1666, %v1666
        %1669 = vadd.xlane.f32.xlu0 %v1667
        %v1670 = vpop.xlane.xlu0 %1669
        %1671 = vadd.xlane.f32.xlu0 %v1668
        %v1672 = vpop.xlane.xlu0 %1671
        %v1673 = vmul.f32 %v1670, 0.007874016
        %v1674 = vmul.f32 %v1672, 0.007874016
        %v1675 = vrsqrt.pop %v1673
        %v1676 = vmul.f32 %v1673, %v1675
        %vm1677 = vcmp.eq.f32.partialorder %v1673, inf
        %v1678 = vsel %vm1677, %v1673, %v1676
        %vm1679 = vcmp.eq.f32.partialorder %v1673, 0.0
        %v1680 = vand.u32 %v1673, 2147483648
        %v1681 = vsel %vm1679, %v1680, %v1678
        %v1682 = vrsqrt.pop %v1674
        %v1683 = vmul.f32 %v1674, %v1682
        %vm1684 = vcmp.eq.f32.partialorder %v1674, inf
        %v1685 = vsel %vm1684, %v1674, %v1683
        %vm1686 = vcmp.eq.f32.partialorder %v1674, 0.0
        %v1687 = vand.u32 %v1674, 2147483648
        %v1688 = vsel %vm1686, %v1687, %v1685
        %v1689 = vadd.f32 %v1681, 1e-06
        %v1690 = vadd.f32 %v1688, 1e-06
        %v1691 = vrcp.pop %v1689
        %v1692 = vmul.f32 %v1665, %v1691
        %v1693 = vrcp.pop %v1690
        %v1694 = vmul.f32 %v1666, %v1693
        %v1696 = vlaneseq
        %v1697 = vshrl.u32 %v1696, 7
        %v1698 = vsub.s32 0, %v1697
        %v1699 = vrot.slane %v1657, %v1698
        %v1701 = vmul.f32 %v1692, %v1699
        %v1702 = vmul.f32 %v1694, %v1699
        %v1704 = vlaneseq
        %v1705 = vshrl.u32 %v1704, 7
        %v1706 = vsub.s32 0, %v1705
        %v1707 = vrot.slane %v1658, %v1706
        %v1709 = vadd.f32 %v1701, %v1707
        %v1710 = vadd.f32 %v1702, %v1707
        %v1711 = vpack.c.bf16 %v1710, %v1709
        %v1712 = vld [vmem:[#allocation19] sm:$0xff]
        %v1713 = vld [vmem:[#allocation19 + $0x8] sm:$0xff]
        %v1714 = vld [vmem:[#allocation19 + $0x40] sm:$0xff]
        %v1715 = vld [vmem:[#allocation19 + $0x48] sm:$0xff]
        %v1716 = vld [vmem:[#allocation19 + $0x80] sm:$0xff]
        %v1717 = vld [vmem:[#allocation19 + $0x88] sm:$0xff]
        %v1718 = vld [vmem:[#allocation19 + $0xc0] sm:$0xff]
        %v1719 = vld [vmem:[#allocation19 + $0xc8] sm:$0xff]
        %v1720 = vld [vmem:[#allocation19 + $0x100] sm:$0xff]
        %v1721 = vld [vmem:[#allocation19 + $0x108] sm:$0xff]
        %v1722 = vld [vmem:[#allocation19 + $0x140] sm:$0xff]
        %v1723 = vld [vmem:[#allocation19 + $0x148] sm:$0xff]
        %v1724 = vld [vmem:[#allocation19 + $0x180] sm:$0xff]
        %v1725 = vld [vmem:[#allocation19 + $0x188] sm:$0xff]
        %v1726 = vld [vmem:[#allocation19 + $0x1c0] sm:$0xff]
        %v1727 = vld [vmem:[#allocation19 + $0x1c8] sm:$0xff]
        %v1728 = vld [vmem:[#allocation19 + $0x200] sm:$0xff]
        %v1729 = vld [vmem:[#allocation19 + $0x208] sm:$0xff]
        %v1730 = vld [vmem:[#allocation19 + $0x240] sm:$0xff]
        %v1731 = vld [vmem:[#allocation19 + $0x248] sm:$0xff]
        %v1732 = vld [vmem:[#allocation19 + $0x280] sm:$0xff]
        %v1733 = vld [vmem:[#allocation19 + $0x288] sm:$0xff]
        %v1734 = vld [vmem:[#allocation19 + $0x2c0] sm:$0xff]
        %v1735 = vld [vmem:[#allocation19 + $0x2c8] sm:$0xff]
        %v1736 = vld [vmem:[#allocation19 + $0x300] sm:$0xff]
        %v1737 = vld [vmem:[#allocation19 + $0x308] sm:$0xff]
        %v1738 = vld [vmem:[#allocation19 + $0x340] sm:$0xff]
        %v1739 = vld [vmem:[#allocation19 + $0x348] sm:$0xff]
        %v1740 = vld [vmem:[#allocation19 + $0x380] sm:$0xff]
        %v1741 = vld [vmem:[#allocation19 + $0x388] sm:$0xff]
        %v1742 = vld [vmem:[#allocation19 + $0x3c0] sm:$0xff]
        %v1743 = vld [vmem:[#allocation19 + $0x3c8] sm:$0xff]
        %v1744 = vld [vmem:[#allocation21] sm:$0xf]
        %v1746 = vlaneseq
        %v1747 = vshrl.u32 %v1746, 7
        %v1748 = vsub.s32 0, %v1747
        %v1749 = vrot.slane %v1744, %v1748
        %v1750 = vlaneseq
        %v1751 = vshrl.u32 %v1750, 7
        %v1752 = vsub.s32 1, %v1751
        %v1753 = vrot.slane %v1744, %v1752
        %v1754 = vlaneseq
        %v1755 = vshrl.u32 %v1754, 7
        %v1756 = vsub.s32 2, %v1755
        %v1757 = vrot.slane %v1744, %v1756
        %v1758 = vlaneseq
        %v1759 = vshrl.u32 %v1758, 7
        %v1760 = vsub.s32 3, %v1759
        %v1761 = vrot.slane %v1744, %v1760
        %v1798 = vunpack.c.l.b16 %v1712
        %v1799 = vunpack.c.h.b16 %v1712
        %v1800 = vunpack.c.l.b16 %v1713
        %v1801 = vunpack.c.h.b16 %v1713
        %v1802 = vunpack.c.l.b16 %v1714
        %v1803 = vunpack.c.h.b16 %v1714
        %v1804 = vunpack.c.l.b16 %v1715
        %v1805 = vunpack.c.h.b16 %v1715
        %v1806 = vunpack.c.l.b16 %v1716
        %v1807 = vunpack.c.h.b16 %v1716
        %v1808 = vunpack.c.l.b16 %v1717
        %v1809 = vunpack.c.h.b16 %v1717
        %v1810 = vunpack.c.l.b16 %v1718
        %v1811 = vunpack.c.h.b16 %v1718
        %v1812 = vunpack.c.l.b16 %v1719
        %v1813 = vunpack.c.h.b16 %v1719
        %v1814 = vunpack.c.l.b16 %v1720
        %v1815 = vunpack.c.h.b16 %v1720
        %v1816 = vunpack.c.l.b16 %v1721
        %v1817 = vunpack.c.h.b16 %v1721
        %v1818 = vunpack.c.l.b16 %v1722
        %v1819 = vunpack.c.h.b16 %v1722
        %v1820 = vunpack.c.l.b16 %v1723
        %v1821 = vunpack.c.h.b16 %v1723
        %v1822 = vunpack.c.l.b16 %v1724
        %v1823 = vunpack.c.h.b16 %v1724
        %v1824 = vunpack.c.l.b16 %v1725
        %v1825 = vunpack.c.h.b16 %v1725
        %v1826 = vunpack.c.l.b16 %v1726
        %v1827 = vunpack.c.h.b16 %v1726
        %v1828 = vunpack.c.l.b16 %v1727
        %v1829 = vunpack.c.h.b16 %v1727
        %v1830 = vunpack.c.l.b16 %v1728
        %v1831 = vunpack.c.h.b16 %v1728
        %v1832 = vunpack.c.l.b16 %v1729
        %v1833 = vunpack.c.h.b16 %v1729
        %v1834 = vunpack.c.l.b16 %v1730
        %v1835 = vunpack.c.h.b16 %v1730
        %v1836 = vunpack.c.l.b16 %v1731
        %v1837 = vunpack.c.h.b16 %v1731
        %v1838 = vunpack.c.l.b16 %v1732
        %v1839 = vunpack.c.h.b16 %v1732
        %v1840 = vunpack.c.l.b16 %v1733
        %v1841 = vunpack.c.h.b16 %v1733
        %v1842 = vunpack.c.l.b16 %v1734
        %v1843 = vunpack.c.h.b16 %v1734
        %v1844 = vunpack.c.l.b16 %v1735
        %v1845 = vunpack.c.h.b16 %v1735
        %v1846 = vunpack.c.l.b16 %v1736
        %v1847 = vunpack.c.h.b16 %v1736
        %v1848 = vunpack.c.l.b16 %v1737
        %v1849 = vunpack.c.h.b16 %v1737
        %v1850 = vunpack.c.l.b16 %v1738
        %v1851 = vunpack.c.h.b16 %v1738
        %v1852 = vunpack.c.l.b16 %v1739
        %v1853 = vunpack.c.h.b16 %v1739
        %v1854 = vunpack.c.l.b16 %v1740
        %v1855 = vunpack.c.h.b16 %v1740
        %v1856 = vunpack.c.l.b16 %v1741
        %v1857 = vunpack.c.h.b16 %v1741
        %v1858 = vunpack.c.l.b16 %v1742
        %v1859 = vunpack.c.h.b16 %v1742
        %v1860 = vunpack.c.l.b16 %v1743
        %v1861 = vunpack.c.h.b16 %v1743
        %v1862 = vpack.c.b16 %v1802, %v1798
        %v1863 = vpack.c.b16 %v1803, %v1799
        %v1864 = vpack.c.b16 %v1804, %v1800
        %v1865 = vpack.c.b16 %v1805, %v1801
        %v1866 = vpack.c.b16 %v1810, %v1806
        %v1867 = vpack.c.b16 %v1811, %v1807
        %v1868 = vpack.c.b16 %v1812, %v1808
        %v1869 = vpack.c.b16 %v1813, %v1809
        %v1870 = vpack.c.b16 %v1818, %v1814
        %v1871 = vpack.c.b16 %v1819, %v1815
        %v1872 = vpack.c.b16 %v1820, %v1816
        %v1873 = vpack.c.b16 %v1821, %v1817
        %v1874 = vpack.c.b16 %v1826, %v1822
        %v1875 = vpack.c.b16 %v1827, %v1823
        %v1876 = vpack.c.b16 %v1828, %v1824
        %v1877 = vpack.c.b16 %v1829, %v1825
        %v1878 = vpack.c.b16 %v1834, %v1830
        %v1879 = vpack.c.b16 %v1835, %v1831
        %v1880 = vpack.c.b16 %v1836, %v1832
        %v1881 = vpack.c.b16 %v1837, %v1833
        %v1882 = vpack.c.b16 %v1842, %v1838
        %v1883 = vpack.c.b16 %v1843, %v1839
        %v1884 = vpack.c.b16 %v1844, %v1840
        %v1885 = vpack.c.b16 %v1845, %v1841
        %v1886 = vpack.c.b16 %v1850, %v1846
        %v1887 = vpack.c.b16 %v1851, %v1847
        %v1888 = vpack.c.b16 %v1852, %v1848
        %v1889 = vpack.c.b16 %v1853, %v1849
        %v1890 = vpack.c.b16 %v1858, %v1854
        %v1891 = vpack.c.b16 %v1859, %v1855
        %v1892 = vpack.c.b16 %v1860, %v1856
        %v1893 = vpack.c.b16 %v1861, %v1857
        %1926 = vmatprep.subr.bf16.mxu0 %v1863
        %1927 = vmatpush1.bf16.msra.mxu0 %v1862
        %1928 = vmatprep.subr.bf16.mxu0 %v1867
        %1929 = vmatpush1.bf16.msra.mxu0 %v1866
        %1930 = vmatprep.subr.bf16.mxu0 %v1871
        %1931 = vmatpush1.bf16.msra.mxu0 %v1870
        %1932 = vmatprep.subr.bf16.mxu0 %v1875
        %1933 = vmatpush1.bf16.msra.mxu0 %v1874
        %1934 = vmatprep.subr.bf16.mxu0 %v1879
        %1935 = vmatpush1.bf16.msra.mxu0 %v1878
        %1936 = vmatprep.subr.bf16.mxu0 %v1883
        %1937 = vmatpush1.bf16.msra.mxu0 %v1882
        %1938 = vmatprep.subr.bf16.mxu0 %v1887
        %1939 = vmatpush1.bf16.msra.mxu0 %v1886
        %1940 = vmatprep.subr.bf16.mxu0 %v1891
        %1941 = vmatpush1.bf16.msra.mxu0 %v1890
        %1942 = vmatprep.subr.bf16.mxu0 0
        %1943 = vmatpush1.bf16.msra.mxu0 0
        %1944 = vmatprep.subr.bf16.mxu0 0
        %1945 = vmatpush1.bf16.msra.mxu0 0
        %1946 = vmatprep.subr.bf16.mxu0 0
        %1947 = vmatpush1.bf16.msra.mxu0 0
        %1948 = vmatprep.subr.bf16.mxu0 0
        %1949 = vmatpush1.bf16.msra.mxu0 0
        %1950 = vmatprep.subr.bf16.mxu0 0
        %1951 = vmatpush1.bf16.msra.mxu0 0
        %1952 = vmatprep.subr.bf16.mxu0 0
        %1953 = vmatpush1.bf16.msra.mxu0 0
        %1954 = vmatprep.subr.bf16.mxu0 0
        %1955 = vmatpush1.bf16.msra.mxu0 0
        %1956 = vmatprep.subr.bf16.mxu0 0
        %1957 = vmatpush1.bf16.msra.mxu0 0
        %1958 = vmatprep.mubr.bf16.mxu0 0
        %1959 = vmatmul.mubr.bf16.gmra.mrb[0].mxu0 %v1711
        %v1960 = vpop.f32.mrb[0].mxu0
        %v1961 = vadd.f32 %v1749, %v1960
        %v1962 = vpop.f32.mrb[0].mxu0
        %v1963 = vadd.f32 %v1753, %v1962
        %v1964 = vpop.f32.mrb[0].mxu0
        %v1965 = vadd.f32 %v1749, %v1964
        %v1966 = vpop.f32.mrb[0].mxu0
        %v1967 = vadd.f32 %v1753, %v1966
        %1968 = vdwg.mxu0
        %1969 = vmatprep.subr.bf16.mxu0 %v1865
        %1970 = vmatpush1.bf16.msra.mxu0 %v1864
        %1971 = vmatprep.subr.bf16.mxu0 %v1869
        %1972 = vmatpush1.bf16.msra.mxu0 %v1868
        %1973 = vmatprep.subr.bf16.mxu0 %v1873
        %1974 = vmatpush1.bf16.msra.mxu0 %v1872
        %1975 = vmatprep.subr.bf16.mxu0 %v1877
        %1976 = vmatpush1.bf16.msra.mxu0 %v1876
        %1977 = vmatprep.subr.bf16.mxu0 %v1881
        %1978 = vmatpush1.bf16.msra.mxu0 %v1880
        %1979 = vmatprep.subr.bf16.mxu0 %v1885
        %1980 = vmatpush1.bf16.msra.mxu0 %v1884
        %1981 = vmatprep.subr.bf16.mxu0 %v1889
        %1982 = vmatpush1.bf16.msra.mxu0 %v1888
        %1983 = vmatprep.subr.bf16.mxu0 %v1893
        %1984 = vmatpush1.bf16.msra.mxu0 %v1892
        %1985 = vmatprep.subr.bf16.mxu0 0
        %1986 = vmatpush1.bf16.msra.mxu0 0
        %1987 = vmatprep.subr.bf16.mxu0 0
        %1988 = vmatpush1.bf16.msra.mxu0 0
        %1989 = vmatprep.subr.bf16.mxu0 0
        %1990 = vmatpush1.bf16.msra.mxu0 0
        %1991 = vmatprep.subr.bf16.mxu0 0
        %1992 = vmatpush1.bf16.msra.mxu0 0
        %1993 = vmatprep.subr.bf16.mxu0 0
        %1994 = vmatpush1.bf16.msra.mxu0 0
        %1995 = vmatprep.subr.bf16.mxu0 0
        %1996 = vmatpush1.bf16.msra.mxu0 0
        %1997 = vmatprep.subr.bf16.mxu0 0
        %1998 = vmatpush1.bf16.msra.mxu0 0
        %1999 = vmatprep.subr.bf16.mxu0 0
        %2000 = vmatpush1.bf16.msra.mxu0 0
        %2001 = vmatprep.mubr.bf16.mxu0 0
        %2002 = vmatmul.mubr.bf16.gmra.mrb[0].mxu0 %v1711
        %v2003 = vpop.f32.mrb[0].mxu0
        %v2004 = vadd.f32 %v1757, %v2003
        %v2005 = vpop.f32.mrb[0].mxu0
        %v2006 = vadd.f32 %v1761, %v2005
        %v2007 = vpop.f32.mrb[0].mxu0
        %v2008 = vadd.f32 %v1757, %v2007
        %v2009 = vpop.f32.mrb[0].mxu0
        %v2010 = vadd.f32 %v1761, %v2009
        %2011 = vdwg.mxu0
        %v2012 = vmax.f32 %v1961, 0.0
        %v2013 = vmax.f32 %v1963, 0.0
        %v2014 = vmax.f32 %v2004, 0.0
        %v2015 = vmax.f32 %v2006, 0.0
        %v2016 = vmax.f32 %v1965, 0.0
        %v2017 = vmax.f32 %v1967, 0.0
        %v2018 = vmax.f32 %v2008, 0.0
        %v2019 = vmax.f32 %v2010, 0.0
        %v2020 = vpack.c.bf16 %v2016, %v2012
        %v2021 = vpack.c.bf16 %v2017, %v2013
        %v2022 = vpack.c.bf16 %v2018, %v2014
        %v2023 = vpack.c.bf16 %v2019, %v2015
        %v2024 = vld [vmem:[#allocation22] sm:$0xf]
        %v2025 = vld [vmem:[#allocation22 + $0x4] sm:$0xf]
        %v2026 = vld [vmem:[#allocation22 + $0x8] sm:$0xf]
        %v2027 = vld [vmem:[#allocation22 + $0xc] sm:$0xf]
        %v2028 = vld [vmem:[#allocation22 + $0x10] sm:$0xf]
        %v2029 = vld [vmem:[#allocation22 + $0x14] sm:$0xf]
        %v2030 = vld [vmem:[#allocation22 + $0x18] sm:$0xf]
        %v2031 = vld [vmem:[#allocation22 + $0x1c] sm:$0xf]
        %v2032 = vld [vmem:[#allocation22 + $0x20] sm:$0xf]
        %v2033 = vld [vmem:[#allocation22 + $0x24] sm:$0xf]
        %v2034 = vld [vmem:[#allocation22 + $0x28] sm:$0xf]
        %v2035 = vld [vmem:[#allocation22 + $0x2c] sm:$0xf]
        %v2036 = vld [vmem:[#allocation22 + $0x30] sm:$0xf]
        %v2037 = vld [vmem:[#allocation22 + $0x34] sm:$0xf]
        %v2038 = vld [vmem:[#allocation22 + $0x38] sm:$0xf]
        %v2039 = vld [vmem:[#allocation22 + $0x3c] sm:$0xf]
        %v2040 = vld [vmem:[#allocation22 + $0x40] sm:$0xf]
        %v2041 = vld [vmem:[#allocation22 + $0x44] sm:$0xf]
        %v2042 = vld [vmem:[#allocation22 + $0x48] sm:$0xf]
        %v2043 = vld [vmem:[#allocation22 + $0x4c] sm:$0xf]
        %v2044 = vld [vmem:[#allocation22 + $0x50] sm:$0xf]
        %v2045 = vld [vmem:[#allocation22 + $0x54] sm:$0xf]
        %v2046 = vld [vmem:[#allocation22 + $0x58] sm:$0xf]
        %v2047 = vld [vmem:[#allocation22 + $0x5c] sm:$0xf]
        %v2048 = vld [vmem:[#allocation22 + $0x60] sm:$0xf]
        %v2049 = vld [vmem:[#allocation22 + $0x64] sm:$0xf]
        %v2050 = vld [vmem:[#allocation22 + $0x68] sm:$0xf]
        %v2051 = vld [vmem:[#allocation22 + $0x6c] sm:$0xf]
        %v2052 = vld [vmem:[#allocation22 + $0x70] sm:$0xf]
        %v2053 = vld [vmem:[#allocation22 + $0x74] sm:$0xf]
        %v2054 = vld [vmem:[#allocation22 + $0x78] sm:$0xf]
        %v2055 = vld [vmem:[#allocation22 + $0x7c] sm:$0xf]
        %v2056 = vld [vmem:[#allocation22 + $0x80] sm:$0xf]
        %v2057 = vld [vmem:[#allocation22 + $0x84] sm:$0xf]
        %v2058 = vld [vmem:[#allocation22 + $0x88] sm:$0xf]
        %v2059 = vld [vmem:[#allocation22 + $0x8c] sm:$0xf]
        %v2060 = vld [vmem:[#allocation22 + $0x90] sm:$0xf]
        %v2061 = vld [vmem:[#allocation22 + $0x94] sm:$0xf]
        %v2062 = vld [vmem:[#allocation22 + $0x98] sm:$0xf]
        %v2063 = vld [vmem:[#allocation22 + $0x9c] sm:$0xf]
        %v2064 = vld [vmem:[#allocation22 + $0xa0] sm:$0xf]
        %v2065 = vld [vmem:[#allocation22 + $0xa4] sm:$0xf]
        %v2066 = vld [vmem:[#allocation22 + $0xa8] sm:$0xf]
        %v2067 = vld [vmem:[#allocation22 + $0xac] sm:$0xf]
        %v2068 = vld [vmem:[#allocation22 + $0xb0] sm:$0xf]
        %v2069 = vld [vmem:[#allocation22 + $0xb4] sm:$0xf]
        %v2070 = vld [vmem:[#allocation22 + $0xb8] sm:$0xf]
        %v2071 = vld [vmem:[#allocation22 + $0xbc] sm:$0xf]
        %v2072 = vld [vmem:[#allocation22 + $0xc0] sm:$0xf]
        %v2073 = vld [vmem:[#allocation22 + $0xc4] sm:$0xf]
        %v2074 = vld [vmem:[#allocation22 + $0xc8] sm:$0xf]
        %v2075 = vld [vmem:[#allocation22 + $0xcc] sm:$0xf]
        %v2076 = vld [vmem:[#allocation22 + $0xd0] sm:$0xf]
        %v2077 = vld [vmem:[#allocation22 + $0xd4] sm:$0xf]
        %v2078 = vld [vmem:[#allocation22 + $0xd8] sm:$0xf]
        %v2079 = vld [vmem:[#allocation22 + $0xdc] sm:$0xf]
        %v2080 = vld [vmem:[#allocation22 + $0xe0] sm:$0xf]
        %v2081 = vld [vmem:[#allocation22 + $0xe4] sm:$0xf]
        %v2082 = vld [vmem:[#allocation22 + $0xe8] sm:$0xf]
        %v2083 = vld [vmem:[#allocation22 + $0xec] sm:$0xf]
        %v2084 = vld [vmem:[#allocation22 + $0xf0] sm:$0xf]
        %v2085 = vld [vmem:[#allocation22 + $0xf4] sm:$0xf]
        %v2086 = vld [vmem:[#allocation22 + $0xf8] sm:$0xf]
        %v2087 = vld [vmem:[#allocation22 + $0xfc] sm:$0xf]
        %v2088 = vld [vmem:[#allocation19 + $0x10] sm:$0xff]
        %v2089 = vld [vmem:[#allocation19 + $0x18] sm:$0xff]
        %v2090 = vld [vmem:[#allocation19 + $0x50] sm:$0xff]
        %v2091 = vld [vmem:[#allocation19 + $0x58] sm:$0xff]
        %v2092 = vld [vmem:[#allocation19 + $0x90] sm:$0xff]
        %v2093 = vld [vmem:[#allocation19 + $0x98] sm:$0xff]
        %v2094 = vld [vmem:[#allocation19 + $0xd0] sm:$0xff]
        %v2095 = vld [vmem:[#allocation19 + $0xd8] sm:$0xff]
        %v2096 = vld [vmem:[#allocation19 + $0x110] sm:$0xff]
        %v2097 = vld [vmem:[#allocation19 + $0x118] sm:$0xff]
        %v2098 = vld [vmem:[#allocation19 + $0x150] sm:$0xff]
        %v2099 = vld [vmem:[#allocation19 + $0x158] sm:$0xff]
        %v2100 = vld [vmem:[#allocation19 + $0x190] sm:$0xff]
        %v2101 = vld [vmem:[#allocation19 + $0x198] sm:$0xff]
        %v2102 = vld [vmem:[#allocation19 + $0x1d0] sm:$0xff]
        %v2103 = vld [vmem:[#allocation19 + $0x1d8] sm:$0xff]
        %v2104 = vld [vmem:[#allocation19 + $0x210] sm:$0xff]
        %v2105 = vld [vmem:[#allocation19 + $0x218] sm:$0xff]
        %v2106 = vld [vmem:[#allocation19 + $0x250] sm:$0xff]
        %v2107 = vld [vmem:[#allocation19 + $0x258] sm:$0xff]
        %v2108 = vld [vmem:[#allocation19 + $0x290] sm:$0xff]
        %v2109 = vld [vmem:[#allocation19 + $0x298] sm:$0xff]
        %v2110 = vld [vmem:[#allocation19 + $0x2d0] sm:$0xff]
        %v2111 = vld [vmem:[#allocation19 + $0x2d8] sm:$0xff]
        %v2112 = vld [vmem:[#allocation19 + $0x310] sm:$0xff]
        %v2113 = vld [vmem:[#allocation19 + $0x318] sm:$0xff]
        %v2114 = vld [vmem:[#allocation19 + $0x350] sm:$0xff]
        %v2115 = vld [vmem:[#allocation19 + $0x358] sm:$0xff]
        %v2116 = vld [vmem:[#allocation19 + $0x390] sm:$0xff]
        %v2117 = vld [vmem:[#allocation19 + $0x398] sm:$0xff]
        %v2118 = vld [vmem:[#allocation19 + $0x3d0] sm:$0xff]
        %v2119 = vld [vmem:[#allocation19 + $0x3d8] sm:$0xff]
        %v2120 = vld [vmem:[#allocation21 + $0x4] sm:$0xf]
        %v2122 = vlaneseq
        %v2123 = vshrl.u32 %v2122, 7
        %v2124 = vsub.s32 0, %v2123
        %v2125 = vrot.slane %v2120, %v2124
        %v2126 = vlaneseq
        %v2127 = vshrl.u32 %v2126, 7
        %v2128 = vsub.s32 1, %v2127
        %v2129 = vrot.slane %v2120, %v2128
        %v2130 = vlaneseq
        %v2131 = vshrl.u32 %v2130, 7
        %v2132 = vsub.s32 2, %v2131
        %v2133 = vrot.slane %v2120, %v2132
        %v2134 = vlaneseq
        %v2135 = vshrl.u32 %v2134, 7
        %v2136 = vsub.s32 3, %v2135
        %v2137 = vrot.slane %v2120, %v2136
        %v2174 = vunpack.c.l.b16 %v2088
        %v2175 = vunpack.c.h.b16 %v2088
        %v2176 = vunpack.c.l.b16 %v2089
        %v2177 = vunpack.c.h.b16 %v2089
        %v2178 = vunpack.c.l.b16 %v2090
        %v2179 = vunpack.c.h.b16 %v2090
        %v2180 = vunpack.c.l.b16 %v2091
        %v2181 = vunpack.c.h.b16 %v2091
        %v2182 = vunpack.c.l.b16 %v2092
        %v2183 = vunpack.c.h.b16 %v2092
        %v2184 = vunpack.c.l.b16 %v2093
        %v2185 = vunpack.c.h.b16 %v2093
        %v2186 = vunpack.c.l.b16 %v2094
        %v2187 = vunpack.c.h.b16 %v2094
        %v2188 = vunpack.c.l.b16 %v2095
        %v2189 = vunpack.c.h.b16 %v2095
        %v2190 = vunpack.c.l.b16 %v2096
        %v2191 = vunpack.c.h.b16 %v2096
        %v2192 = vunpack.c.l.b16 %v2097
        %v2193 = vunpack.c.h.b16 %v2097
        %v2194 = vunpack.c.l.b16 %v2098
        %v2195 = vunpack.c.h.b16 %v2098
        %v2196 = vunpack.c.l.b16 %v2099
        %v2197 = vunpack.c.h.b16 %v2099
        %v2198 = vunpack.c.l.b16 %v2100
        %v2199 = vunpack.c.h.b16 %v2100
        %v2200 = vunpack.c.l.b16 %v2101
        %v2201 = vunpack.c.h.b16 %v2101
        %v2202 = vunpack.c.l.b16 %v2102
        %v2203 = vunpack.c.h.b16 %v2102
        %v2204 = vunpack.c.l.b16 %v2103
        %v2205 = vunpack.c.h.b16 %v2103
        %v2206 = vunpack.c.l.b16 %v2104
        %v2207 = vunpack.c.h.b16 %v2104
        %v2208 = vunpack.c.l.b16 %v2105
        %v2209 = vunpack.c.h.b16 %v2105
        %v2210 = vunpack.c.l.b16 %v2106
        %v2211 = vunpack.c.h.b16 %v2106
        %v2212 = vunpack.c.l.b16 %v2107
        %v2213 = vunpack.c.h.b16 %v2107
        %v2214 = vunpack.c.l.b16 %v2108
        %v2215 = vunpack.c.h.b16 %v2108
        %v2216 = vunpack.c.l.b16 %v2109
        %v2217 = vunpack.c.h.b16 %v2109
        %v2218 = vunpack.c.l.b16 %v2110
        %v2219 = vunpack.c.h.b16 %v2110
        %v2220 = vunpack.c.l.b16 %v2111
        %v2221 = vunpack.c.h.b16 %v2111
        %v2222 = vunpack.c.l.b16 %v2112
        %v2223 = vunpack.c.h.b16 %v2112
        %v2224 = vunpack.c.l.b16 %v2113
        %v2225 = vunpack.c.h.b16 %v2113
        %v2226 = vunpack.c.l.b16 %v2114
        %v2227 = vunpack.c.h.b16 %v2114
        %v2228 = vunpack.c.l.b16 %v2115
        %v2229 = vunpack.c.h.b16 %v2115
        %v2230 = vunpack.c.l.b16 %v2116
        %v2231 = vunpack.c.h.b16 %v2116
        %v2232 = vunpack.c.l.b16 %v2117
        %v2233 = vunpack.c.h.b16 %v2117
        %v2234 = vunpack.c.l.b16 %v2118
        %v2235 = vunpack.c.h.b16 %v2118
        %v2236 = vunpack.c.l.b16 %v2119
        %v2237 = vunpack.c.h.b16 %v2119
        %v2238 = vpack.c.b16 %v2178, %v2174
        %v2239 = vpack.c.b16 %v2179, %v2175
        %v2240 = vpack.c.b16 %v2180, %v2176
        %v2241 = vpack.c.b16 %v2181, %v2177
        %v2242 = vpack.c.b16 %v2186, %v2182
        %v2243 = vpack.c.b16 %v2187, %v2183
        %v2244 = vpack.c.b16 %v2188, %v2184
        %v2245 = vpack.c.b16 %v2189, %v2185
        %v2246 = vpack.c.b16 %v2194, %v2190
        %v2247 = vpack.c.b16 %v2195, %v2191
        %v2248 = vpack.c.b16 %v2196, %v2192
        %v2249 = vpack.c.b16 %v2197, %v2193
        %v2250 = vpack.c.b16 %v2202, %v2198
        %v2251 = vpack.c.b16 %v2203, %v2199
        %v2252 = vpack.c.b16 %v2204, %v2200
        %v2253 = vpack.c.b16 %v2205, %v2201
        %v2254 = vpack.c.b16 %v2210, %v2206
        %v2255 = vpack.c.b16 %v2211, %v2207
        %v2256 = vpack.c.b16 %v2212, %v2208
        %v2257 = vpack.c.b16 %v2213, %v2209
        %v2258 = vpack.c.b16 %v2218, %v2214
        %v2259 = vpack.c.b16 %v2219, %v2215
        %v2260 = vpack.c.b16 %v2220, %v2216
        %v2261 = vpack.c.b16 %v2221, %v2217
        %v2262 = vpack.c.b16 %v2226, %v2222
        %v2263 = vpack.c.b16 %v2227, %v2223
        %v2264 = vpack.c.b16 %v2228, %v2224
        %v2265 = vpack.c.b16 %v2229, %v2225
        %v2266 = vpack.c.b16 %v2234, %v2230
        %v2267 = vpack.c.b16 %v2235, %v2231
        %v2268 = vpack.c.b16 %v2236, %v2232
        %v2269 = vpack.c.b16 %v2237, %v2233
        %2302 = vmatprep.subr.bf16.mxu0 %v2239
        %2303 = vmatpush1.bf16.msra.mxu0 %v2238
        %2304 = vmatprep.subr.bf16.mxu0 %v2243
        %2305 = vmatpush1.bf16.msra.mxu0 %v2242
        %2306 = vmatprep.subr.bf16.mxu0 %v2247
        %2307 = vmatpush1.bf16.msra.mxu0 %v2246
        %2308 = vmatprep.subr.bf16.mxu0 %v2251
        %2309 = vmatpush1.bf16.msra.mxu0 %v2250
        %2310 = vmatprep.subr.bf16.mxu0 %v2255
        %2311 = vmatpush1.bf16.msra.mxu0 %v2254
        %2312 = vmatprep.subr.bf16.mxu0 %v2259
        %2313 = vmatpush1.bf16.msra.mxu0 %v2258
        %2314 = vmatprep.subr.bf16.mxu0 %v2263
        %2315 = vmatpush1.bf16.msra.mxu0 %v2262
        %2316 = vmatprep.subr.bf16.mxu0 %v2267
        %2317 = vmatpush1.bf16.msra.mxu0 %v2266
        %2318 = vmatprep.subr.bf16.mxu0 0
        %2319 = vmatpush1.bf16.msra.mxu0 0
        %2320 = vmatprep.subr.bf16.mxu0 0
        %2321 = vmatpush1.bf16.msra.mxu0 0
        %2322 = vmatprep.subr.bf16.mxu0 0
        %2323 = vmatpush1.bf16.msra.mxu0 0
        %2324 = vmatprep.subr.bf16.mxu0 0
        %2325 = vmatpush1.bf16.msra.mxu0 0
        %2326 = vmatprep.subr.bf16.mxu0 0
        %2327 = vmatpush1.bf16.msra.mxu0 0
        %2328 = vmatprep.subr.bf16.mxu0 0
        %2329 = vmatpush1.bf16.msra.mxu0 0
        %2330 = vmatprep.subr.bf16.mxu0 0
        %2331 = vmatpush1.bf16.msra.mxu0 0
        %2332 = vmatprep.subr.bf16.mxu0 0
        %2333 = vmatpush1.bf16.msra.mxu0 0
        %2334 = vmatprep.mubr.bf16.mxu0 0
        %2335 = vmatmul.mubr.bf16.gmra.mrb[0].mxu0 %v1711
        %v2336 = vpop.f32.mrb[0].mxu0
        %v2337 = vadd.f32 %v2125, %v2336
        %v2338 = vpop.f32.mrb[0].mxu0
        %v2339 = vadd.f32 %v2129, %v2338
        %v2340 = vpop.f32.mrb[0].mxu0
        %v2341 = vadd.f32 %v2125, %v2340
        %v2342 = vpop.f32.mrb[0].mxu0
        %v2343 = vadd.f32 %v2129, %v2342
        %2344 = vdwg.mxu0
        %2345 = vmatprep.subr.bf16.mxu0 %v2241
        %2346 = vmatpush1.bf16.msra.mxu0 %v2240
        %2347 = vmatprep.subr.bf16.mxu0 %v2245
        %2348 = vmatpush1.bf16.msra.mxu0 %v2244
        %2349 = vmatprep.subr.bf16.mxu0 %v2249
        %2350 = vmatpush1.bf16.msra.mxu0 %v2248
        %2351 = vmatprep.subr.bf16.mxu0 %v2253
        %2352 = vmatpush1.bf16.msra.mxu0 %v2252
        %2353 = vmatprep.subr.bf16.mxu0 %v2257
        %2354 = vmatpush1.bf16.msra.mxu0 %v2256
        %2355 = vmatprep.subr.bf16.mxu0 %v2261
        %2356 = vmatpush1.bf16.msra.mxu0 %v2260
        %2357 = vmatprep.subr.bf16.mxu0 %v2265
        %2358 = vmatpush1.bf16.msra.mxu0 %v2264
        %2359 = vmatprep.subr.bf16.mxu0 %v2269
        %2360 = vmatpush1.bf16.msra.mxu0 %v2268
        %2361 = vmatprep.subr.bf16.mxu0 0
        %2362 = vmatpush1.bf16.msra.mxu0 0
        %2363 = vmatprep.subr.bf16.mxu0 0
        %2364 = vmatpush1.bf16.msra.mxu0 0
        %2365 = vmatprep.subr.bf16.mxu0 0
        %2366 = vmatpush1.bf16.msra.mxu0 0
        %2367 = vmatprep.subr.bf16.mxu0 0
        %2368 = vmatpush1.bf16.msra.mxu0 0
        %2369 = vmatprep.subr.bf16.mxu0 0
        %2370 = vmatpush1.bf16.msra.mxu0 0
        %2371 = vmatprep.subr.bf16.mxu0 0
        %2372 = vmatpush1.bf16.msra.mxu0 0
        %2373 = vmatprep.subr.bf16.mxu0 0
        %2374 = vmatpush1.bf16.msra.mxu0 0
        %2375 = vmatprep.subr.bf16.mxu0 0
        %2376 = vmatpush1.bf16.msra.mxu0 0
        %2377 = vmatprep.mubr.bf16.mxu0 0
        %2378 = vmatmul.mubr.bf16.gmra.mrb[0].mxu0 %v1711
        %v2379 = vpop.f32.mrb[0].mxu0
        %v2380 = vadd.f32 %v2133, %v2379
        %v2381 = vpop.f32.mrb[0].mxu0
        %v2382 = vadd.f32 %v2137, %v2381
        %v2383 = vpop.f32.mrb[0].mxu0
        %v2384 = vadd.f32 %v2133, %v2383
        %v2385 = vpop.f32.mrb[0].mxu0
        %v2386 = vadd.f32 %v2137, %v2385
        %2387 = vdwg.mxu0
        %v2388 = vmax.f32 %v2337, 0.0
        %v2389 = vmax.f32 %v2339, 0.0
        %v2390 = vmax.f32 %v2380, 0.0
        %v2391 = vmax.f32 %v2382, 0.0
        %v2392 = vmax.f32 %v2341, 0.0
        %v2393 = vmax.f32 %v2343, 0.0
        %v2394 = vmax.f32 %v2384, 0.0
        %v2395 = vmax.f32 %v2386, 0.0
        %v2396 = vpack.c.bf16 %v2392, %v2388
        %v2397 = vpack.c.bf16 %v2393, %v2389
        %v2398 = vpack.c.bf16 %v2394, %v2390
        %v2399 = vpack.c.bf16 %v2395, %v2391
        %v2400 = vld [vmem:[#allocation22 + $0x100] sm:$0xf]
        %v2401 = vld [vmem:[#allocation22 + $0x104] sm:$0xf]
        %v2402 = vld [vmem:[#allocation22 + $0x108] sm:$0xf]
        %v2403 = vld [vmem:[#allocation22 + $0x10c] sm:$0xf]
        %v2404 = vld [vmem:[#allocation22 + $0x110] sm:$0xf]
        %v2405 = vld [vmem:[#allocation22 + $0x114] sm:$0xf]
        %v2406 = vld [vmem:[#allocation22 + $0x118] sm:$0xf]
        %v2407 = vld [vmem:[#allocation22 + $0x11c] sm:$0xf]
        %v2408 = vld [vmem:[#allocation22 + $0x120] sm:$0xf]
        %v2409 = vld [vmem:[#allocation22 + $0x124] sm:$0xf]
        %v2410 = vld [vmem:[#allocation22 + $0x128] sm:$0xf]
        %v2411 = vld [vmem:[#allocation22 + $0x12c] sm:$0xf]
        %v2412 = vld [vmem:[#allocation22 + $0x130] sm:$0xf]
        %v2413 = vld [vmem:[#allocation22 + $0x134] sm:$0xf]
        %v2414 = vld [vmem:[#allocation22 + $0x138] sm:$0xf]
        %v2415 = vld [vmem:[#allocation22 + $0x13c] sm:$0xf]
        %v2416 = vld [vmem:[#allocation22 + $0x140] sm:$0xf]
        %v2417 = vld [vmem:[#allocation22 + $0x144] sm:$0xf]
        %v2418 = vld [vmem:[#allocation22 + $0x148] sm:$0xf]
        %v2419 = vld [vmem:[#allocation22 + $0x14c] sm:$0xf]
        %v2420 = vld [vmem:[#allocation22 + $0x150] sm:$0xf]
        %v2421 = vld [vmem:[#allocation22 + $0x154] sm:$0xf]
        %v2422 = vld [vmem:[#allocation22 + $0x158] sm:$0xf]
        %v2423 = vld [vmem:[#allocation22 + $0x15c] sm:$0xf]
        %v2424 = vld [vmem:[#allocation22 + $0x160] sm:$0xf]
        %v2425 = vld [vmem:[#allocation22 + $0x164] sm:$0xf]
        %v2426 = vld [vmem:[#allocation22 + $0x168] sm:$0xf]
        %v2427 = vld [vmem:[#allocation22 + $0x16c] sm:$0xf]
        %v2428 = vld [vmem:[#allocation22 + $0x170] sm:$0xf]
        %v2429 = vld [vmem:[#allocation22 + $0x174] sm:$0xf]
        %v2430 = vld [vmem:[#allocation22 + $0x178] sm:$0xf]
        %v2431 = vld [vmem:[#allocation22 + $0x17c] sm:$0xf]
        %v2432 = vld [vmem:[#allocation22 + $0x180] sm:$0xf]
        %v2433 = vld [vmem:[#allocation22 + $0x184] sm:$0xf]
        %v2434 = vld [vmem:[#allocation22 + $0x188] sm:$0xf]
        %v2435 = vld [vmem:[#allocation22 + $0x18c] sm:$0xf]
        %v2436 = vld [vmem:[#allocation22 + $0x190] sm:$0xf]
        %v2437 = vld [vmem:[#allocation22 + $0x194] sm:$0xf]
        %v2438 = vld [vmem:[#allocation22 + $0x198] sm:$0xf]
        %v2439 = vld [vmem:[#allocation22 + $0x19c] sm:$0xf]
        %v2440 = vld [vmem:[#allocation22 + $0x1a0] sm:$0xf]
        %v2441 = vld [vmem:[#allocation22 + $0x1a4] sm:$0xf]
        %v2442 = vld [vmem:[#allocation22 + $0x1a8] sm:$0xf]
        %v2443 = vld [vmem:[#allocation22 + $0x1ac] sm:$0xf]
        %v2444 = vld [vmem:[#allocation22 + $0x1b0] sm:$0xf]
        %v2445 = vld [vmem:[#allocation22 + $0x1b4] sm:$0xf]
        %v2446 = vld [vmem:[#allocation22 + $0x1b8] sm:$0xf]
        %v2447 = vld [vmem:[#allocation22 + $0x1bc] sm:$0xf]
        %v2448 = vld [vmem:[#allocation22 + $0x1c0] sm:$0xf]
        %v2449 = vld [vmem:[#allocation22 + $0x1c4] sm:$0xf]
        %v2450 = vld [vmem:[#allocation22 + $0x1c8] sm:$0xf]
        %v2451 = vld [vmem:[#allocation22 + $0x1cc] sm:$0xf]
        %v2452 = vld [vmem:[#allocation22 + $0x1d0] sm:$0xf]
        %v2453 = vld [vmem:[#allocation22 + $0x1d4] sm:$0xf]
        %v2454 = vld [vmem:[#allocation22 + $0x1d8] sm:$0xf]
        %v2455 = vld [vmem:[#allocation22 + $0x1dc] sm:$0xf]
        %v2456 = vld [vmem:[#allocation22 + $0x1e0] sm:$0xf]
        %v2457 = vld [vmem:[#allocation22 + $0x1e4] sm:$0xf]
        %v2458 = vld [vmem:[#allocation22 + $0x1e8] sm:$0xf]
        %v2459 = vld [vmem:[#allocation22 + $0x1ec] sm:$0xf]
        %v2460 = vld [vmem:[#allocation22 + $0x1f0] sm:$0xf]
        %v2461 = vld [vmem:[#allocation22 + $0x1f4] sm:$0xf]
        %v2462 = vld [vmem:[#allocation22 + $0x1f8] sm:$0xf]
        %v2463 = vld [vmem:[#allocation22 + $0x1fc] sm:$0xf]
        %v2528 = vunpack.c.l.b16 %v2400
        %v2529 = vunpack.c.l.b16 %v2401
        %v2530 = vunpack.c.l.b16 %v2402
        %v2531 = vunpack.c.l.b16 %v2403
        %v2532 = vunpack.c.l.b16 %v2404
        %v2533 = vunpack.c.l.b16 %v2405
        %v2534 = vunpack.c.l.b16 %v2406
        %v2535 = vunpack.c.l.b16 %v2407
        %v2536 = vunpack.c.l.b16 %v2408
        %v2537 = vunpack.c.l.b16 %v2409
        %v2538 = vunpack.c.l.b16 %v2410
        %v2539 = vunpack.c.l.b16 %v2411
        %v2540 = vunpack.c.l.b16 %v2412
        %v2541 = vunpack.c.l.b16 %v2413
        %v2542 = vunpack.c.l.b16 %v2414
        %v2543 = vunpack.c.l.b16 %v2415
        %v2544 = vunpack.c.l.b16 %v2416
        %v2545 = vunpack.c.l.b16 %v2417
        %v2546 = vunpack.c.l.b16 %v2418
        %v2547 = vunpack.c.l.b16 %v2419
        %v2548 = vunpack.c.l.b16 %v2420
        %v2549 = vunpack.c.l.b16 %v2421
        %v2550 = vunpack.c.l.b16 %v2422
        %v2551 = vunpack.c.l.b16 %v2423
        %v2552 = vunpack.c.l.b16 %v2424
        %v2553 = vunpack.c.l.b16 %v2425
        %v2554 = vunpack.c.l.b16 %v2426
        %v2555 = vunpack.c.l.b16 %v2427
        %v2556 = vunpack.c.l.b16 %v2428
        %v2557 = vunpack.c.l.b16 %v2429
        %v2558 = vunpack.c.l.b16 %v2430
        %v2559 = vunpack.c.l.b16 %v2431
        %v2560 = vunpack.c.l.b16 %v2432
        %v2561 = vunpack.c.l.b16 %v2433
        %v2562 = vunpack.c.l.b16 %v2434
        %v2563 = vunpack.c.l.b16 %v2435
        %v2564 = vunpack.c.l.b16 %v2436
        %v2565 = vunpack.c.l.b16 %v2437
        %v2566 = vunpack.c.l.b16 %v2438
        %v2567 = vunpack.c.l.b16 %v2439
        %v2568 = vunpack.c.l.b16 %v2440
        %v2569 = vunpack.c.l.b16 %v2441
        %v2570 = vunpack.c.l.b16 %v2442
        %v2571 = vunpack.c.l.b16 %v2443
        %v2572 = vunpack.c.l.b16 %v2444
        %v2573 = vunpack.c.l.b16 %v2445
        %v2574 = vunpack.c.l.b16 %v2446
        %v2575 = vunpack.c.l.b16 %v2447
        %v2576 = vunpack.c.l.b16 %v2448
        %v2577 = vunpack.c.l.b16 %v2449
        %v2578 = vunpack.c.l.b16 %v2450
        %v2579 = vunpack.c.l.b16 %v2451
        %v2580 = vunpack.c.l.b16 %v2452
        %v2581 = vunpack.c.l.b16 %v2453
        %v2582 = vunpack.c.l.b16 %v2454
        %v2583 = vunpack.c.l.b16 %v2455
        %v2584 = vunpack.c.l.b16 %v2456
        %v2585 = vunpack.c.l.b16 %v2457
        %v2586 = vunpack.c.l.b16 %v2458
        %v2587 = vunpack.c.l.b16 %v2459
        %v2588 = vunpack.c.l.b16 %v2460
        %v2589 = vunpack.c.l.b16 %v2461
        %v2590 = vunpack.c.l.b16 %v2462
        %v2591 = vunpack.c.l.b16 %v2463
        %v2592 = vpack.c.b16 %v2529, %v2528
        %v2593 = vpack.c.b16 %v2531, %v2530
        %v2594 = vpack.c.b16 %v2533, %v2532
        %v2595 = vpack.c.b16 %v2535, %v2534
        %v2596 = vpack.c.b16 %v2537, %v2536
        %v2597 = vpack.c.b16 %v2539, %v2538
        %v2598 = vpack.c.b16 %v2541, %v2540
        %v2599 = vpack.c.b16 %v2543, %v2542
        %v2600 = vpack.c.b16 %v2545, %v2544
        %v2601 = vpack.c.b16 %v2547, %v2546
        %v2602 = vpack.c.b16 %v2549, %v2548
        %v2603 = vpack.c.b16 %v2551, %v2550
        %v2604 = vpack.c.b16 %v2553, %v2552
        %v2605 = vpack.c.b16 %v2555, %v2554
        %v2606 = vpack.c.b16 %v2557, %v2556
        %v2607 = vpack.c.b16 %v2559, %v2558
        %v2608 = vpack.c.b16 %v2561, %v2560
        %v2609 = vpack.c.b16 %v2563, %v2562
        %v2610 = vpack.c.b16 %v2565, %v2564
        %v2611 = vpack.c.b16 %v2567, %v2566
        %v2612 = vpack.c.b16 %v2569, %v2568
        %v2613 = vpack.c.b16 %v2571, %v2570
        %v2614 = vpack.c.b16 %v2573, %v2572
        %v2615 = vpack.c.b16 %v2575, %v2574
        %v2616 = vpack.c.b16 %v2577, %v2576
        %v2617 = vpack.c.b16 %v2579, %v2578
        %v2618 = vpack.c.b16 %v2581, %v2580
        %v2619 = vpack.c.b16 %v2583, %v2582
        %v2620 = vpack.c.b16 %v2585, %v2584
        %v2621 = vpack.c.b16 %v2587, %v2586
        %v2622 = vpack.c.b16 %v2589, %v2588
        %v2623 = vpack.c.b16 %v2591, %v2590
        %2656 = vmatprep.subr.bf16.mxu0 0
        %2657 = vmatpush1.bf16.msra.mxu0 %v2592
        %2658 = vmatprep.subr.bf16.mxu0 0
        %2659 = vmatpush1.bf16.msra.mxu0 %v2593
        %2660 = vmatprep.subr.bf16.mxu0 0
        %2661 = vmatpush1.bf16.msra.mxu0 %v2594
        %2662 = vmatprep.subr.bf16.mxu0 0
        %2663 = vmatpush1.bf16.msra.mxu0 %v2595
        %2664 = vmatprep.subr.bf16.mxu0 0
        %2665 = vmatpush1.bf16.msra.mxu0 %v2596
        %2666 = vmatprep.subr.bf16.mxu0 0
        %2667 = vmatpush1.bf16.msra.mxu0 %v2597
        %2668 = vmatprep.subr.bf16.mxu0 0
        %2669 = vmatpush1.bf16.msra.mxu0 %v2598
        %2670 = vmatprep.subr.bf16.mxu0 0
        %2671 = vmatpush1.bf16.msra.mxu0 %v2599
        %2672 = vmatprep.subr.bf16.mxu0 0
        %2673 = vmatpush1.bf16.msra.mxu0 %v2600
        %2674 = vmatprep.subr.bf16.mxu0 0
        %2675 = vmatpush1.bf16.msra.mxu0 %v2601
        %2676 = vmatprep.subr.bf16.mxu0 0
        %2677 = vmatpush1.bf16.msra.mxu0 %v2602
        %2678 = vmatprep.subr.bf16.mxu0 0
        %2679 = vmatpush1.bf16.msra.mxu0 %v2603
        %2680 = vmatprep.subr.bf16.mxu0 0
        %2681 = vmatpush1.bf16.msra.mxu0 %v2604
        %2682 = vmatprep.subr.bf16.mxu0 0
        %2683 = vmatpush1.bf16.msra.mxu0 %v2605
        %2684 = vmatprep.subr.bf16.mxu0 0
        %2685 = vmatpush1.bf16.msra.mxu0 %v2606
        %2686 = vmatprep.subr.bf16.mxu0 0
        %2687 = vmatpush1.bf16.msra.mxu0 %v2607
        %2688 = vmatprep.mubr.bf16.mxu0 %v2397
        %2689 = vmatmul.mubr.bf16.gmra.mrb[0].mxu0 %v2396
        %v2690 = vpop.f32.mrb[0].mxu0
        %v2691 = vadd.f32 0.0, %v2690
        %v2692 = vpop.f32.mrb[0].mxu0
        %v2693 = vpop.f32.mrb[0].mxu0
        %v2694 = vadd.f32 0.0, %v2693
        %v2695 = vpop.f32.mrb[0].mxu0
        %2696 = vdwg.mxu0
        %2697 = vmatprep.subr.bf16.mxu0 0
        %2698 = vmatpush1.bf16.msra.mxu0 %v2608
        %2699 = vmatprep.subr.bf16.mxu0 0
        %2700 = vmatpush1.bf16.msra.mxu0 %v2609
        %2701 = vmatprep.subr.bf16.mxu0 0
        %2702 = vmatpush1.bf16.msra.mxu0 %v2610
        %2703 = vmatprep.subr.bf16.mxu0 0
        %2704 = vmatpush1.bf16.msra.mxu0 %v2611
        %2705 = vmatprep.subr.bf16.mxu0 0
        %2706 = vmatpush1.bf16.msra.mxu0 %v2612
        %2707 = vmatprep.subr.bf16.mxu0 0
        %2708 = vmatpush1.bf16.msra.mxu0 %v2613
        %2709 = vmatprep.subr.bf16.mxu0 0
        %2710 = vmatpush1.bf16.msra.mxu0 %v2614
        %2711 = vmatprep.subr.bf16.mxu0 0
        %2712 = vmatpush1.bf16.msra.mxu0 %v2615
        %2713 = vmatprep.subr.bf16.mxu0 0
        %2714 = vmatpush1.bf16.msra.mxu0 %v2616
        %2715 = vmatprep.subr.bf16.mxu0 0
        %2716 = vmatpush1.bf16.msra.mxu0 %v2617
        %2717 = vmatprep.subr.bf16.mxu0 0
        %2718 = vmatpush1.bf16.msra.mxu0 %v2618
        %2719 = vmatprep.subr.bf16.mxu0 0
        %2720 = vmatpush1.bf16.msra.mxu0 %v2619
        %2721 = vmatprep.subr.bf16.mxu0 0
        %2722 = vmatpush1.bf16.msra.mxu0 %v2620
        %2723 = vmatprep.subr.bf16.mxu0 0
        %2724 = vmatpush1.bf16.msra.mxu0 %v2621
        %2725 = vmatprep.subr.bf16.mxu0 0
        %2726 = vmatpush1.bf16.msra.mxu0 %v2622
        %2727 = vmatprep.subr.bf16.mxu0 0
        %2728 = vmatpush1.bf16.msra.mxu0 %v2623
        %2729 = vmatprep.mubr.bf16.mxu0 %v2399
        %2730 = vmatmul.mubr.bf16.gmra.mrb[0].mxu0 %v2398
        %v2731 = vpop.f32.mrb[0].mxu0
        %v2732 = vadd.f32 %v2691, %v2731
        %v2733 = vpop.f32.mrb[0].mxu0
        %v2734 = vpop.f32.mrb[0].mxu0
        %v2735 = vadd.f32 %v2694, %v2734
        %v2736 = vpop.f32.mrb[0].mxu0
        %2737 = vdwg.mxu0
        %v2802 = vunpack.c.l.b16 %v2024
        %v2803 = vunpack.c.l.b16 %v2025
        %v2804 = vunpack.c.l.b16 %v2026
        %v2805 = vunpack.c.l.b16 %v2027
        %v2806 = vunpack.c.l.b16 %v2028
        %v2807 = vunpack.c.l.b16 %v2029
        %v2808 = vunpack.c.l.b16 %v2030
        %v2809 = vunpack.c.l.b16 %v2031
        %v2810 = vunpack.c.l.b16 %v2032
        %v2811 = vunpack.c.l.b16 %v2033
        %v2812 = vunpack.c.l.b16 %v2034
        %v2813 = vunpack.c.l.b16 %v2035
        %v2814 = vunpack.c.l.b16 %v2036
        %v2815 = vunpack.c.l.b16 %v2037
        %v2816 = vunpack.c.l.b16 %v2038
        %v2817 = vunpack.c.l.b16 %v2039
        %v2818 = vunpack.c.l.b16 %v2040
        %v2819 = vunpack.c.l.b16 %v2041
        %v2820 = vunpack.c.l.b16 %v2042
        %v2821 = vunpack.c.l.b16 %v2043
        %v2822 = vunpack.c.l.b16 %v2044
        %v2823 = vunpack.c.l.b16 %v2045
        %v2824 = vunpack.c.l.b16 %v2046
        %v2825 = vunpack.c.l.b16 %v2047
        %v2826 = vunpack.c.l.b16 %v2048
        %v2827 = vunpack.c.l.b16 %v2049
        %v2828 = vunpack.c.l.b16 %v2050
        %v2829 = vunpack.c.l.b16 %v2051
        %v2830 = vunpack.c.l.b16 %v2052
        %v2831 = vunpack.c.l.b16 %v2053
        %v2832 = vunpack.c.l.b16 %v2054
        %v2833 = vunpack.c.l.b16 %v2055
        %v2834 = vunpack.c.l.b16 %v2056
        %v2835 = vunpack.c.l.b16 %v2057
        %v2836 = vunpack.c.l.b16 %v2058
        %v2837 = vunpack.c.l.b16 %v2059
        %v2838 = vunpack.c.l.b16 %v2060
        %v2839 = vunpack.c.l.b16 %v2061
        %v2840 = vunpack.c.l.b16 %v2062
        %v2841 = vunpack.c.l.b16 %v2063
        %v2842 = vunpack.c.l.b16 %v2064
        %v2843 = vunpack.c.l.b16 %v2065
        %v2844 = vunpack.c.l.b16 %v2066
        %v2845 = vunpack.c.l.b16 %v2067
        %v2846 = vunpack.c.l.b16 %v2068
        %v2847 = vunpack.c.l.b16 %v2069
        %v2848 = vunpack.c.l.b16 %v2070
        %v2849 = vunpack.c.l.b16 %v2071
        %v2850 = vunpack.c.l.b16 %v2072
        %v2851 = vunpack.c.l.b16 %v2073
        %v2852 = vunpack.c.l.b16 %v2074
        %v2853 = vunpack.c.l.b16 %v2075
        %v2854 = vunpack.c.l.b16 %v2076
        %v2855 = vunpack.c.l.b16 %v2077
        %v2856 = vunpack.c.l.b16 %v2078
        %v2857 = vunpack.c.l.b16 %v2079
        %v2858 = vunpack.c.l.b16 %v2080
        %v2859 = vunpack.c.l.b16 %v2081
        %v2860 = vunpack.c.l.b16 %v2082
        %v2861 = vunpack.c.l.b16 %v2083
        %v2862 = vunpack.c.l.b16 %v2084
        %v2863 = vunpack.c.l.b16 %v2085
        %v2864 = vunpack.c.l.b16 %v2086
        %v2865 = vunpack.c.l.b16 %v2087
        %v2866 = vpack.c.b16 %v2803, %v2802
        %v2867 = vpack.c.b16 %v2805, %v2804
        %v2868 = vpack.c.b16 %v2807, %v2806
        %v2869 = vpack.c.b16 %v2809, %v2808
        %v2870 = vpack.c.b16 %v2811, %v2810
        %v2871 = vpack.c.b16 %v2813, %v2812
        %v2872 = vpack.c.b16 %v2815, %v2814
        %v2873 = vpack.c.b16 %v2817, %v2816
        %v2874 = vpack.c.b16 %v2819, %v2818
        %v2875 = vpack.c.b16 %v2821, %v2820
        %v2876 = vpack.c.b16 %v2823, %v2822
        %v2877 = vpack.c.b16 %v2825, %v2824
        %v2878 = vpack.c.b16 %v2827, %v2826
        %v2879 = vpack.c.b16 %v2829, %v2828
        %v2880 = vpack.c.b16 %v2831, %v2830
        %v2881 = vpack.c.b16 %v2833, %v2832
        %v2882 = vpack.c.b16 %v2835, %v2834
        %v2883 = vpack.c.b16 %v2837, %v2836
        %v2884 = vpack.c.b16 %v2839, %v2838
        %v2885 = vpack.c.b16 %v2841, %v2840
        %v2886 = vpack.c.b16 %v2843, %v2842
        %v2887 = vpack.c.b16 %v2845, %v2844
        %v2888 = vpack.c.b16 %v2847, %v2846
        %v2889 = vpack.c.b16 %v2849, %v2848
        %v2890 = vpack.c.b16 %v2851, %v2850
        %v2891 = vpack.c.b16 %v2853, %v2852
        %v2892 = vpack.c.b16 %v2855, %v2854
        %v2893 = vpack.c.b16 %v2857, %v2856
        %v2894 = vpack.c.b16 %v2859, %v2858
        %v2895 = vpack.c.b16 %v2861, %v2860
        %v2896 = vpack.c.b16 %v2863, %v2862
        %v2897 = vpack.c.b16 %v2865, %v2864
        %2930 = vmatprep.subr.bf16.mxu0 0
        %2931 = vmatpush1.bf16.msra.mxu0 %v2866
        %2932 = vmatprep.subr.bf16.mxu0 0
        %2933 = vmatpush1.bf16.msra.mxu0 %v2867
        %2934 = vmatprep.subr.bf16.mxu0 0
        %2935 = vmatpush1.bf16.msra.mxu0 %v2868
        %2936 = vmatprep.subr.bf16.mxu0 0
        %2937 = vmatpush1.bf16.msra.mxu0 %v2869
        %2938 = vmatprep.subr.bf16.mxu0 0
        %2939 = vmatpush1.bf16.msra.mxu0 %v2870
        %2940 = vmatprep.subr.bf16.mxu0 0
        %2941 = vmatpush1.bf16.msra.mxu0 %v2871
        %2942 = vmatprep.subr.bf16.mxu0 0
        %2943 = vmatpush1.bf16.msra.mxu0 %v2872
        %2944 = vmatprep.subr.bf16.mxu0 0
        %2945 = vmatpush1.bf16.msra.mxu0 %v2873
        %2946 = vmatprep.subr.bf16.mxu0 0
        %2947 = vmatpush1.bf16.msra.mxu0 %v2874
        %2948 = vmatprep.subr.bf16.mxu0 0
        %2949 = vmatpush1.bf16.msra.mxu0 %v2875
        %2950 = vmatprep.subr.bf16.mxu0 0
        %2951 = vmatpush1.bf16.msra.mxu0 %v2876
        %2952 = vmatprep.subr.bf16.mxu0 0
        %2953 = vmatpush1.bf16.msra.mxu0 %v2877
        %2954 = vmatprep.subr.bf16.mxu0 0
        %2955 = vmatpush1.bf16.msra.mxu0 %v2878
        %2956 = vmatprep.subr.bf16.mxu0 0
        %2957 = vmatpush1.bf16.msra.mxu0 %v2879
        %2958 = vmatprep.subr.bf16.mxu0 0
        %2959 = vmatpush1.bf16.msra.mxu0 %v2880
        %2960 = vmatprep.subr.bf16.mxu0 0
        %2961 = vmatpush1.bf16.msra.mxu0 %v2881
        %2962 = vmatprep.mubr.bf16.mxu0 %v2021
        %2963 = vmatmul.mubr.bf16.gmra.mrb[0].mxu0 %v2020
        %v2964 = vpop.f32.mrb[0].mxu0
        %v2965 = vadd.f32 %v2732, %v2964
        %v2966 = vpop.f32.mrb[0].mxu0
        %v2967 = vpop.f32.mrb[0].mxu0
        %v2968 = vadd.f32 %v2735, %v2967
        %v2969 = vpop.f32.mrb[0].mxu0
        %2970 = vdwg.mxu0
        %2971 = vmatprep.subr.bf16.mxu0 0
        %2972 = vmatpush1.bf16.msra.mxu0 %v2882
        %2973 = vmatprep.subr.bf16.mxu0 0
        %2974 = vmatpush1.bf16.msra.mxu0 %v2883
        %2975 = vmatprep.subr.bf16.mxu0 0
        %2976 = vmatpush1.bf16.msra.mxu0 %v2884
        %2977 = vmatprep.subr.bf16.mxu0 0
        %2978 = vmatpush1.bf16.msra.mxu0 %v2885
        %2979 = vmatprep.subr.bf16.mxu0 0
        %2980 = vmatpush1.bf16.msra.mxu0 %v2886
        %2981 = vmatprep.subr.bf16.mxu0 0
        %2982 = vmatpush1.bf16.msra.mxu0 %v2887
        %2983 = vmatprep.subr.bf16.mxu0 0
        %2984 = vmatpush1.bf16.msra.mxu0 %v2888
        %2985 = vmatprep.subr.bf16.mxu0 0
        %2986 = vmatpush1.bf16.msra.mxu0 %v2889
        %2987 = vmatprep.subr.bf16.mxu0 0
        %2988 = vmatpush1.bf16.msra.mxu0 %v2890
        %2989 = vmatprep.subr.bf16.mxu0 0
        %2990 = vmatpush1.bf16.msra.mxu0 %v2891
        %2991 = vmatprep.subr.bf16.mxu0 0
        %2992 = vmatpush1.bf16.msra.mxu0 %v2892
        %2993 = vmatprep.subr.bf16.mxu0 0
        %2994 = vmatpush1.bf16.msra.mxu0 %v2893
        %2995 = vmatprep.subr.bf16.mxu0 0
        %2996 = vmatpush1.bf16.msra.mxu0 %v2894
        %2997 = vmatprep.subr.bf16.mxu0 0
        %2998 = vmatpush1.bf16.msra.mxu0 %v2895
        %2999 = vmatprep.subr.bf16.mxu0 0
        %3000 = vmatpush1.bf16.msra.mxu0 %v2896
        %3001 = vmatprep.subr.bf16.mxu0 0
        %3002 = vmatpush1.bf16.msra.mxu0 %v2897
        %3003 = vmatprep.mubr.bf16.mxu0 %v2023
        %3004 = vmatmul.mubr.bf16.gmra.mrb[0].mxu0 %v2022
        %v3005 = vpop.f32.mrb[0].mxu0
        %v3006 = vadd.f32 %v2965, %v3005
        %v3007 = vpop.f32.mrb[0].mxu0
        %v3008 = vpop.f32.mrb[0].mxu0
        %v3009 = vadd.f32 %v2968, %v3008
        %v3010 = vpop.f32.mrb[0].mxu0
        %3011 = vdwg.mxu0
        %v3012 = vld [vmem:[#allocation19 + $0x20] sm:$0xff]
        %v3013 = vld [vmem:[#allocation19 + $0x28] sm:$0xff]
        %v3014 = vld [vmem:[#allocation19 + $0x60] sm:$0xff]
        %v3015 = vld [vmem:[#allocation19 + $0x68] sm:$0xff]
        %v3016 = vld [vmem:[#allocation19 + $0xa0] sm:$0xff]
        %v3017 = vld [vmem:[#allocation19 + $0xa8] sm:$0xff]
        %v3018 = vld [vmem:[#allocation19 + $0xe0] sm:$0xff]
        %v3019 = vld [vmem:[#allocation19 + $0xe8] sm:$0xff]
        %v3020 = vld [vmem:[#allocation19 + $0x120] sm:$0xff]
        %v3021 = vld [vmem:[#allocation19 + $0x128] sm:$0xff]
        %v3022 = vld [vmem:[#allocation19 + $0x160] sm:$0xff]
        %v3023 = vld [vmem:[#allocation19 + $0x168] sm:$0xff]
        %v3024 = vld [vmem:[#allocation19 + $0x1a0] sm:$0xff]
        %v3025 = vld [vmem:[#allocation19 + $0x1a8] sm:$0xff]
        %v3026 = vld [vmem:[#allocation19 + $0x1e0] sm:$0xff]
        %v3027 = vld [vmem:[#allocation19 + $0x1e8] sm:$0xff]
        %v3028 = vld [vmem:[#allocation19 + $0x220] sm:$0xff]
        %v3029 = vld [vmem:[#allocation19 + $0x228] sm:$0xff]
        %v3030 = vld [vmem:[#allocation19 + $0x260] sm:$0xff]
        %v3031 = vld [vmem:[#allocation19 + $0x268] sm:$0xff]
        %v3032 = vld [vmem:[#allocation19 + $0x2a0] sm:$0xff]
        %v3033 = vld [vmem:[#allocation19 + $0x2a8] sm:$0xff]
        %v3034 = vld [vmem:[#allocation19 + $0x2e0] sm:$0xff]
        %v3035 = vld [vmem:[#allocation19 + $0x2e8] sm:$0xff]
        %v3036 = vld [vmem:[#allocation19 + $0x320] sm:$0xff]
        %v3037 = vld [vmem:[#allocation19 + $0x328] sm:$0xff]
        %v3038 = vld [vmem:[#allocation19 + $0x360] sm:$0xff]
        %v3039 = vld [vmem:[#allocation19 + $0x368] sm:$0xff]
        %v3040 = vld [vmem:[#allocation19 + $0x3a0] sm:$0xff]
        %v3041 = vld [vmem:[#allocation19 + $0x3a8] sm:$0xff]
        %v3042 = vld [vmem:[#allocation19 + $0x3e0] sm:$0xff]
        %v3043 = vld [vmem:[#allocation19 + $0x3e8] sm:$0xff]
        %v3044 = vld [vmem:[#allocation21 + $0x8] sm:$0xf]
        %v3046 = vlaneseq
        %v3047 = vshrl.u32 %v3046, 7
        %v3048 = vsub.s32 0, %v3047
        %v3049 = vrot.slane %v3044, %v3048
        %v3050 = vlaneseq
        %v3051 = vshrl.u32 %v3050, 7
        %v3052 = vsub.s32 1, %v3051
        %v3053 = vrot.slane %v3044, %v3052
        %v3054 = vlaneseq
        %v3055 = vshrl.u32 %v3054, 7
        %v3056 = vsub.s32 2, %v3055
        %v3057 = vrot.slane %v3044, %v3056
        %v3058 = vlaneseq
        %v3059 = vshrl.u32 %v3058, 7
        %v3060 = vsub.s32 3, %v3059
        %v3061 = vrot.slane %v3044, %v3060
        %v3098 = vunpack.c.l.b16 %v3012
        %v3099 = vunpack.c.h.b16 %v3012
        %v3100 = vunpack.c.l.b16 %v3013
        %v3101 = vunpack.c.h.b16 %v3013
        %v3102 = vunpack.c.l.b16 %v3014
        %v3103 = vunpack.c.h.b16 %v3014
        %v3104 = vunpack.c.l.b16 %v3015
        %v3105 = vunpack.c.h.b16 %v3015
        %v3106 = vunpack.c.l.b16 %v3016
        %v3107 = vunpack.c.h.b16 %v3016
        %v3108 = vunpack.c.l.b16 %v3017
        %v3109 = vunpack.c.h.b16 %v3017
        %v3110 = vunpack.c.l.b16 %v3018
        %v3111 = vunpack.c.h.b16 %v3018
        %v3112 = vunpack.c.l.b16 %v3019
        %v3113 = vunpack.c.h.b16 %v3019
        %v3114 = vunpack.c.l.b16 %v3020
        %v3115 = vunpack.c.h.b16 %v3020
        %v3116 = vunpack.c.l.b16 %v3021
        %v3117 = vunpack.c.h.b16 %v3021
        %v3118 = vunpack.c.l.b16 %v3022
        %v3119 = vunpack.c.h.b16 %v3022
        %v3120 = vunpack.c.l.b16 %v3023
        %v3121 = vunpack.c.h.b16 %v3023
        %v3122 = vunpack.c.l.b16 %v3024
        %v3123 = vunpack.c.h.b16 %v3024
        %v3124 = vunpack.c.l.b16 %v3025
        %v3125 = vunpack.c.h.b16 %v3025
        %v3126 = vunpack.c.l.b16 %v3026
        %v3127 = vunpack.c.h.b16 %v3026
        %v3128 = vunpack.c.l.b16 %v3027
        %v3129 = vunpack.c.h.b16 %v3027
        %v3130 = vunpack.c.l.b16 %v3028
        %v3131 = vunpack.c.h.b16 %v3028
        %v3132 = vunpack.c.l.b16 %v3029
        %v3133 = vunpack.c.h.b16 %v3029
        %v3134 = vunpack.c.l.b16 %v3030
        %v3135 = vunpack.c.h.b16 %v3030
        %v3136 = vunpack.c.l.b16 %v3031
        %v3137 = vunpack.c.h.b16 %v3031
        %v3138 = vunpack.c.l.b16 %v3032
        %v3139 = vunpack.c.h.b16 %v3032
        %v3140 = vunpack.c.l.b16 %v3033
        %v3141 = vunpack.c.h.b16 %v3033
        %v3142 = vunpack.c.l.b16 %v3034
        %v3143 = vunpack.c.h.b16 %v3034
        %v3144 = vunpack.c.l.b16 %v3035
        %v3145 = vunpack.c.h.b16 %v3035
        %v3146 = vunpack.c.l.b16 %v3036
        %v3147 = vunpack.c.h.b16 %v3036
        %v3148 = vunpack.c.l.b16 %v3037
        %v3149 = vunpack.c.h.b16 %v3037
        %v3150 = vunpack.c.l.b16 %v3038
        %v3151 = vunpack.c.h.b16 %v3038
        %v3152 = vunpack.c.l.b16 %v3039
        %v3153 = vunpack.c.h.b16 %v3039
        %v3154 = vunpack.c.l.b16 %v3040
        %v3155 = vunpack.c.h.b16 %v3040
        %v3156 = vunpack.c.l.b16 %v3041
        %v3157 = vunpack.c.h.b16 %v3041
        %v3158 = vunpack.c.l.b16 %v3042
        %v3159 = vunpack.c.h.b16 %v3042
        %v3160 = vunpack.c.l.b16 %v3043
        %v3161 = vunpack.c.h.b16 %v3043
        %v3162 = vpack.c.b16 %v3102, %v3098
        %v3163 = vpack.c.b16 %v3103, %v3099
        %v3164 = vpack.c.b16 %v3104, %v3100
        %v3165 = vpack.c.b16 %v3105, %v3101
        %v3166 = vpack.c.b16 %v3110, %v3106
        %v3167 = vpack.c.b16 %v3111, %v3107
        %v3168 = vpack.c.b16 %v3112, %v3108
        %v3169 = vpack.c.b16 %v3113, %v3109
        %v3170 = vpack.c.b16 %v3118, %v3114
        %v3171 = vpack.c.b16 %v3119, %v3115
        %v3172 = vpack.c.b16 %v3120, %v3116
        %v3173 = vpack.c.b16 %v3121, %v3117
        %v3174 = vpack.c.b16 %v3126, %v3122
        %v3175 = vpack.c.b16 %v3127, %v3123
        %v3176 = vpack.c.b16 %v3128, %v3124
        %v3177 = vpack.c.b16 %v3129, %v3125
        %v3178 = vpack.c.b16 %v3134, %v3130
        %v3179 = vpack.c.b16 %v3135, %v3131
        %v3180 = vpack.c.b16 %v3136, %v3132
        %v3181 = vpack.c.b16 %v3137, %v3133
        %v3182 = vpack.c.b16 %v3142, %v3138
        %v3183 = vpack.c.b16 %v3143, %v3139
        %v3184 = vpack.c.b16 %v3144, %v3140
        %v3185 = vpack.c.b16 %v3145, %v3141
        %v3186 = vpack.c.b16 %v3150, %v3146
        %v3187 = vpack.c.b16 %v3151, %v3147
        %v3188 = vpack.c.b16 %v3152, %v3148
        %v3189 = vpack.c.b16 %v3153, %v3149
        %v3190 = vpack.c.b16 %v3158, %v3154
        %v3191 = vpack.c.b16 %v3159, %v3155
        %v3192 = vpack.c.b16 %v3160, %v3156
        %v3193 = vpack.c.b16 %v3161, %v3157
        %3226 = vmatprep.subr.bf16.mxu0 %v3163
        %3227 = vmatpush1.bf16.msra.mxu0 %v3162
        %3228 = vmatprep.subr.bf16.mxu0 %v3167
        %3229 = vmatpush1.bf16.msra.mxu0 %v3166
        %3230 = vmatprep.subr.bf16.mxu0 %v3171
        %3231 = vmatpush1.bf16.msra.mxu0 %v3170
        %3232 = vmatprep.subr.bf16.mxu0 %v3175
        %3233 = vmatpush1.bf16.msra.mxu0 %v3174
        %3234 = vmatprep.subr.bf16.mxu0 %v3179
        %3235 = vmatpush1.bf16.msra.mxu0 %v3178
        %3236 = vmatprep.subr.bf16.mxu0 %v3183
        %3237 = vmatpush1.bf16.msra.mxu0 %v3182
        %3238 = vmatprep.subr.bf16.mxu0 %v3187
        %3239 = vmatpush1.bf16.msra.mxu0 %v3186
        %3240 = vmatprep.subr.bf16.mxu0 %v3191
        %3241 = vmatpush1.bf16.msra.mxu0 %v3190
        %3242 = vmatprep.subr.bf16.mxu0 0
        %3243 = vmatpush1.bf16.msra.mxu0 0
        %3244 = vmatprep.subr.bf16.mxu0 0
        %3245 = vmatpush1.bf16.msra.mxu0 0
        %3246 = vmatprep.subr.bf16.mxu0 0
        %3247 = vmatpush1.bf16.msra.mxu0 0
        %3248 = vmatprep.subr.bf16.mxu0 0
        %3249 = vmatpush1.bf16.msra.mxu0 0
        %3250 = vmatprep.subr.bf16.mxu0 0
        %3251 = vmatpush1.bf16.msra.mxu0 0
        %3252 = vmatprep.subr.bf16.mxu0 0
        %3253 = vmatpush1.bf16.msra.mxu0 0
        %3254 = vmatprep.subr.bf16.mxu0 0
        %3255 = vmatpush1.bf16.msra.mxu0 0
        %3256 = vmatprep.subr.bf16.mxu0 0
        %3257 = vmatpush1.bf16.msra.mxu0 0
        %3258 = vmatprep.mubr.bf16.mxu0 0
        %3259 = vmatmul.mubr.bf16.gmra.mrb[0].mxu0 %v1711
        %v3260 = vpop.f32.mrb[0].mxu0
        %v3261 = vadd.f32 %v3049, %v3260
        %v3262 = vpop.f32.mrb[0].mxu0
        %v3263 = vadd.f32 %v3053, %v3262
        %v3264 = vpop.f32.mrb[0].mxu0
        %v3265 = vadd.f32 %v3049, %v3264
        %v3266 = vpop.f32.mrb[0].mxu0
        %v3267 = vadd.f32 %v3053, %v3266
        %3268 = vdwg.mxu0
        %3269 = vmatprep.subr.bf16.mxu0 %v3165
        %3270 = vmatpush1.bf16.msra.mxu0 %v3164
        %3271 = vmatprep.subr.bf16.mxu0 %v3169
        %3272 = vmatpush1.bf16.msra.mxu0 %v3168
        %3273 = vmatprep.subr.bf16.mxu0 %v3173
        %3274 = vmatpush1.bf16.msra.mxu0 %v3172
        %3275 = vmatprep.subr.bf16.mxu0 %v3177
        %3276 = vmatpush1.bf16.msra.mxu0 %v3176
        %3277 = vmatprep.subr.bf16.mxu0 %v3181
        %3278 = vmatpush1.bf16.msra.mxu0 %v3180
        %3279 = vmatprep.subr.bf16.mxu0 %v3185
        %3280 = vmatpush1.bf16.msra.mxu0 %v3184
        %3281 = vmatprep.subr.bf16.mxu0 %v3189
        %3282 = vmatpush1.bf16.msra.mxu0 %v3188
        %3283 = vmatprep.subr.bf16.mxu0 %v3193
        %3284 = vmatpush1.bf16.msra.mxu0 %v3192
        %3285 = vmatprep.subr.bf16.mxu0 0
        %3286 = vmatpush1.bf16.msra.mxu0 0
        %3287 = vmatprep.subr.bf16.mxu0 0
        %3288 = vmatpush1.bf16.msra.mxu0 0
        %3289 = vmatprep.subr.bf16.mxu0 0
        %3290 = vmatpush1.bf16.msra.mxu0 0
        %3291 = vmatprep.subr.bf16.mxu0 0
        %3292 = vmatpush1.bf16.msra.mxu0 0
        %3293 = vmatprep.subr.bf16.mxu0 0
        %3294 = vmatpush1.bf16.msra.mxu0 0
        %3295 = vmatprep.subr.bf16.mxu0 0
        %3296 = vmatpush1.bf16.msra.mxu0 0
        %3297 = vmatprep.subr.bf16.mxu0 0
        %3298 = vmatpush1.bf16.msra.mxu0 0
        %3299 = vmatprep.subr.bf16.mxu0 0
        %3300 = vmatpush1.bf16.msra.mxu0 0
        %3301 = vmatprep.mubr.bf16.mxu0 0
        %3302 = vmatmul.mubr.bf16.gmra.mrb[0].mxu0 %v1711
        %v3303 = vpop.f32.mrb[0].mxu0
        %v3304 = vadd.f32 %v3057, %v3303
        %v3305 = vpop.f32.mrb[0].mxu0
        %v3306 = vadd.f32 %v3061, %v3305
        %v3307 = vpop.f32.mrb[0].mxu0
        %v3308 = vadd.f32 %v3057, %v3307
        %v3309 = vpop.f32.mrb[0].mxu0
        %v3310 = vadd.f32 %v3061, %v3309
        %3311 = vdwg.mxu0
        %v3312 = vmax.f32 %v3261, 0.0
        %v3313 = vmax.f32 %v3263, 0.0
        %v3314 = vmax.f32 %v3304, 0.0
        %v3315 = vmax.f32 %v3306, 0.0
        %v3316 = vmax.f32 %v3265, 0.0
        %v3317 = vmax.f32 %v3267, 0.0
        %v3318 = vmax.f32 %v3308, 0.0
        %v3319 = vmax.f32 %v3310, 0.0
        %v3320 = vpack.c.bf16 %v3316, %v3312
        %v3321 = vpack.c.bf16 %v3317, %v3313
        %v3322 = vpack.c.bf16 %v3318, %v3314
        %v3323 = vpack.c.bf16 %v3319, %v3315
        %v3324 = vld [vmem:[#allocation22 + $0x200] sm:$0xf]
        %v3325 = vld [vmem:[#allocation22 + $0x204] sm:$0xf]
        %v3326 = vld [vmem:[#allocation22 + $0x208] sm:$0xf]
        %v3327 = vld [vmem:[#allocation22 + $0x20c] sm:$0xf]
        %v3328 = vld [vmem:[#allocation22 + $0x210] sm:$0xf]
        %v3329 = vld [vmem:[#allocation22 + $0x214] sm:$0xf]
        %v3330 = vld [vmem:[#allocation22 + $0x218] sm:$0xf]
        %v3331 = vld [vmem:[#allocation22 + $0x21c] sm:$0xf]
        %v3332 = vld [vmem:[#allocation22 + $0x220] sm:$0xf]
        %v3333 = vld [vmem:[#allocation22 + $0x224] sm:$0xf]
        %v3334 = vld [vmem:[#allocation22 + $0x228] sm:$0xf]
        %v3335 = vld [vmem:[#allocation22 + $0x22c] sm:$0xf]
        %v3336 = vld [vmem:[#allocation22 + $0x230] sm:$0xf]
        %v3337 = vld [vmem:[#allocation22 + $0x234] sm:$0xf]
        %v3338 = vld [vmem:[#allocation22 + $0x238] sm:$0xf]
        %v3339 = vld [vmem:[#allocation22 + $0x23c] sm:$0xf]
        %v3340 = vld [vmem:[#allocation22 + $0x240] sm:$0xf]
        %v3341 = vld [vmem:[#allocation22 + $0x244] sm:$0xf]
        %v3342 = vld [vmem:[#allocation22 + $0x248] sm:$0xf]
        %v3343 = vld [vmem:[#allocation22 + $0x24c] sm:$0xf]
        %v3344 = vld [vmem:[#allocation22 + $0x250] sm:$0xf]
        %v3345 = vld [vmem:[#allocation22 + $0x254] sm:$0xf]
        %v3346 = vld [vmem:[#allocation22 + $0x258] sm:$0xf]
        %v3347 = vld [vmem:[#allocation22 + $0x25c] sm:$0xf]
        %v3348 = vld [vmem:[#allocation22 + $0x260] sm:$0xf]
        %v3349 = vld [vmem:[#allocation22 + $0x264] sm:$0xf]
        %v3350 = vld [vmem:[#allocation22 + $0x268] sm:$0xf]
        %v3351 = vld [vmem:[#allocation22 + $0x26c] sm:$0xf]
        %v3352 = vld [vmem:[#allocation22 + $0x270] sm:$0xf]
        %v3353 = vld [vmem:[#allocation22 + $0x274] sm:$0xf]
        %v3354 = vld [vmem:[#allocation22 + $0x278] sm:$0xf]
        %v3355 = vld [vmem:[#allocation22 + $0x27c] sm:$0xf]
        %v3356 = vld [vmem:[#allocation22 + $0x280] sm:$0xf]
        %v3357 = vld [vmem:[#allocation22 + $0x284] sm:$0xf]
        %v3358 = vld [vmem:[#allocation22 + $0x288] sm:$0xf]
        %v3359 = vld [vmem:[#allocation22 + $0x28c] sm:$0xf]
        %v3360 = vld [vmem:[#allocation22 + $0x290] sm:$0xf]
        %v3361 = vld [vmem:[#allocation22 + $0x294] sm:$0xf]
        %v3362 = vld [vmem:[#allocation22 + $0x298] sm:$0xf]
        %v3363 = vld [vmem:[#allocation22 + $0x29c] sm:$0xf]
        %v3364 = vld [vmem:[#allocation22 + $0x2a0] sm:$0xf]
        %v3365 = vld [vmem:[#allocation22 + $0x2a4] sm:$0xf]
        %v3366 = vld [vmem:[#allocation22 + $0x2a8] sm:$0xf]
        %v3367 = vld [vmem:[#allocation22 + $0x2ac] sm:$0xf]
        %v3368 = vld [vmem:[#allocation22 + $0x2b0] sm:$0xf]
        %v3369 = vld [vmem:[#allocation22 + $0x2b4] sm:$0xf]
        %v3370 = vld [vmem:[#allocation22 + $0x2b8] sm:$0xf]
        %v3371 = vld [vmem:[#allocation22 + $0x2bc] sm:$0xf]
        %v3372 = vld [vmem:[#allocation22 + $0x2c0] sm:$0xf]
        %v3373 = vld [vmem:[#allocation22 + $0x2c4] sm:$0xf]
        %v3374 = vld [vmem:[#allocation22 + $0x2c8] sm:$0xf]
        %v3375 = vld [vmem:[#allocation22 + $0x2cc] sm:$0xf]
        %v3376 = vld [vmem:[#allocation22 + $0x2d0] sm:$0xf]
        %v3377 = vld [vmem:[#allocation22 + $0x2d4] sm:$0xf]
        %v3378 = vld [vmem:[#allocation22 + $0x2d8] sm:$0xf]
        %v3379 = vld [vmem:[#allocation22 + $0x2dc] sm:$0xf]
        %v3380 = vld [vmem:[#allocation22 + $0x2e0] sm:$0xf]
        %v3381 = vld [vmem:[#allocation22 + $0x2e4] sm:$0xf]
        %v3382 = vld [vmem:[#allocation22 + $0x2e8] sm:$0xf]
        %v3383 = vld [vmem:[#allocation22 + $0x2ec] sm:$0xf]
        %v3384 = vld [vmem:[#allocation22 + $0x2f0] sm:$0xf]
        %v3385 = vld [vmem:[#allocation22 + $0x2f4] sm:$0xf]
        %v3386 = vld [vmem:[#allocation22 + $0x2f8] sm:$0xf]
        %v3387 = vld [vmem:[#allocation22 + $0x2fc] sm:$0xf]
        %v3452 = vunpack.c.l.b16 %v3324
        %v3453 = vunpack.c.l.b16 %v3325
        %v3454 = vunpack.c.l.b16 %v3326
        %v3455 = vunpack.c.l.b16 %v3327
        %v3456 = vunpack.c.l.b16 %v3328
        %v3457 = vunpack.c.l.b16 %v3329
        %v3458 = vunpack.c.l.b16 %v3330
        %v3459 = vunpack.c.l.b16 %v3331
        %v3460 = vunpack.c.l.b16 %v3332
        %v3461 = vunpack.c.l.b16 %v3333
        %v3462 = vunpack.c.l.b16 %v3334
        %v3463 = vunpack.c.l.b16 %v3335
        %v3464 = vunpack.c.l.b16 %v3336
        %v3465 = vunpack.c.l.b16 %v3337
        %v3466 = vunpack.c.l.b16 %v3338
        %v3467 = vunpack.c.l.b16 %v3339
        %v3468 = vunpack.c.l.b16 %v3340
        %v3469 = vunpack.c.l.b16 %v3341
        %v3470 = vunpack.c.l.b16 %v3342
        %v3471 = vunpack.c.l.b16 %v3343
        %v3472 = vunpack.c.l.b16 %v3344
        %v3473 = vunpack.c.l.b16 %v3345
        %v3474 = vunpack.c.l.b16 %v3346
        %v3475 = vunpack.c.l.b16 %v3347
        %v3476 = vunpack.c.l.b16 %v3348
        %v3477 = vunpack.c.l.b16 %v3349
        %v3478 = vunpack.c.l.b16 %v3350
        %v3479 = vunpack.c.l.b16 %v3351
        %v3480 = vunpack.c.l.b16 %v3352
        %v3481 = vunpack.c.l.b16 %v3353
        %v3482 = vunpack.c.l.b16 %v3354
        %v3483 = vunpack.c.l.b16 %v3355
        %v3484 = vunpack.c.l.b16 %v3356
        %v3485 = vunpack.c.l.b16 %v3357
        %v3486 = vunpack.c.l.b16 %v3358
        %v3487 = vunpack.c.l.b16 %v3359
        %v3488 = vunpack.c.l.b16 %v3360
        %v3489 = vunpack.c.l.b16 %v3361
        %v3490 = vunpack.c.l.b16 %v3362
        %v3491 = vunpack.c.l.b16 %v3363
        %v3492 = vunpack.c.l.b16 %v3364
        %v3493 = vunpack.c.l.b16 %v3365
        %v3494 = vunpack.c.l.b16 %v3366
        %v3495 = vunpack.c.l.b16 %v3367
        %v3496 = vunpack.c.l.b16 %v3368
        %v3497 = vunpack.c.l.b16 %v3369
        %v3498 = vunpack.c.l.b16 %v3370
        %v3499 = vunpack.c.l.b16 %v3371
        %v3500 = vunpack.c.l.b16 %v3372
        %v3501 = vunpack.c.l.b16 %v3373
        %v3502 = vunpack.c.l.b16 %v3374
        %v3503 = vunpack.c.l.b16 %v3375
        %v3504 = vunpack.c.l.b16 %v3376
        %v3505 = vunpack.c.l.b16 %v3377
        %v3506 = vunpack.c.l.b16 %v3378
        %v3507 = vunpack.c.l.b16 %v3379
        %v3508 = vunpack.c.l.b16 %v3380
        %v3509 = vunpack.c.l.b16 %v3381
        %v3510 = vunpack.c.l.b16 %v3382
        %v3511 = vunpack.c.l.b16 %v3383
        %v3512 = vunpack.c.l.b16 %v3384
        %v3513 = vunpack.c.l.b16 %v3385
        %v3514 = vunpack.c.l.b16 %v3386
        %v3515 = vunpack.c.l.b16 %v3387
        %v3516 = vpack.c.b16 %v3453, %v3452
        %v3517 = vpack.c.b16 %v3455, %v3454
        %v3518 = vpack.c.b16 %v3457, %v3456
        %v3519 = vpack.c.b16 %v3459, %v3458
        %v3520 = vpack.c.b16 %v3461, %v3460
        %v3521 = vpack.c.b16 %v3463, %v3462
        %v3522 = vpack.c.b16 %v3465, %v3464
        %v3523 = vpack.c.b16 %v3467, %v3466
        %v3524 = vpack.c.b16 %v3469, %v3468
        %v3525 = vpack.c.b16 %v3471, %v3470
        %v3526 = vpack.c.b16 %v3473, %v3472
        %v3527 = vpack.c.b16 %v3475, %v3474
        %v3528 = vpack.c.b16 %v3477, %v3476
        %v3529 = vpack.c.b16 %v3479, %v3478
        %v3530 = vpack.c.b16 %v3481, %v3480
        %v3531 = vpack.c.b16 %v3483, %v3482
        %v3532 = vpack.c.b16 %v3485, %v3484
        %v3533 = vpack.c.b16 %v3487, %v3486
        %v3534 = vpack.c.b16 %v3489, %v3488
        %v3535 = vpack.c.b16 %v3491, %v3490
        %v3536 = vpack.c.b16 %v3493, %v3492
        %v3537 = vpack.c.b16 %v3495, %v3494
        %v3538 = vpack.c.b16 %v3497, %v3496
        %v3539 = vpack.c.b16 %v3499, %v3498
        %v3540 = vpack.c.b16 %v3501, %v3500
        %v3541 = vpack.c.b16 %v3503, %v3502
        %v3542 = vpack.c.b16 %v3505, %v3504
        %v3543 = vpack.c.b16 %v3507, %v3506
        %v3544 = vpack.c.b16 %v3509, %v3508
        %v3545 = vpack.c.b16 %v3511, %v3510
        %v3546 = vpack.c.b16 %v3513, %v3512
        %v3547 = vpack.c.b16 %v3515, %v3514
        %3580 = vmatprep.subr.bf16.mxu0 0
        %3581 = vmatpush1.bf16.msra.mxu0 %v3516
        %3582 = vmatprep.subr.bf16.mxu0 0
        %3583 = vmatpush1.bf16.msra.mxu0 %v3517
        %3584 = vmatprep.subr.bf16.mxu0 0
        %3585 = vmatpush1.bf16.msra.mxu0 %v3518
        %3586 = vmatprep.subr.bf16.mxu0 0
        %3587 = vmatpush1.bf16.msra.mxu0 %v3519
        %3588 = vmatprep.subr.bf16.mxu0 0
        %3589 = vmatpush1.bf16.msra.mxu0 %v3520
        %3590 = vmatprep.subr.bf16.mxu0 0
        %3591 = vmatpush1.bf16.msra.mxu0 %v3521
        %3592 = vmatprep.subr.bf16.mxu0 0
        %3593 = vmatpush1.bf16.msra.mxu0 %v3522
        %3594 = vmatprep.subr.bf16.mxu0 0
        %3595 = vmatpush1.bf16.msra.mxu0 %v3523
        %3596 = vmatprep.subr.bf16.mxu0 0
        %3597 = vmatpush1.bf16.msra.mxu0 %v3524
        %3598 = vmatprep.subr.bf16.mxu0 0
        %3599 = vmatpush1.bf16.msra.mxu0 %v3525
        %3600 = vmatprep.subr.bf16.mxu0 0
        %3601 = vmatpush1.bf16.msra.mxu0 %v3526
        %3602 = vmatprep.subr.bf16.mxu0 0
        %3603 = vmatpush1.bf16.msra.mxu0 %v3527
        %3604 = vmatprep.subr.bf16.mxu0 0
        %3605 = vmatpush1.bf16.msra.mxu0 %v3528
        %3606 = vmatprep.subr.bf16.mxu0 0
        %3607 = vmatpush1.bf16.msra.mxu0 %v3529
        %3608 = vmatprep.subr.bf16.mxu0 0
        %3609 = vmatpush1.bf16.msra.mxu0 %v3530
        %3610 = vmatprep.subr.bf16.mxu0 0
        %3611 = vmatpush1.bf16.msra.mxu0 %v3531
        %3612 = vmatprep.mubr.bf16.mxu0 %v3321
        %3613 = vmatmul.mubr.bf16.gmra.mrb[0].mxu0 %v3320
        %v3614 = vpop.f32.mrb[0].mxu0
        %v3615 = vadd.f32 0.0, %v3614
        %v3616 = vpop.f32.mrb[0].mxu0
        %v3617 = vpop.f32.mrb[0].mxu0
        %v3618 = vadd.f32 0.0, %v3617
        %v3619 = vpop.f32.mrb[0].mxu0
        %3620 = vdwg.mxu0
        %3621 = vmatprep.subr.bf16.mxu0 0
        %3622 = vmatpush1.bf16.msra.mxu0 %v3532
        %3623 = vmatprep.subr.bf16.mxu0 0
        %3624 = vmatpush1.bf16.msra.mxu0 %v3533
        %3625 = vmatprep.subr.bf16.mxu0 0
        %3626 = vmatpush1.bf16.msra.mxu0 %v3534
        %3627 = vmatprep.subr.bf16.mxu0 0
        %3628 = vmatpush1.bf16.msra.mxu0 %v3535
        %3629 = vmatprep.subr.bf16.mxu0 0
        %3630 = vmatpush1.bf16.msra.mxu0 %v3536
        %3631 = vmatprep.subr.bf16.mxu0 0
        %3632 = vmatpush1.bf16.msra.mxu0 %v3537
        %3633 = vmatprep.subr.bf16.mxu0 0
        %3634 = vmatpush1.bf16.msra.mxu0 %v3538
        %3635 = vmatprep.subr.bf16.mxu0 0
        %3636 = vmatpush1.bf16.msra.mxu0 %v3539
        %3637 = vmatprep.subr.bf16.mxu0 0
        %3638 = vmatpush1.bf16.msra.mxu0 %v3540
        %3639 = vmatprep.subr.bf16.mxu0 0
        %3640 = vmatpush1.bf16.msra.mxu0 %v3541
        %3641 = vmatprep.subr.bf16.mxu0 0
        %3642 = vmatpush1.bf16.msra.mxu0 %v3542
        %3643 = vmatprep.subr.bf16.mxu0 0
        %3644 = vmatpush1.bf16.msra.mxu0 %v3543
        %3645 = vmatprep.subr.bf16.mxu0 0
        %3646 = vmatpush1.bf16.msra.mxu0 %v3544
        %3647 = vmatprep.subr.bf16.mxu0 0
        %3648 = vmatpush1.bf16.msra.mxu0 %v3545
        %3649 = vmatprep.subr.bf16.mxu0 0
        %3650 = vmatpush1.bf16.msra.mxu0 %v3546
        %3651 = vmatprep.subr.bf16.mxu0 0
        %3652 = vmatpush1.bf16.msra.mxu0 %v3547
        %3653 = vmatprep.mubr.bf16.mxu0 %v3323
        %3654 = vmatmul.mubr.bf16.gmra.mrb[0].mxu0 %v3322
        %v3655 = vpop.f32.mrb[0].mxu0
        %v3656 = vadd.f32 %v3615, %v3655
        %v3657 = vpop.f32.mrb[0].mxu0
        %v3658 = vpop.f32.mrb[0].mxu0
        %v3659 = vadd.f32 %v3618, %v3658
        %v3660 = vpop.f32.mrb[0].mxu0
        %3661 = vdwg.mxu0
        %v3662 = vadd.f32 %v3006, %v3656
        %v3663 = vadd.f32 %v3009, %v3659
        %v3664 = vld [vmem:[#allocation19 + $0x30] sm:$0xff]
        %v3665 = vld [vmem:[#allocation19 + $0x38] sm:$0xff]
        %v3666 = vld [vmem:[#allocation19 + $0x70] sm:$0xff]
        %v3667 = vld [vmem:[#allocation19 + $0x78] sm:$0xff]
        %v3668 = vld [vmem:[#allocation19 + $0xb0] sm:$0xff]
        %v3669 = vld [vmem:[#allocation19 + $0xb8] sm:$0xff]
        %v3670 = vld [vmem:[#allocation19 + $0xf0] sm:$0xff]
        %v3671 = vld [vmem:[#allocation19 + $0xf8] sm:$0xff]
        %v3672 = vld [vmem:[#allocation19 + $0x130] sm:$0xff]
        %v3673 = vld [vmem:[#allocation19 + $0x138] sm:$0xff]
        %v3674 = vld [vmem:[#allocation19 + $0x170] sm:$0xff]
        %v3675 = vld [vmem:[#allocation19 + $0x178] sm:$0xff]
        %v3676 = vld [vmem:[#allocation19 + $0x1b0] sm:$0xff]
        %v3677 = vld [vmem:[#allocation19 + $0x1b8] sm:$0xff]
        %v3678 = vld [vmem:[#allocation19 + $0x1f0] sm:$0xff]
        %v3679 = vld [vmem:[#allocation19 + $0x1f8] sm:$0xff]
        %v3680 = vld [vmem:[#allocation19 + $0x230] sm:$0xff]
        %v3681 = vld [vmem:[#allocation19 + $0x238] sm:$0xff]
        %v3682 = vld [vmem:[#allocation19 + $0x270] sm:$0xff]
        %v3683 = vld [vmem:[#allocation19 + $0x278] sm:$0xff]
        %v3684 = vld [vmem:[#allocation19 + $0x2b0] sm:$0xff]
        %v3685 = vld [vmem:[#allocation19 + $0x2b8] sm:$0xff]
        %v3686 = vld [vmem:[#allocation19 + $0x2f0] sm:$0xff]
        %v3687 = vld [vmem:[#allocation19 + $0x2f8] sm:$0xff]
        %v3688 = vld [vmem:[#allocation19 + $0x330] sm:$0xff]
        %v3689 = vld [vmem:[#allocation19 + $0x338] sm:$0xff]
        %v3690 = vld [vmem:[#allocation19 + $0x370] sm:$0xff]
        %v3691 = vld [vmem:[#allocation19 + $0x378] sm:$0xff]
        %v3692 = vld [vmem:[#allocation19 + $0x3b0] sm:$0xff]
        %v3693 = vld [vmem:[#allocation19 + $0x3b8] sm:$0xff]
        %v3694 = vld [vmem:[#allocation19 + $0x3f0] sm:$0xff]
        %v3695 = vld [vmem:[#allocation19 + $0x3f8] sm:$0xff]
        %v3696 = vld [vmem:[#allocation21 + $0xc] sm:$0xf]
        %v3698 = vlaneseq
        %v3699 = vshrl.u32 %v3698, 7
        %v3700 = vsub.s32 0, %v3699
        %v3701 = vrot.slane %v3696, %v3700
        %v3702 = vlaneseq
        %v3703 = vshrl.u32 %v3702, 7
        %v3704 = vsub.s32 1, %v3703
        %v3705 = vrot.slane %v3696, %v3704
        %v3706 = vlaneseq
        %v3707 = vshrl.u32 %v3706, 7
        %v3708 = vsub.s32 2, %v3707
        %v3709 = vrot.slane %v3696, %v3708
        %v3710 = vlaneseq
        %v3711 = vshrl.u32 %v3710, 7
        %v3712 = vsub.s32 3, %v3711
        %v3713 = vrot.slane %v3696, %v3712
        %v3750 = vunpack.c.l.b16 %v3664
        %v3751 = vunpack.c.h.b16 %v3664
        %v3752 = vunpack.c.l.b16 %v3665
        %v3753 = vunpack.c.h.b16 %v3665
        %v3754 = vunpack.c.l.b16 %v3666
        %v3755 = vunpack.c.h.b16 %v3666
        %v3756 = vunpack.c.l.b16 %v3667
        %v3757 = vunpack.c.h.b16 %v3667
        %v3758 = vunpack.c.l.b16 %v3668
        %v3759 = vunpack.c.h.b16 %v3668
        %v3760 = vunpack.c.l.b16 %v3669
        %v3761 = vunpack.c.h.b16 %v3669
        %v3762 = vunpack.c.l.b16 %v3670
        %v3763 = vunpack.c.h.b16 %v3670
        %v3764 = vunpack.c.l.b16 %v3671
        %v3765 = vunpack.c.h.b16 %v3671
        %v3766 = vunpack.c.l.b16 %v3672
        %v3767 = vunpack.c.h.b16 %v3672
        %v3768 = vunpack.c.l.b16 %v3673
        %v3769 = vunpack.c.h.b16 %v3673
        %v3770 = vunpack.c.l.b16 %v3674
        %v3771 = vunpack.c.h.b16 %v3674
        %v3772 = vunpack.c.l.b16 %v3675
        %v3773 = vunpack.c.h.b16 %v3675
        %v3774 = vunpack.c.l.b16 %v3676
        %v3775 = vunpack.c.h.b16 %v3676
        %v3776 = vunpack.c.l.b16 %v3677
        %v3777 = vunpack.c.h.b16 %v3677
        %v3778 = vunpack.c.l.b16 %v3678
        %v3779 = vunpack.c.h.b16 %v3678
        %v3780 = vunpack.c.l.b16 %v3679
        %v3781 = vunpack.c.h.b16 %v3679
        %v3782 = vunpack.c.l.b16 %v3680
        %v3783 = vunpack.c.h.b16 %v3680
        %v3784 = vunpack.c.l.b16 %v3681
        %v3785 = vunpack.c.h.b16 %v3681
        %v3786 = vunpack.c.l.b16 %v3682
        %v3787 = vunpack.c.h.b16 %v3682
        %v3788 = vunpack.c.l.b16 %v3683
        %v3789 = vunpack.c.h.b16 %v3683
        %v3790 = vunpack.c.l.b16 %v3684
        %v3791 = vunpack.c.h.b16 %v3684
        %v3792 = vunpack.c.l.b16 %v3685
        %v3793 = vunpack.c.h.b16 %v3685
        %v3794 = vunpack.c.l.b16 %v3686
        %v3795 = vunpack.c.h.b16 %v3686
        %v3796 = vunpack.c.l.b16 %v3687
        %v3797 = vunpack.c.h.b16 %v3687
        %v3798 = vunpack.c.l.b16 %v3688
        %v3799 = vunpack.c.h.b16 %v3688
        %v3800 = vunpack.c.l.b16 %v3689
        %v3801 = vunpack.c.h.b16 %v3689
        %v3802 = vunpack.c.l.b16 %v3690
        %v3803 = vunpack.c.h.b16 %v3690
        %v3804 = vunpack.c.l.b16 %v3691
        %v3805 = vunpack.c.h.b16 %v3691
        %v3806 = vunpack.c.l.b16 %v3692
        %v3807 = vunpack.c.h.b16 %v3692
        %v3808 = vunpack.c.l.b16 %v3693
        %v3809 = vunpack.c.h.b16 %v3693
        %v3810 = vunpack.c.l.b16 %v3694
        %v3811 = vunpack.c.h.b16 %v3694
        %v3812 = vunpack.c.l.b16 %v3695
        %v3813 = vunpack.c.h.b16 %v3695
        %v3814 = vpack.c.b16 %v3754, %v3750
        %v3815 = vpack.c.b16 %v3755, %v3751
        %v3816 = vpack.c.b16 %v3756, %v3752
        %v3817 = vpack.c.b16 %v3757, %v3753
        %v3818 = vpack.c.b16 %v3762, %v3758
        %v3819 = vpack.c.b16 %v3763, %v3759
        %v3820 = vpack.c.b16 %v3764, %v3760
        %v3821 = vpack.c.b16 %v3765, %v3761
        %v3822 = vpack.c.b16 %v3770, %v3766
        %v3823 = vpack.c.b16 %v3771, %v3767
        %v3824 = vpack.c.b16 %v3772, %v3768
        %v3825 = vpack.c.b16 %v3773, %v3769
        %v3826 = vpack.c.b16 %v3778, %v3774
        %v3827 = vpack.c.b16 %v3779, %v3775
        %v3828 = vpack.c.b16 %v3780, %v3776
        %v3829 = vpack.c.b16 %v3781, %v3777
        %v3830 = vpack.c.b16 %v3786, %v3782
        %v3831 = vpack.c.b16 %v3787, %v3783
        %v3832 = vpack.c.b16 %v3788, %v3784
        %v3833 = vpack.c.b16 %v3789, %v3785
        %v3834 = vpack.c.b16 %v3794, %v3790
        %v3835 = vpack.c.b16 %v3795, %v3791
        %v3836 = vpack.c.b16 %v3796, %v3792
        %v3837 = vpack.c.b16 %v3797, %v3793
        %v3838 = vpack.c.b16 %v3802, %v3798
        %v3839 = vpack.c.b16 %v3803, %v3799
        %v3840 = vpack.c.b16 %v3804, %v3800
        %v3841 = vpack.c.b16 %v3805, %v3801
        %v3842 = vpack.c.b16 %v3810, %v3806
        %v3843 = vpack.c.b16 %v3811, %v3807
        %v3844 = vpack.c.b16 %v3812, %v3808
        %v3845 = vpack.c.b16 %v3813, %v3809
        %3878 = vmatprep.subr.bf16.mxu0 %v3815
        %3879 = vmatpush1.bf16.msra.mxu0 %v3814
        %3880 = vmatprep.subr.bf16.mxu0 %v3819
        %3881 = vmatpush1.bf16.msra.mxu0 %v3818
        %3882 = vmatprep.subr.bf16.mxu0 %v3823
        %3883 = vmatpush1.bf16.msra.mxu0 %v3822
        %3884 = vmatprep.subr.bf16.mxu0 %v3827
        %3885 = vmatpush1.bf16.msra.mxu0 %v3826
        %3886 = vmatprep.subr.bf16.mxu0 %v3831
        %3887 = vmatpush1.bf16.msra.mxu0 %v3830
        %3888 = vmatprep.subr.bf16.mxu0 %v3835
        %3889 = vmatpush1.bf16.msra.mxu0 %v3834
        %3890 = vmatprep.subr.bf16.mxu0 %v3839
        %3891 = vmatpush1.bf16.msra.mxu0 %v3838
        %3892 = vmatprep.subr.bf16.mxu0 %v3843
        %3893 = vmatpush1.bf16.msra.mxu0 %v3842
        %3894 = vmatprep.subr.bf16.mxu0 0
        %3895 = vmatpush1.bf16.msra.mxu0 0
        %3896 = vmatprep.subr.bf16.mxu0 0
        %3897 = vmatpush1.bf16.msra.mxu0 0
        %3898 = vmatprep.subr.bf16.mxu0 0
        %3899 = vmatpush1.bf16.msra.mxu0 0
        %3900 = vmatprep.subr.bf16.mxu0 0
        %3901 = vmatpush1.bf16.msra.mxu0 0
        %3902 = vmatprep.subr.bf16.mxu0 0
        %3903 = vmatpush1.bf16.msra.mxu0 0
        %3904 = vmatprep.subr.bf16.mxu0 0
        %3905 = vmatpush1.bf16.msra.mxu0 0
        %3906 = vmatprep.subr.bf16.mxu0 0
        %3907 = vmatpush1.bf16.msra.mxu0 0
        %3908 = vmatprep.subr.bf16.mxu0 0
        %3909 = vmatpush1.bf16.msra.mxu0 0
        %3910 = vmatprep.mubr.bf16.mxu0 0
        %3911 = vmatmul.mubr.bf16.gmra.mrb[0].mxu0 %v1711
        %v3912 = vpop.f32.mrb[0].mxu0
        %v3913 = vadd.f32 %v3701, %v3912
        %v3914 = vpop.f32.mrb[0].mxu0
        %v3915 = vadd.f32 %v3705, %v3914
        %v3916 = vpop.f32.mrb[0].mxu0
        %v3917 = vadd.f32 %v3701, %v3916
        %v3918 = vpop.f32.mrb[0].mxu0
        %v3919 = vadd.f32 %v3705, %v3918
        %3920 = vdwg.mxu0
        %3921 = vmatprep.subr.bf16.mxu0 %v3817
        %3922 = vmatpush1.bf16.msra.mxu0 %v3816
        %3923 = vmatprep.subr.bf16.mxu0 %v3821
        %3924 = vmatpush1.bf16.msra.mxu0 %v3820
        %3925 = vmatprep.subr.bf16.mxu0 %v3825
        %3926 = vmatpush1.bf16.msra.mxu0 %v3824
        %3927 = vmatprep.subr.bf16.mxu0 %v3829
        %3928 = vmatpush1.bf16.msra.mxu0 %v3828
        %3929 = vmatprep.subr.bf16.mxu0 %v3833
        %3930 = vmatpush1.bf16.msra.mxu0 %v3832
        %3931 = vmatprep.subr.bf16.mxu0 %v3837
        %3932 = vmatpush1.bf16.msra.mxu0 %v3836
        %3933 = vmatprep.subr.bf16.mxu0 %v3841
        %3934 = vmatpush1.bf16.msra.mxu0 %v3840
        %3935 = vmatprep.subr.bf16.mxu0 %v3845
        %3936 = vmatpush1.bf16.msra.mxu0 %v3844
        %3937 = vmatprep.subr.bf16.mxu0 0
        %3938 = vmatpush1.bf16.msra.mxu0 0
        %3939 = vmatprep.subr.bf16.mxu0 0
        %3940 = vmatpush1.bf16.msra.mxu0 0
        %3941 = vmatprep.subr.bf16.mxu0 0
        %3942 = vmatpush1.bf16.msra.mxu0 0
        %3943 = vmatprep.subr.bf16.mxu0 0
        %3944 = vmatpush1.bf16.msra.mxu0 0
        %3945 = vmatprep.subr.bf16.mxu0 0
        %3946 = vmatpush1.bf16.msra.mxu0 0
        %3947 = vmatprep.subr.bf16.mxu0 0
        %3948 = vmatpush1.bf16.msra.mxu0 0
        %3949 = vmatprep.subr.bf16.mxu0 0
        %3950 = vmatpush1.bf16.msra.mxu0 0
        %3951 = vmatprep.subr.bf16.mxu0 0
        %3952 = vmatpush1.bf16.msra.mxu0 0
        %3953 = vmatprep.mubr.bf16.mxu0 0
        %3954 = vmatmul.mubr.bf16.gmra.mrb[0].mxu0 %v1711
        %v3955 = vpop.f32.mrb[0].mxu0
        %v3956 = vadd.f32 %v3709, %v3955
        %v3957 = vpop.f32.mrb[0].mxu0
        %v3958 = vadd.f32 %v3713, %v3957
        %v3959 = vpop.f32.mrb[0].mxu0
        %v3960 = vadd.f32 %v3709, %v3959
        %v3961 = vpop.f32.mrb[0].mxu0
        %v3962 = vadd.f32 %v3713, %v3961
        %3963 = vdwg.mxu0
        %v3964 = vmax.f32 %v3913, 0.0
        %v3965 = vmax.f32 %v3915, 0.0
        %v3966 = vmax.f32 %v3956, 0.0
        %v3967 = vmax.f32 %v3958, 0.0
        %v3968 = vmax.f32 %v3917, 0.0
        %v3969 = vmax.f32 %v3919, 0.0
        %v3970 = vmax.f32 %v3960, 0.0
        %v3971 = vmax.f32 %v3962, 0.0
        %v3972 = vpack.c.bf16 %v3968, %v3964
        %v3973 = vpack.c.bf16 %v3969, %v3965
        %v3974 = vpack.c.bf16 %v3970, %v3966
        %v3975 = vpack.c.bf16 %v3971, %v3967
        %v3976 = vld [vmem:[#allocation22 + $0x300] sm:$0xf]
        %v3977 = vld [vmem:[#allocation22 + $0x304] sm:$0xf]
        %v3978 = vld [vmem:[#allocation22 + $0x308] sm:$0xf]
        %v3979 = vld [vmem:[#allocation22 + $0x30c] sm:$0xf]
        %v3980 = vld [vmem:[#allocation22 + $0x310] sm:$0xf]
        %v3981 = vld [vmem:[#allocation22 + $0x314] sm:$0xf]
        %v3982 = vld [vmem:[#allocation22 + $0x318] sm:$0xf]
        %v3983 = vld [vmem:[#allocation22 + $0x31c] sm:$0xf]
        %v3984 = vld [vmem:[#allocation22 + $0x320] sm:$0xf]
        %v3985 = vld [vmem:[#allocation22 + $0x324] sm:$0xf]
        %v3986 = vld [vmem:[#allocation22 + $0x328] sm:$0xf]
        %v3987 = vld [vmem:[#allocation22 + $0x32c] sm:$0xf]
        %v3988 = vld [vmem:[#allocation22 + $0x330] sm:$0xf]
        %v3989 = vld [vmem:[#allocation22 + $0x334] sm:$0xf]
        %v3990 = vld [vmem:[#allocation22 + $0x338] sm:$0xf]
        %v3991 = vld [vmem:[#allocation22 + $0x33c] sm:$0xf]
        %v3992 = vld [vmem:[#allocation22 + $0x340] sm:$0xf]
        %v3993 = vld [vmem:[#allocation22 + $0x344] sm:$0xf]
        %v3994 = vld [vmem:[#allocation22 + $0x348] sm:$0xf]
        %v3995 = vld [vmem:[#allocation22 + $0x34c] sm:$0xf]
        %v3996 = vld [vmem:[#allocation22 + $0x350] sm:$0xf]
        %v3997 = vld [vmem:[#allocation22 + $0x354] sm:$0xf]
        %v3998 = vld [vmem:[#allocation22 + $0x358] sm:$0xf]
        %v3999 = vld [vmem:[#allocation22 + $0x35c] sm:$0xf]
        %v4000 = vld [vmem:[#allocation22 + $0x360] sm:$0xf]
        %v4001 = vld [vmem:[#allocation22 + $0x364] sm:$0xf]
        %v4002 = vld [vmem:[#allocation22 + $0x368] sm:$0xf]
        %v4003 = vld [vmem:[#allocation22 + $0x36c] sm:$0xf]
        %v4004 = vld [vmem:[#allocation22 + $0x370] sm:$0xf]
        %v4005 = vld [vmem:[#allocation22 + $0x374] sm:$0xf]
        %v4006 = vld [vmem:[#allocation22 + $0x378] sm:$0xf]
        %v4007 = vld [vmem:[#allocation22 + $0x37c] sm:$0xf]
        %v4008 = vld [vmem:[#allocation22 + $0x380] sm:$0xf]
        %v4009 = vld [vmem:[#allocation22 + $0x384] sm:$0xf]
        %v4010 = vld [vmem:[#allocation22 + $0x388] sm:$0xf]
        %v4011 = vld [vmem:[#allocation22 + $0x38c] sm:$0xf]
        %v4012 = vld [vmem:[#allocation22 + $0x390] sm:$0xf]
        %v4013 = vld [vmem:[#allocation22 + $0x394] sm:$0xf]
        %v4014 = vld [vmem:[#allocation22 + $0x398] sm:$0xf]
        %v4015 = vld [vmem:[#allocation22 + $0x39c] sm:$0xf]
        %v4016 = vld [vmem:[#allocation22 + $0x3a0] sm:$0xf]
        %v4017 = vld [vmem:[#allocation22 + $0x3a4] sm:$0xf]
        %v4018 = vld [vmem:[#allocation22 + $0x3a8] sm:$0xf]
        %v4019 = vld [vmem:[#allocation22 + $0x3ac] sm:$0xf]
        %v4020 = vld [vmem:[#allocation22 + $0x3b0] sm:$0xf]
        %v4021 = vld [vmem:[#allocation22 + $0x3b4] sm:$0xf]
        %v4022 = vld [vmem:[#allocation22 + $0x3b8] sm:$0xf]
        %v4023 = vld [vmem:[#allocation22 + $0x3bc] sm:$0xf]
        %v4024 = vld [vmem:[#allocation22 + $0x3c0] sm:$0xf]
        %v4025 = vld [vmem:[#allocation22 + $0x3c4] sm:$0xf]
        %v4026 = vld [vmem:[#allocation22 + $0x3c8] sm:$0xf]
        %v4027 = vld [vmem:[#allocation22 + $0x3cc] sm:$0xf]
        %v4028 = vld [vmem:[#allocation22 + $0x3d0] sm:$0xf]
        %v4029 = vld [vmem:[#allocation22 + $0x3d4] sm:$0xf]
        %v4030 = vld [vmem:[#allocation22 + $0x3d8] sm:$0xf]
        %v4031 = vld [vmem:[#allocation22 + $0x3dc] sm:$0xf]
        %v4032 = vld [vmem:[#allocation22 + $0x3e0] sm:$0xf]
        %v4033 = vld [vmem:[#allocation22 + $0x3e4] sm:$0xf]
        %v4034 = vld [vmem:[#allocation22 + $0x3e8] sm:$0xf]
        %v4035 = vld [vmem:[#allocation22 + $0x3ec] sm:$0xf]
        %v4036 = vld [vmem:[#allocation22 + $0x3f0] sm:$0xf]
        %v4037 = vld [vmem:[#allocation22 + $0x3f4] sm:$0xf]
        %v4038 = vld [vmem:[#allocation22 + $0x3f8] sm:$0xf]
        %v4039 = vld [vmem:[#allocation22 + $0x3fc] sm:$0xf]
        %v4104 = vunpack.c.l.b16 %v3976
        %v4105 = vunpack.c.l.b16 %v3977
        %v4106 = vunpack.c.l.b16 %v3978
        %v4107 = vunpack.c.l.b16 %v3979
        %v4108 = vunpack.c.l.b16 %v3980
        %v4109 = vunpack.c.l.b16 %v3981
        %v4110 = vunpack.c.l.b16 %v3982
        %v4111 = vunpack.c.l.b16 %v3983
        %v4112 = vunpack.c.l.b16 %v3984
        %v4113 = vunpack.c.l.b16 %v3985
        %v4114 = vunpack.c.l.b16 %v3986
        %v4115 = vunpack.c.l.b16 %v3987
        %v4116 = vunpack.c.l.b16 %v3988
        %v4117 = vunpack.c.l.b16 %v3989
        %v4118 = vunpack.c.l.b16 %v3990
        %v4119 = vunpack.c.l.b16 %v3991
        %v4120 = vunpack.c.l.b16 %v3992
        %v4121 = vunpack.c.l.b16 %v3993
        %v4122 = vunpack.c.l.b16 %v3994
        %v4123 = vunpack.c.l.b16 %v3995
        %v4124 = vunpack.c.l.b16 %v3996
        %v4125 = vunpack.c.l.b16 %v3997
        %v4126 = vunpack.c.l.b16 %v3998
        %v4127 = vunpack.c.l.b16 %v3999
        %v4128 = vunpack.c.l.b16 %v4000
        %v4129 = vunpack.c.l.b16 %v4001
        %v4130 = vunpack.c.l.b16 %v4002
        %v4131 = vunpack.c.l.b16 %v4003
        %v4132 = vunpack.c.l.b16 %v4004
        %v4133 = vunpack.c.l.b16 %v4005
        %v4134 = vunpack.c.l.b16 %v4006
        %v4135 = vunpack.c.l.b16 %v4007
        %v4136 = vunpack.c.l.b16 %v4008
        %v4137 = vunpack.c.l.b16 %v4009
        %v4138 = vunpack.c.l.b16 %v4010
        %v4139 = vunpack.c.l.b16 %v4011
        %v4140 = vunpack.c.l.b16 %v4012
        %v4141 = vunpack.c.l.b16 %v4013
        %v4142 = vunpack.c.l.b16 %v4014
        %v4143 = vunpack.c.l.b16 %v4015
        %v4144 = vunpack.c.l.b16 %v4016
        %v4145 = vunpack.c.l.b16 %v4017
        %v4146 = vunpack.c.l.b16 %v4018
        %v4147 = vunpack.c.l.b16 %v4019
        %v4148 = vunpack.c.l.b16 %v4020
        %v4149 = vunpack.c.l.b16 %v4021
        %v4150 = vunpack.c.l.b16 %v4022
        %v4151 = vunpack.c.l.b16 %v4023
        %v4152 = vunpack.c.l.b16 %v4024
        %v4153 = vunpack.c.l.b16 %v4025
        %v4154 = vunpack.c.l.b16 %v4026
        %v4155 = vunpack.c.l.b16 %v4027
        %v4156 = vunpack.c.l.b16 %v4028
        %v4157 = vunpack.c.l.b16 %v4029
        %v4158 = vunpack.c.l.b16 %v4030
        %v4159 = vunpack.c.l.b16 %v4031
        %v4160 = vunpack.c.l.b16 %v4032
        %v4161 = vunpack.c.l.b16 %v4033
        %v4162 = vunpack.c.l.b16 %v4034
        %v4163 = vunpack.c.l.b16 %v4035
        %v4164 = vunpack.c.l.b16 %v4036
        %v4165 = vunpack.c.l.b16 %v4037
        %v4166 = vunpack.c.l.b16 %v4038
        %v4167 = vunpack.c.l.b16 %v4039
        %v4168 = vpack.c.b16 %v4105, %v4104
        %v4169 = vpack.c.b16 %v4107, %v4106
        %v4170 = vpack.c.b16 %v4109, %v4108
        %v4171 = vpack.c.b16 %v4111, %v4110
        %v4172 = vpack.c.b16 %v4113, %v4112
        %v4173 = vpack.c.b16 %v4115, %v4114
        %v4174 = vpack.c.b16 %v4117, %v4116
        %v4175 = vpack.c.b16 %v4119, %v4118
        %v4176 = vpack.c.b16 %v4121, %v4120
        %v4177 = vpack.c.b16 %v4123, %v4122
        %v4178 = vpack.c.b16 %v4125, %v4124
        %v4179 = vpack.c.b16 %v4127, %v4126
        %v4180 = vpack.c.b16 %v4129, %v4128
        %v4181 = vpack.c.b16 %v4131, %v4130
        %v4182 = vpack.c.b16 %v4133, %v4132
        %v4183 = vpack.c.b16 %v4135, %v4134
        %v4184 = vpack.c.b16 %v4137, %v4136
        %v4185 = vpack.c.b16 %v4139, %v4138
        %v4186 = vpack.c.b16 %v4141, %v4140
        %v4187 = vpack.c.b16 %v4143, %v4142
        %v4188 = vpack.c.b16 %v4145, %v4144
        %v4189 = vpack.c.b16 %v4147, %v4146
        %v4190 = vpack.c.b16 %v4149, %v4148
        %v4191 = vpack.c.b16 %v4151, %v4150
        %v4192 = vpack.c.b16 %v4153, %v4152
        %v4193 = vpack.c.b16 %v4155, %v4154
        %v4194 = vpack.c.b16 %v4157, %v4156
        %v4195 = vpack.c.b16 %v4159, %v4158
        %v4196 = vpack.c.b16 %v4161, %v4160
        %v4197 = vpack.c.b16 %v4163, %v4162
        %v4198 = vpack.c.b16 %v4165, %v4164
        %v4199 = vpack.c.b16 %v4167, %v4166
        %4232 = vmatprep.subr.bf16.mxu0 0
        %4233 = vmatpush1.bf16.msra.mxu0 %v4168
        %4234 = vmatprep.subr.bf16.mxu0 0
        %4235 = vmatpush1.bf16.msra.mxu0 %v4169
        %4236 = vmatprep.subr.bf16.mxu0 0
        %4237 = vmatpush1.bf16.msra.mxu0 %v4170
        %4238 = vmatprep.subr.bf16.mxu0 0
        %4239 = vmatpush1.bf16.msra.mxu0 %v4171
        %4240 = vmatprep.subr.bf16.mxu0 0
        %4241 = vmatpush1.bf16.msra.mxu0 %v4172
        %4242 = vmatprep.subr.bf16.mxu0 0
        %4243 = vmatpush1.bf16.msra.mxu0 %v4173
        %4244 = vmatprep.subr.bf16.mxu0 0
        %4245 = vmatpush1.bf16.msra.mxu0 %v4174
        %4246 = vmatprep.subr.bf16.mxu0 0
        %4247 = vmatpush1.bf16.msra.mxu0 %v4175
        %4248 = vmatprep.subr.bf16.mxu0 0
        %4249 = vmatpush1.bf16.msra.mxu0 %v4176
        %4250 = vmatprep.subr.bf16.mxu0 0
        %4251 = vmatpush1.bf16.msra.mxu0 %v4177
        %4252 = vmatprep.subr.bf16.mxu0 0
        %4253 = vmatpush1.bf16.msra.mxu0 %v4178
        %4254 = vmatprep.subr.bf16.mxu0 0
        %4255 = vmatpush1.bf16.msra.mxu0 %v4179
        %4256 = vmatprep.subr.bf16.mxu0 0
        %4257 = vmatpush1.bf16.msra.mxu0 %v4180
        %4258 = vmatprep.subr.bf16.mxu0 0
        %4259 = vmatpush1.bf16.msra.mxu0 %v4181
        %4260 = vmatprep.subr.bf16.mxu0 0
        %4261 = vmatpush1.bf16.msra.mxu0 %v4182
        %4262 = vmatprep.subr.bf16.mxu0 0
        %4263 = vmatpush1.bf16.msra.mxu0 %v4183
        %4264 = vmatprep.mubr.bf16.mxu0 %v3973
        %4265 = vmatmul.mubr.bf16.gmra.mrb[0].mxu0 %v3972
        %v4266 = vpop.f32.mrb[0].mxu0
        %v4267 = vadd.f32 0.0, %v4266
        %v4268 = vpop.f32.mrb[0].mxu0
        %v4269 = vpop.f32.mrb[0].mxu0
        %v4270 = vadd.f32 0.0, %v4269
        %v4271 = vpop.f32.mrb[0].mxu0
        %4272 = vdwg.mxu0
        %4273 = vmatprep.subr.bf16.mxu0 0
        %4274 = vmatpush1.bf16.msra.mxu0 %v4184
        %4275 = vmatprep.subr.bf16.mxu0 0
        %4276 = vmatpush1.bf16.msra.mxu0 %v4185
        %4277 = vmatprep.subr.bf16.mxu0 0
        %4278 = vmatpush1.bf16.msra.mxu0 %v4186
        %4279 = vmatprep.subr.bf16.mxu0 0
        %4280 = vmatpush1.bf16.msra.mxu0 %v4187
        %4281 = vmatprep.subr.bf16.mxu0 0
        %4282 = vmatpush1.bf16.msra.mxu0 %v4188
        %4283 = vmatprep.subr.bf16.mxu0 0
        %4284 = vmatpush1.bf16.msra.mxu0 %v4189
        %4285 = vmatprep.subr.bf16.mxu0 0
        %4286 = vmatpush1.bf16.msra.mxu0 %v4190
        %4287 = vmatprep.subr.bf16.mxu0 0
        %4288 = vmatpush1.bf16.msra.mxu0 %v4191
        %4289 = vmatprep.subr.bf16.mxu0 0
        %4290 = vmatpush1.bf16.msra.mxu0 %v4192
        %4291 = vmatprep.subr.bf16.mxu0 0
        %4292 = vmatpush1.bf16.msra.mxu0 %v4193
        %4293 = vmatprep.subr.bf16.mxu0 0
        %4294 = vmatpush1.bf16.msra.mxu0 %v4194
        %4295 = vmatprep.subr.bf16.mxu0 0
        %4296 = vmatpush1.bf16.msra.mxu0 %v4195
        %4297 = vmatprep.subr.bf16.mxu0 0
        %4298 = vmatpush1.bf16.msra.mxu0 %v4196
        %4299 = vmatprep.subr.bf16.mxu0 0
        %4300 = vmatpush1.bf16.msra.mxu0 %v4197
        %4301 = vmatprep.subr.bf16.mxu0 0
        %4302 = vmatpush1.bf16.msra.mxu0 %v4198
        %4303 = vmatprep.subr.bf16.mxu0 0
        %4304 = vmatpush1.bf16.msra.mxu0 %v4199
        %4305 = vmatprep.mubr.bf16.mxu0 %v3975
        %4306 = vmatmul.mubr.bf16.gmra.mrb[0].mxu0 %v3974
        %v4307 = vpop.f32.mrb[0].mxu0
        %v4308 = vadd.f32 %v4267, %v4307
        %v4309 = vpop.f32.mrb[0].mxu0
        %v4310 = vpop.f32.mrb[0].mxu0
        %v4311 = vadd.f32 %v4270, %v4310
        %v4312 = vpop.f32.mrb[0].mxu0
        %4313 = vdwg.mxu0
        %v4314 = vadd.f32 %v3662, %v4308
        %v4315 = vadd.f32 %v3663, %v4311
        %v4316 = vld [vmem:[#allocation24] sm:$0x1]
        %v4318 = vlaneseq
        %v4319 = vshrl.u32 %v4318, 7
        %v4320 = vsub.s32 0, %v4319
        %v4321 = vrot.slane %v4316, %v4320
        %v4323 = vadd.f32 %v4314, %v4321
        %v4324 = vadd.f32 %v4315, %v4321
        %v4325 = vadd.f32 %v4323, %v1655
        %v4326 = vadd.f32 %v4324, %v1656
        %4327 = vst [vmem:[#allocation2] sm:$0xff] %v4325
        %4328 = vst [vmem:[#allocation2 + $0x8] sm:$0xff] %v4326
        %p4329 = scmp.eq.s32.totalorder %s43, 1
        // Predicated region
        $region129: #{tpu_custom_call.1} parent=71 // pred_check
          %p4330 = pneg %p4329
        $region130: #{tpu_custom_call.1} parent=71 // pred_check_branch
          %4332 = sbr.rel (%p4330) target = $region132
        $region131: #{tpu_custom_call.1} parent=71 // pred_region
          %v4333 = vld [vmem:[#allocation7] sm:$0x1]
          %v4334 = vld [vmem:[#allocation9] sm:$0x1]
          %4335 = vadd.xlane.f32.xlu0 %v4325
          %v4336 = vpop.xlane.xlu0 %4335
          %4337 = vadd.xlane.f32.xlu0 %v4326
          %v4338 = vpop.xlane.xlu0 %4337
          %v4339 = vmul.f32 %v4336, %v723
          %v4340 = vmul.f32 %v4338, %v723
          %v4341 = vsub.f32 %v4325, %v4339
          %v4342 = vsub.f32 %v4326, %v4340
          %v4343 = vmul.f32 %v4341, %v4341
          %v4344 = vmul.f32 %v4342, %v4342
          %4345 = vadd.xlane.f32.xlu0 %v4343
          %v4346 = vpop.xlane.xlu0 %4345
          %4347 = vadd.xlane.f32.xlu0 %v4344
          %v4348 = vpop.xlane.xlu0 %4347
          %v4349 = vmul.f32 %v4346, 0.007874016
          %v4350 = vmul.f32 %v4348, 0.007874016
          %v4351 = vrsqrt.pop %v4349
          %v4352 = vmul.f32 %v4349, %v4351
          %vm4353 = vcmp.eq.f32.partialorder %v4349, inf
          %v4354 = vsel %vm4353, %v4349, %v4352
          %vm4355 = vcmp.eq.f32.partialorder %v4349, 0.0
          %v4356 = vand.u32 %v4349, 2147483648
          %v4357 = vsel %vm4355, %v4356, %v4354
          %v4358 = vrsqrt.pop %v4350
          %v4359 = vmul.f32 %v4350, %v4358
          %vm4360 = vcmp.eq.f32.partialorder %v4350, inf
          %v4361 = vsel %vm4360, %v4350, %v4359
          %vm4362 = vcmp.eq.f32.partialorder %v4350, 0.0
          %v4363 = vand.u32 %v4350, 2147483648
          %v4364 = vsel %vm4362, %v4363, %v4361
          %v4365 = vadd.f32 %v4357, 1e-06
          %v4366 = vadd.f32 %v4364, 1e-06
          %v4367 = vrcp.pop %v4365
          %v4368 = vmul.f32 %v4341, %v4367
          %v4369 = vrcp.pop %v4366
          %v4370 = vmul.f32 %v4342, %v4369
          %v4372 = vlaneseq
          %v4373 = vshrl.u32 %v4372, 7
          %v4374 = vsub.s32 0, %v4373
          %v4375 = vrot.slane %v4333, %v4374
          %v4377 = vmul.f32 %v4368, %v4375
          %v4378 = vmul.f32 %v4370, %v4375
          %v4380 = vlaneseq
          %v4381 = vshrl.u32 %v4380, 7
          %v4382 = vsub.s32 0, %v4381
          %v4383 = vrot.slane %v4334, %v4382
          %v4385 = vadd.f32 %v4377, %v4383
          %v4386 = vadd.f32 %v4378, %v4383
          %4387 = vst [vmem:[%s703] sm:$0xff] %v4385
          %4388 = vst [vmem:[%s703 + $0x8] sm:$0xff] %v4386
        $region132: #{tpu_custom_call.1} parent=71 // pred_fallthru
          _
        %s4389 = sand.u32 %s356, 1
        %s4390 = scalar_lea.sflag [#allocation6], %s4389
        %s4391 = sand.u32 %s356, 1
        %s4392 = smul.addr %s4391, 16
        %s4393 = scalar_lea.vmem [#allocation25], %s4392
        // Predicated region
        $region133: #{tpu_custom_call.1} parent=71 // pred_check
          %p4394 = pneg %p366
        $region134: #{tpu_custom_call.1} parent=71 // pred_check_branch
          %4396 = sbr.rel (%p4394) target = $region136
        $region135: #{tpu_custom_call.1} parent=71 // pred_region
          %s4397 = smul.u32 2, %s42
          %s4399 = ssub.s32 256, 256
          %4400 = vsyncadd %s4390, %s4399
          %s4401 = smul.addr %s4397, 128
          %s4402 = scalar_lea.hbm %s13, %s4401
          %s4403 = sshll.u32 %s4393, 4
          %s4404 = int_to_ptr.vmem [resolvable:$true] %s4403
          %4409 = dma.vmem_to_hbm [thread:$0]  %s4404, 256, %s4402, %s4390, 128, 128, 8
        $region136: #{tpu_custom_call.1} parent=71 // pred_fallthru
          _
      $region72: #{tpu_custom_call.1} parent=5 // pred_fallthru
        _
      %p4410 = scmp.le.s32.totalorder 2, %s33
      // Predicated region
      $region137: #{tpu_custom_call.1} parent=5 // pred_check
        %p4411 = pneg %p4410
      $region138: #{tpu_custom_call.1} parent=5 // pred_check_branch
        %4413 = sbr.rel (%p4411) target = $region140
      $region139: #{tpu_custom_call.1} parent=5 // pred_region
        %s4414 = ssub.s32 %s33, 2
        // Predicated region
        $region141: #{tpu_custom_call.1} parent=139 // pred_check
          %p4415 = pneg %p372
        $region142: #{tpu_custom_call.1} parent=139 // pred_check_branch
          %4417 = sbr.rel (%p4415) target = $region144
        $region143: #{tpu_custom_call.1} parent=139 // pred_region
          %s4418 = sand.u32 %s357, 1
          %s4419 = scalar_lea.sflag [#allocation6], %s4418
          %s4420 = sand.u32 %s357, 1
          %s4421 = smul.addr %s4420, 16
          %s4422 = scalar_lea.vmem [#allocation25], %s4421
          %4423 = dma.done %s4419, 256
        $region144: #{tpu_custom_call.1} parent=139 // pred_fallthru
          _
      $region140: #{tpu_custom_call.1} parent=5 // pred_fallthru
        _
    $region6: #{tpu_custom_call.1} parent=1 // loop_footer
      %s37 = sadd.s32 1, %s33
    $region7: #{tpu_custom_call.1} parent=1 // loop_footer_branch
      %32 = sbr.rel target = $region3
    $region8: #{tpu_custom_call.1} parent=1 // loop_exit
      _
    %4424 = vsyncpa [#allocation5], 1
    %s4425 = scalar_lea.sflag [#allocation5], 1
    %4426 = vsyncpa %s4425, 1
    %4427 = vsyncpa [#allocation8], 1
    %4428 = vsyncpa [#allocation11], 1
    %s4429 = scalar_lea.sflag [#allocation11], 1
    %4430 = vsyncpa %s4429, 1
    %4431 = vsyncpa [#allocation14], 1
    %s4432 = scalar_lea.sflag [#allocation14], 1
    %4433 = vsyncpa %s4432, 1
    %4434 = vsyncpa [#allocation17], 1
    %4435 = vsyncpa [#allocation20], 1
    %4436 = vsyncpa [#allocation23], 1
    %4437 = vsyncpa [#allocation6], 1
    %s4438 = scalar_lea.sflag [#allocation6], 1
    %4439 = vsyncpa %s4438, 1

// kernel: tpu_custom_call.1
$region0: #{tpu_custom_call.1}
  #allocation0 [shape = 'u32[]', space=smem, size = 0x4, offset = 0x4, fixed_abs, tag = 'smem constant byte address 0x4 - core index']
  #allocation1 [shape = 'u32[144,128]{1,0:T(1,128)}', space=vmem, size = 0x12000, scoped, tag = 'internal scratch']
  #allocation2 [shape = 'f32[16,128]{1,0:T(8,128)}', space=vmem, size = 0x2000, scoped, tag = 'scratch operand']
  #allocation3 [shape = 'bf16[16,128]{1,0:T(16,128)(2,1)}', space=vmem, size = 0x1000, scoped, tag = 'scratch operand']
  %s0 = inlined_call_operand.hbm [shape: f32[32,128], index: 0, kind: input, shape index: {}]
  %s1 = inlined_call_operand.hbm [shape: f32[1,128], index: 1, kind: input, shape index: {}]
  %s2 = inlined_call_operand.hbm [shape: f32[1,128], index: 2, kind: input, shape index: {}]
  %s3 = inlined_call_operand.hbm [shape: bf16[2,128,384], index: 3, kind: input, shape index: {}]
  %s4 = inlined_call_operand.hbm [shape: f32[2,1,384], index: 4, kind: input, shape index: {}]
  %s5 = inlined_call_operand.hbm [shape: bf16[2,128,128], index: 5, kind: input, shape index: {}]
  %s6 = inlined_call_operand.hbm [shape: f32[2,1,128], index: 6, kind: input, shape index: {}]
  %s7 = inlined_call_operand.hbm [shape: f32[1,128], index: 7, kind: input, shape index: {}]
  %s8 = inlined_call_operand.hbm [shape: f32[1,128], index: 8, kind: input, shape index: {}]
  %s9 = inlined_call_operand.hbm [shape: bf16[128,2048], index: 9, kind: input, shape index: {}]
  %s10 = inlined_call_operand.hbm [shape: f32[1,2048], index: 10, kind: input, shape index: {}]
  %s11 = inlined_call_operand.hbm [shape: bf16[2048,128], index: 11, kind: input, shape index: {}]
  %s12 = inlined_call_operand.hbm [shape: f32[1,128], index: 12, kind: input, shape index: {}]
  %s13 = inlined_call_operand.hbm [shape: f32[32,128], index: 13, kind: output, shape index: {}]
  %s14 = sld [smem:[#allocation0]]
  $region145: #{tpu_custom_call.1} parent=0
    _
  %s16 = ssub.s32 1, %s14
  %s17 = scalar_select 0, %s16, %s14
  $region1: #{tpu_custom_call.1} parent=0
    #allocation4 [shape = 'u8[16384]{0}', space=vmem, size = 0x4000, scoped, tag = 'input window, operand 0']
    #allocation5 [shape = 's32[2]{0}', space=sflag, size = 0x8, scoped, tag = 'scoped memory for tpu_custom_call.1']
    #allocation6 [shape = 's32[2]{0}', space=sflag, size = 0x8, scoped, tag = 'scoped memory for tpu_custom_call.1']
    #allocation7 [shape = 'u8[512]{0}', space=vmem, size = 0x400, scoped, tag = 'input window, operand 1, single buffered']
    #allocation8 [shape = 's32[1]{0}', space=sflag, size = 0x4, scoped, tag = 'scoped memory for tpu_custom_call.1']
    #allocation9 [shape = 'u8[512]{0}', space=vmem, size = 0x400, scoped, tag = 'input window, operand 2, single buffered']
    #allocation10 [shape = 'u8[196608]{0}', space=vmem, size = 0x30000, scoped, tag = 'input window, operand 3']
    #allocation11 [shape = 's32[2]{0}', space=sflag, size = 0x8, scoped, tag = 'scoped memory for tpu_custom_call.1']
    #allocation12 [shape = 'u8[3072]{0}', space=vmem, size = 0xc00, scoped, tag = 'input window, operand 4']
    #allocation13 [shape = 'u8[65536]{0}', space=vmem, size = 0x10000, scoped, tag = 'input window, operand 5']
    #allocation14 [shape = 's32[2]{0}', space=sflag, size = 0x8, scoped, tag = 'scoped memory for tpu_custom_call.1']
    #allocation15 [shape = 'u8[1024]{0}', space=vmem, size = 0x400, scoped, tag = 'input window, operand 6']
    #allocation16 [shape = 'u8[512]{0}', space=vmem, size = 0x400, scoped, tag = 'input window, operand 7, single buffered']
    #allocation17 [shape = 's32[1]{0}', space=sflag, size = 0x4, scoped, tag = 'scoped memory for tpu_custom_call.1']
    #allocation18 [shape = 'u8[512]{0}', space=vmem, size = 0x400, scoped, tag = 'input window, operand 8, single buffered']
    #allocation19 [shape = 'u8[524288]{0}', space=vmem, size = 0x80000, scoped, tag = 'input window, operand 9, single buffered']
    #allocation20 [shape = 's32[1]{0}', space=sflag, size = 0x4, scoped, tag = 'scoped memory for tpu_custom_call.1']
    #allocation21 [shape = 'u8[8192]{0}', space=vmem, size = 0x2000, scoped, tag = 'input window, operand 10, single buffered']
    #allocation22 [shape = 'u8[524288]{0}', space=vmem, size = 0x80000, scoped, tag = 'input window, operand 11, single buffered']
    #allocation23 [shape = 's32[1]{0}', space=sflag, size = 0x4, scoped, tag = 'scoped memory for tpu_custom_call.1']
    #allocation24 [shape = 'u8[512]{0}', space=vmem, size = 0x400, scoped, tag = 'input window, operand 12, single buffered']
    #allocation25 [shape = 'u8[16384]{0}', space=vmem, size = 0x4000, scoped, tag = 'output window, operand 0']
    %18 = vsyncpa [#allocation5], 0
    %s19 = scalar_lea.sflag [#allocation5], 1
    %20 = vsyncpa %s19, 0
    %21 = vsyncpa [#allocation8], 0
    %22 = vsyncpa [#allocation11], 0
    %s23 = scalar_lea.sflag [#allocation11], 1
    %24 = vsyncpa %s23, 0
    %25 = vsyncpa [#allocation14], 0
    %s26 = scalar_lea.sflag [#allocation14], 1
    %27 = vsyncpa %s26, 0
    %28 = vsyncpa [#allocation17], 0
    %29 = vsyncpa [#allocation20], 0
    %30 = vsyncpa [#allocation23], 0
    %31 = vsyncpa [#allocation6], 0
    %s32 = scalar_lea.sflag [#allocation6], 1
    %33 = vsyncpa %s32, 0
    loop: start=0, step=1, limit=6
    $region2: #{tpu_custom_call.1} parent=1 // loop_pre_header
      _
    $region3: #{tpu_custom_call.1} parent=1 // loop_header
      %s35 = sphi 0, %s39
      %p36 = scmp.ge.s32.totalorder %s35, 6
      %s42 = sphi 0, %s54
      %s43 = sphi 0, %s50
      %s44 = sphi 0, %s42
      %s45 = sphi 0, %s43
      %s46 = sphi 0, %s44
      %s47 = sphi 0, %s45
      %s57 = sphi 0, %s59
      %s60 = sphi 0, %s57
      %s61 = sphi 0, %s60
      %s77 = sphi 0, %s61
      %s81 = sphi 0, %s81
      %s83 = sphi 0, %s81
      %s84 = sphi 0, %s83
      %s98 = sphi 0, %s84
      %s102 = sphi 0, %s102
      %s104 = sphi 0, %s102
      %s105 = sphi 0, %s104
      %s119 = sphi 0, %s105
      %s125 = sphi 0, %s127
      %s128 = sphi 0, %s125
      %s129 = sphi 0, %s128
      %s145 = sphi 0, %s129
      %s151 = sphi 0, %s153
      %s154 = sphi 0, %s151
      %s155 = sphi 0, %s154
      %s171 = sphi 0, %s155
      %s177 = sphi 0, %s179
      %s180 = sphi 0, %s177
      %s181 = sphi 0, %s180
      %s197 = sphi 0, %s181
      %s203 = sphi 0, %s205
      %s206 = sphi 0, %s203
      %s207 = sphi 0, %s206
      %s223 = sphi 0, %s207
      %s227 = sphi 0, %s227
      %s229 = sphi 0, %s227
      %s230 = sphi 0, %s229
      %s244 = sphi 0, %s230
      %s248 = sphi 0, %s248
      %s250 = sphi 0, %s248
      %s251 = sphi 0, %s250
      %s265 = sphi 0, %s251
      %s269 = sphi 0, %s269
      %s271 = sphi 0, %s269
      %s272 = sphi 0, %s271
      %s286 = sphi 0, %s272
      %s290 = sphi 0, %s290
      %s292 = sphi 0, %s290
      %s293 = sphi 0, %s292
      %s307 = sphi 0, %s293
      %s311 = sphi 0, %s311
      %s313 = sphi 0, %s311
      %s314 = sphi 0, %s313
      %s328 = sphi 0, %s314
      %s332 = sphi 0, %s332
      %s334 = sphi 0, %s332
      %s335 = sphi 0, %s334
      %s349 = sphi 0, %s335
      %s355 = sphi 0, %s357
      %s358 = sphi 0, %s355
      %s359 = sphi 0, %s358
      %s375 = sphi 0, %s359
    $region4: #{tpu_custom_call.1} parent=1 // loop_header_branch
      %38 = sbr.rel (%p36) target = $region8
    $region5: #{tpu_custom_call.1} parent=1 // loop_body
      %s40 = ssub.s32 %s35, 1
      %s41 = ssub.s32 %s35, 2
      %s48 = sadd.s32 1, %s43
      %p49 = scmp.ge.s32.totalorder %s48, 2
      %s50 = scalar_select %p49, 0, %s48
      %s51 = sadd.s32 1, %s42
      %s52 = scalar_select %p49, %s51, %s42
      %p53 = scmp.ge.s32.totalorder %s52, 2
      %s54 = scalar_select %p53, 0, %s52
      %s55 = ssub.s32 %s42, %s54
      %p56 = scmp.eq.s32.totalorder %s55, 0
      %s58 = sadd.s32 %s57, 1
      %s59 = scalar_select %p56, %s57, %s58
      %p62 = pneg %p56
      %p63 = scmp.eq.s32.totalorder %s35, 3
      %p64 = por %p62, %p63
      %p65 = scmp.ne.s32.totalorder %s57, %s60
      %p66 = scmp.eq.s32.totalorder %s35, 0
      %p67 = por %p65, %p66
      %p68 = scmp.ne.s32.totalorder %s57, %s60
      %p69 = scmp.eq.s32.totalorder %s40, 3
      %p70 = por %p68, %p69
      %p71 = scmp.ne.s32.totalorder %s60, %s61
      %p72 = scmp.eq.s32.totalorder %s40, 0
      %p73 = por %p71, %p72
      %p74 = scmp.ne.s32.totalorder %s60, %s61
      %p75 = scmp.eq.s32.totalorder %s41, 3
      %p76 = por %p74, %p75
      %p78 = scmp.ne.s32.totalorder %s61, %s77
      %p79 = scmp.eq.s32.totalorder %s41, 0
      %p80 = por %p78, %p79
      %s82 = sadd.s32 %s81, 1
      %p85 = scmp.eq.s32.totalorder %s35, 3
      %p86 = scmp.ne.s32.totalorder %s81, %s83
      %p87 = scmp.eq.s32.totalorder %s35, 0
      %p88 = por %p86, %p87
      %p89 = scmp.ne.s32.totalorder %s81, %s83
      %p90 = scmp.eq.s32.totalorder %s40, 3
      %p91 = por %p89, %p90
      %p92 = scmp.ne.s32.totalorder %s83, %s84
      %p93 = scmp.eq.s32.totalorder %s40, 0
      %p94 = por %p92, %p93
      %p95 = scmp.ne.s32.totalorder %s83, %s84
      %p96 = scmp.eq.s32.totalorder %s41, 3
      %p97 = por %p95, %p96
      %p99 = scmp.ne.s32.totalorder %s84, %s98
      %p100 = scmp.eq.s32.totalorder %s41, 0
      %p101 = por %p99, %p100
      %s103 = sadd.s32 %s102, 1
      %p106 = scmp.eq.s32.totalorder %s35, 3
      %p107 = scmp.ne.s32.totalorder %s102, %s104
      %p108 = scmp.eq.s32.totalorder %s35, 0
      %p109 = por %p107, %p108
      %p110 = scmp.ne.s32.totalorder %s102, %s104
      %p111 = scmp.eq.s32.totalorder %s40, 3
      %p112 = por %p110, %p111
      %p113 = scmp.ne.s32.totalorder %s104, %s105
      %p114 = scmp.eq.s32.totalorder %s40, 0
      %p115 = por %p113, %p114
      %p116 = scmp.ne.s32.totalorder %s104, %s105
      %p117 = scmp.eq.s32.totalorder %s41, 3
      %p118 = por %p116, %p117
      %p120 = scmp.ne.s32.totalorder %s105, %s119
      %p121 = scmp.eq.s32.totalorder %s41, 0
      %p122 = por %p120, %p121
      %s123 = ssub.s32 %s43, %s50
      %p124 = scmp.eq.s32.totalorder %s123, 0
      %s126 = sadd.s32 %s125, 1
      %s127 = scalar_select %p124, %s125, %s126
      %p130 = pneg %p124
      %p131 = scmp.eq.s32.totalorder %s35, 3
      %p132 = por %p130, %p131
      %p133 = scmp.ne.s32.totalorder %s125, %s128
      %p134 = scmp.eq.s32.totalorder %s35, 0
      %p135 = por %p133, %p134
      %p136 = scmp.ne.s32.totalorder %s125, %s128
      %p137 = scmp.eq.s32.totalorder %s40, 3
      %p138 = por %p136, %p137
      %p139 = scmp.ne.s32.totalorder %s128, %s129
      %p140 = scmp.eq.s32.totalorder %s40, 0
      %p141 = por %p139, %p140
      %p142 = scmp.ne.s32.totalorder %s128, %s129
      %p143 = scmp.eq.s32.totalorder %s41, 3
      %p144 = por %p142, %p143
      %p146 = scmp.ne.s32.totalorder %s129, %s145
      %p147 = scmp.eq.s32.totalorder %s41, 0
      %p148 = por %p146, %p147
      %s149 = ssub.s32 %s43, %s50
      %p150 = scmp.eq.s32.totalorder %s149, 0
      %s152 = sadd.s32 %s151, 1
      %s153 = scalar_select %p150, %s151, %s152
      %p156 = pneg %p150
      %p157 = scmp.eq.s32.totalorder %s35, 3
      %p158 = por %p156, %p157
      %p159 = scmp.ne.s32.totalorder %s151, %s154
      %p160 = scmp.eq.s32.totalorder %s35, 0
      %p161 = por %p159, %p160
      %p162 = scmp.ne.s32.totalorder %s151, %s154
      %p163 = scmp.eq.s32.totalorder %s40, 3
      %p164 = por %p162, %p163
      %p165 = scmp.ne.s32.totalorder %s154, %s155
      %p166 = scmp.eq.s32.totalorder %s40, 0
      %p167 = por %p165, %p166
      %p168 = scmp.ne.s32.totalorder %s154, %s155
      %p169 = scmp.eq.s32.totalorder %s41, 3
      %p170 = por %p168, %p169
      %p172 = scmp.ne.s32.totalorder %s155, %s171
      %p173 = scmp.eq.s32.totalorder %s41, 0
      %p174 = por %p172, %p173
      %s175 = ssub.s32 %s43, %s50
      %p176 = scmp.eq.s32.totalorder %s175, 0
      %s178 = sadd.s32 %s177, 1
      %s179 = scalar_select %p176, %s177, %s178
      %p182 = pneg %p176
      %p183 = scmp.eq.s32.totalorder %s35, 3
      %p184 = por %p182, %p183
      %p185 = scmp.ne.s32.totalorder %s177, %s180
      %p186 = scmp.eq.s32.totalorder %s35, 0
      %p187 = por %p185, %p186
      %p188 = scmp.ne.s32.totalorder %s177, %s180
      %p189 = scmp.eq.s32.totalorder %s40, 3
      %p190 = por %p188, %p189
      %p191 = scmp.ne.s32.totalorder %s180, %s181
      %p192 = scmp.eq.s32.totalorder %s40, 0
      %p193 = por %p191, %p192
      %p194 = scmp.ne.s32.totalorder %s180, %s181
      %p195 = scmp.eq.s32.totalorder %s41, 3
      %p196 = por %p194, %p195
      %p198 = scmp.ne.s32.totalorder %s181, %s197
      %p199 = scmp.eq.s32.totalorder %s41, 0
      %p200 = por %p198, %p199
      %s201 = ssub.s32 %s43, %s50
      %p202 = scmp.eq.s32.totalorder %s201, 0
      %s204 = sadd.s32 %s203, 1
      %s205 = scalar_select %p202, %s203, %s204
      %p208 = pneg %p202
      %p209 = scmp.eq.s32.totalorder %s35, 3
      %p210 = por %p208, %p209
      %p211 = scmp.ne.s32.totalorder %s203, %s206
      %p212 = scmp.eq.s32.totalorder %s35, 0
      %p213 = por %p211, %p212
      %p214 = scmp.ne.s32.totalorder %s203, %s206
      %p215 = scmp.eq.s32.totalorder %s40, 3
      %p216 = por %p214, %p215
      %p217 = scmp.ne.s32.totalorder %s206, %s207
      %p218 = scmp.eq.s32.totalorder %s40, 0
      %p219 = por %p217, %p218
      %p220 = scmp.ne.s32.totalorder %s206, %s207
      %p221 = scmp.eq.s32.totalorder %s41, 3
      %p222 = por %p220, %p221
      %p224 = scmp.ne.s32.totalorder %s207, %s223
      %p225 = scmp.eq.s32.totalorder %s41, 0
      %p226 = por %p224, %p225
      %s228 = sadd.s32 %s227, 1
      %p231 = scmp.eq.s32.totalorder %s35, 3
      %p232 = scmp.ne.s32.totalorder %s227, %s229
      %p233 = scmp.eq.s32.totalorder %s35, 0
      %p234 = por %p232, %p233
      %p235 = scmp.ne.s32.totalorder %s227, %s229
      %p236 = scmp.eq.s32.totalorder %s40, 3
      %p237 = por %p235, %p236
      %p238 = scmp.ne.s32.totalorder %s229, %s230
      %p239 = scmp.eq.s32.totalorder %s40, 0
      %p240 = por %p238, %p239
      %p241 = scmp.ne.s32.totalorder %s229, %s230
      %p242 = scmp.eq.s32.totalorder %s41, 3
      %p243 = por %p241, %p242
      %p245 = scmp.ne.s32.totalorder %s230, %s244
      %p246 = scmp.eq.s32.totalorder %s41, 0
      %p247 = por %p245, %p246
      %s249 = sadd.s32 %s248, 1
      %p252 = scmp.eq.s32.totalorder %s35, 3
      %p253 = scmp.ne.s32.totalorder %s248, %s250
      %p254 = scmp.eq.s32.totalorder %s35, 0
      %p255 = por %p253, %p254
      %p256 = scmp.ne.s32.totalorder %s248, %s250
      %p257 = scmp.eq.s32.totalorder %s40, 3
      %p258 = por %p256, %p257
      %p259 = scmp.ne.s32.totalorder %s250, %s251
      %p260 = scmp.eq.s32.totalorder %s40, 0
      %p261 = por %p259, %p260
      %p262 = scmp.ne.s32.totalorder %s250, %s251
      %p263 = scmp.eq.s32.totalorder %s41, 3
      %p264 = por %p262, %p263
      %p266 = scmp.ne.s32.totalorder %s251, %s265
      %p267 = scmp.eq.s32.totalorder %s41, 0
      %p268 = por %p266, %p267
      %s270 = sadd.s32 %s269, 1
      %p273 = scmp.eq.s32.totalorder %s35, 3
      %p274 = scmp.ne.s32.totalorder %s269, %s271
      %p275 = scmp.eq.s32.totalorder %s35, 0
      %p276 = por %p274, %p275
      %p277 = scmp.ne.s32.totalorder %s269, %s271
      %p278 = scmp.eq.s32.totalorder %s40, 3
      %p279 = por %p277, %p278
      %p280 = scmp.ne.s32.totalorder %s271, %s272
      %p281 = scmp.eq.s32.totalorder %s40, 0
      %p282 = por %p280, %p281
      %p283 = scmp.ne.s32.totalorder %s271, %s272
      %p284 = scmp.eq.s32.totalorder %s41, 3
      %p285 = por %p283, %p284
      %p287 = scmp.ne.s32.totalorder %s272, %s286
      %p288 = scmp.eq.s32.totalorder %s41, 0
      %p289 = por %p287, %p288
      %s291 = sadd.s32 %s290, 1
      %p294 = scmp.eq.s32.totalorder %s35, 3
      %p295 = scmp.ne.s32.totalorder %s290, %s292
      %p296 = scmp.eq.s32.totalorder %s35, 0
      %p297 = por %p295, %p296
      %p298 = scmp.ne.s32.totalorder %s290, %s292
      %p299 = scmp.eq.s32.totalorder %s40, 3
      %p300 = por %p298, %p299
      %p301 = scmp.ne.s32.totalorder %s292, %s293
      %p302 = scmp.eq.s32.totalorder %s40, 0
      %p303 = por %p301, %p302
      %p304 = scmp.ne.s32.totalorder %s292, %s293
      %p305 = scmp.eq.s32.totalorder %s41, 3
      %p306 = por %p304, %p305
      %p308 = scmp.ne.s32.totalorder %s293, %s307
      %p309 = scmp.eq.s32.totalorder %s41, 0
      %p310 = por %p308, %p309
      %s312 = sadd.s32 %s311, 1
      %p315 = scmp.eq.s32.totalorder %s35, 3
      %p316 = scmp.ne.s32.totalorder %s311, %s313
      %p317 = scmp.eq.s32.totalorder %s35, 0
      %p318 = por %p316, %p317
      %p319 = scmp.ne.s32.totalorder %s311, %s313
      %p320 = scmp.eq.s32.totalorder %s40, 3
      %p321 = por %p319, %p320
      %p322 = scmp.ne.s32.totalorder %s313, %s314
      %p323 = scmp.eq.s32.totalorder %s40, 0
      %p324 = por %p322, %p323
      %p325 = scmp.ne.s32.totalorder %s313, %s314
      %p326 = scmp.eq.s32.totalorder %s41, 3
      %p327 = por %p325, %p326
      %p329 = scmp.ne.s32.totalorder %s314, %s328
      %p330 = scmp.eq.s32.totalorder %s41, 0
      %p331 = por %p329, %p330
      %s333 = sadd.s32 %s332, 1
      %p336 = scmp.eq.s32.totalorder %s35, 3
      %p337 = scmp.ne.s32.totalorder %s332, %s334
      %p338 = scmp.eq.s32.totalorder %s35, 0
      %p339 = por %p337, %p338
      %p340 = scmp.ne.s32.totalorder %s332, %s334
      %p341 = scmp.eq.s32.totalorder %s40, 3
      %p342 = por %p340, %p341
      %p343 = scmp.ne.s32.totalorder %s334, %s335
      %p344 = scmp.eq.s32.totalorder %s40, 0
      %p345 = por %p343, %p344
      %p346 = scmp.ne.s32.totalorder %s334, %s335
      %p347 = scmp.eq.s32.totalorder %s41, 3
      %p348 = por %p346, %p347
      %p350 = scmp.ne.s32.totalorder %s335, %s349
      %p351 = scmp.eq.s32.totalorder %s41, 0
      %p352 = por %p350, %p351
      %s353 = ssub.s32 %s42, %s54
      %p354 = scmp.eq.s32.totalorder %s353, 0
      %s356 = sadd.s32 %s355, 1
      %s357 = scalar_select %p354, %s355, %s356
      %p360 = pneg %p354
      %p361 = scmp.eq.s32.totalorder %s35, 3
      %p362 = por %p360, %p361
      %p363 = scmp.ne.s32.totalorder %s355, %s358
      %p364 = scmp.eq.s32.totalorder %s35, 0
      %p365 = por %p363, %p364
      %p366 = scmp.ne.s32.totalorder %s355, %s358
      %p367 = scmp.eq.s32.totalorder %s40, 3
      %p368 = por %p366, %p367
      %p369 = scmp.ne.s32.totalorder %s358, %s359
      %p370 = scmp.eq.s32.totalorder %s40, 0
      %p371 = por %p369, %p370
      %p372 = scmp.ne.s32.totalorder %s358, %s359
      %p373 = scmp.eq.s32.totalorder %s41, 3
      %p374 = por %p372, %p373
      %p376 = scmp.ne.s32.totalorder %s359, %s375
      %p377 = scmp.eq.s32.totalorder %s41, 0
      %p378 = por %p376, %p377
      %p379 = scmp.le.s32.totalorder 1, %s35
      %p380 = scmp.lt.s32.totalorder %s35, 5
      %p381 = pnand %p379, %p380
      %p382 = pneg %p381
      // Predicated region
      $region9: #{tpu_custom_call.1} parent=5 // pred_check
        _
      $region10: #{tpu_custom_call.1} parent=5 // pred_check_branch
        %384 = sbr.rel (%p381) target = $region12
      $region11: #{tpu_custom_call.1} parent=5 // pred_region
        %s385 = ssub.s32 %s35, 1
        // Predicated region
        $region13: #{tpu_custom_call.1} parent=11 // pred_check
          %p386 = pneg %p94
        $region14: #{tpu_custom_call.1} parent=11 // pred_check_branch
          %388 = sbr.rel (%p386) target = $region16
        $region15: #{tpu_custom_call.1} parent=11 // pred_region
          %s390 = ssub.s32 16, 16
          %391 = vsyncadd [#allocation8], %s390
          %s393 = sshll.u32 [#allocation7], 4
          %s394 = int_to_ptr.vmem [resolvable:$true] %s393
          %396 = dma.hbm_to_vmem [thread:$0]  %s1, 16, %s394, [#allocation8]
        $region16: #{tpu_custom_call.1} parent=11 // pred_fallthru
          _
        // Predicated region
        $region17: #{tpu_custom_call.1} parent=11 // pred_check
          %p397 = pneg %p115
        $region18: #{tpu_custom_call.1} parent=11 // pred_check_branch
          %399 = sbr.rel (%p397) target = $region20
        $region19: #{tpu_custom_call.1} parent=11 // pred_region
          %s401 = ssub.s32 16, 16
          %402 = vsyncadd [#allocation8], %s401
          %s404 = sshll.u32 [#allocation9], 4
          %s405 = int_to_ptr.vmem [resolvable:$true] %s404
          %407 = dma.hbm_to_vmem [thread:$0]  %s2, 16, %s405, [#allocation8]
        $region20: #{tpu_custom_call.1} parent=11 // pred_fallthru
          _
        // Predicated region
        $region21: #{tpu_custom_call.1} parent=11 // pred_check
          %p408 = pneg %p240
        $region22: #{tpu_custom_call.1} parent=11 // pred_check_branch
          %410 = sbr.rel (%p408) target = $region24
        $region23: #{tpu_custom_call.1} parent=11 // pred_region
          %s412 = ssub.s32 16, 16
          %413 = vsyncadd [#allocation17], %s412
          %s415 = sshll.u32 [#allocation16], 4
          %s416 = int_to_ptr.vmem [resolvable:$true] %s415
          %418 = dma.hbm_to_vmem [thread:$0]  %s7, 16, %s416, [#allocation17]
        $region24: #{tpu_custom_call.1} parent=11 // pred_fallthru
          _
        // Predicated region
        $region25: #{tpu_custom_call.1} parent=11 // pred_check
          %p419 = pneg %p261
        $region26: #{tpu_custom_call.1} parent=11 // pred_check_branch
          %421 = sbr.rel (%p419) target = $region28
        $region27: #{tpu_custom_call.1} parent=11 // pred_region
          %s423 = ssub.s32 16, 16
          %424 = vsyncadd [#allocation17], %s423
          %s426 = sshll.u32 [#allocation18], 4
          %s427 = int_to_ptr.vmem [resolvable:$true] %s426
          %429 = dma.hbm_to_vmem [thread:$0]  %s8, 16, %s427, [#allocation17]
        $region28: #{tpu_custom_call.1} parent=11 // pred_fallthru
          _
        // Predicated region
        $region29: #{tpu_custom_call.1} parent=11 // pred_check
          %p430 = pneg %p282
        $region30: #{tpu_custom_call.1} parent=11 // pred_check_branch
          %432 = sbr.rel (%p430) target = $region32
        $region31: #{tpu_custom_call.1} parent=11 // pred_region
          %s434 = ssub.s32 16384, 16384
          %435 = vsyncadd [#allocation20], %s434
          %s436 = sshll.u32 [#allocation19], 4
          %s437 = int_to_ptr.vmem [resolvable:$true] %s436
          %442 = dma.hbm_to_vmem [thread:$0]  %s9, 16384, %s437, [#allocation20], 1024, 1024, 64
        $region32: #{tpu_custom_call.1} parent=11 // pred_fallthru
          _
        // Predicated region
        $region33: #{tpu_custom_call.1} parent=11 // pred_check
          %p443 = pneg %p303
        $region34: #{tpu_custom_call.1} parent=11 // pred_check_branch
          %445 = sbr.rel (%p443) target = $region36
        $region35: #{tpu_custom_call.1} parent=11 // pred_region
          %s447 = ssub.s32 256, 256
          %448 = vsyncadd [#allocation20], %s447
          %s450 = sshll.u32 [#allocation21], 4
          %s451 = int_to_ptr.vmem [resolvable:$true] %s450
          %453 = dma.hbm_to_vmem [thread:$0]  %s10, 256, %s451, [#allocation20]
        $region36: #{tpu_custom_call.1} parent=11 // pred_fallthru
          _
        // Predicated region
        $region37: #{tpu_custom_call.1} parent=11 // pred_check
          %p454 = pneg %p324
        $region38: #{tpu_custom_call.1} parent=11 // pred_check_branch
          %456 = sbr.rel (%p454) target = $region40
        $region39: #{tpu_custom_call.1} parent=11 // pred_region
          %s458 = ssub.s32 16384, 16384
          %459 = vsyncadd [#allocation23], %s458
          %s460 = sshll.u32 [#allocation22], 4
          %s461 = int_to_ptr.vmem [resolvable:$true] %s460
          %466 = dma.hbm_to_vmem [thread:$0]  %s11, 16384, %s461, [#allocation23], 64, 64, 4
        $region40: #{tpu_custom_call.1} parent=11 // pred_fallthru
          _
        // Predicated region
        $region41: #{tpu_custom_call.1} parent=11 // pred_check
          %p467 = pneg %p345
        $region42: #{tpu_custom_call.1} parent=11 // pred_check_branch
          %469 = sbr.rel (%p467) target = $region44
        $region43: #{tpu_custom_call.1} parent=11 // pred_region
          %s471 = ssub.s32 16, 16
          %472 = vsyncadd [#allocation23], %s471
          %s474 = sshll.u32 [#allocation24], 4
          %s475 = int_to_ptr.vmem [resolvable:$true] %s474
          %477 = dma.hbm_to_vmem [thread:$0]  %s12, 16, %s475, [#allocation23]
        $region44: #{tpu_custom_call.1} parent=11 // pred_fallthru
          _
      $region12: #{tpu_custom_call.1} parent=5 // pred_fallthru
        _
      %p478 = scmp.lt.s32.totalorder %s35, 4
      // Predicated region
      $region45: #{tpu_custom_call.1} parent=5 // pred_check
        %p479 = pneg %p478
      $region46: #{tpu_custom_call.1} parent=5 // pred_check_branch
        %481 = sbr.rel (%p479) target = $region48
      $region47: #{tpu_custom_call.1} parent=5 // pred_region
        // Predicated region
        $region49: #{tpu_custom_call.1} parent=47 // pred_check
          %p482 = pneg %p67
        $region50: #{tpu_custom_call.1} parent=47 // pred_check_branch
          %484 = sbr.rel (%p482) target = $region52
        $region51: #{tpu_custom_call.1} parent=47 // pred_region
          %s485 = sand.u32 %s57, 1
          %s486 = scalar_lea.sflag [#allocation5], %s485
          %s487 = sand.u32 %s57, 1
          %s488 = smul.addr %s487, 16
          %s489 = scalar_lea.vmem [#allocation4], %s488
          %s490 = smul.u32 2, %s42
          %s492 = ssub.s32 256, 256
          %493 = vsyncadd %s486, %s492
          %s494 = smul.addr %s490, 128
          %s495 = scalar_lea.hbm %s0, %s494
          %s496 = sshll.u32 %s489, 4
          %s497 = int_to_ptr.vmem [resolvable:$true] %s496
          %502 = dma.hbm_to_vmem [thread:$0]  %s495, 256, %s497, %s486, 128, 128, 8
        $region52: #{tpu_custom_call.1} parent=47 // pred_fallthru
          _
        // Predicated region
        $region53: #{tpu_custom_call.1} parent=47 // pred_check
          %p503 = pneg %p135
        $region54: #{tpu_custom_call.1} parent=47 // pred_check_branch
          %505 = sbr.rel (%p503) target = $region56
        $region55: #{tpu_custom_call.1} parent=47 // pred_region
          %s506 = sand.u32 %s35, 1
          %s507 = scalar_lea.sflag [#allocation11], %s506
          %s508 = sand.u32 %s125, 1
          %s509 = smul.addr %s508, 192
          %s510 = scalar_lea.vmem [#allocation10], %s509
          %s512 = ssub.s32 3072, 3072
          %513 = vsyncadd %s507, %s512
          %s514 = smul.addr %s43, 48
          %s515 = smul.addr %s514, 64
          %s516 = scalar_lea.hbm %s3, %s515
          %s517 = sshll.u32 %s510, 4
          %s518 = int_to_ptr.vmem [resolvable:$true] %s517
          %523 = dma.hbm_to_vmem [thread:$0]  %s516, 3072, %s518, %s507, 192, 192, 12
        $region56: #{tpu_custom_call.1} parent=47 // pred_fallthru
          _
        // Predicated region
        $region57: #{tpu_custom_call.1} parent=47 // pred_check
          %p524 = pneg %p161
        $region58: #{tpu_custom_call.1} parent=47 // pred_check_branch
          %526 = sbr.rel (%p524) target = $region60
        $region59: #{tpu_custom_call.1} parent=47 // pred_region
          %s527 = sand.u32 %s35, 1
          %s528 = scalar_lea.sflag [#allocation11], %s527
          %s529 = sand.u32 %s151, 1
          %s530 = smul.addr %s529, 3
          %s531 = scalar_lea.vmem [#allocation12], %s530
          %s533 = ssub.s32 48, 48
          %534 = vsyncadd %s528, %s533
          %s535 = smul.addr %s43, 3
          %s536 = smul.addr %s535, 16
          %s537 = scalar_lea.hbm %s4, %s536
          %s539 = sshll.u32 %s531, 4
          %s540 = int_to_ptr.vmem [resolvable:$true] %s539
          %542 = dma.hbm_to_vmem [thread:$0]  %s537, 48, %s540, %s528
        $region60: #{tpu_custom_call.1} parent=47 // pred_fallthru
          _
        // Predicated region
        $region61: #{tpu_custom_call.1} parent=47 // pred_check
          %p543 = pneg %p187
        $region62: #{tpu_custom_call.1} parent=47 // pred_check_branch
          %545 = sbr.rel (%p543) target = $region64
        $region63: #{tpu_custom_call.1} parent=47 // pred_region
          %s546 = sand.u32 %s35, 1
          %s547 = scalar_lea.sflag [#allocation14], %s546
          %s548 = sand.u32 %s177, 1
          %s549 = smul.addr %s548, 64
          %s550 = scalar_lea.vmem [#allocation13], %s549
          %s552 = ssub.s32 1024, 1024
          %553 = vsyncadd %s547, %s552
          %s554 = smul.addr %s43, 16
          %s555 = smul.addr %s554, 64
          %s556 = scalar_lea.hbm %s5, %s555
          %s557 = sshll.u32 %s550, 4
          %s558 = int_to_ptr.vmem [resolvable:$true] %s557
          %563 = dma.hbm_to_vmem [thread:$0]  %s556, 1024, %s558, %s547, 64, 64, 4
        $region64: #{tpu_custom_call.1} parent=47 // pred_fallthru
          _
        // Predicated region
        $region65: #{tpu_custom_call.1} parent=47 // pred_check
          %p564 = pneg %p213
        $region66: #{tpu_custom_call.1} parent=47 // pred_check_branch
          %566 = sbr.rel (%p564) target = $region68
        $region67: #{tpu_custom_call.1} parent=47 // pred_region
          %s567 = sand.u32 %s35, 1
          %s568 = scalar_lea.sflag [#allocation14], %s567
          %s569 = sand.u32 %s203, 1
          %s570 = scalar_lea.vmem [#allocation15], %s569
          %s572 = ssub.s32 16, 16
          %573 = vsyncadd %s568, %s572
          %s574 = smul.addr %s43, 16
          %s575 = scalar_lea.hbm %s6, %s574
          %s577 = sshll.u32 %s570, 4
          %s578 = int_to_ptr.vmem [resolvable:$true] %s577
          %580 = dma.hbm_to_vmem [thread:$0]  %s575, 16, %s578, %s568
        $region68: #{tpu_custom_call.1} parent=47 // pred_fallthru
          _
      $region48: #{tpu_custom_call.1} parent=5 // pred_fallthru
        _
      %p581 = scmp.le.s32.totalorder 1, %s35
      %p582 = scmp.lt.s32.totalorder %s35, 5
      %p583 = pnand %p581, %p582
      %p584 = pneg %p583
      // Predicated region
      $region69: #{tpu_custom_call.1} parent=5 // pred_check
        _
      $region70: #{tpu_custom_call.1} parent=5 // pred_check_branch
        %586 = sbr.rel (%p583) target = $region72
      $region71: #{tpu_custom_call.1} parent=5 // pred_region
        %s587 = ssub.s32 %s35, 1
        %s588 = sand.u32 %s60, 1
        %s589 = scalar_lea.sflag [#allocation5], %s588
        %s590 = sand.u32 %s60, 1
        %s591 = smul.addr %s590, 16
        %s592 = scalar_lea.vmem [#allocation4], %s591
        // Predicated region
        $region73: #{tpu_custom_call.1} parent=71 // pred_check
          %p593 = pneg %p73
        $region74: #{tpu_custom_call.1} parent=71 // pred_check_branch
          %595 = sbr.rel (%p593) target = $region76
        $region75: #{tpu_custom_call.1} parent=71 // pred_region
          %596 = dma.done %s589, 256
        $region76: #{tpu_custom_call.1} parent=71 // pred_fallthru
          _
        // Predicated region
        $region77: #{tpu_custom_call.1} parent=71 // pred_check
          %p597 = pneg %p94
        $region78: #{tpu_custom_call.1} parent=71 // pred_check_branch
          %599 = sbr.rel (%p597) target = $region80
        $region79: #{tpu_custom_call.1} parent=71 // pred_region
          %600 = dma.done [#allocation8], 16
        $region80: #{tpu_custom_call.1} parent=71 // pred_fallthru
          _
        // Predicated region
        $region81: #{tpu_custom_call.1} parent=71 // pred_check
          %p601 = pneg %p115
        $region82: #{tpu_custom_call.1} parent=71 // pred_check_branch
          %603 = sbr.rel (%p601) target = $region84
        $region83: #{tpu_custom_call.1} parent=71 // pred_region
          %604 = dma.done [#allocation8], 16
        $region84: #{tpu_custom_call.1} parent=71 // pred_fallthru
          _
        %s605 = sand.u32 %s40, 1
        %s606 = scalar_lea.sflag [#allocation11], %s605
        %s607 = sand.u32 %s128, 1
        %s608 = smul.addr %s607, 192
        %s609 = scalar_lea.vmem [#allocation10], %s608
        // Predicated region
        $region85: #{tpu_custom_call.1} parent=71 // pred_check
          %p610 = pneg %p141
        $region86: #{tpu_custom_call.1} parent=71 // pred_check_branch
          %612 = sbr.rel (%p610) target = $region88
        $region87: #{tpu_custom_call.1} parent=71 // pred_region
          %613 = dma.done %s606, 3072
        $region88: #{tpu_custom_call.1} parent=71 // pred_fallthru
          _
        %s614 = sand.u32 %s40, 1
        %s615 = scalar_lea.sflag [#allocation11], %s614
        %s616 = sand.u32 %s154, 1
        %s617 = smul.addr %s616, 3
        %s618 = scalar_lea.vmem [#allocation12], %s617
        // Predicated region
        $region89: #{tpu_custom_call.1} parent=71 // pred_check
          %p619 = pneg %p167
        $region90: #{tpu_custom_call.1} parent=71 // pred_check_branch
          %621 = sbr.rel (%p619) target = $region92
        $region91: #{tpu_custom_call.1} parent=71 // pred_region
          %622 = dma.done %s615, 48
        $region92: #{tpu_custom_call.1} parent=71 // pred_fallthru
          _
        %s623 = sand.u32 %s40, 1
        %s624 = scalar_lea.sflag [#allocation14], %s623
        %s625 = sand.u32 %s180, 1
        %s626 = smul.addr %s625, 64
        %s627 = scalar_lea.vmem [#allocation13], %s626
        // Predicated region
        $region93: #{tpu_custom_call.1} parent=71 // pred_check
          %p628 = pneg %p193
        $region94: #{tpu_custom_call.1} parent=71 // pred_check_branch
          %630 = sbr.rel (%p628) target = $region96
        $region95: #{tpu_custom_call.1} parent=71 // pred_region
          %631 = dma.done %s624, 1024
        $region96: #{tpu_custom_call.1} parent=71 // pred_fallthru
          _
        %s632 = sand.u32 %s40, 1
        %s633 = scalar_lea.sflag [#allocation14], %s632
        %s634 = sand.u32 %s206, 1
        %s635 = scalar_lea.vmem [#allocation15], %s634
        // Predicated region
        $region97: #{tpu_custom_call.1} parent=71 // pred_check
          %p636 = pneg %p219
        $region98: #{tpu_custom_call.1} parent=71 // pred_check_branch
          %638 = sbr.rel (%p636) target = $region100
        $region99: #{tpu_custom_call.1} parent=71 // pred_region
          %639 = dma.done %s633, 16
        $region100: #{tpu_custom_call.1} parent=71 // pred_fallthru
          _
        // Predicated region
        $region101: #{tpu_custom_call.1} parent=71 // pred_check
          %p640 = pneg %p240
        $region102: #{tpu_custom_call.1} parent=71 // pred_check_branch
          %642 = sbr.rel (%p640) target = $region104
        $region103: #{tpu_custom_call.1} parent=71 // pred_region
          %643 = dma.done [#allocation17], 16
        $region104: #{tpu_custom_call.1} parent=71 // pred_fallthru
          _
        // Predicated region
        $region105: #{tpu_custom_call.1} parent=71 // pred_check
          %p644 = pneg %p261
        $region106: #{tpu_custom_call.1} parent=71 // pred_check_branch
          %646 = sbr.rel (%p644) target = $region108
        $region107: #{tpu_custom_call.1} parent=71 // pred_region
          %647 = dma.done [#allocation17], 16
        $region108: #{tpu_custom_call.1} parent=71 // pred_fallthru
          _
        // Predicated region
        $region109: #{tpu_custom_call.1} parent=71 // pred_check
          %p648 = pneg %p282
        $region110: #{tpu_custom_call.1} parent=71 // pred_check_branch
          %650 = sbr.rel (%p648) target = $region112
        $region111: #{tpu_custom_call.1} parent=71 // pred_region
          %651 = dma.done [#allocation20], 16384
        $region112: #{tpu_custom_call.1} parent=71 // pred_fallthru
          _
        // Predicated region
        $region113: #{tpu_custom_call.1} parent=71 // pred_check
          %p652 = pneg %p303
        $region114: #{tpu_custom_call.1} parent=71 // pred_check_branch
          %654 = sbr.rel (%p652) target = $region116
        $region115: #{tpu_custom_call.1} parent=71 // pred_region
          %655 = dma.done [#allocation20], 256
        $region116: #{tpu_custom_call.1} parent=71 // pred_fallthru
          _
        // Predicated region
        $region117: #{tpu_custom_call.1} parent=71 // pred_check
          %p656 = pneg %p324
        $region118: #{tpu_custom_call.1} parent=71 // pred_check_branch
          %658 = sbr.rel (%p656) target = $region120
        $region119: #{tpu_custom_call.1} parent=71 // pred_region
          %659 = dma.done [#allocation23], 16384
        $region120: #{tpu_custom_call.1} parent=71 // pred_fallthru
          _
        // Predicated region
        $region121: #{tpu_custom_call.1} parent=71 // pred_check
          %p660 = pneg %p345
        $region122: #{tpu_custom_call.1} parent=71 // pred_check_branch
          %662 = sbr.rel (%p660) target = $region124
        $region123: #{tpu_custom_call.1} parent=71 // pred_region
          %663 = dma.done [#allocation23], 16
        $region124: #{tpu_custom_call.1} parent=71 // pred_fallthru
          _
        %s664 = sand.u32 %s60, 1
        %s665 = scalar_lea.sflag [#allocation5], %s664
        %s666 = sand.u32 %s60, 1
        %s667 = smul.addr %s666, 16
        %s668 = scalar_lea.vmem [#allocation4], %s667
        %p669 = pneg %p73
        %p670 = pneg %p70
        %p671 = pneg %p94
        %p672 = pneg %p91
        %p673 = pneg %p115
        %p674 = pneg %p112
        %s675 = sand.u32 %s40, 1
        %s676 = scalar_lea.sflag [#allocation11], %s675
        %s677 = sand.u32 %s128, 1
        %s678 = smul.addr %s677, 192
        %s679 = scalar_lea.vmem [#allocation10], %s678
        %p680 = pneg %p141
        %p681 = pneg %p138
        %s682 = sand.u32 %s40, 1
        %s683 = scalar_lea.sflag [#allocation11], %s682
        %s684 = sand.u32 %s154, 1
        %s685 = smul.addr %s684, 3
        %s686 = scalar_lea.vmem [#allocation12], %s685
        %p687 = pneg %p167
        %p688 = pneg %p164
        %s689 = sand.u32 %s40, 1
        %s690 = scalar_lea.sflag [#allocation14], %s689
        %s691 = sand.u32 %s180, 1
        %s692 = smul.addr %s691, 64
        %s693 = scalar_lea.vmem [#allocation13], %s692
        %p694 = pneg %p193
        %p695 = pneg %p190
        %s696 = sand.u32 %s40, 1
        %s697 = scalar_lea.sflag [#allocation14], %s696
        %s698 = sand.u32 %s206, 1
        %s699 = scalar_lea.vmem [#allocation15], %s698
        %p700 = pneg %p219
        %p701 = pneg %p216
        %p702 = pneg %p240
        %p703 = pneg %p237
        %p704 = pneg %p261
        %p705 = pneg %p258
        %p706 = pneg %p282
        %p707 = pneg %p279
        %p708 = pneg %p303
        %p709 = pneg %p300
        %p710 = pneg %p324
        %p711 = pneg %p321
        %p712 = pneg %p345
        %p713 = pneg %p342
        %p714 = pneg %p371
        %p715 = pneg %p368
        %s716 = sand.u32 %s358, 1
        %s717 = scalar_lea.sflag [#allocation6], %s716
        %s718 = sand.u32 %s358, 1
        %s719 = smul.addr %s718, 16
        %s720 = scalar_lea.vmem [#allocation25], %s719
        %s721 = smul.u32 2, %s44
        %s722 = smul.u32 2, %s44
        %p724 = scmp.eq.s32.totalorder %s45, 0
        // Predicated region
        $region125: #{tpu_custom_call.1} parent=71 // pred_check
          %p725 = pneg %p724
        $region126: #{tpu_custom_call.1} parent=71 // pred_check_branch
          %727 = sbr.rel (%p725) target = $region128
        $region127: #{tpu_custom_call.1} parent=71 // pred_region
          %v728 = vld [vmem:[%s592] sm:$0xff]
          %v729 = vld [vmem:[%s592 + $0x8] sm:$0xff]
          %730 = vst [vmem:[#allocation2] sm:$0xff] %v728
          %731 = vst [vmem:[#allocation2 + $0x8] sm:$0xff] %v729
        $region128: #{tpu_custom_call.1} parent=71 // pred_fallthru
          _
        %v732 = vld [vmem:[#allocation2] sm:$0xff]
        %v733 = vld [vmem:[#allocation2 + $0x8] sm:$0xff]
        %v734 = vld [vmem:[#allocation7] sm:$0x1]
        %v735 = vld [vmem:[#allocation9] sm:$0x1]
        %736 = vadd.xlane.f32.xlu0 %v732
        %v737 = vpop.xlane.xlu0 %736
        %738 = vadd.xlane.f32.xlu0 %v733
        %v739 = vpop.xlane.xlu0 %738
        %v740 = vrcp.pop 128.0
        %v741 = vmul.f32 %v737, %v740
        %v742 = vmul.f32 %v739, %v740
        %v743 = vsub.f32 %v732, %v741
        %v744 = vsub.f32 %v733, %v742
        %v745 = vmul.f32 %v743, %v743
        %v746 = vmul.f32 %v744, %v744
        %747 = vadd.xlane.f32.xlu0 %v745
        %v748 = vpop.xlane.xlu0 %747
        %749 = vadd.xlane.f32.xlu0 %v746
        %v750 = vpop.xlane.xlu0 %749
        %v751 = vmul.f32 %v748, 0.007874016
        %v752 = vmul.f32 %v750, 0.007874016
        %v753 = vrsqrt.pop %v751
        %v754 = vmul.f32 %v751, %v753
        %vm755 = vcmp.eq.f32.partialorder %v751, inf
        %v756 = vsel %vm755, %v751, %v754
        %vm757 = vcmp.eq.f32.partialorder %v751, 0.0
        %v758 = vand.u32 %v751, 2147483648
        %v759 = vsel %vm757, %v758, %v756
        %v760 = vrsqrt.pop %v752
        %v761 = vmul.f32 %v752, %v760
        %vm762 = vcmp.eq.f32.partialorder %v752, inf
        %v763 = vsel %vm762, %v752, %v761
        %vm764 = vcmp.eq.f32.partialorder %v752, 0.0
        %v765 = vand.u32 %v752, 2147483648
        %v766 = vsel %vm764, %v765, %v763
        %v767 = vadd.f32 %v759, 1e-06
        %v768 = vadd.f32 %v766, 1e-06
        %v769 = vrcp.pop %v767
        %v770 = vmul.f32 %v743, %v769
        %v771 = vrcp.pop %v768
        %v772 = vmul.f32 %v744, %v771
        %v774 = vlaneseq
        %v775 = vshrl.u32 %v774, 7
        %v776 = vsub.s32 0, %v775
        %v777 = vrot.slane %v734, %v776
        %v779 = vmul.f32 %v770, %v777
        %v780 = vmul.f32 %v772, %v777
        %v782 = vlaneseq
        %v783 = vshrl.u32 %v782, 7
        %v784 = vsub.s32 0, %v783
        %v785 = vrot.slane %v735, %v784
        %v787 = vadd.f32 %v779, %v785
        %v788 = vadd.f32 %v780, %v785
        %v789 = vpack.c.bf16 %v788, %v787
        %v790 = vld [vmem:[%s609] sm:$0xff]
        %v791 = vld [vmem:[%s609 + $0x8] sm:$0xf]
        %v792 = vld [vmem:[%s609 + $0xc] sm:$0xff]
        %v793 = vld [vmem:[%s609 + $0x14] sm:$0xf]
        %v794 = vld [vmem:[%s609 + $0x18] sm:$0xff]
        %v795 = vld [vmem:[%s609 + $0x20] sm:$0xf]
        %v796 = vld [vmem:[%s609 + $0x24] sm:$0xff]
        %v797 = vld [vmem:[%s609 + $0x2c] sm:$0xf]
        %v798 = vld [vmem:[%s609 + $0x30] sm:$0xff]
        %v799 = vld [vmem:[%s609 + $0x38] sm:$0xf]
        %v800 = vld [vmem:[%s609 + $0x3c] sm:$0xff]
        %v801 = vld [vmem:[%s609 + $0x44] sm:$0xf]
        %v802 = vld [vmem:[%s609 + $0x48] sm:$0xff]
        %v803 = vld [vmem:[%s609 + $0x50] sm:$0xf]
        %v804 = vld [vmem:[%s609 + $0x54] sm:$0xff]
        %v805 = vld [vmem:[%s609 + $0x5c] sm:$0xf]
        %v806 = vld [vmem:[%s609 + $0x60] sm:$0xff]
        %v807 = vld [vmem:[%s609 + $0x68] sm:$0xf]
        %v808 = vld [vmem:[%s609 + $0x6c] sm:$0xff]
        %v809 = vld [vmem:[%s609 + $0x74] sm:$0xf]
        %v810 = vld [vmem:[%s609 + $0x78] sm:$0xff]
        %v811 = vld [vmem:[%s609 + $0x80] sm:$0xf]
        %v812 = vld [vmem:[%s609 + $0x84] sm:$0xff]
        %v813 = vld [vmem:[%s609 + $0x8c] sm:$0xf]
        %v814 = vld [vmem:[%s609 + $0x90] sm:$0xff]
        %v815 = vld [vmem:[%s609 + $0x98] sm:$0xf]
        %v816 = vld [vmem:[%s609 + $0x9c] sm:$0xff]
        %v817 = vld [vmem:[%s609 + $0xa4] sm:$0xf]
        %v818 = vld [vmem:[%s609 + $0xa8] sm:$0xff]
        %v819 = vld [vmem:[%s609 + $0xb0] sm:$0xf]
        %v820 = vld [vmem:[%s609 + $0xb4] sm:$0xff]
        %v821 = vld [vmem:[%s609 + $0xbc] sm:$0xf]
        %v822 = vld [vmem:[%s618] sm:$0x7]
        %v824 = vlaneseq
        %v825 = vshrl.u32 %v824, 7
        %v826 = vsub.s32 0, %v825
        %v827 = vrot.slane %v822, %v826
        %v828 = vlaneseq
        %v829 = vshrl.u32 %v828, 7
        %v830 = vsub.s32 1, %v829
        %v831 = vrot.slane %v822, %v830
        %v832 = vlaneseq
        %v833 = vshrl.u32 %v832, 7
        %v834 = vsub.s32 2, %v833
        %v835 = vrot.slane %v822, %v834
        %v871 = vunpack.c.l.b16 %v790
        %v872 = vunpack.c.h.b16 %v790
        %v873 = vunpack.c.l.b16 %v791
        %v874 = vunpack.c.l.b16 %v792
        %v875 = vunpack.c.h.b16 %v792
        %v876 = vunpack.c.l.b16 %v793
        %v877 = vunpack.c.l.b16 %v794
        %v878 = vunpack.c.h.b16 %v794
        %v879 = vunpack.c.l.b16 %v795
        %v880 = vunpack.c.l.b16 %v796
        %v881 = vunpack.c.h.b16 %v796
        %v882 = vunpack.c.l.b16 %v797
        %v883 = vunpack.c.l.b16 %v798
        %v884 = vunpack.c.h.b16 %v798
        %v885 = vunpack.c.l.b16 %v799
        %v886 = vunpack.c.l.b16 %v800
        %v887 = vunpack.c.h.b16 %v800
        %v888 = vunpack.c.l.b16 %v801
        %v889 = vunpack.c.l.b16 %v802
        %v890 = vunpack.c.h.b16 %v802
        %v891 = vunpack.c.l.b16 %v803
        %v892 = vunpack.c.l.b16 %v804
        %v893 = vunpack.c.h.b16 %v804
        %v894 = vunpack.c.l.b16 %v805
        %v895 = vunpack.c.l.b16 %v806
        %v896 = vunpack.c.h.b16 %v806
        %v897 = vunpack.c.l.b16 %v807
        %v898 = vunpack.c.l.b16 %v808
        %v899 = vunpack.c.h.b16 %v808
        %v900 = vunpack.c.l.b16 %v809
        %v901 = vunpack.c.l.b16 %v810
        %v902 = vunpack.c.h.b16 %v810
        %v903 = vunpack.c.l.b16 %v811
        %v904 = vunpack.c.l.b16 %v812
        %v905 = vunpack.c.h.b16 %v812
        %v906 = vunpack.c.l.b16 %v813
        %v907 = vunpack.c.l.b16 %v814
        %v908 = vunpack.c.h.b16 %v814
        %v909 = vunpack.c.l.b16 %v815
        %v910 = vunpack.c.l.b16 %v816
        %v911 = vunpack.c.h.b16 %v816
        %v912 = vunpack.c.l.b16 %v817
        %v913 = vunpack.c.l.b16 %v818
        %v914 = vunpack.c.h.b16 %v818
        %v915 = vunpack.c.l.b16 %v819
        %v916 = vunpack.c.l.b16 %v820
        %v917 = vunpack.c.h.b16 %v820
        %v918 = vunpack.c.l.b16 %v821
        %v919 = vpack.c.b16 %v874, %v871
        %v920 = vpack.c.b16 %v875, %v872
        %v921 = vpack.c.b16 %v876, %v873
        %v922 = vpack.c.b16 %v880, %v877
        %v923 = vpack.c.b16 %v881, %v878
        %v924 = vpack.c.b16 %v882, %v879
        %v925 = vpack.c.b16 %v886, %v883
        %v926 = vpack.c.b16 %v887, %v884
        %v927 = vpack.c.b16 %v888, %v885
        %v928 = vpack.c.b16 %v892, %v889
        %v929 = vpack.c.b16 %v893, %v890
        %v930 = vpack.c.b16 %v894, %v891
        %v931 = vpack.c.b16 %v898, %v895
        %v932 = vpack.c.b16 %v899, %v896
        %v933 = vpack.c.b16 %v900, %v897
        %v934 = vpack.c.b16 %v904, %v901
        %v935 = vpack.c.b16 %v905, %v902
        %v936 = vpack.c.b16 %v906, %v903
        %v937 = vpack.c.b16 %v910, %v907
        %v938 = vpack.c.b16 %v911, %v908
        %v939 = vpack.c.b16 %v912, %v909
        %v940 = vpack.c.b16 %v916, %v913
        %v941 = vpack.c.b16 %v917, %v914
        %v942 = vpack.c.b16 %v918, %v915
        %967 = vmatprep.subr.bf16.mxu0 %v920
        %968 = vmatpush1.bf16.msra.mxu0 %v919
        %969 = vmatprep.subr.bf16.mxu0 %v923
        %970 = vmatpush1.bf16.msra.mxu0 %v922
        %971 = vmatprep.subr.bf16.mxu0 %v926
        %972 = vmatpush1.bf16.msra.mxu0 %v925
        %973 = vmatprep.subr.bf16.mxu0 %v929
        %974 = vmatpush1.bf16.msra.mxu0 %v928
        %975 = vmatprep.subr.bf16.mxu0 %v932
        %976 = vmatpush1.bf16.msra.mxu0 %v931
        %977 = vmatprep.subr.bf16.mxu0 %v935
        %978 = vmatpush1.bf16.msra.mxu0 %v934
        %979 = vmatprep.subr.bf16.mxu0 %v938
        %980 = vmatpush1.bf16.msra.mxu0 %v937
        %981 = vmatprep.subr.bf16.mxu0 %v941
        %982 = vmatpush1.bf16.msra.mxu0 %v940
        %983 = vmatprep.subr.bf16.mxu0 0
        %984 = vmatpush1.bf16.msra.mxu0 0
        %985 = vmatprep.subr.bf16.mxu0 0
        %986 = vmatpush1.bf16.msra.mxu0 0
        %987 = vmatprep.subr.bf16.mxu0 0
        %988 = vmatpush1.bf16.msra.mxu0 0
        %989 = vmatprep.subr.bf16.mxu0 0
        %990 = vmatpush1.bf16.msra.mxu0 0
        %991 = vmatprep.subr.bf16.mxu0 0
        %992 = vmatpush1.bf16.msra.mxu0 0
        %993 = vmatprep.subr.bf16.mxu0 0
        %994 = vmatpush1.bf16.msra.mxu0 0
        %995 = vmatprep.subr.bf16.mxu0 0
        %996 = vmatpush1.bf16.msra.mxu0 0
        %997 = vmatprep.subr.bf16.mxu0 0
        %998 = vmatpush1.bf16.msra.mxu0 0
        %999 = vmatprep.mubr.bf16.mxu0 0
        %1000 = vmatmul.mubr.bf16.gmra.mrb[0].mxu0 %v789
        %v1001 = vpop.f32.mrb[0].mxu0
        %v1002 = vadd.f32 %v827, %v1001
        %v1003 = vpop.f32.mrb[0].mxu0
        %v1004 = vadd.f32 %v831, %v1003
        %v1005 = vpop.f32.mrb[0].mxu0
        %v1006 = vadd.f32 %v827, %v1005
        %v1007 = vpop.f32.mrb[0].mxu0
        %v1008 = vadd.f32 %v831, %v1007
        %1009 = vdwg.mxu0
        %1010 = vmatprep.subr.bf16.mxu0 0
        %1011 = vmatpush1.bf16.msra.mxu0 %v921
        %1012 = vmatprep.subr.bf16.mxu0 0
        %1013 = vmatpush1.bf16.msra.mxu0 %v924
        %1014 = vmatprep.subr.bf16.mxu0 0
        %1015 = vmatpush1.bf16.msra.mxu0 %v927
        %1016 = vmatprep.subr.bf16.mxu0 0
        %1017 = vmatpush1.bf16.msra.mxu0 %v930
        %1018 = vmatprep.subr.bf16.mxu0 0
        %1019 = vmatpush1.bf16.msra.mxu0 %v933
        %1020 = vmatprep.subr.bf16.mxu0 0
        %1021 = vmatpush1.bf16.msra.mxu0 %v936
        %1022 = vmatprep.subr.bf16.mxu0 0
        %1023 = vmatpush1.bf16.msra.mxu0 %v939
        %1024 = vmatprep.subr.bf16.mxu0 0
        %1025 = vmatpush1.bf16.msra.mxu0 %v942
        %1026 = vmatprep.subr.bf16.mxu0 0
        %1027 = vmatpush1.bf16.msra.mxu0 0
        %1028 = vmatprep.subr.bf16.mxu0 0
        %1029 = vmatpush1.bf16.msra.mxu0 0
        %1030 = vmatprep.subr.bf16.mxu0 0
        %1031 = vmatpush1.bf16.msra.mxu0 0
        %1032 = vmatprep.subr.bf16.mxu0 0
        %1033 = vmatpush1.bf16.msra.mxu0 0
        %1034 = vmatprep.subr.bf16.mxu0 0
        %1035 = vmatpush1.bf16.msra.mxu0 0
        %1036 = vmatprep.subr.bf16.mxu0 0
        %1037 = vmatpush1.bf16.msra.mxu0 0
        %1038 = vmatprep.subr.bf16.mxu0 0
        %1039 = vmatpush1.bf16.msra.mxu0 0
        %1040 = vmatprep.subr.bf16.mxu0 0
        %1041 = vmatpush1.bf16.msra.mxu0 0
        %1042 = vmatprep.mubr.bf16.mxu0 0
        %1043 = vmatmul.mubr.bf16.gmra.mrb[0].mxu0 %v789
        %v1044 = vpop.f32.mrb[0].mxu0
        %v1045 = vadd.f32 %v835, %v1044
        %v1046 = vpop.f32.mrb[0].mxu0
        %v1047 = vpop.f32.mrb[0].mxu0
        %v1048 = vadd.f32 %v835, %v1047
        %v1049 = vpop.f32.mrb[0].mxu0
        %1050 = vdwg.mxu0
        %v1051 = vpack.c.bf16 %v1006, %v1002
        %v1052 = vpack.c.bf16 %v1008, %v1004
        %v1053 = vpack.c.bf16 %v1048, %v1045
        %vm1054 = vcmask 261120
        %v1056 = vsel %vm1054, %v1051, 0
        %v1059 = vsel %vm1054, %v1052, 0
        %1061 = vmatprep.subr.bf16.mxu0 0
        %1062 = vmatpush1.bf16.xpose.msra.mxu0 %v1059
        %1063 = vmatprep.subr.bf16.mxu0 0
        %1064 = vmatpush1.bf16.xpose.msra.mxu0 0
        %1065 = vmatprep.subr.bf16.mxu0 0
        %1066 = vmatpush1.bf16.xpose.msra.mxu0 0
        %1067 = vmatprep.subr.bf16.mxu0 0
        %1068 = vmatpush1.bf16.xpose.msra.mxu0 0
        %1069 = vmatprep.subr.bf16.mxu0 0
        %1070 = vmatpush1.bf16.xpose.msra.mxu0 0
        %1071 = vmatprep.subr.bf16.mxu0 0
        %1072 = vmatpush1.bf16.xpose.msra.mxu0 0
        %1073 = vmatprep.subr.bf16.mxu0 0
        %1074 = vmatpush1.bf16.xpose.msra.mxu0 0
        %1075 = vmatprep.subr.bf16.mxu0 0
        %1076 = vmatpush1.bf16.xpose.msra.mxu0 0
        %1077 = vmatprep.subr.bf16.mxu0 0
        %1078 = vmatpush1.bf16.xpose.msra.mxu0 0
        %1079 = vmatprep.subr.bf16.mxu0 0
        %1080 = vmatpush1.bf16.xpose.msra.mxu0 0
        %1081 = vmatprep.subr.bf16.mxu0 0
        %1082 = vmatpush1.bf16.xpose.msra.mxu0 0
        %1083 = vmatprep.subr.bf16.mxu0 0
        %1084 = vmatpush1.bf16.xpose.msra.mxu0 0
        %1085 = vmatprep.subr.bf16.mxu0 0
        %1086 = vmatpush1.bf16.xpose.msra.mxu0 0
        %1087 = vmatprep.subr.bf16.mxu0 0
        %1088 = vmatpush1.bf16.xpose.msra.mxu0 0
        %1089 = vmatprep.subr.bf16.mxu0 0
        %1090 = vmatpush1.bf16.xpose.msra.mxu0 0
        %1091 = vmatprep.subr.bf16.mxu0 0
        %1092 = vmatpush1.bf16.xpose.msra.mxu0 0
        %1093 = vmatprep.mubr.bf16.mxu0 0
        %1094 = vmatmul.mubr.bf16.gmra.mrb[0].mxu0 %v1056
        %v1095 = vpop.f32.mrb[0].mxu0
        %v1096 = vadd.f32 0.0, %v1095
        %v1097 = vpop.f32.mrb[0].mxu0
        %v1098 = vpop.f32.mrb[0].mxu0
        %v1099 = vadd.f32 0.0, %v1098
        %v1100 = vpop.f32.mrb[0].mxu0
        %1101 = vdwg.mxu0
        %vm1102 = vcmask 130048
        %v1103 = vsel %vm1102, %v1096, -inf
        %1104 = vmax.xlane.f32.xlu0 %v1103
        %v1105 = vpop.xlane.xlu0 %1104
        %v1106 = vsel %vm1102, %v1099, -inf
        %1107 = vmax.xlane.f32.xlu0 %v1106
        %v1108 = vpop.xlane.xlu0 %1107
        %v1109 = vsub.f32 %v1096, %v1105
        %v1110 = vsub.f32 %v1099, %v1108
        %v1111 = vmul.f32 %v1109, 1.442695
        %v1112 = vpow.pop %v1111
        %v1113 = vmul.f32 %v1110, 1.442695
        %v1114 = vpow.pop %v1113
        %v1115 = vsel %vm1102, %v1112, 0.0
        %1116 = vadd.xlane.f32.xlu0 %v1115
        %v1117 = vpop.xlane.xlu0 %1116
        %v1118 = vsel %vm1102, %v1114, 0.0
        %1119 = vadd.xlane.f32.xlu0 %v1118
        %v1120 = vpop.xlane.xlu0 %1119
        %v1121 = vrcp.pop %v1117
        %v1122 = vrcp.pop %v1120
        %v1123 = vmul.f32 %v1112, %v1121
        %v1124 = vmul.f32 %v1114, %v1122
        %v1125 = vpack.c.bf16 %v1124, %v1123
        %v1127 = vsel %vm1102, %v1125, 0
        %1129 = vmatprep.subr.bf16.mxu0 0
        %1130 = vmatpush1.bf16.msra.mxu0 %v1053
        %1131 = vmatprep.subr.bf16.mxu0 0
        %1132 = vmatpush1.bf16.msra.mxu0 0
        %1133 = vmatprep.subr.bf16.mxu0 0
        %1134 = vmatpush1.bf16.msra.mxu0 0
        %1135 = vmatprep.subr.bf16.mxu0 0
        %1136 = vmatpush1.bf16.msra.mxu0 0
        %1137 = vmatprep.subr.bf16.mxu0 0
        %1138 = vmatpush1.bf16.msra.mxu0 0
        %1139 = vmatprep.subr.bf16.mxu0 0
        %1140 = vmatpush1.bf16.msra.mxu0 0
        %1141 = vmatprep.subr.bf16.mxu0 0
        %1142 = vmatpush1.bf16.msra.mxu0 0
        %1143 = vmatprep.subr.bf16.mxu0 0
        %1144 = vmatpush1.bf16.msra.mxu0 0
        %1145 = vmatprep.subr.bf16.mxu0 0
        %1146 = vmatpush1.bf16.msra.mxu0 0
        %1147 = vmatprep.subr.bf16.mxu0 0
        %1148 = vmatpush1.bf16.msra.mxu0 0
        %1149 = vmatprep.subr.bf16.mxu0 0
        %1150 = vmatpush1.bf16.msra.mxu0 0
        %1151 = vmatprep.subr.bf16.mxu0 0
        %1152 = vmatpush1.bf16.msra.mxu0 0
        %1153 = vmatprep.subr.bf16.mxu0 0
        %1154 = vmatpush1.bf16.msra.mxu0 0
        %1155 = vmatprep.subr.bf16.mxu0 0
        %1156 = vmatpush1.bf16.msra.mxu0 0
        %1157 = vmatprep.subr.bf16.mxu0 0
        %1158 = vmatpush1.bf16.msra.mxu0 0
        %1159 = vmatprep.subr.bf16.mxu0 0
        %1160 = vmatpush1.bf16.msra.mxu0 0
        %1161 = vmatprep.mubr.bf16.mxu0 0
        %1162 = vmatmul.mubr.bf16.gmra.mrb[0].mxu0 %v1127
        %v1163 = vpop.f32.mrb[0].mxu0
        %v1164 = vadd.f32 0.0, %v1163
        %v1165 = vpop.f32.mrb[0].mxu0
        %v1166 = vpop.f32.mrb[0].mxu0
        %v1167 = vadd.f32 0.0, %v1166
        %v1168 = vpop.f32.mrb[0].mxu0
        %1169 = vdwg.mxu0
        %v1170 = vpack.c.bf16 %v1167, %v1164
        %1171 = vst.msk [vmem:[#allocation3] sm:$0xff] %vm1054, %v1170
        %1173 = vrot.lane.b32.xlu0 %v1051, 96
        %v1174 = vpop.permute.xlu0 %1173
        %1176 = vrot.lane.b32.xlu0 %v1052, 96
        %v1177 = vpop.permute.xlu0 %1176
        %v1179 = vsel %vm1054, %v1174, 0
        %v1182 = vsel %vm1054, %v1177, 0
        %1184 = vmatprep.subr.bf16.mxu0 0
        %1185 = vmatpush1.bf16.xpose.msra.mxu0 %v1182
        %1186 = vmatprep.subr.bf16.mxu0 0
        %1187 = vmatpush1.bf16.xpose.msra.mxu0 0
        %1188 = vmatprep.subr.bf16.mxu0 0
        %1189 = vmatpush1.bf16.xpose.msra.mxu0 0
        %1190 = vmatprep.subr.bf16.mxu0 0
        %1191 = vmatpush1.bf16.xpose.msra.mxu0 0
        %1192 = vmatprep.subr.bf16.mxu0 0
        %1193 = vmatpush1.bf16.xpose.msra.mxu0 0
        %1194 = vmatprep.subr.bf16.mxu0 0
        %1195 = vmatpush1.bf16.xpose.msra.mxu0 0
        %1196 = vmatprep.subr.bf16.mxu0 0
        %1197 = vmatpush1.bf16.xpose.msra.mxu0 0
        %1198 = vmatprep.subr.bf16.mxu0 0
        %1199 = vmatpush1.bf16.xpose.msra.mxu0 0
        %1200 = vmatprep.subr.bf16.mxu0 0
        %1201 = vmatpush1.bf16.xpose.msra.mxu0 0
        %1202 = vmatprep.subr.bf16.mxu0 0
        %1203 = vmatpush1.bf16.xpose.msra.mxu0 0
        %1204 = vmatprep.subr.bf16.mxu0 0
        %1205 = vmatpush1.bf16.xpose.msra.mxu0 0
        %1206 = vmatprep.subr.bf16.mxu0 0
        %1207 = vmatpush1.bf16.xpose.msra.mxu0 0
        %1208 = vmatprep.subr.bf16.mxu0 0
        %1209 = vmatpush1.bf16.xpose.msra.mxu0 0
        %1210 = vmatprep.subr.bf16.mxu0 0
        %1211 = vmatpush1.bf16.xpose.msra.mxu0 0
        %1212 = vmatprep.subr.bf16.mxu0 0
        %1213 = vmatpush1.bf16.xpose.msra.mxu0 0
        %1214 = vmatprep.subr.bf16.mxu0 0
        %1215 = vmatpush1.bf16.xpose.msra.mxu0 0
        %1216 = vmatprep.mubr.bf16.mxu0 0
        %1217 = vmatmul.mubr.bf16.gmra.mrb[0].mxu0 %v1179
        %v1218 = vpop.f32.mrb[0].mxu0
        %v1219 = vadd.f32 0.0, %v1218
        %v1220 = vpop.f32.mrb[0].mxu0
        %v1221 = vpop.f32.mrb[0].mxu0
        %v1222 = vadd.f32 0.0, %v1221
        %v1223 = vpop.f32.mrb[0].mxu0
        %1224 = vdwg.mxu0
        %v1225 = vsel %vm1102, %v1219, -inf
        %1226 = vmax.xlane.f32.xlu0 %v1225
        %v1227 = vpop.xlane.xlu0 %1226
        %v1228 = vsel %vm1102, %v1222, -inf
        %1229 = vmax.xlane.f32.xlu0 %v1228
        %v1230 = vpop.xlane.xlu0 %1229
        %v1231 = vsub.f32 %v1219, %v1227
        %v1232 = vsub.f32 %v1222, %v1230
        %v1233 = vmul.f32 %v1231, 1.442695
        %v1234 = vpow.pop %v1233
        %v1235 = vmul.f32 %v1232, 1.442695
        %v1236 = vpow.pop %v1235
        %v1237 = vsel %vm1102, %v1234, 0.0
        %1238 = vadd.xlane.f32.xlu0 %v1237
        %v1239 = vpop.xlane.xlu0 %1238
        %v1240 = vsel %vm1102, %v1236, 0.0
        %1241 = vadd.xlane.f32.xlu0 %v1240
        %v1242 = vpop.xlane.xlu0 %1241
        %v1243 = vrcp.pop %v1239
        %v1244 = vrcp.pop %v1242
        %v1245 = vmul.f32 %v1234, %v1243
        %v1246 = vmul.f32 %v1236, %v1244
        %v1247 = vpack.c.bf16 %v1246, %v1245
        %1249 = vrot.lane.b32.xlu0 %v1053, 96
        %v1250 = vpop.permute.xlu0 %1249
        %v1253 = vsel %vm1102, %v1247, 0
        %1255 = vmatprep.subr.bf16.mxu0 0
        %1256 = vmatpush1.bf16.msra.mxu0 %v1250
        %1257 = vmatprep.subr.bf16.mxu0 0
        %1258 = vmatpush1.bf16.msra.mxu0 0
        %1259 = vmatprep.subr.bf16.mxu0 0
        %1260 = vmatpush1.bf16.msra.mxu0 0
        %1261 = vmatprep.subr.bf16.mxu0 0
        %1262 = vmatpush1.bf16.msra.mxu0 0
        %1263 = vmatprep.subr.bf16.mxu0 0
        %1264 = vmatpush1.bf16.msra.mxu0 0
        %1265 = vmatprep.subr.bf16.mxu0 0
        %1266 = vmatpush1.bf16.msra.mxu0 0
        %1267 = vmatprep.subr.bf16.mxu0 0
        %1268 = vmatpush1.bf16.msra.mxu0 0
        %1269 = vmatprep.subr.bf16.mxu0 0
        %1270 = vmatpush1.bf16.msra.mxu0 0
        %1271 = vmatprep.subr.bf16.mxu0 0
        %1272 = vmatpush1.bf16.msra.mxu0 0
        %1273 = vmatprep.subr.bf16.mxu0 0
        %1274 = vmatpush1.bf16.msra.mxu0 0
        %1275 = vmatprep.subr.bf16.mxu0 0
        %1276 = vmatpush1.bf16.msra.mxu0 0
        %1277 = vmatprep.subr.bf16.mxu0 0
        %1278 = vmatpush1.bf16.msra.mxu0 0
        %1279 = vmatprep.subr.bf16.mxu0 0
        %1280 = vmatpush1.bf16.msra.mxu0 0
        %1281 = vmatprep.subr.bf16.mxu0 0
        %1282 = vmatpush1.bf16.msra.mxu0 0
        %1283 = vmatprep.subr.bf16.mxu0 0
        %1284 = vmatpush1.bf16.msra.mxu0 0
        %1285 = vmatprep.subr.bf16.mxu0 0
        %1286 = vmatpush1.bf16.msra.mxu0 0
        %1287 = vmatprep.mubr.bf16.mxu0 0
        %1288 = vmatmul.mubr.bf16.gmra.mrb[0].mxu0 %v1253
        %v1289 = vpop.f32.mrb[0].mxu0
        %v1290 = vadd.f32 0.0, %v1289
        %v1291 = vpop.f32.mrb[0].mxu0
        %v1292 = vpop.f32.mrb[0].mxu0
        %v1293 = vadd.f32 0.0, %v1292
        %v1294 = vpop.f32.mrb[0].mxu0
        %1295 = vdwg.mxu0
        %v1296 = vpack.c.bf16 %v1293, %v1290
        %1298 = vrot.lane.b32.xlu0 %v1296, 32
        %v1299 = vpop.permute.xlu0 %1298
        %vm1301 = vcmask 523520
        %1302 = vst.msk [vmem:[#allocation3] sm:$0xff] %vm1301, %v1299
        %1303 = vrot.lane.b32.xlu0 %v1051, 64
        %v1304 = vpop.permute.xlu0 %1303
        %1305 = vrot.lane.b32.xlu0 %v1052, 64
        %v1306 = vpop.permute.xlu0 %1305
        %v1308 = vsel %vm1054, %v1304, 0
        %v1311 = vsel %vm1054, %v1306, 0
        %1313 = vmatprep.subr.bf16.mxu0 0
        %1314 = vmatpush1.bf16.xpose.msra.mxu0 %v1311
        %1315 = vmatprep.subr.bf16.mxu0 0
        %1316 = vmatpush1.bf16.xpose.msra.mxu0 0
        %1317 = vmatprep.subr.bf16.mxu0 0
        %1318 = vmatpush1.bf16.xpose.msra.mxu0 0
        %1319 = vmatprep.subr.bf16.mxu0 0
        %1320 = vmatpush1.bf16.xpose.msra.mxu0 0
        %1321 = vmatprep.subr.bf16.mxu0 0
        %1322 = vmatpush1.bf16.xpose.msra.mxu0 0
        %1323 = vmatprep.subr.bf16.mxu0 0
        %1324 = vmatpush1.bf16.xpose.msra.mxu0 0
        %1325 = vmatprep.subr.bf16.mxu0 0
        %1326 = vmatpush1.bf16.xpose.msra.mxu0 0
        %1327 = vmatprep.subr.bf16.mxu0 0
        %1328 = vmatpush1.bf16.xpose.msra.mxu0 0
        %1329 = vmatprep.subr.bf16.mxu0 0
        %1330 = vmatpush1.bf16.xpose.msra.mxu0 0
        %1331 = vmatprep.subr.bf16.mxu0 0
        %1332 = vmatpush1.bf16.xpose.msra.mxu0 0
        %1333 = vmatprep.subr.bf16.mxu0 0
        %1334 = vmatpush1.bf16.xpose.msra.mxu0 0
        %1335 = vmatprep.subr.bf16.mxu0 0
        %1336 = vmatpush1.bf16.xpose.msra.mxu0 0
        %1337 = vmatprep.subr.bf16.mxu0 0
        %1338 = vmatpush1.bf16.xpose.msra.mxu0 0
        %1339 = vmatprep.subr.bf16.mxu0 0
        %1340 = vmatpush1.bf16.xpose.msra.mxu0 0
        %1341 = vmatprep.subr.bf16.mxu0 0
        %1342 = vmatpush1.bf16.xpose.msra.mxu0 0
        %1343 = vmatprep.subr.bf16.mxu0 0
        %1344 = vmatpush1.bf16.xpose.msra.mxu0 0
        %1345 = vmatprep.mubr.bf16.mxu0 0
        %1346 = vmatmul.mubr.bf16.gmra.mrb[0].mxu0 %v1308
        %v1347 = vpop.f32.mrb[0].mxu0
        %v1348 = vadd.f32 0.0, %v1347
        %v1349 = vpop.f32.mrb[0].mxu0
        %v1350 = vpop.f32.mrb[0].mxu0
        %v1351 = vadd.f32 0.0, %v1350
        %v1352 = vpop.f32.mrb[0].mxu0
        %1353 = vdwg.mxu0
        %v1354 = vsel %vm1102, %v1348, -inf
        %1355 = vmax.xlane.f32.xlu0 %v1354
        %v1356 = vpop.xlane.xlu0 %1355
        %v1357 = vsel %vm1102, %v1351, -inf
        %1358 = vmax.xlane.f32.xlu0 %v1357
        %v1359 = vpop.xlane.xlu0 %1358
        %v1360 = vsub.f32 %v1348, %v1356
        %v1361 = vsub.f32 %v1351, %v1359
        %v1362 = vmul.f32 %v1360, 1.442695
        %v1363 = vpow.pop %v1362
        %v1364 = vmul.f32 %v1361, 1.442695
        %v1365 = vpow.pop %v1364
        %v1366 = vsel %vm1102, %v1363, 0.0
        %1367 = vadd.xlane.f32.xlu0 %v1366
        %v1368 = vpop.xlane.xlu0 %1367
        %v1369 = vsel %vm1102, %v1365, 0.0
        %1370 = vadd.xlane.f32.xlu0 %v1369
        %v1371 = vpop.xlane.xlu0 %1370
        %v1372 = vrcp.pop %v1368
        %v1373 = vrcp.pop %v1371
        %v1374 = vmul.f32 %v1363, %v1372
        %v1375 = vmul.f32 %v1365, %v1373
        %v1376 = vpack.c.bf16 %v1375, %v1374
        %1377 = vrot.lane.b32.xlu0 %v1053, 64
        %v1378 = vpop.permute.xlu0 %1377
        %v1381 = vsel %vm1102, %v1376, 0
        %1383 = vmatprep.subr.bf16.mxu0 0
        %1384 = vmatpush1.bf16.msra.mxu0 %v1378
        %1385 = vmatprep.subr.bf16.mxu0 0
        %1386 = vmatpush1.bf16.msra.mxu0 0
        %1387 = vmatprep.subr.bf16.mxu0 0
        %1388 = vmatpush1.bf16.msra.mxu0 0
        %1389 = vmatprep.subr.bf16.mxu0 0
        %1390 = vmatpush1.bf16.msra.mxu0 0
        %1391 = vmatprep.subr.bf16.mxu0 0
        %1392 = vmatpush1.bf16.msra.mxu0 0
        %1393 = vmatprep.subr.bf16.mxu0 0
        %1394 = vmatpush1.bf16.msra.mxu0 0
        %1395 = vmatprep.subr.bf16.mxu0 0
        %1396 = vmatpush1.bf16.msra.mxu0 0
        %1397 = vmatprep.subr.bf16.mxu0 0
        %1398 = vmatpush1.bf16.msra.mxu0 0
        %1399 = vmatprep.subr.bf16.mxu0 0
        %1400 = vmatpush1.bf16.msra.mxu0 0
        %1401 = vmatprep.subr.bf16.mxu0 0
        %1402 = vmatpush1.bf16.msra.mxu0 0
        %1403 = vmatprep.subr.bf16.mxu0 0
        %1404 = vmatpush1.bf16.msra.mxu0 0
        %1405 = vmatprep.subr.bf16.mxu0 0
        %1406 = vmatpush1.bf16.msra.mxu0 0
        %1407 = vmatprep.subr.bf16.mxu0 0
        %1408 = vmatpush1.bf16.msra.mxu0 0
        %1409 = vmatprep.subr.bf16.mxu0 0
        %1410 = vmatpush1.bf16.msra.mxu0 0
        %1411 = vmatprep.subr.bf16.mxu0 0
        %1412 = vmatpush1.bf16.msra.mxu0 0
        %1413 = vmatprep.subr.bf16.mxu0 0
        %1414 = vmatpush1.bf16.msra.mxu0 0
        %1415 = vmatprep.mubr.bf16.mxu0 0
        %1416 = vmatmul.mubr.bf16.gmra.mrb[0].mxu0 %v1381
        %v1417 = vpop.f32.mrb[0].mxu0
        %v1418 = vadd.f32 0.0, %v1417
        %v1419 = vpop.f32.mrb[0].mxu0
        %v1420 = vpop.f32.mrb[0].mxu0
        %v1421 = vadd.f32 0.0, %v1420
        %v1422 = vpop.f32.mrb[0].mxu0
        %1423 = vdwg.mxu0
        %v1424 = vpack.c.bf16 %v1421, %v1418
        %1426 = vrot.lane.b32.xlu0 %v1424, 64
        %v1427 = vpop.permute.xlu0 %1426
        %vm1429 = vcmask 785920
        %1430 = vst.msk [vmem:[#allocation3] sm:$0xff] %vm1429, %v1427
        %1431 = vrot.lane.b32.xlu0 %v1051, 32
        %v1432 = vpop.permute.xlu0 %1431
        %1433 = vrot.lane.b32.xlu0 %v1052, 32
        %v1434 = vpop.permute.xlu0 %1433
        %v1436 = vsel %vm1054, %v1432, 0
        %v1439 = vsel %vm1054, %v1434, 0
        %1441 = vmatprep.subr.bf16.mxu0 0
        %1442 = vmatpush1.bf16.xpose.msra.mxu0 %v1439
        %1443 = vmatprep.subr.bf16.mxu0 0
        %1444 = vmatpush1.bf16.xpose.msra.mxu0 0
        %1445 = vmatprep.subr.bf16.mxu0 0
        %1446 = vmatpush1.bf16.xpose.msra.mxu0 0
        %1447 = vmatprep.subr.bf16.mxu0 0
        %1448 = vmatpush1.bf16.xpose.msra.mxu0 0
        %1449 = vmatprep.subr.bf16.mxu0 0
        %1450 = vmatpush1.bf16.xpose.msra.mxu0 0
        %1451 = vmatprep.subr.bf16.mxu0 0
        %1452 = vmatpush1.bf16.xpose.msra.mxu0 0
        %1453 = vmatprep.subr.bf16.mxu0 0
        %1454 = vmatpush1.bf16.xpose.msra.mxu0 0
        %1455 = vmatprep.subr.bf16.mxu0 0
        %1456 = vmatpush1.bf16.xpose.msra.mxu0 0
        %1457 = vmatprep.subr.bf16.mxu0 0
        %1458 = vmatpush1.bf16.xpose.msra.mxu0 0
        %1459 = vmatprep.subr.bf16.mxu0 0
        %1460 = vmatpush1.bf16.xpose.msra.mxu0 0
        %1461 = vmatprep.subr.bf16.mxu0 0
        %1462 = vmatpush1.bf16.xpose.msra.mxu0 0
        %1463 = vmatprep.subr.bf16.mxu0 0
        %1464 = vmatpush1.bf16.xpose.msra.mxu0 0
        %1465 = vmatprep.subr.bf16.mxu0 0
        %1466 = vmatpush1.bf16.xpose.msra.mxu0 0
        %1467 = vmatprep.subr.bf16.mxu0 0
        %1468 = vmatpush1.bf16.xpose.msra.mxu0 0
        %1469 = vmatprep.subr.bf16.mxu0 0
        %1470 = vmatpush1.bf16.xpose.msra.mxu0 0
        %1471 = vmatprep.subr.bf16.mxu0 0
        %1472 = vmatpush1.bf16.xpose.msra.mxu0 0
        %1473 = vmatprep.mubr.bf16.mxu0 0
        %1474 = vmatmul.mubr.bf16.gmra.mrb[0].mxu0 %v1436
        %v1475 = vpop.f32.mrb[0].mxu0
        %v1476 = vadd.f32 0.0, %v1475
        %v1477 = vpop.f32.mrb[0].mxu0
        %v1478 = vpop.f32.mrb[0].mxu0
        %v1479 = vadd.f32 0.0, %v1478
        %v1480 = vpop.f32.mrb[0].mxu0
        %1481 = vdwg.mxu0
        %v1482 = vsel %vm1102, %v1476, -inf
        %1483 = vmax.xlane.f32.xlu0 %v1482
        %v1484 = vpop.xlane.xlu0 %1483
        %v1485 = vsel %vm1102, %v1479, -inf
        %1486 = vmax.xlane.f32.xlu0 %v1485
        %v1487 = vpop.xlane.xlu0 %1486
        %v1488 = vsub.f32 %v1476, %v1484
        %v1489 = vsub.f32 %v1479, %v1487
        %v1490 = vmul.f32 %v1488, 1.442695
        %v1491 = vpow.pop %v1490
        %v1492 = vmul.f32 %v1489, 1.442695
        %v1493 = vpow.pop %v1492
        %v1494 = vsel %vm1102, %v1491, 0.0
        %1495 = vadd.xlane.f32.xlu0 %v1494
        %v1496 = vpop.xlane.xlu0 %1495
        %v1497 = vsel %vm1102, %v1493, 0.0
        %1498 = vadd.xlane.f32.xlu0 %v1497
        %v1499 = vpop.xlane.xlu0 %1498
        %v1500 = vrcp.pop %v1496
        %v1501 = vrcp.pop %v1499
        %v1502 = vmul.f32 %v1491, %v1500
        %v1503 = vmul.f32 %v1493, %v1501
        %v1504 = vpack.c.bf16 %v1503, %v1502
        %1505 = vrot.lane.b32.xlu0 %v1053, 32
        %v1506 = vpop.permute.xlu0 %1505
        %v1509 = vsel %vm1102, %v1504, 0
        %1511 = vmatprep.subr.bf16.mxu0 0
        %1512 = vmatpush1.bf16.msra.mxu0 %v1506
        %1513 = vmatprep.subr.bf16.mxu0 0
        %1514 = vmatpush1.bf16.msra.mxu0 0
        %1515 = vmatprep.subr.bf16.mxu0 0
        %1516 = vmatpush1.bf16.msra.mxu0 0
        %1517 = vmatprep.subr.bf16.mxu0 0
        %1518 = vmatpush1.bf16.msra.mxu0 0
        %1519 = vmatprep.subr.bf16.mxu0 0
        %1520 = vmatpush1.bf16.msra.mxu0 0
        %1521 = vmatprep.subr.bf16.mxu0 0
        %1522 = vmatpush1.bf16.msra.mxu0 0
        %1523 = vmatprep.subr.bf16.mxu0 0
        %1524 = vmatpush1.bf16.msra.mxu0 0
        %1525 = vmatprep.subr.bf16.mxu0 0
        %1526 = vmatpush1.bf16.msra.mxu0 0
        %1527 = vmatprep.subr.bf16.mxu0 0
        %1528 = vmatpush1.bf16.msra.mxu0 0
        %1529 = vmatprep.subr.bf16.mxu0 0
        %1530 = vmatpush1.bf16.msra.mxu0 0
        %1531 = vmatprep.subr.bf16.mxu0 0
        %1532 = vmatpush1.bf16.msra.mxu0 0
        %1533 = vmatprep.subr.bf16.mxu0 0
        %1534 = vmatpush1.bf16.msra.mxu0 0
        %1535 = vmatprep.subr.bf16.mxu0 0
        %1536 = vmatpush1.bf16.msra.mxu0 0
        %1537 = vmatprep.subr.bf16.mxu0 0
        %1538 = vmatpush1.bf16.msra.mxu0 0
        %1539 = vmatprep.subr.bf16.mxu0 0
        %1540 = vmatpush1.bf16.msra.mxu0 0
        %1541 = vmatprep.subr.bf16.mxu0 0
        %1542 = vmatpush1.bf16.msra.mxu0 0
        %1543 = vmatprep.mubr.bf16.mxu0 0
        %1544 = vmatmul.mubr.bf16.gmra.mrb[0].mxu0 %v1509
        %v1545 = vpop.f32.mrb[0].mxu0
        %v1546 = vadd.f32 0.0, %v1545
        %v1547 = vpop.f32.mrb[0].mxu0
        %v1548 = vpop.f32.mrb[0].mxu0
        %v1549 = vadd.f32 0.0, %v1548
        %v1550 = vpop.f32.mrb[0].mxu0
        %1551 = vdwg.mxu0
        %v1552 = vpack.c.bf16 %v1549, %v1546
        %1554 = vrot.lane.b32.xlu0 %v1552, 96
        %v1555 = vpop.permute.xlu0 %1554
        %vm1557 = vcmask 1048320
        %1558 = vst.msk [vmem:[#allocation3] sm:$0xff] %vm1557, %v1555
        %v1559 = vld [vmem:[#allocation3] sm:$0xff]
        %v1560 = vld [vmem:[%s627] sm:$0xf]
        %v1561 = vld [vmem:[%s627 + $0x4] sm:$0xf]
        %v1562 = vld [vmem:[%s627 + $0x8] sm:$0xf]
        %v1563 = vld [vmem:[%s627 + $0xc] sm:$0xf]
        %v1564 = vld [vmem:[%s627 + $0x10] sm:$0xf]
        %v1565 = vld [vmem:[%s627 + $0x14] sm:$0xf]
        %v1566 = vld [vmem:[%s627 + $0x18] sm:$0xf]
        %v1567 = vld [vmem:[%s627 + $0x1c] sm:$0xf]
        %v1568 = vld [vmem:[%s627 + $0x20] sm:$0xf]
        %v1569 = vld [vmem:[%s627 + $0x24] sm:$0xf]
        %v1570 = vld [vmem:[%s627 + $0x28] sm:$0xf]
        %v1571 = vld [vmem:[%s627 + $0x2c] sm:$0xf]
        %v1572 = vld [vmem:[%s627 + $0x30] sm:$0xf]
        %v1573 = vld [vmem:[%s627 + $0x34] sm:$0xf]
        %v1574 = vld [vmem:[%s627 + $0x38] sm:$0xf]
        %v1575 = vld [vmem:[%s627 + $0x3c] sm:$0xf]
        %v1576 = vld [vmem:[%s635] sm:$0x1]
        %v1578 = vlaneseq
        %v1579 = vshrl.u32 %v1578, 7
        %v1580 = vsub.s32 0, %v1579
        %v1581 = vrot.slane %v1576, %v1580
        %v1599 = vunpack.c.l.b16 %v1560
        %v1600 = vunpack.c.l.b16 %v1561
        %v1601 = vunpack.c.l.b16 %v1562
        %v1602 = vunpack.c.l.b16 %v1563
        %v1603 = vunpack.c.l.b16 %v1564
        %v1604 = vunpack.c.l.b16 %v1565
        %v1605 = vunpack.c.l.b16 %v1566
        %v1606 = vunpack.c.l.b16 %v1567
        %v1607 = vunpack.c.l.b16 %v1568
        %v1608 = vunpack.c.l.b16 %v1569
        %v1609 = vunpack.c.l.b16 %v1570
        %v1610 = vunpack.c.l.b16 %v1571
        %v1611 = vunpack.c.l.b16 %v1572
        %v1612 = vunpack.c.l.b16 %v1573
        %v1613 = vunpack.c.l.b16 %v1574
        %v1614 = vunpack.c.l.b16 %v1575
        %v1615 = vpack.c.b16 %v1600, %v1599
        %v1616 = vpack.c.b16 %v1602, %v1601
        %v1617 = vpack.c.b16 %v1604, %v1603
        %v1618 = vpack.c.b16 %v1606, %v1605
        %v1619 = vpack.c.b16 %v1608, %v1607
        %v1620 = vpack.c.b16 %v1610, %v1609
        %v1621 = vpack.c.b16 %v1612, %v1611
        %v1622 = vpack.c.b16 %v1614, %v1613
        %1631 = vmatprep.subr.bf16.mxu0 0
        %1632 = vmatpush1.bf16.msra.mxu0 %v1615
        %1633 = vmatprep.subr.bf16.mxu0 0
        %1634 = vmatpush1.bf16.msra.mxu0 %v1616
        %1635 = vmatprep.subr.bf16.mxu0 0
        %1636 = vmatpush1.bf16.msra.mxu0 %v1617
        %1637 = vmatprep.subr.bf16.mxu0 0
        %1638 = vmatpush1.bf16.msra.mxu0 %v1618
        %1639 = vmatprep.subr.bf16.mxu0 0
        %1640 = vmatpush1.bf16.msra.mxu0 %v1619
        %1641 = vmatprep.subr.bf16.mxu0 0
        %1642 = vmatpush1.bf16.msra.mxu0 %v1620
        %1643 = vmatprep.subr.bf16.mxu0 0
        %1644 = vmatpush1.bf16.msra.mxu0 %v1621
        %1645 = vmatprep.subr.bf16.mxu0 0
        %1646 = vmatpush1.bf16.msra.mxu0 %v1622
        %1647 = vmatprep.subr.bf16.mxu0 0
        %1648 = vmatpush1.bf16.msra.mxu0 0
        %1649 = vmatprep.subr.bf16.mxu0 0
        %1650 = vmatpush1.bf16.msra.mxu0 0
        %1651 = vmatprep.subr.bf16.mxu0 0
        %1652 = vmatpush1.bf16.msra.mxu0 0
        %1653 = vmatprep.subr.bf16.mxu0 0
        %1654 = vmatpush1.bf16.msra.mxu0 0
        %1655 = vmatprep.subr.bf16.mxu0 0
        %1656 = vmatpush1.bf16.msra.mxu0 0
        %1657 = vmatprep.subr.bf16.mxu0 0
        %1658 = vmatpush1.bf16.msra.mxu0 0
        %1659 = vmatprep.subr.bf16.mxu0 0
        %1660 = vmatpush1.bf16.msra.mxu0 0
        %1661 = vmatprep.subr.bf16.mxu0 0
        %1662 = vmatpush1.bf16.msra.mxu0 0
        %1663 = vmatprep.mubr.bf16.mxu0 0
        %1664 = vmatmul.mubr.bf16.gmra.mrb[0].mxu0 %v1559
        %v1665 = vpop.f32.mrb[0].mxu0
        %v1666 = vadd.f32 %v1581, %v1665
        %v1667 = vpop.f32.mrb[0].mxu0
        %v1668 = vpop.f32.mrb[0].mxu0
        %v1669 = vadd.f32 %v1581, %v1668
        %v1670 = vpop.f32.mrb[0].mxu0
        %1671 = vdwg.mxu0
        %v1672 = vadd.f32 %v1666, %v732
        %v1673 = vadd.f32 %v1669, %v733
        %v1674 = vld [vmem:[#allocation16] sm:$0x1]
        %v1675 = vld [vmem:[#allocation18] sm:$0x1]
        %1676 = vadd.xlane.f32.xlu0 %v1672
        %v1677 = vpop.xlane.xlu0 %1676
        %1678 = vadd.xlane.f32.xlu0 %v1673
        %v1679 = vpop.xlane.xlu0 %1678
        %v1680 = vmul.f32 %v1677, %v740
        %v1681 = vmul.f32 %v1679, %v740
        %v1682 = vsub.f32 %v1672, %v1680
        %v1683 = vsub.f32 %v1673, %v1681
        %v1684 = vmul.f32 %v1682, %v1682
        %v1685 = vmul.f32 %v1683, %v1683
        %1686 = vadd.xlane.f32.xlu0 %v1684
        %v1687 = vpop.xlane.xlu0 %1686
        %1688 = vadd.xlane.f32.xlu0 %v1685
        %v1689 = vpop.xlane.xlu0 %1688
        %v1690 = vmul.f32 %v1687, 0.007874016
        %v1691 = vmul.f32 %v1689, 0.007874016
        %v1692 = vrsqrt.pop %v1690
        %v1693 = vmul.f32 %v1690, %v1692
        %vm1694 = vcmp.eq.f32.partialorder %v1690, inf
        %v1695 = vsel %vm1694, %v1690, %v1693
        %vm1696 = vcmp.eq.f32.partialorder %v1690, 0.0
        %v1697 = vand.u32 %v1690, 2147483648
        %v1698 = vsel %vm1696, %v1697, %v1695
        %v1699 = vrsqrt.pop %v1691
        %v1700 = vmul.f32 %v1691, %v1699
        %vm1701 = vcmp.eq.f32.partialorder %v1691, inf
        %v1702 = vsel %vm1701, %v1691, %v1700
        %vm1703 = vcmp.eq.f32.partialorder %v1691, 0.0
        %v1704 = vand.u32 %v1691, 2147483648
        %v1705 = vsel %vm1703, %v1704, %v1702
        %v1706 = vadd.f32 %v1698, 1e-06
        %v1707 = vadd.f32 %v1705, 1e-06
        %v1708 = vrcp.pop %v1706
        %v1709 = vmul.f32 %v1682, %v1708
        %v1710 = vrcp.pop %v1707
        %v1711 = vmul.f32 %v1683, %v1710
        %v1713 = vlaneseq
        %v1714 = vshrl.u32 %v1713, 7
        %v1715 = vsub.s32 0, %v1714
        %v1716 = vrot.slane %v1674, %v1715
        %v1718 = vmul.f32 %v1709, %v1716
        %v1719 = vmul.f32 %v1711, %v1716
        %v1721 = vlaneseq
        %v1722 = vshrl.u32 %v1721, 7
        %v1723 = vsub.s32 0, %v1722
        %v1724 = vrot.slane %v1675, %v1723
        %v1726 = vadd.f32 %v1718, %v1724
        %v1727 = vadd.f32 %v1719, %v1724
        %v1728 = vpack.c.bf16 %v1727, %v1726
        %v1729 = vld [vmem:[#allocation19] sm:$0xff]
        %v1730 = vld [vmem:[#allocation19 + $0x8] sm:$0xff]
        %v1731 = vld [vmem:[#allocation19 + $0x40] sm:$0xff]
        %v1732 = vld [vmem:[#allocation19 + $0x48] sm:$0xff]
        %v1733 = vld [vmem:[#allocation19 + $0x80] sm:$0xff]
        %v1734 = vld [vmem:[#allocation19 + $0x88] sm:$0xff]
        %v1735 = vld [vmem:[#allocation19 + $0xc0] sm:$0xff]
        %v1736 = vld [vmem:[#allocation19 + $0xc8] sm:$0xff]
        %v1737 = vld [vmem:[#allocation19 + $0x100] sm:$0xff]
        %v1738 = vld [vmem:[#allocation19 + $0x108] sm:$0xff]
        %v1739 = vld [vmem:[#allocation19 + $0x140] sm:$0xff]
        %v1740 = vld [vmem:[#allocation19 + $0x148] sm:$0xff]
        %v1741 = vld [vmem:[#allocation19 + $0x180] sm:$0xff]
        %v1742 = vld [vmem:[#allocation19 + $0x188] sm:$0xff]
        %v1743 = vld [vmem:[#allocation19 + $0x1c0] sm:$0xff]
        %v1744 = vld [vmem:[#allocation19 + $0x1c8] sm:$0xff]
        %v1745 = vld [vmem:[#allocation19 + $0x200] sm:$0xff]
        %v1746 = vld [vmem:[#allocation19 + $0x208] sm:$0xff]
        %v1747 = vld [vmem:[#allocation19 + $0x240] sm:$0xff]
        %v1748 = vld [vmem:[#allocation19 + $0x248] sm:$0xff]
        %v1749 = vld [vmem:[#allocation19 + $0x280] sm:$0xff]
        %v1750 = vld [vmem:[#allocation19 + $0x288] sm:$0xff]
        %v1751 = vld [vmem:[#allocation19 + $0x2c0] sm:$0xff]
        %v1752 = vld [vmem:[#allocation19 + $0x2c8] sm:$0xff]
        %v1753 = vld [vmem:[#allocation19 + $0x300] sm:$0xff]
        %v1754 = vld [vmem:[#allocation19 + $0x308] sm:$0xff]
        %v1755 = vld [vmem:[#allocation19 + $0x340] sm:$0xff]
        %v1756 = vld [vmem:[#allocation19 + $0x348] sm:$0xff]
        %v1757 = vld [vmem:[#allocation19 + $0x380] sm:$0xff]
        %v1758 = vld [vmem:[#allocation19 + $0x388] sm:$0xff]
        %v1759 = vld [vmem:[#allocation19 + $0x3c0] sm:$0xff]
        %v1760 = vld [vmem:[#allocation19 + $0x3c8] sm:$0xff]
        %v1761 = vld [vmem:[#allocation21] sm:$0xf]
        %v1763 = vlaneseq
        %v1764 = vshrl.u32 %v1763, 7
        %v1765 = vsub.s32 0, %v1764
        %v1766 = vrot.slane %v1761, %v1765
        %v1767 = vlaneseq
        %v1768 = vshrl.u32 %v1767, 7
        %v1769 = vsub.s32 1, %v1768
        %v1770 = vrot.slane %v1761, %v1769
        %v1771 = vlaneseq
        %v1772 = vshrl.u32 %v1771, 7
        %v1773 = vsub.s32 2, %v1772
        %v1774 = vrot.slane %v1761, %v1773
        %v1775 = vlaneseq
        %v1776 = vshrl.u32 %v1775, 7
        %v1777 = vsub.s32 3, %v1776
        %v1778 = vrot.slane %v1761, %v1777
        %v1815 = vunpack.c.l.b16 %v1729
        %v1816 = vunpack.c.h.b16 %v1729
        %v1817 = vunpack.c.l.b16 %v1730
        %v1818 = vunpack.c.h.b16 %v1730
        %v1819 = vunpack.c.l.b16 %v1731
        %v1820 = vunpack.c.h.b16 %v1731
        %v1821 = vunpack.c.l.b16 %v1732
        %v1822 = vunpack.c.h.b16 %v1732
        %v1823 = vunpack.c.l.b16 %v1733
        %v1824 = vunpack.c.h.b16 %v1733
        %v1825 = vunpack.c.l.b16 %v1734
        %v1826 = vunpack.c.h.b16 %v1734
        %v1827 = vunpack.c.l.b16 %v1735
        %v1828 = vunpack.c.h.b16 %v1735
        %v1829 = vunpack.c.l.b16 %v1736
        %v1830 = vunpack.c.h.b16 %v1736
        %v1831 = vunpack.c.l.b16 %v1737
        %v1832 = vunpack.c.h.b16 %v1737
        %v1833 = vunpack.c.l.b16 %v1738
        %v1834 = vunpack.c.h.b16 %v1738
        %v1835 = vunpack.c.l.b16 %v1739
        %v1836 = vunpack.c.h.b16 %v1739
        %v1837 = vunpack.c.l.b16 %v1740
        %v1838 = vunpack.c.h.b16 %v1740
        %v1839 = vunpack.c.l.b16 %v1741
        %v1840 = vunpack.c.h.b16 %v1741
        %v1841 = vunpack.c.l.b16 %v1742
        %v1842 = vunpack.c.h.b16 %v1742
        %v1843 = vunpack.c.l.b16 %v1743
        %v1844 = vunpack.c.h.b16 %v1743
        %v1845 = vunpack.c.l.b16 %v1744
        %v1846 = vunpack.c.h.b16 %v1744
        %v1847 = vunpack.c.l.b16 %v1745
        %v1848 = vunpack.c.h.b16 %v1745
        %v1849 = vunpack.c.l.b16 %v1746
        %v1850 = vunpack.c.h.b16 %v1746
        %v1851 = vunpack.c.l.b16 %v1747
        %v1852 = vunpack.c.h.b16 %v1747
        %v1853 = vunpack.c.l.b16 %v1748
        %v1854 = vunpack.c.h.b16 %v1748
        %v1855 = vunpack.c.l.b16 %v1749
        %v1856 = vunpack.c.h.b16 %v1749
        %v1857 = vunpack.c.l.b16 %v1750
        %v1858 = vunpack.c.h.b16 %v1750
        %v1859 = vunpack.c.l.b16 %v1751
        %v1860 = vunpack.c.h.b16 %v1751
        %v1861 = vunpack.c.l.b16 %v1752
        %v1862 = vunpack.c.h.b16 %v1752
        %v1863 = vunpack.c.l.b16 %v1753
        %v1864 = vunpack.c.h.b16 %v1753
        %v1865 = vunpack.c.l.b16 %v1754
        %v1866 = vunpack.c.h.b16 %v1754
        %v1867 = vunpack.c.l.b16 %v1755
        %v1868 = vunpack.c.h.b16 %v1755
        %v1869 = vunpack.c.l.b16 %v1756
        %v1870 = vunpack.c.h.b16 %v1756
        %v1871 = vunpack.c.l.b16 %v1757
        %v1872 = vunpack.c.h.b16 %v1757
        %v1873 = vunpack.c.l.b16 %v1758
        %v1874 = vunpack.c.h.b16 %v1758
        %v1875 = vunpack.c.l.b16 %v1759
        %v1876 = vunpack.c.h.b16 %v1759
        %v1877 = vunpack.c.l.b16 %v1760
        %v1878 = vunpack.c.h.b16 %v1760
        %v1879 = vpack.c.b16 %v1819, %v1815
        %v1880 = vpack.c.b16 %v1820, %v1816
        %v1881 = vpack.c.b16 %v1821, %v1817
        %v1882 = vpack.c.b16 %v1822, %v1818
        %v1883 = vpack.c.b16 %v1827, %v1823
        %v1884 = vpack.c.b16 %v1828, %v1824
        %v1885 = vpack.c.b16 %v1829, %v1825
        %v1886 = vpack.c.b16 %v1830, %v1826
        %v1887 = vpack.c.b16 %v1835, %v1831
        %v1888 = vpack.c.b16 %v1836, %v1832
        %v1889 = vpack.c.b16 %v1837, %v1833
        %v1890 = vpack.c.b16 %v1838, %v1834
        %v1891 = vpack.c.b16 %v1843, %v1839
        %v1892 = vpack.c.b16 %v1844, %v1840
        %v1893 = vpack.c.b16 %v1845, %v1841
        %v1894 = vpack.c.b16 %v1846, %v1842
        %v1895 = vpack.c.b16 %v1851, %v1847
        %v1896 = vpack.c.b16 %v1852, %v1848
        %v1897 = vpack.c.b16 %v1853, %v1849
        %v1898 = vpack.c.b16 %v1854, %v1850
        %v1899 = vpack.c.b16 %v1859, %v1855
        %v1900 = vpack.c.b16 %v1860, %v1856
        %v1901 = vpack.c.b16 %v1861, %v1857
        %v1902 = vpack.c.b16 %v1862, %v1858
        %v1903 = vpack.c.b16 %v1867, %v1863
        %v1904 = vpack.c.b16 %v1868, %v1864
        %v1905 = vpack.c.b16 %v1869, %v1865
        %v1906 = vpack.c.b16 %v1870, %v1866
        %v1907 = vpack.c.b16 %v1875, %v1871
        %v1908 = vpack.c.b16 %v1876, %v1872
        %v1909 = vpack.c.b16 %v1877, %v1873
        %v1910 = vpack.c.b16 %v1878, %v1874
        %1943 = vmatprep.subr.bf16.mxu0 %v1880
        %1944 = vmatpush1.bf16.msra.mxu0 %v1879
        %1945 = vmatprep.subr.bf16.mxu0 %v1884
        %1946 = vmatpush1.bf16.msra.mxu0 %v1883
        %1947 = vmatprep.subr.bf16.mxu0 %v1888
        %1948 = vmatpush1.bf16.msra.mxu0 %v1887
        %1949 = vmatprep.subr.bf16.mxu0 %v1892
        %1950 = vmatpush1.bf16.msra.mxu0 %v1891
        %1951 = vmatprep.subr.bf16.mxu0 %v1896
        %1952 = vmatpush1.bf16.msra.mxu0 %v1895
        %1953 = vmatprep.subr.bf16.mxu0 %v1900
        %1954 = vmatpush1.bf16.msra.mxu0 %v1899
        %1955 = vmatprep.subr.bf16.mxu0 %v1904
        %1956 = vmatpush1.bf16.msra.mxu0 %v1903
        %1957 = vmatprep.subr.bf16.mxu0 %v1908
        %1958 = vmatpush1.bf16.msra.mxu0 %v1907
        %1959 = vmatprep.subr.bf16.mxu0 0
        %1960 = vmatpush1.bf16.msra.mxu0 0
        %1961 = vmatprep.subr.bf16.mxu0 0
        %1962 = vmatpush1.bf16.msra.mxu0 0
        %1963 = vmatprep.subr.bf16.mxu0 0
        %1964 = vmatpush1.bf16.msra.mxu0 0
        %1965 = vmatprep.subr.bf16.mxu0 0
        %1966 = vmatpush1.bf16.msra.mxu0 0
        %1967 = vmatprep.subr.bf16.mxu0 0
        %1968 = vmatpush1.bf16.msra.mxu0 0
        %1969 = vmatprep.subr.bf16.mxu0 0
        %1970 = vmatpush1.bf16.msra.mxu0 0
        %1971 = vmatprep.subr.bf16.mxu0 0
        %1972 = vmatpush1.bf16.msra.mxu0 0
        %1973 = vmatprep.subr.bf16.mxu0 0
        %1974 = vmatpush1.bf16.msra.mxu0 0
        %1975 = vmatprep.mubr.bf16.mxu0 0
        %1976 = vmatmul.mubr.bf16.gmra.mrb[0].mxu0 %v1728
        %v1977 = vpop.f32.mrb[0].mxu0
        %v1978 = vadd.f32 %v1766, %v1977
        %v1979 = vpop.f32.mrb[0].mxu0
        %v1980 = vadd.f32 %v1770, %v1979
        %v1981 = vpop.f32.mrb[0].mxu0
        %v1982 = vadd.f32 %v1766, %v1981
        %v1983 = vpop.f32.mrb[0].mxu0
        %v1984 = vadd.f32 %v1770, %v1983
        %1985 = vdwg.mxu0
        %1986 = vmatprep.subr.bf16.mxu0 %v1882
        %1987 = vmatpush1.bf16.msra.mxu0 %v1881
        %1988 = vmatprep.subr.bf16.mxu0 %v1886
        %1989 = vmatpush1.bf16.msra.mxu0 %v1885
        %1990 = vmatprep.subr.bf16.mxu0 %v1890
        %1991 = vmatpush1.bf16.msra.mxu0 %v1889
        %1992 = vmatprep.subr.bf16.mxu0 %v1894
        %1993 = vmatpush1.bf16.msra.mxu0 %v1893
        %1994 = vmatprep.subr.bf16.mxu0 %v1898
        %1995 = vmatpush1.bf16.msra.mxu0 %v1897
        %1996 = vmatprep.subr.bf16.mxu0 %v1902
        %1997 = vmatpush1.bf16.msra.mxu0 %v1901
        %1998 = vmatprep.subr.bf16.mxu0 %v1906
        %1999 = vmatpush1.bf16.msra.mxu0 %v1905
        %2000 = vmatprep.subr.bf16.mxu0 %v1910
        %2001 = vmatpush1.bf16.msra.mxu0 %v1909
        %2002 = vmatprep.subr.bf16.mxu0 0
        %2003 = vmatpush1.bf16.msra.mxu0 0
        %2004 = vmatprep.subr.bf16.mxu0 0
        %2005 = vmatpush1.bf16.msra.mxu0 0
        %2006 = vmatprep.subr.bf16.mxu0 0
        %2007 = vmatpush1.bf16.msra.mxu0 0
        %2008 = vmatprep.subr.bf16.mxu0 0
        %2009 = vmatpush1.bf16.msra.mxu0 0
        %2010 = vmatprep.subr.bf16.mxu0 0
        %2011 = vmatpush1.bf16.msra.mxu0 0
        %2012 = vmatprep.subr.bf16.mxu0 0
        %2013 = vmatpush1.bf16.msra.mxu0 0
        %2014 = vmatprep.subr.bf16.mxu0 0
        %2015 = vmatpush1.bf16.msra.mxu0 0
        %2016 = vmatprep.subr.bf16.mxu0 0
        %2017 = vmatpush1.bf16.msra.mxu0 0
        %2018 = vmatprep.mubr.bf16.mxu0 0
        %2019 = vmatmul.mubr.bf16.gmra.mrb[0].mxu0 %v1728
        %v2020 = vpop.f32.mrb[0].mxu0
        %v2021 = vadd.f32 %v1774, %v2020
        %v2022 = vpop.f32.mrb[0].mxu0
        %v2023 = vadd.f32 %v1778, %v2022
        %v2024 = vpop.f32.mrb[0].mxu0
        %v2025 = vadd.f32 %v1774, %v2024
        %v2026 = vpop.f32.mrb[0].mxu0
        %v2027 = vadd.f32 %v1778, %v2026
        %2028 = vdwg.mxu0
        %v2029 = vmax.f32 %v1978, 0.0
        %v2030 = vmax.f32 %v1980, 0.0
        %v2031 = vmax.f32 %v2021, 0.0
        %v2032 = vmax.f32 %v2023, 0.0
        %v2033 = vmax.f32 %v1982, 0.0
        %v2034 = vmax.f32 %v1984, 0.0
        %v2035 = vmax.f32 %v2025, 0.0
        %v2036 = vmax.f32 %v2027, 0.0
        %v2037 = vpack.c.bf16 %v2033, %v2029
        %v2038 = vpack.c.bf16 %v2034, %v2030
        %v2039 = vpack.c.bf16 %v2035, %v2031
        %v2040 = vpack.c.bf16 %v2036, %v2032
        %v2041 = vld [vmem:[#allocation22] sm:$0xf]
        %v2042 = vld [vmem:[#allocation22 + $0x4] sm:$0xf]
        %v2043 = vld [vmem:[#allocation22 + $0x8] sm:$0xf]
        %v2044 = vld [vmem:[#allocation22 + $0xc] sm:$0xf]
        %v2045 = vld [vmem:[#allocation22 + $0x10] sm:$0xf]
        %v2046 = vld [vmem:[#allocation22 + $0x14] sm:$0xf]
        %v2047 = vld [vmem:[#allocation22 + $0x18] sm:$0xf]
        %v2048 = vld [vmem:[#allocation22 + $0x1c] sm:$0xf]
        %v2049 = vld [vmem:[#allocation22 + $0x20] sm:$0xf]
        %v2050 = vld [vmem:[#allocation22 + $0x24] sm:$0xf]
        %v2051 = vld [vmem:[#allocation22 + $0x28] sm:$0xf]
        %v2052 = vld [vmem:[#allocation22 + $0x2c] sm:$0xf]
        %v2053 = vld [vmem:[#allocation22 + $0x30] sm:$0xf]
        %v2054 = vld [vmem:[#allocation22 + $0x34] sm:$0xf]
        %v2055 = vld [vmem:[#allocation22 + $0x38] sm:$0xf]
        %v2056 = vld [vmem:[#allocation22 + $0x3c] sm:$0xf]
        %v2057 = vld [vmem:[#allocation22 + $0x40] sm:$0xf]
        %v2058 = vld [vmem:[#allocation22 + $0x44] sm:$0xf]
        %v2059 = vld [vmem:[#allocation22 + $0x48] sm:$0xf]
        %v2060 = vld [vmem:[#allocation22 + $0x4c] sm:$0xf]
        %v2061 = vld [vmem:[#allocation22 + $0x50] sm:$0xf]
        %v2062 = vld [vmem:[#allocation22 + $0x54] sm:$0xf]
        %v2063 = vld [vmem:[#allocation22 + $0x58] sm:$0xf]
        %v2064 = vld [vmem:[#allocation22 + $0x5c] sm:$0xf]
        %v2065 = vld [vmem:[#allocation22 + $0x60] sm:$0xf]
        %v2066 = vld [vmem:[#allocation22 + $0x64] sm:$0xf]
        %v2067 = vld [vmem:[#allocation22 + $0x68] sm:$0xf]
        %v2068 = vld [vmem:[#allocation22 + $0x6c] sm:$0xf]
        %v2069 = vld [vmem:[#allocation22 + $0x70] sm:$0xf]
        %v2070 = vld [vmem:[#allocation22 + $0x74] sm:$0xf]
        %v2071 = vld [vmem:[#allocation22 + $0x78] sm:$0xf]
        %v2072 = vld [vmem:[#allocation22 + $0x7c] sm:$0xf]
        %v2073 = vld [vmem:[#allocation22 + $0x80] sm:$0xf]
        %v2074 = vld [vmem:[#allocation22 + $0x84] sm:$0xf]
        %v2075 = vld [vmem:[#allocation22 + $0x88] sm:$0xf]
        %v2076 = vld [vmem:[#allocation22 + $0x8c] sm:$0xf]
        %v2077 = vld [vmem:[#allocation22 + $0x90] sm:$0xf]
        %v2078 = vld [vmem:[#allocation22 + $0x94] sm:$0xf]
        %v2079 = vld [vmem:[#allocation22 + $0x98] sm:$0xf]
        %v2080 = vld [vmem:[#allocation22 + $0x9c] sm:$0xf]
        %v2081 = vld [vmem:[#allocation22 + $0xa0] sm:$0xf]
        %v2082 = vld [vmem:[#allocation22 + $0xa4] sm:$0xf]
        %v2083 = vld [vmem:[#allocation22 + $0xa8] sm:$0xf]
        %v2084 = vld [vmem:[#allocation22 + $0xac] sm:$0xf]
        %v2085 = vld [vmem:[#allocation22 + $0xb0] sm:$0xf]
        %v2086 = vld [vmem:[#allocation22 + $0xb4] sm:$0xf]
        %v2087 = vld [vmem:[#allocation22 + $0xb8] sm:$0xf]
        %v2088 = vld [vmem:[#allocation22 + $0xbc] sm:$0xf]
        %v2089 = vld [vmem:[#allocation22 + $0xc0] sm:$0xf]
        %v2090 = vld [vmem:[#allocation22 + $0xc4] sm:$0xf]
        %v2091 = vld [vmem:[#allocation22 + $0xc8] sm:$0xf]
        %v2092 = vld [vmem:[#allocation22 + $0xcc] sm:$0xf]
        %v2093 = vld [vmem:[#allocation22 + $0xd0] sm:$0xf]
        %v2094 = vld [vmem:[#allocation22 + $0xd4] sm:$0xf]
        %v2095 = vld [vmem:[#allocation22 + $0xd8] sm:$0xf]
        %v2096 = vld [vmem:[#allocation22 + $0xdc] sm:$0xf]
        %v2097 = vld [vmem:[#allocation22 + $0xe0] sm:$0xf]
        %v2098 = vld [vmem:[#allocation22 + $0xe4] sm:$0xf]
        %v2099 = vld [vmem:[#allocation22 + $0xe8] sm:$0xf]
        %v2100 = vld [vmem:[#allocation22 + $0xec] sm:$0xf]
        %v2101 = vld [vmem:[#allocation22 + $0xf0] sm:$0xf]
        %v2102 = vld [vmem:[#allocation22 + $0xf4] sm:$0xf]
        %v2103 = vld [vmem:[#allocation22 + $0xf8] sm:$0xf]
        %v2104 = vld [vmem:[#allocation22 + $0xfc] sm:$0xf]
        %v2105 = vld [vmem:[#allocation19 + $0x10] sm:$0xff]
        %v2106 = vld [vmem:[#allocation19 + $0x18] sm:$0xff]
        %v2107 = vld [vmem:[#allocation19 + $0x50] sm:$0xff]
        %v2108 = vld [vmem:[#allocation19 + $0x58] sm:$0xff]
        %v2109 = vld [vmem:[#allocation19 + $0x90] sm:$0xff]
        %v2110 = vld [vmem:[#allocation19 + $0x98] sm:$0xff]
        %v2111 = vld [vmem:[#allocation19 + $0xd0] sm:$0xff]
        %v2112 = vld [vmem:[#allocation19 + $0xd8] sm:$0xff]
        %v2113 = vld [vmem:[#allocation19 + $0x110] sm:$0xff]
        %v2114 = vld [vmem:[#allocation19 + $0x118] sm:$0xff]
        %v2115 = vld [vmem:[#allocation19 + $0x150] sm:$0xff]
        %v2116 = vld [vmem:[#allocation19 + $0x158] sm:$0xff]
        %v2117 = vld [vmem:[#allocation19 + $0x190] sm:$0xff]
        %v2118 = vld [vmem:[#allocation19 + $0x198] sm:$0xff]
        %v2119 = vld [vmem:[#allocation19 + $0x1d0] sm:$0xff]
        %v2120 = vld [vmem:[#allocation19 + $0x1d8] sm:$0xff]
        %v2121 = vld [vmem:[#allocation19 + $0x210] sm:$0xff]
        %v2122 = vld [vmem:[#allocation19 + $0x218] sm:$0xff]
        %v2123 = vld [vmem:[#allocation19 + $0x250] sm:$0xff]
        %v2124 = vld [vmem:[#allocation19 + $0x258] sm:$0xff]
        %v2125 = vld [vmem:[#allocation19 + $0x290] sm:$0xff]
        %v2126 = vld [vmem:[#allocation19 + $0x298] sm:$0xff]
        %v2127 = vld [vmem:[#allocation19 + $0x2d0] sm:$0xff]
        %v2128 = vld [vmem:[#allocation19 + $0x2d8] sm:$0xff]
        %v2129 = vld [vmem:[#allocation19 + $0x310] sm:$0xff]
        %v2130 = vld [vmem:[#allocation19 + $0x318] sm:$0xff]
        %v2131 = vld [vmem:[#allocation19 + $0x350] sm:$0xff]
        %v2132 = vld [vmem:[#allocation19 + $0x358] sm:$0xff]
        %v2133 = vld [vmem:[#allocation19 + $0x390] sm:$0xff]
        %v2134 = vld [vmem:[#allocation19 + $0x398] sm:$0xff]
        %v2135 = vld [vmem:[#allocation19 + $0x3d0] sm:$0xff]
        %v2136 = vld [vmem:[#allocation19 + $0x3d8] sm:$0xff]
        %v2137 = vld [vmem:[#allocation21 + $0x4] sm:$0xf]
        %v2139 = vlaneseq
        %v2140 = vshrl.u32 %v2139, 7
        %v2141 = vsub.s32 0, %v2140
        %v2142 = vrot.slane %v2137, %v2141
        %v2143 = vlaneseq
        %v2144 = vshrl.u32 %v2143, 7
        %v2145 = vsub.s32 1, %v2144
        %v2146 = vrot.slane %v2137, %v2145
        %v2147 = vlaneseq
        %v2148 = vshrl.u32 %v2147, 7
        %v2149 = vsub.s32 2, %v2148
        %v2150 = vrot.slane %v2137, %v2149
        %v2151 = vlaneseq
        %v2152 = vshrl.u32 %v2151, 7
        %v2153 = vsub.s32 3, %v2152
        %v2154 = vrot.slane %v2137, %v2153
        %v2191 = vunpack.c.l.b16 %v2105
        %v2192 = vunpack.c.h.b16 %v2105
        %v2193 = vunpack.c.l.b16 %v2106
        %v2194 = vunpack.c.h.b16 %v2106
        %v2195 = vunpack.c.l.b16 %v2107
        %v2196 = vunpack.c.h.b16 %v2107
        %v2197 = vunpack.c.l.b16 %v2108
        %v2198 = vunpack.c.h.b16 %v2108
        %v2199 = vunpack.c.l.b16 %v2109
        %v2200 = vunpack.c.h.b16 %v2109
        %v2201 = vunpack.c.l.b16 %v2110
        %v2202 = vunpack.c.h.b16 %v2110
        %v2203 = vunpack.c.l.b16 %v2111
        %v2204 = vunpack.c.h.b16 %v2111
        %v2205 = vunpack.c.l.b16 %v2112
        %v2206 = vunpack.c.h.b16 %v2112
        %v2207 = vunpack.c.l.b16 %v2113
        %v2208 = vunpack.c.h.b16 %v2113
        %v2209 = vunpack.c.l.b16 %v2114
        %v2210 = vunpack.c.h.b16 %v2114
        %v2211 = vunpack.c.l.b16 %v2115
        %v2212 = vunpack.c.h.b16 %v2115
        %v2213 = vunpack.c.l.b16 %v2116
        %v2214 = vunpack.c.h.b16 %v2116
        %v2215 = vunpack.c.l.b16 %v2117
        %v2216 = vunpack.c.h.b16 %v2117
        %v2217 = vunpack.c.l.b16 %v2118
        %v2218 = vunpack.c.h.b16 %v2118
        %v2219 = vunpack.c.l.b16 %v2119
        %v2220 = vunpack.c.h.b16 %v2119
        %v2221 = vunpack.c.l.b16 %v2120
        %v2222 = vunpack.c.h.b16 %v2120
        %v2223 = vunpack.c.l.b16 %v2121
        %v2224 = vunpack.c.h.b16 %v2121
        %v2225 = vunpack.c.l.b16 %v2122
        %v2226 = vunpack.c.h.b16 %v2122
        %v2227 = vunpack.c.l.b16 %v2123
        %v2228 = vunpack.c.h.b16 %v2123
        %v2229 = vunpack.c.l.b16 %v2124
        %v2230 = vunpack.c.h.b16 %v2124
        %v2231 = vunpack.c.l.b16 %v2125
        %v2232 = vunpack.c.h.b16 %v2125
        %v2233 = vunpack.c.l.b16 %v2126
        %v2234 = vunpack.c.h.b16 %v2126
        %v2235 = vunpack.c.l.b16 %v2127
        %v2236 = vunpack.c.h.b16 %v2127
        %v2237 = vunpack.c.l.b16 %v2128
        %v2238 = vunpack.c.h.b16 %v2128
        %v2239 = vunpack.c.l.b16 %v2129
        %v2240 = vunpack.c.h.b16 %v2129
        %v2241 = vunpack.c.l.b16 %v2130
        %v2242 = vunpack.c.h.b16 %v2130
        %v2243 = vunpack.c.l.b16 %v2131
        %v2244 = vunpack.c.h.b16 %v2131
        %v2245 = vunpack.c.l.b16 %v2132
        %v2246 = vunpack.c.h.b16 %v2132
        %v2247 = vunpack.c.l.b16 %v2133
        %v2248 = vunpack.c.h.b16 %v2133
        %v2249 = vunpack.c.l.b16 %v2134
        %v2250 = vunpack.c.h.b16 %v2134
        %v2251 = vunpack.c.l.b16 %v2135
        %v2252 = vunpack.c.h.b16 %v2135
        %v2253 = vunpack.c.l.b16 %v2136
        %v2254 = vunpack.c.h.b16 %v2136
        %v2255 = vpack.c.b16 %v2195, %v2191
        %v2256 = vpack.c.b16 %v2196, %v2192
        %v2257 = vpack.c.b16 %v2197, %v2193
        %v2258 = vpack.c.b16 %v2198, %v2194
        %v2259 = vpack.c.b16 %v2203, %v2199
        %v2260 = vpack.c.b16 %v2204, %v2200
        %v2261 = vpack.c.b16 %v2205, %v2201
        %v2262 = vpack.c.b16 %v2206, %v2202
        %v2263 = vpack.c.b16 %v2211, %v2207
        %v2264 = vpack.c.b16 %v2212, %v2208
        %v2265 = vpack.c.b16 %v2213, %v2209
        %v2266 = vpack.c.b16 %v2214, %v2210
        %v2267 = vpack.c.b16 %v2219, %v2215
        %v2268 = vpack.c.b16 %v2220, %v2216
        %v2269 = vpack.c.b16 %v2221, %v2217
        %v2270 = vpack.c.b16 %v2222, %v2218
        %v2271 = vpack.c.b16 %v2227, %v2223
        %v2272 = vpack.c.b16 %v2228, %v2224
        %v2273 = vpack.c.b16 %v2229, %v2225
        %v2274 = vpack.c.b16 %v2230, %v2226
        %v2275 = vpack.c.b16 %v2235, %v2231
        %v2276 = vpack.c.b16 %v2236, %v2232
        %v2277 = vpack.c.b16 %v2237, %v2233
        %v2278 = vpack.c.b16 %v2238, %v2234
        %v2279 = vpack.c.b16 %v2243, %v2239
        %v2280 = vpack.c.b16 %v2244, %v2240
        %v2281 = vpack.c.b16 %v2245, %v2241
        %v2282 = vpack.c.b16 %v2246, %v2242
        %v2283 = vpack.c.b16 %v2251, %v2247
        %v2284 = vpack.c.b16 %v2252, %v2248
        %v2285 = vpack.c.b16 %v2253, %v2249
        %v2286 = vpack.c.b16 %v2254, %v2250
        %2319 = vmatprep.subr.bf16.mxu0 %v2256
        %2320 = vmatpush1.bf16.msra.mxu0 %v2255
        %2321 = vmatprep.subr.bf16.mxu0 %v2260
        %2322 = vmatpush1.bf16.msra.mxu0 %v2259
        %2323 = vmatprep.subr.bf16.mxu0 %v2264
        %2324 = vmatpush1.bf16.msra.mxu0 %v2263
        %2325 = vmatprep.subr.bf16.mxu0 %v2268
        %2326 = vmatpush1.bf16.msra.mxu0 %v2267
        %2327 = vmatprep.subr.bf16.mxu0 %v2272
        %2328 = vmatpush1.bf16.msra.mxu0 %v2271
        %2329 = vmatprep.subr.bf16.mxu0 %v2276
        %2330 = vmatpush1.bf16.msra.mxu0 %v2275
        %2331 = vmatprep.subr.bf16.mxu0 %v2280
        %2332 = vmatpush1.bf16.msra.mxu0 %v2279
        %2333 = vmatprep.subr.bf16.mxu0 %v2284
        %2334 = vmatpush1.bf16.msra.mxu0 %v2283
        %2335 = vmatprep.subr.bf16.mxu0 0
        %2336 = vmatpush1.bf16.msra.mxu0 0
        %2337 = vmatprep.subr.bf16.mxu0 0
        %2338 = vmatpush1.bf16.msra.mxu0 0
        %2339 = vmatprep.subr.bf16.mxu0 0
        %2340 = vmatpush1.bf16.msra.mxu0 0
        %2341 = vmatprep.subr.bf16.mxu0 0
        %2342 = vmatpush1.bf16.msra.mxu0 0
        %2343 = vmatprep.subr.bf16.mxu0 0
        %2344 = vmatpush1.bf16.msra.mxu0 0
        %2345 = vmatprep.subr.bf16.mxu0 0
        %2346 = vmatpush1.bf16.msra.mxu0 0
        %2347 = vmatprep.subr.bf16.mxu0 0
        %2348 = vmatpush1.bf16.msra.mxu0 0
        %2349 = vmatprep.subr.bf16.mxu0 0
        %2350 = vmatpush1.bf16.msra.mxu0 0
        %2351 = vmatprep.mubr.bf16.mxu0 0
        %2352 = vmatmul.mubr.bf16.gmra.mrb[0].mxu0 %v1728
        %v2353 = vpop.f32.mrb[0].mxu0
        %v2354 = vadd.f32 %v2142, %v2353
        %v2355 = vpop.f32.mrb[0].mxu0
        %v2356 = vadd.f32 %v2146, %v2355
        %v2357 = vpop.f32.mrb[0].mxu0
        %v2358 = vadd.f32 %v2142, %v2357
        %v2359 = vpop.f32.mrb[0].mxu0
        %v2360 = vadd.f32 %v2146, %v2359
        %2361 = vdwg.mxu0
        %2362 = vmatprep.subr.bf16.mxu0 %v2258
        %2363 = vmatpush1.bf16.msra.mxu0 %v2257
        %2364 = vmatprep.subr.bf16.mxu0 %v2262
        %2365 = vmatpush1.bf16.msra.mxu0 %v2261
        %2366 = vmatprep.subr.bf16.mxu0 %v2266
        %2367 = vmatpush1.bf16.msra.mxu0 %v2265
        %2368 = vmatprep.subr.bf16.mxu0 %v2270
        %2369 = vmatpush1.bf16.msra.mxu0 %v2269
        %2370 = vmatprep.subr.bf16.mxu0 %v2274
        %2371 = vmatpush1.bf16.msra.mxu0 %v2273
        %2372 = vmatprep.subr.bf16.mxu0 %v2278
        %2373 = vmatpush1.bf16.msra.mxu0 %v2277
        %2374 = vmatprep.subr.bf16.mxu0 %v2282
        %2375 = vmatpush1.bf16.msra.mxu0 %v2281
        %2376 = vmatprep.subr.bf16.mxu0 %v2286
        %2377 = vmatpush1.bf16.msra.mxu0 %v2285
        %2378 = vmatprep.subr.bf16.mxu0 0
        %2379 = vmatpush1.bf16.msra.mxu0 0
        %2380 = vmatprep.subr.bf16.mxu0 0
        %2381 = vmatpush1.bf16.msra.mxu0 0
        %2382 = vmatprep.subr.bf16.mxu0 0
        %2383 = vmatpush1.bf16.msra.mxu0 0
        %2384 = vmatprep.subr.bf16.mxu0 0
        %2385 = vmatpush1.bf16.msra.mxu0 0
        %2386 = vmatprep.subr.bf16.mxu0 0
        %2387 = vmatpush1.bf16.msra.mxu0 0
        %2388 = vmatprep.subr.bf16.mxu0 0
        %2389 = vmatpush1.bf16.msra.mxu0 0
        %2390 = vmatprep.subr.bf16.mxu0 0
        %2391 = vmatpush1.bf16.msra.mxu0 0
        %2392 = vmatprep.subr.bf16.mxu0 0
        %2393 = vmatpush1.bf16.msra.mxu0 0
        %2394 = vmatprep.mubr.bf16.mxu0 0
        %2395 = vmatmul.mubr.bf16.gmra.mrb[0].mxu0 %v1728
        %v2396 = vpop.f32.mrb[0].mxu0
        %v2397 = vadd.f32 %v2150, %v2396
        %v2398 = vpop.f32.mrb[0].mxu0
        %v2399 = vadd.f32 %v2154, %v2398
        %v2400 = vpop.f32.mrb[0].mxu0
        %v2401 = vadd.f32 %v2150, %v2400
        %v2402 = vpop.f32.mrb[0].mxu0
        %v2403 = vadd.f32 %v2154, %v2402
        %2404 = vdwg.mxu0
        %v2405 = vmax.f32 %v2354, 0.0
        %v2406 = vmax.f32 %v2356, 0.0
        %v2407 = vmax.f32 %v2397, 0.0
        %v2408 = vmax.f32 %v2399, 0.0
        %v2409 = vmax.f32 %v2358, 0.0
        %v2410 = vmax.f32 %v2360, 0.0
        %v2411 = vmax.f32 %v2401, 0.0
        %v2412 = vmax.f32 %v2403, 0.0
        %v2413 = vpack.c.bf16 %v2409, %v2405
        %v2414 = vpack.c.bf16 %v2410, %v2406
        %v2415 = vpack.c.bf16 %v2411, %v2407
        %v2416 = vpack.c.bf16 %v2412, %v2408
        %v2417 = vld [vmem:[#allocation22 + $0x100] sm:$0xf]
        %v2418 = vld [vmem:[#allocation22 + $0x104] sm:$0xf]
        %v2419 = vld [vmem:[#allocation22 + $0x108] sm:$0xf]
        %v2420 = vld [vmem:[#allocation22 + $0x10c] sm:$0xf]
        %v2421 = vld [vmem:[#allocation22 + $0x110] sm:$0xf]
        %v2422 = vld [vmem:[#allocation22 + $0x114] sm:$0xf]
        %v2423 = vld [vmem:[#allocation22 + $0x118] sm:$0xf]
        %v2424 = vld [vmem:[#allocation22 + $0x11c] sm:$0xf]
        %v2425 = vld [vmem:[#allocation22 + $0x120] sm:$0xf]
        %v2426 = vld [vmem:[#allocation22 + $0x124] sm:$0xf]
        %v2427 = vld [vmem:[#allocation22 + $0x128] sm:$0xf]
        %v2428 = vld [vmem:[#allocation22 + $0x12c] sm:$0xf]
        %v2429 = vld [vmem:[#allocation22 + $0x130] sm:$0xf]
        %v2430 = vld [vmem:[#allocation22 + $0x134] sm:$0xf]
        %v2431 = vld [vmem:[#allocation22 + $0x138] sm:$0xf]
        %v2432 = vld [vmem:[#allocation22 + $0x13c] sm:$0xf]
        %v2433 = vld [vmem:[#allocation22 + $0x140] sm:$0xf]
        %v2434 = vld [vmem:[#allocation22 + $0x144] sm:$0xf]
        %v2435 = vld [vmem:[#allocation22 + $0x148] sm:$0xf]
        %v2436 = vld [vmem:[#allocation22 + $0x14c] sm:$0xf]
        %v2437 = vld [vmem:[#allocation22 + $0x150] sm:$0xf]
        %v2438 = vld [vmem:[#allocation22 + $0x154] sm:$0xf]
        %v2439 = vld [vmem:[#allocation22 + $0x158] sm:$0xf]
        %v2440 = vld [vmem:[#allocation22 + $0x15c] sm:$0xf]
        %v2441 = vld [vmem:[#allocation22 + $0x160] sm:$0xf]
        %v2442 = vld [vmem:[#allocation22 + $0x164] sm:$0xf]
        %v2443 = vld [vmem:[#allocation22 + $0x168] sm:$0xf]
        %v2444 = vld [vmem:[#allocation22 + $0x16c] sm:$0xf]
        %v2445 = vld [vmem:[#allocation22 + $0x170] sm:$0xf]
        %v2446 = vld [vmem:[#allocation22 + $0x174] sm:$0xf]
        %v2447 = vld [vmem:[#allocation22 + $0x178] sm:$0xf]
        %v2448 = vld [vmem:[#allocation22 + $0x17c] sm:$0xf]
        %v2449 = vld [vmem:[#allocation22 + $0x180] sm:$0xf]
        %v2450 = vld [vmem:[#allocation22 + $0x184] sm:$0xf]
        %v2451 = vld [vmem:[#allocation22 + $0x188] sm:$0xf]
        %v2452 = vld [vmem:[#allocation22 + $0x18c] sm:$0xf]
        %v2453 = vld [vmem:[#allocation22 + $0x190] sm:$0xf]
        %v2454 = vld [vmem:[#allocation22 + $0x194] sm:$0xf]
        %v2455 = vld [vmem:[#allocation22 + $0x198] sm:$0xf]
        %v2456 = vld [vmem:[#allocation22 + $0x19c] sm:$0xf]
        %v2457 = vld [vmem:[#allocation22 + $0x1a0] sm:$0xf]
        %v2458 = vld [vmem:[#allocation22 + $0x1a4] sm:$0xf]
        %v2459 = vld [vmem:[#allocation22 + $0x1a8] sm:$0xf]
        %v2460 = vld [vmem:[#allocation22 + $0x1ac] sm:$0xf]
        %v2461 = vld [vmem:[#allocation22 + $0x1b0] sm:$0xf]
        %v2462 = vld [vmem:[#allocation22 + $0x1b4] sm:$0xf]
        %v2463 = vld [vmem:[#allocation22 + $0x1b8] sm:$0xf]
        %v2464 = vld [vmem:[#allocation22 + $0x1bc] sm:$0xf]
        %v2465 = vld [vmem:[#allocation22 + $0x1c0] sm:$0xf]
        %v2466 = vld [vmem:[#allocation22 + $0x1c4] sm:$0xf]
        %v2467 = vld [vmem:[#allocation22 + $0x1c8] sm:$0xf]
        %v2468 = vld [vmem:[#allocation22 + $0x1cc] sm:$0xf]
        %v2469 = vld [vmem:[#allocation22 + $0x1d0] sm:$0xf]
        %v2470 = vld [vmem:[#allocation22 + $0x1d4] sm:$0xf]
        %v2471 = vld [vmem:[#allocation22 + $0x1d8] sm:$0xf]
        %v2472 = vld [vmem:[#allocation22 + $0x1dc] sm:$0xf]
        %v2473 = vld [vmem:[#allocation22 + $0x1e0] sm:$0xf]
        %v2474 = vld [vmem:[#allocation22 + $0x1e4] sm:$0xf]
        %v2475 = vld [vmem:[#allocation22 + $0x1e8] sm:$0xf]
        %v2476 = vld [vmem:[#allocation22 + $0x1ec] sm:$0xf]
        %v2477 = vld [vmem:[#allocation22 + $0x1f0] sm:$0xf]
        %v2478 = vld [vmem:[#allocation22 + $0x1f4] sm:$0xf]
        %v2479 = vld [vmem:[#allocation22 + $0x1f8] sm:$0xf]
        %v2480 = vld [vmem:[#allocation22 + $0x1fc] sm:$0xf]
        %v2545 = vunpack.c.l.b16 %v2417
        %v2546 = vunpack.c.l.b16 %v2418
        %v2547 = vunpack.c.l.b16 %v2419
        %v2548 = vunpack.c.l.b16 %v2420
        %v2549 = vunpack.c.l.b16 %v2421
        %v2550 = vunpack.c.l.b16 %v2422
        %v2551 = vunpack.c.l.b16 %v2423
        %v2552 = vunpack.c.l.b16 %v2424
        %v2553 = vunpack.c.l.b16 %v2425
        %v2554 = vunpack.c.l.b16 %v2426
        %v2555 = vunpack.c.l.b16 %v2427
        %v2556 = vunpack.c.l.b16 %v2428
        %v2557 = vunpack.c.l.b16 %v2429
        %v2558 = vunpack.c.l.b16 %v2430
        %v2559 = vunpack.c.l.b16 %v2431
        %v2560 = vunpack.c.l.b16 %v2432
        %v2561 = vunpack.c.l.b16 %v2433
        %v2562 = vunpack.c.l.b16 %v2434
        %v2563 = vunpack.c.l.b16 %v2435
        %v2564 = vunpack.c.l.b16 %v2436
        %v2565 = vunpack.c.l.b16 %v2437
        %v2566 = vunpack.c.l.b16 %v2438
        %v2567 = vunpack.c.l.b16 %v2439
        %v2568 = vunpack.c.l.b16 %v2440
        %v2569 = vunpack.c.l.b16 %v2441
        %v2570 = vunpack.c.l.b16 %v2442
        %v2571 = vunpack.c.l.b16 %v2443
        %v2572 = vunpack.c.l.b16 %v2444
        %v2573 = vunpack.c.l.b16 %v2445
        %v2574 = vunpack.c.l.b16 %v2446
        %v2575 = vunpack.c.l.b16 %v2447
        %v2576 = vunpack.c.l.b16 %v2448
        %v2577 = vunpack.c.l.b16 %v2449
        %v2578 = vunpack.c.l.b16 %v2450
        %v2579 = vunpack.c.l.b16 %v2451
        %v2580 = vunpack.c.l.b16 %v2452
        %v2581 = vunpack.c.l.b16 %v2453
        %v2582 = vunpack.c.l.b16 %v2454
        %v2583 = vunpack.c.l.b16 %v2455
        %v2584 = vunpack.c.l.b16 %v2456
        %v2585 = vunpack.c.l.b16 %v2457
        %v2586 = vunpack.c.l.b16 %v2458
        %v2587 = vunpack.c.l.b16 %v2459
        %v2588 = vunpack.c.l.b16 %v2460
        %v2589 = vunpack.c.l.b16 %v2461
        %v2590 = vunpack.c.l.b16 %v2462
        %v2591 = vunpack.c.l.b16 %v2463
        %v2592 = vunpack.c.l.b16 %v2464
        %v2593 = vunpack.c.l.b16 %v2465
        %v2594 = vunpack.c.l.b16 %v2466
        %v2595 = vunpack.c.l.b16 %v2467
        %v2596 = vunpack.c.l.b16 %v2468
        %v2597 = vunpack.c.l.b16 %v2469
        %v2598 = vunpack.c.l.b16 %v2470
        %v2599 = vunpack.c.l.b16 %v2471
        %v2600 = vunpack.c.l.b16 %v2472
        %v2601 = vunpack.c.l.b16 %v2473
        %v2602 = vunpack.c.l.b16 %v2474
        %v2603 = vunpack.c.l.b16 %v2475
        %v2604 = vunpack.c.l.b16 %v2476
        %v2605 = vunpack.c.l.b16 %v2477
        %v2606 = vunpack.c.l.b16 %v2478
        %v2607 = vunpack.c.l.b16 %v2479
        %v2608 = vunpack.c.l.b16 %v2480
        %v2609 = vpack.c.b16 %v2546, %v2545
        %v2610 = vpack.c.b16 %v2548, %v2547
        %v2611 = vpack.c.b16 %v2550, %v2549
        %v2612 = vpack.c.b16 %v2552, %v2551
        %v2613 = vpack.c.b16 %v2554, %v2553
        %v2614 = vpack.c.b16 %v2556, %v2555
        %v2615 = vpack.c.b16 %v2558, %v2557
        %v2616 = vpack.c.b16 %v2560, %v2559
        %v2617 = vpack.c.b16 %v2562, %v2561
        %v2618 = vpack.c.b16 %v2564, %v2563
        %v2619 = vpack.c.b16 %v2566, %v2565
        %v2620 = vpack.c.b16 %v2568, %v2567
        %v2621 = vpack.c.b16 %v2570, %v2569
        %v2622 = vpack.c.b16 %v2572, %v2571
        %v2623 = vpack.c.b16 %v2574, %v2573
        %v2624 = vpack.c.b16 %v2576, %v2575
        %v2625 = vpack.c.b16 %v2578, %v2577
        %v2626 = vpack.c.b16 %v2580, %v2579
        %v2627 = vpack.c.b16 %v2582, %v2581
        %v2628 = vpack.c.b16 %v2584, %v2583
        %v2629 = vpack.c.b16 %v2586, %v2585
        %v2630 = vpack.c.b16 %v2588, %v2587
        %v2631 = vpack.c.b16 %v2590, %v2589
        %v2632 = vpack.c.b16 %v2592, %v2591
        %v2633 = vpack.c.b16 %v2594, %v2593
        %v2634 = vpack.c.b16 %v2596, %v2595
        %v2635 = vpack.c.b16 %v2598, %v2597
        %v2636 = vpack.c.b16 %v2600, %v2599
        %v2637 = vpack.c.b16 %v2602, %v2601
        %v2638 = vpack.c.b16 %v2604, %v2603
        %v2639 = vpack.c.b16 %v2606, %v2605
        %v2640 = vpack.c.b16 %v2608, %v2607
        %2673 = vmatprep.subr.bf16.mxu0 0
        %2674 = vmatpush1.bf16.msra.mxu0 %v2609
        %2675 = vmatprep.subr.bf16.mxu0 0
        %2676 = vmatpush1.bf16.msra.mxu0 %v2610
        %2677 = vmatprep.subr.bf16.mxu0 0
        %2678 = vmatpush1.bf16.msra.mxu0 %v2611
        %2679 = vmatprep.subr.bf16.mxu0 0
        %2680 = vmatpush1.bf16.msra.mxu0 %v2612
        %2681 = vmatprep.subr.bf16.mxu0 0
        %2682 = vmatpush1.bf16.msra.mxu0 %v2613
        %2683 = vmatprep.subr.bf16.mxu0 0
        %2684 = vmatpush1.bf16.msra.mxu0 %v2614
        %2685 = vmatprep.subr.bf16.mxu0 0
        %2686 = vmatpush1.bf16.msra.mxu0 %v2615
        %2687 = vmatprep.subr.bf16.mxu0 0
        %2688 = vmatpush1.bf16.msra.mxu0 %v2616
        %2689 = vmatprep.subr.bf16.mxu0 0
        %2690 = vmatpush1.bf16.msra.mxu0 %v2617
        %2691 = vmatprep.subr.bf16.mxu0 0
        %2692 = vmatpush1.bf16.msra.mxu0 %v2618
        %2693 = vmatprep.subr.bf16.mxu0 0
        %2694 = vmatpush1.bf16.msra.mxu0 %v2619
        %2695 = vmatprep.subr.bf16.mxu0 0
        %2696 = vmatpush1.bf16.msra.mxu0 %v2620
        %2697 = vmatprep.subr.bf16.mxu0 0
        %2698 = vmatpush1.bf16.msra.mxu0 %v2621
        %2699 = vmatprep.subr.bf16.mxu0 0
        %2700 = vmatpush1.bf16.msra.mxu0 %v2622
        %2701 = vmatprep.subr.bf16.mxu0 0
        %2702 = vmatpush1.bf16.msra.mxu0 %v2623
        %2703 = vmatprep.subr.bf16.mxu0 0
        %2704 = vmatpush1.bf16.msra.mxu0 %v2624
        %2705 = vmatprep.mubr.bf16.mxu0 %v2414
        %2706 = vmatmul.mubr.bf16.gmra.mrb[0].mxu0 %v2413
        %v2707 = vpop.f32.mrb[0].mxu0
        %v2708 = vadd.f32 0.0, %v2707
        %v2709 = vpop.f32.mrb[0].mxu0
        %v2710 = vpop.f32.mrb[0].mxu0
        %v2711 = vadd.f32 0.0, %v2710
        %v2712 = vpop.f32.mrb[0].mxu0
        %2713 = vdwg.mxu0
        %2714 = vmatprep.subr.bf16.mxu0 0
        %2715 = vmatpush1.bf16.msra.mxu0 %v2625
        %2716 = vmatprep.subr.bf16.mxu0 0
        %2717 = vmatpush1.bf16.msra.mxu0 %v2626
        %2718 = vmatprep.subr.bf16.mxu0 0
        %2719 = vmatpush1.bf16.msra.mxu0 %v2627
        %2720 = vmatprep.subr.bf16.mxu0 0
        %2721 = vmatpush1.bf16.msra.mxu0 %v2628
        %2722 = vmatprep.subr.bf16.mxu0 0
        %2723 = vmatpush1.bf16.msra.mxu0 %v2629
        %2724 = vmatprep.subr.bf16.mxu0 0
        %2725 = vmatpush1.bf16.msra.mxu0 %v2630
        %2726 = vmatprep.subr.bf16.mxu0 0
        %2727 = vmatpush1.bf16.msra.mxu0 %v2631
        %2728 = vmatprep.subr.bf16.mxu0 0
        %2729 = vmatpush1.bf16.msra.mxu0 %v2632
        %2730 = vmatprep.subr.bf16.mxu0 0
        %2731 = vmatpush1.bf16.msra.mxu0 %v2633
        %2732 = vmatprep.subr.bf16.mxu0 0
        %2733 = vmatpush1.bf16.msra.mxu0 %v2634
        %2734 = vmatprep.subr.bf16.mxu0 0
        %2735 = vmatpush1.bf16.msra.mxu0 %v2635
        %2736 = vmatprep.subr.bf16.mxu0 0
        %2737 = vmatpush1.bf16.msra.mxu0 %v2636
        %2738 = vmatprep.subr.bf16.mxu0 0
        %2739 = vmatpush1.bf16.msra.mxu0 %v2637
        %2740 = vmatprep.subr.bf16.mxu0 0
        %2741 = vmatpush1.bf16.msra.mxu0 %v2638
        %2742 = vmatprep.subr.bf16.mxu0 0
        %2743 = vmatpush1.bf16.msra.mxu0 %v2639
        %2744 = vmatprep.subr.bf16.mxu0 0
        %2745 = vmatpush1.bf16.msra.mxu0 %v2640
        %2746 = vmatprep.mubr.bf16.mxu0 %v2416
        %2747 = vmatmul.mubr.bf16.gmra.mrb[0].mxu0 %v2415
        %v2748 = vpop.f32.mrb[0].mxu0
        %v2749 = vadd.f32 %v2708, %v2748
        %v2750 = vpop.f32.mrb[0].mxu0
        %v2751 = vpop.f32.mrb[0].mxu0
        %v2752 = vadd.f32 %v2711, %v2751
        %v2753 = vpop.f32.mrb[0].mxu0
        %2754 = vdwg.mxu0
        %v2819 = vunpack.c.l.b16 %v2041
        %v2820 = vunpack.c.l.b16 %v2042
        %v2821 = vunpack.c.l.b16 %v2043
        %v2822 = vunpack.c.l.b16 %v2044
        %v2823 = vunpack.c.l.b16 %v2045
        %v2824 = vunpack.c.l.b16 %v2046
        %v2825 = vunpack.c.l.b16 %v2047
        %v2826 = vunpack.c.l.b16 %v2048
        %v2827 = vunpack.c.l.b16 %v2049
        %v2828 = vunpack.c.l.b16 %v2050
        %v2829 = vunpack.c.l.b16 %v2051
        %v2830 = vunpack.c.l.b16 %v2052
        %v2831 = vunpack.c.l.b16 %v2053
        %v2832 = vunpack.c.l.b16 %v2054
        %v2833 = vunpack.c.l.b16 %v2055
        %v2834 = vunpack.c.l.b16 %v2056
        %v2835 = vunpack.c.l.b16 %v2057
        %v2836 = vunpack.c.l.b16 %v2058
        %v2837 = vunpack.c.l.b16 %v2059
        %v2838 = vunpack.c.l.b16 %v2060
        %v2839 = vunpack.c.l.b16 %v2061
        %v2840 = vunpack.c.l.b16 %v2062
        %v2841 = vunpack.c.l.b16 %v2063
        %v2842 = vunpack.c.l.b16 %v2064
        %v2843 = vunpack.c.l.b16 %v2065
        %v2844 = vunpack.c.l.b16 %v2066
        %v2845 = vunpack.c.l.b16 %v2067
        %v2846 = vunpack.c.l.b16 %v2068
        %v2847 = vunpack.c.l.b16 %v2069
        %v2848 = vunpack.c.l.b16 %v2070
        %v2849 = vunpack.c.l.b16 %v2071
        %v2850 = vunpack.c.l.b16 %v2072
        %v2851 = vunpack.c.l.b16 %v2073
        %v2852 = vunpack.c.l.b16 %v2074
        %v2853 = vunpack.c.l.b16 %v2075
        %v2854 = vunpack.c.l.b16 %v2076
        %v2855 = vunpack.c.l.b16 %v2077
        %v2856 = vunpack.c.l.b16 %v2078
        %v2857 = vunpack.c.l.b16 %v2079
        %v2858 = vunpack.c.l.b16 %v2080
        %v2859 = vunpack.c.l.b16 %v2081
        %v2860 = vunpack.c.l.b16 %v2082
        %v2861 = vunpack.c.l.b16 %v2083
        %v2862 = vunpack.c.l.b16 %v2084
        %v2863 = vunpack.c.l.b16 %v2085
        %v2864 = vunpack.c.l.b16 %v2086
        %v2865 = vunpack.c.l.b16 %v2087
        %v2866 = vunpack.c.l.b16 %v2088
        %v2867 = vunpack.c.l.b16 %v2089
        %v2868 = vunpack.c.l.b16 %v2090
        %v2869 = vunpack.c.l.b16 %v2091
        %v2870 = vunpack.c.l.b16 %v2092
        %v2871 = vunpack.c.l.b16 %v2093
        %v2872 = vunpack.c.l.b16 %v2094
        %v2873 = vunpack.c.l.b16 %v2095
        %v2874 = vunpack.c.l.b16 %v2096
        %v2875 = vunpack.c.l.b16 %v2097
        %v2876 = vunpack.c.l.b16 %v2098
        %v2877 = vunpack.c.l.b16 %v2099
        %v2878 = vunpack.c.l.b16 %v2100
        %v2879 = vunpack.c.l.b16 %v2101
        %v2880 = vunpack.c.l.b16 %v2102
        %v2881 = vunpack.c.l.b16 %v2103
        %v2882 = vunpack.c.l.b16 %v2104
        %v2883 = vpack.c.b16 %v2820, %v2819
        %v2884 = vpack.c.b16 %v2822, %v2821
        %v2885 = vpack.c.b16 %v2824, %v2823
        %v2886 = vpack.c.b16 %v2826, %v2825
        %v2887 = vpack.c.b16 %v2828, %v2827
        %v2888 = vpack.c.b16 %v2830, %v2829
        %v2889 = vpack.c.b16 %v2832, %v2831
        %v2890 = vpack.c.b16 %v2834, %v2833
        %v2891 = vpack.c.b16 %v2836, %v2835
        %v2892 = vpack.c.b16 %v2838, %v2837
        %v2893 = vpack.c.b16 %v2840, %v2839
        %v2894 = vpack.c.b16 %v2842, %v2841
        %v2895 = vpack.c.b16 %v2844, %v2843
        %v2896 = vpack.c.b16 %v2846, %v2845
        %v2897 = vpack.c.b16 %v2848, %v2847
        %v2898 = vpack.c.b16 %v2850, %v2849
        %v2899 = vpack.c.b16 %v2852, %v2851
        %v2900 = vpack.c.b16 %v2854, %v2853
        %v2901 = vpack.c.b16 %v2856, %v2855
        %v2902 = vpack.c.b16 %v2858, %v2857
        %v2903 = vpack.c.b16 %v2860, %v2859
        %v2904 = vpack.c.b16 %v2862, %v2861
        %v2905 = vpack.c.b16 %v2864, %v2863
        %v2906 = vpack.c.b16 %v2866, %v2865
        %v2907 = vpack.c.b16 %v2868, %v2867
        %v2908 = vpack.c.b16 %v2870, %v2869
        %v2909 = vpack.c.b16 %v2872, %v2871
        %v2910 = vpack.c.b16 %v2874, %v2873
        %v2911 = vpack.c.b16 %v2876, %v2875
        %v2912 = vpack.c.b16 %v2878, %v2877
        %v2913 = vpack.c.b16 %v2880, %v2879
        %v2914 = vpack.c.b16 %v2882, %v2881
        %2947 = vmatprep.subr.bf16.mxu0 0
        %2948 = vmatpush1.bf16.msra.mxu0 %v2883
        %2949 = vmatprep.subr.bf16.mxu0 0
        %2950 = vmatpush1.bf16.msra.mxu0 %v2884
        %2951 = vmatprep.subr.bf16.mxu0 0
        %2952 = vmatpush1.bf16.msra.mxu0 %v2885
        %2953 = vmatprep.subr.bf16.mxu0 0
        %2954 = vmatpush1.bf16.msra.mxu0 %v2886
        %2955 = vmatprep.subr.bf16.mxu0 0
        %2956 = vmatpush1.bf16.msra.mxu0 %v2887
        %2957 = vmatprep.subr.bf16.mxu0 0
        %2958 = vmatpush1.bf16.msra.mxu0 %v2888
        %2959 = vmatprep.subr.bf16.mxu0 0
        %2960 = vmatpush1.bf16.msra.mxu0 %v2889
        %2961 = vmatprep.subr.bf16.mxu0 0
        %2962 = vmatpush1.bf16.msra.mxu0 %v2890
        %2963 = vmatprep.subr.bf16.mxu0 0
        %2964 = vmatpush1.bf16.msra.mxu0 %v2891
        %2965 = vmatprep.subr.bf16.mxu0 0
        %2966 = vmatpush1.bf16.msra.mxu0 %v2892
        %2967 = vmatprep.subr.bf16.mxu0 0
        %2968 = vmatpush1.bf16.msra.mxu0 %v2893
        %2969 = vmatprep.subr.bf16.mxu0 0
        %2970 = vmatpush1.bf16.msra.mxu0 %v2894
        %2971 = vmatprep.subr.bf16.mxu0 0
        %2972 = vmatpush1.bf16.msra.mxu0 %v2895
        %2973 = vmatprep.subr.bf16.mxu0 0
        %2974 = vmatpush1.bf16.msra.mxu0 %v2896
        %2975 = vmatprep.subr.bf16.mxu0 0
        %2976 = vmatpush1.bf16.msra.mxu0 %v2897
        %2977 = vmatprep.subr.bf16.mxu0 0
        %2978 = vmatpush1.bf16.msra.mxu0 %v2898
        %2979 = vmatprep.mubr.bf16.mxu0 %v2038
        %2980 = vmatmul.mubr.bf16.gmra.mrb[0].mxu0 %v2037
        %v2981 = vpop.f32.mrb[0].mxu0
        %v2982 = vadd.f32 %v2749, %v2981
        %v2983 = vpop.f32.mrb[0].mxu0
        %v2984 = vpop.f32.mrb[0].mxu0
        %v2985 = vadd.f32 %v2752, %v2984
        %v2986 = vpop.f32.mrb[0].mxu0
        %2987 = vdwg.mxu0
        %2988 = vmatprep.subr.bf16.mxu0 0
        %2989 = vmatpush1.bf16.msra.mxu0 %v2899
        %2990 = vmatprep.subr.bf16.mxu0 0
        %2991 = vmatpush1.bf16.msra.mxu0 %v2900
        %2992 = vmatprep.subr.bf16.mxu0 0
        %2993 = vmatpush1.bf16.msra.mxu0 %v2901
        %2994 = vmatprep.subr.bf16.mxu0 0
        %2995 = vmatpush1.bf16.msra.mxu0 %v2902
        %2996 = vmatprep.subr.bf16.mxu0 0
        %2997 = vmatpush1.bf16.msra.mxu0 %v2903
        %2998 = vmatprep.subr.bf16.mxu0 0
        %2999 = vmatpush1.bf16.msra.mxu0 %v2904
        %3000 = vmatprep.subr.bf16.mxu0 0
        %3001 = vmatpush1.bf16.msra.mxu0 %v2905
        %3002 = vmatprep.subr.bf16.mxu0 0
        %3003 = vmatpush1.bf16.msra.mxu0 %v2906
        %3004 = vmatprep.subr.bf16.mxu0 0
        %3005 = vmatpush1.bf16.msra.mxu0 %v2907
        %3006 = vmatprep.subr.bf16.mxu0 0
        %3007 = vmatpush1.bf16.msra.mxu0 %v2908
        %3008 = vmatprep.subr.bf16.mxu0 0
        %3009 = vmatpush1.bf16.msra.mxu0 %v2909
        %3010 = vmatprep.subr.bf16.mxu0 0
        %3011 = vmatpush1.bf16.msra.mxu0 %v2910
        %3012 = vmatprep.subr.bf16.mxu0 0
        %3013 = vmatpush1.bf16.msra.mxu0 %v2911
        %3014 = vmatprep.subr.bf16.mxu0 0
        %3015 = vmatpush1.bf16.msra.mxu0 %v2912
        %3016 = vmatprep.subr.bf16.mxu0 0
        %3017 = vmatpush1.bf16.msra.mxu0 %v2913
        %3018 = vmatprep.subr.bf16.mxu0 0
        %3019 = vmatpush1.bf16.msra.mxu0 %v2914
        %3020 = vmatprep.mubr.bf16.mxu0 %v2040
        %3021 = vmatmul.mubr.bf16.gmra.mrb[0].mxu0 %v2039
        %v3022 = vpop.f32.mrb[0].mxu0
        %v3023 = vadd.f32 %v2982, %v3022
        %v3024 = vpop.f32.mrb[0].mxu0
        %v3025 = vpop.f32.mrb[0].mxu0
        %v3026 = vadd.f32 %v2985, %v3025
        %v3027 = vpop.f32.mrb[0].mxu0
        %3028 = vdwg.mxu0
        %v3029 = vld [vmem:[#allocation19 + $0x20] sm:$0xff]
        %v3030 = vld [vmem:[#allocation19 + $0x28] sm:$0xff]
        %v3031 = vld [vmem:[#allocation19 + $0x60] sm:$0xff]
        %v3032 = vld [vmem:[#allocation19 + $0x68] sm:$0xff]
        %v3033 = vld [vmem:[#allocation19 + $0xa0] sm:$0xff]
        %v3034 = vld [vmem:[#allocation19 + $0xa8] sm:$0xff]
        %v3035 = vld [vmem:[#allocation19 + $0xe0] sm:$0xff]
        %v3036 = vld [vmem:[#allocation19 + $0xe8] sm:$0xff]
        %v3037 = vld [vmem:[#allocation19 + $0x120] sm:$0xff]
        %v3038 = vld [vmem:[#allocation19 + $0x128] sm:$0xff]
        %v3039 = vld [vmem:[#allocation19 + $0x160] sm:$0xff]
        %v3040 = vld [vmem:[#allocation19 + $0x168] sm:$0xff]
        %v3041 = vld [vmem:[#allocation19 + $0x1a0] sm:$0xff]
        %v3042 = vld [vmem:[#allocation19 + $0x1a8] sm:$0xff]
        %v3043 = vld [vmem:[#allocation19 + $0x1e0] sm:$0xff]
        %v3044 = vld [vmem:[#allocation19 + $0x1e8] sm:$0xff]
        %v3045 = vld [vmem:[#allocation19 + $0x220] sm:$0xff]
        %v3046 = vld [vmem:[#allocation19 + $0x228] sm:$0xff]
        %v3047 = vld [vmem:[#allocation19 + $0x260] sm:$0xff]
        %v3048 = vld [vmem:[#allocation19 + $0x268] sm:$0xff]
        %v3049 = vld [vmem:[#allocation19 + $0x2a0] sm:$0xff]
        %v3050 = vld [vmem:[#allocation19 + $0x2a8] sm:$0xff]
        %v3051 = vld [vmem:[#allocation19 + $0x2e0] sm:$0xff]
        %v3052 = vld [vmem:[#allocation19 + $0x2e8] sm:$0xff]
        %v3053 = vld [vmem:[#allocation19 + $0x320] sm:$0xff]
        %v3054 = vld [vmem:[#allocation19 + $0x328] sm:$0xff]
        %v3055 = vld [vmem:[#allocation19 + $0x360] sm:$0xff]
        %v3056 = vld [vmem:[#allocation19 + $0x368] sm:$0xff]
        %v3057 = vld [vmem:[#allocation19 + $0x3a0] sm:$0xff]
        %v3058 = vld [vmem:[#allocation19 + $0x3a8] sm:$0xff]
        %v3059 = vld [vmem:[#allocation19 + $0x3e0] sm:$0xff]
        %v3060 = vld [vmem:[#allocation19 + $0x3e8] sm:$0xff]
        %v3061 = vld [vmem:[#allocation21 + $0x8] sm:$0xf]
        %v3063 = vlaneseq
        %v3064 = vshrl.u32 %v3063, 7
        %v3065 = vsub.s32 0, %v3064
        %v3066 = vrot.slane %v3061, %v3065
        %v3067 = vlaneseq
        %v3068 = vshrl.u32 %v3067, 7
        %v3069 = vsub.s32 1, %v3068
        %v3070 = vrot.slane %v3061, %v3069
        %v3071 = vlaneseq
        %v3072 = vshrl.u32 %v3071, 7
        %v3073 = vsub.s32 2, %v3072
        %v3074 = vrot.slane %v3061, %v3073
        %v3075 = vlaneseq
        %v3076 = vshrl.u32 %v3075, 7
        %v3077 = vsub.s32 3, %v3076
        %v3078 = vrot.slane %v3061, %v3077
        %v3115 = vunpack.c.l.b16 %v3029
        %v3116 = vunpack.c.h.b16 %v3029
        %v3117 = vunpack.c.l.b16 %v3030
        %v3118 = vunpack.c.h.b16 %v3030
        %v3119 = vunpack.c.l.b16 %v3031
        %v3120 = vunpack.c.h.b16 %v3031
        %v3121 = vunpack.c.l.b16 %v3032
        %v3122 = vunpack.c.h.b16 %v3032
        %v3123 = vunpack.c.l.b16 %v3033
        %v3124 = vunpack.c.h.b16 %v3033
        %v3125 = vunpack.c.l.b16 %v3034
        %v3126 = vunpack.c.h.b16 %v3034
        %v3127 = vunpack.c.l.b16 %v3035
        %v3128 = vunpack.c.h.b16 %v3035
        %v3129 = vunpack.c.l.b16 %v3036
        %v3130 = vunpack.c.h.b16 %v3036
        %v3131 = vunpack.c.l.b16 %v3037
        %v3132 = vunpack.c.h.b16 %v3037
        %v3133 = vunpack.c.l.b16 %v3038
        %v3134 = vunpack.c.h.b16 %v3038
        %v3135 = vunpack.c.l.b16 %v3039
        %v3136 = vunpack.c.h.b16 %v3039
        %v3137 = vunpack.c.l.b16 %v3040
        %v3138 = vunpack.c.h.b16 %v3040
        %v3139 = vunpack.c.l.b16 %v3041
        %v3140 = vunpack.c.h.b16 %v3041
        %v3141 = vunpack.c.l.b16 %v3042
        %v3142 = vunpack.c.h.b16 %v3042
        %v3143 = vunpack.c.l.b16 %v3043
        %v3144 = vunpack.c.h.b16 %v3043
        %v3145 = vunpack.c.l.b16 %v3044
        %v3146 = vunpack.c.h.b16 %v3044
        %v3147 = vunpack.c.l.b16 %v3045
        %v3148 = vunpack.c.h.b16 %v3045
        %v3149 = vunpack.c.l.b16 %v3046
        %v3150 = vunpack.c.h.b16 %v3046
        %v3151 = vunpack.c.l.b16 %v3047
        %v3152 = vunpack.c.h.b16 %v3047
        %v3153 = vunpack.c.l.b16 %v3048
        %v3154 = vunpack.c.h.b16 %v3048
        %v3155 = vunpack.c.l.b16 %v3049
        %v3156 = vunpack.c.h.b16 %v3049
        %v3157 = vunpack.c.l.b16 %v3050
        %v3158 = vunpack.c.h.b16 %v3050
        %v3159 = vunpack.c.l.b16 %v3051
        %v3160 = vunpack.c.h.b16 %v3051
        %v3161 = vunpack.c.l.b16 %v3052
        %v3162 = vunpack.c.h.b16 %v3052
        %v3163 = vunpack.c.l.b16 %v3053
        %v3164 = vunpack.c.h.b16 %v3053
        %v3165 = vunpack.c.l.b16 %v3054
        %v3166 = vunpack.c.h.b16 %v3054
        %v3167 = vunpack.c.l.b16 %v3055
        %v3168 = vunpack.c.h.b16 %v3055
        %v3169 = vunpack.c.l.b16 %v3056
        %v3170 = vunpack.c.h.b16 %v3056
        %v3171 = vunpack.c.l.b16 %v3057
        %v3172 = vunpack.c.h.b16 %v3057
        %v3173 = vunpack.c.l.b16 %v3058
        %v3174 = vunpack.c.h.b16 %v3058
        %v3175 = vunpack.c.l.b16 %v3059
        %v3176 = vunpack.c.h.b16 %v3059
        %v3177 = vunpack.c.l.b16 %v3060
        %v3178 = vunpack.c.h.b16 %v3060
        %v3179 = vpack.c.b16 %v3119, %v3115
        %v3180 = vpack.c.b16 %v3120, %v3116
        %v3181 = vpack.c.b16 %v3121, %v3117
        %v3182 = vpack.c.b16 %v3122, %v3118
        %v3183 = vpack.c.b16 %v3127, %v3123
        %v3184 = vpack.c.b16 %v3128, %v3124
        %v3185 = vpack.c.b16 %v3129, %v3125
        %v3186 = vpack.c.b16 %v3130, %v3126
        %v3187 = vpack.c.b16 %v3135, %v3131
        %v3188 = vpack.c.b16 %v3136, %v3132
        %v3189 = vpack.c.b16 %v3137, %v3133
        %v3190 = vpack.c.b16 %v3138, %v3134
        %v3191 = vpack.c.b16 %v3143, %v3139
        %v3192 = vpack.c.b16 %v3144, %v3140
        %v3193 = vpack.c.b16 %v3145, %v3141
        %v3194 = vpack.c.b16 %v3146, %v3142
        %v3195 = vpack.c.b16 %v3151, %v3147
        %v3196 = vpack.c.b16 %v3152, %v3148
        %v3197 = vpack.c.b16 %v3153, %v3149
        %v3198 = vpack.c.b16 %v3154, %v3150
        %v3199 = vpack.c.b16 %v3159, %v3155
        %v3200 = vpack.c.b16 %v3160, %v3156
        %v3201 = vpack.c.b16 %v3161, %v3157
        %v3202 = vpack.c.b16 %v3162, %v3158
        %v3203 = vpack.c.b16 %v3167, %v3163
        %v3204 = vpack.c.b16 %v3168, %v3164
        %v3205 = vpack.c.b16 %v3169, %v3165
        %v3206 = vpack.c.b16 %v3170, %v3166
        %v3207 = vpack.c.b16 %v3175, %v3171
        %v3208 = vpack.c.b16 %v3176, %v3172
        %v3209 = vpack.c.b16 %v3177, %v3173
        %v3210 = vpack.c.b16 %v3178, %v3174
        %3243 = vmatprep.subr.bf16.mxu0 %v3180
        %3244 = vmatpush1.bf16.msra.mxu0 %v3179
        %3245 = vmatprep.subr.bf16.mxu0 %v3184
        %3246 = vmatpush1.bf16.msra.mxu0 %v3183
        %3247 = vmatprep.subr.bf16.mxu0 %v3188
        %3248 = vmatpush1.bf16.msra.mxu0 %v3187
        %3249 = vmatprep.subr.bf16.mxu0 %v3192
        %3250 = vmatpush1.bf16.msra.mxu0 %v3191
        %3251 = vmatprep.subr.bf16.mxu0 %v3196
        %3252 = vmatpush1.bf16.msra.mxu0 %v3195
        %3253 = vmatprep.subr.bf16.mxu0 %v3200
        %3254 = vmatpush1.bf16.msra.mxu0 %v3199
        %3255 = vmatprep.subr.bf16.mxu0 %v3204
        %3256 = vmatpush1.bf16.msra.mxu0 %v3203
        %3257 = vmatprep.subr.bf16.mxu0 %v3208
        %3258 = vmatpush1.bf16.msra.mxu0 %v3207
        %3259 = vmatprep.subr.bf16.mxu0 0
        %3260 = vmatpush1.bf16.msra.mxu0 0
        %3261 = vmatprep.subr.bf16.mxu0 0
        %3262 = vmatpush1.bf16.msra.mxu0 0
        %3263 = vmatprep.subr.bf16.mxu0 0
        %3264 = vmatpush1.bf16.msra.mxu0 0
        %3265 = vmatprep.subr.bf16.mxu0 0
        %3266 = vmatpush1.bf16.msra.mxu0 0
        %3267 = vmatprep.subr.bf16.mxu0 0
        %3268 = vmatpush1.bf16.msra.mxu0 0
        %3269 = vmatprep.subr.bf16.mxu0 0
        %3270 = vmatpush1.bf16.msra.mxu0 0
        %3271 = vmatprep.subr.bf16.mxu0 0
        %3272 = vmatpush1.bf16.msra.mxu0 0
        %3273 = vmatprep.subr.bf16.mxu0 0
        %3274 = vmatpush1.bf16.msra.mxu0 0
        %3275 = vmatprep.mubr.bf16.mxu0 0
        %3276 = vmatmul.mubr.bf16.gmra.mrb[0].mxu0 %v1728
        %v3277 = vpop.f32.mrb[0].mxu0
        %v3278 = vadd.f32 %v3066, %v3277
        %v3279 = vpop.f32.mrb[0].mxu0
        %v3280 = vadd.f32 %v3070, %v3279
        %v3281 = vpop.f32.mrb[0].mxu0
        %v3282 = vadd.f32 %v3066, %v3281
        %v3283 = vpop.f32.mrb[0].mxu0
        %v3284 = vadd.f32 %v3070, %v3283
        %3285 = vdwg.mxu0
        %3286 = vmatprep.subr.bf16.mxu0 %v3182
        %3287 = vmatpush1.bf16.msra.mxu0 %v3181
        %3288 = vmatprep.subr.bf16.mxu0 %v3186
        %3289 = vmatpush1.bf16.msra.mxu0 %v3185
        %3290 = vmatprep.subr.bf16.mxu0 %v3190
        %3291 = vmatpush1.bf16.msra.mxu0 %v3189
        %3292 = vmatprep.subr.bf16.mxu0 %v3194
        %3293 = vmatpush1.bf16.msra.mxu0 %v3193
        %3294 = vmatprep.subr.bf16.mxu0 %v3198
        %3295 = vmatpush1.bf16.msra.mxu0 %v3197
        %3296 = vmatprep.subr.bf16.mxu0 %v3202
        %3297 = vmatpush1.bf16.msra.mxu0 %v3201
        %3298 = vmatprep.subr.bf16.mxu0 %v3206
        %3299 = vmatpush1.bf16.msra.mxu0 %v3205
        %3300 = vmatprep.subr.bf16.mxu0 %v3210
        %3301 = vmatpush1.bf16.msra.mxu0 %v3209
        %3302 = vmatprep.subr.bf16.mxu0 0
        %3303 = vmatpush1.bf16.msra.mxu0 0
        %3304 = vmatprep.subr.bf16.mxu0 0
        %3305 = vmatpush1.bf16.msra.mxu0 0
        %3306 = vmatprep.subr.bf16.mxu0 0
        %3307 = vmatpush1.bf16.msra.mxu0 0
        %3308 = vmatprep.subr.bf16.mxu0 0
        %3309 = vmatpush1.bf16.msra.mxu0 0
        %3310 = vmatprep.subr.bf16.mxu0 0
        %3311 = vmatpush1.bf16.msra.mxu0 0
        %3312 = vmatprep.subr.bf16.mxu0 0
        %3313 = vmatpush1.bf16.msra.mxu0 0
        %3314 = vmatprep.subr.bf16.mxu0 0
        %3315 = vmatpush1.bf16.msra.mxu0 0
        %3316 = vmatprep.subr.bf16.mxu0 0
        %3317 = vmatpush1.bf16.msra.mxu0 0
        %3318 = vmatprep.mubr.bf16.mxu0 0
        %3319 = vmatmul.mubr.bf16.gmra.mrb[0].mxu0 %v1728
        %v3320 = vpop.f32.mrb[0].mxu0
        %v3321 = vadd.f32 %v3074, %v3320
        %v3322 = vpop.f32.mrb[0].mxu0
        %v3323 = vadd.f32 %v3078, %v3322
        %v3324 = vpop.f32.mrb[0].mxu0
        %v3325 = vadd.f32 %v3074, %v3324
        %v3326 = vpop.f32.mrb[0].mxu0
        %v3327 = vadd.f32 %v3078, %v3326
        %3328 = vdwg.mxu0
        %v3329 = vmax.f32 %v3278, 0.0
        %v3330 = vmax.f32 %v3280, 0.0
        %v3331 = vmax.f32 %v3321, 0.0
        %v3332 = vmax.f32 %v3323, 0.0
        %v3333 = vmax.f32 %v3282, 0.0
        %v3334 = vmax.f32 %v3284, 0.0
        %v3335 = vmax.f32 %v3325, 0.0
        %v3336 = vmax.f32 %v3327, 0.0
        %v3337 = vpack.c.bf16 %v3333, %v3329
        %v3338 = vpack.c.bf16 %v3334, %v3330
        %v3339 = vpack.c.bf16 %v3335, %v3331
        %v3340 = vpack.c.bf16 %v3336, %v3332
        %v3341 = vld [vmem:[#allocation22 + $0x200] sm:$0xf]
        %v3342 = vld [vmem:[#allocation22 + $0x204] sm:$0xf]
        %v3343 = vld [vmem:[#allocation22 + $0x208] sm:$0xf]
        %v3344 = vld [vmem:[#allocation22 + $0x20c] sm:$0xf]
        %v3345 = vld [vmem:[#allocation22 + $0x210] sm:$0xf]
        %v3346 = vld [vmem:[#allocation22 + $0x214] sm:$0xf]
        %v3347 = vld [vmem:[#allocation22 + $0x218] sm:$0xf]
        %v3348 = vld [vmem:[#allocation22 + $0x21c] sm:$0xf]
        %v3349 = vld [vmem:[#allocation22 + $0x220] sm:$0xf]
        %v3350 = vld [vmem:[#allocation22 + $0x224] sm:$0xf]
        %v3351 = vld [vmem:[#allocation22 + $0x228] sm:$0xf]
        %v3352 = vld [vmem:[#allocation22 + $0x22c] sm:$0xf]
        %v3353 = vld [vmem:[#allocation22 + $0x230] sm:$0xf]
        %v3354 = vld [vmem:[#allocation22 + $0x234] sm:$0xf]
        %v3355 = vld [vmem:[#allocation22 + $0x238] sm:$0xf]
        %v3356 = vld [vmem:[#allocation22 + $0x23c] sm:$0xf]
        %v3357 = vld [vmem:[#allocation22 + $0x240] sm:$0xf]
        %v3358 = vld [vmem:[#allocation22 + $0x244] sm:$0xf]
        %v3359 = vld [vmem:[#allocation22 + $0x248] sm:$0xf]
        %v3360 = vld [vmem:[#allocation22 + $0x24c] sm:$0xf]
        %v3361 = vld [vmem:[#allocation22 + $0x250] sm:$0xf]
        %v3362 = vld [vmem:[#allocation22 + $0x254] sm:$0xf]
        %v3363 = vld [vmem:[#allocation22 + $0x258] sm:$0xf]
        %v3364 = vld [vmem:[#allocation22 + $0x25c] sm:$0xf]
        %v3365 = vld [vmem:[#allocation22 + $0x260] sm:$0xf]
        %v3366 = vld [vmem:[#allocation22 + $0x264] sm:$0xf]
        %v3367 = vld [vmem:[#allocation22 + $0x268] sm:$0xf]
        %v3368 = vld [vmem:[#allocation22 + $0x26c] sm:$0xf]
        %v3369 = vld [vmem:[#allocation22 + $0x270] sm:$0xf]
        %v3370 = vld [vmem:[#allocation22 + $0x274] sm:$0xf]
        %v3371 = vld [vmem:[#allocation22 + $0x278] sm:$0xf]
        %v3372 = vld [vmem:[#allocation22 + $0x27c] sm:$0xf]
        %v3373 = vld [vmem:[#allocation22 + $0x280] sm:$0xf]
        %v3374 = vld [vmem:[#allocation22 + $0x284] sm:$0xf]
        %v3375 = vld [vmem:[#allocation22 + $0x288] sm:$0xf]
        %v3376 = vld [vmem:[#allocation22 + $0x28c] sm:$0xf]
        %v3377 = vld [vmem:[#allocation22 + $0x290] sm:$0xf]
        %v3378 = vld [vmem:[#allocation22 + $0x294] sm:$0xf]
        %v3379 = vld [vmem:[#allocation22 + $0x298] sm:$0xf]
        %v3380 = vld [vmem:[#allocation22 + $0x29c] sm:$0xf]
        %v3381 = vld [vmem:[#allocation22 + $0x2a0] sm:$0xf]
        %v3382 = vld [vmem:[#allocation22 + $0x2a4] sm:$0xf]
        %v3383 = vld [vmem:[#allocation22 + $0x2a8] sm:$0xf]
        %v3384 = vld [vmem:[#allocation22 + $0x2ac] sm:$0xf]
        %v3385 = vld [vmem:[#allocation22 + $0x2b0] sm:$0xf]
        %v3386 = vld [vmem:[#allocation22 + $0x2b4] sm:$0xf]
        %v3387 = vld [vmem:[#allocation22 + $0x2b8] sm:$0xf]
        %v3388 = vld [vmem:[#allocation22 + $0x2bc] sm:$0xf]
        %v3389 = vld [vmem:[#allocation22 + $0x2c0] sm:$0xf]
        %v3390 = vld [vmem:[#allocation22 + $0x2c4] sm:$0xf]
        %v3391 = vld [vmem:[#allocation22 + $0x2c8] sm:$0xf]
        %v3392 = vld [vmem:[#allocation22 + $0x2cc] sm:$0xf]
        %v3393 = vld [vmem:[#allocation22 + $0x2d0] sm:$0xf]
        %v3394 = vld [vmem:[#allocation22 + $0x2d4] sm:$0xf]
        %v3395 = vld [vmem:[#allocation22 + $0x2d8] sm:$0xf]
        %v3396 = vld [vmem:[#allocation22 + $0x2dc] sm:$0xf]
        %v3397 = vld [vmem:[#allocation22 + $0x2e0] sm:$0xf]
        %v3398 = vld [vmem:[#allocation22 + $0x2e4] sm:$0xf]
        %v3399 = vld [vmem:[#allocation22 + $0x2e8] sm:$0xf]
        %v3400 = vld [vmem:[#allocation22 + $0x2ec] sm:$0xf]
        %v3401 = vld [vmem:[#allocation22 + $0x2f0] sm:$0xf]
        %v3402 = vld [vmem:[#allocation22 + $0x2f4] sm:$0xf]
        %v3403 = vld [vmem:[#allocation22 + $0x2f8] sm:$0xf]
        %v3404 = vld [vmem:[#allocation22 + $0x2fc] sm:$0xf]
        %v3469 = vunpack.c.l.b16 %v3341
        %v3470 = vunpack.c.l.b16 %v3342
        %v3471 = vunpack.c.l.b16 %v3343
        %v3472 = vunpack.c.l.b16 %v3344
        %v3473 = vunpack.c.l.b16 %v3345
        %v3474 = vunpack.c.l.b16 %v3346
        %v3475 = vunpack.c.l.b16 %v3347
        %v3476 = vunpack.c.l.b16 %v3348
        %v3477 = vunpack.c.l.b16 %v3349
        %v3478 = vunpack.c.l.b16 %v3350
        %v3479 = vunpack.c.l.b16 %v3351
        %v3480 = vunpack.c.l.b16 %v3352
        %v3481 = vunpack.c.l.b16 %v3353
        %v3482 = vunpack.c.l.b16 %v3354
        %v3483 = vunpack.c.l.b16 %v3355
        %v3484 = vunpack.c.l.b16 %v3356
        %v3485 = vunpack.c.l.b16 %v3357
        %v3486 = vunpack.c.l.b16 %v3358
        %v3487 = vunpack.c.l.b16 %v3359
        %v3488 = vunpack.c.l.b16 %v3360
        %v3489 = vunpack.c.l.b16 %v3361
        %v3490 = vunpack.c.l.b16 %v3362
        %v3491 = vunpack.c.l.b16 %v3363
        %v3492 = vunpack.c.l.b16 %v3364
        %v3493 = vunpack.c.l.b16 %v3365
        %v3494 = vunpack.c.l.b16 %v3366
        %v3495 = vunpack.c.l.b16 %v3367
        %v3496 = vunpack.c.l.b16 %v3368
        %v3497 = vunpack.c.l.b16 %v3369
        %v3498 = vunpack.c.l.b16 %v3370
        %v3499 = vunpack.c.l.b16 %v3371
        %v3500 = vunpack.c.l.b16 %v3372
        %v3501 = vunpack.c.l.b16 %v3373
        %v3502 = vunpack.c.l.b16 %v3374
        %v3503 = vunpack.c.l.b16 %v3375
        %v3504 = vunpack.c.l.b16 %v3376
        %v3505 = vunpack.c.l.b16 %v3377
        %v3506 = vunpack.c.l.b16 %v3378
        %v3507 = vunpack.c.l.b16 %v3379
        %v3508 = vunpack.c.l.b16 %v3380
        %v3509 = vunpack.c.l.b16 %v3381
        %v3510 = vunpack.c.l.b16 %v3382
        %v3511 = vunpack.c.l.b16 %v3383
        %v3512 = vunpack.c.l.b16 %v3384
        %v3513 = vunpack.c.l.b16 %v3385
        %v3514 = vunpack.c.l.b16 %v3386
        %v3515 = vunpack.c.l.b16 %v3387
        %v3516 = vunpack.c.l.b16 %v3388
        %v3517 = vunpack.c.l.b16 %v3389
        %v3518 = vunpack.c.l.b16 %v3390
        %v3519 = vunpack.c.l.b16 %v3391
        %v3520 = vunpack.c.l.b16 %v3392
        %v3521 = vunpack.c.l.b16 %v3393
        %v3522 = vunpack.c.l.b16 %v3394
        %v3523 = vunpack.c.l.b16 %v3395
        %v3524 = vunpack.c.l.b16 %v3396
        %v3525 = vunpack.c.l.b16 %v3397
        %v3526 = vunpack.c.l.b16 %v3398
        %v3527 = vunpack.c.l.b16 %v3399
        %v3528 = vunpack.c.l.b16 %v3400
        %v3529 = vunpack.c.l.b16 %v3401
        %v3530 = vunpack.c.l.b16 %v3402
        %v3531 = vunpack.c.l.b16 %v3403
        %v3532 = vunpack.c.l.b16 %v3404
        %v3533 = vpack.c.b16 %v3470, %v3469
        %v3534 = vpack.c.b16 %v3472, %v3471
        %v3535 = vpack.c.b16 %v3474, %v3473
        %v3536 = vpack.c.b16 %v3476, %v3475
        %v3537 = vpack.c.b16 %v3478, %v3477
        %v3538 = vpack.c.b16 %v3480, %v3479
        %v3539 = vpack.c.b16 %v3482, %v3481
        %v3540 = vpack.c.b16 %v3484, %v3483
        %v3541 = vpack.c.b16 %v3486, %v3485
        %v3542 = vpack.c.b16 %v3488, %v3487
        %v3543 = vpack.c.b16 %v3490, %v3489
        %v3544 = vpack.c.b16 %v3492, %v3491
        %v3545 = vpack.c.b16 %v3494, %v3493
        %v3546 = vpack.c.b16 %v3496, %v3495
        %v3547 = vpack.c.b16 %v3498, %v3497
        %v3548 = vpack.c.b16 %v3500, %v3499
        %v3549 = vpack.c.b16 %v3502, %v3501
        %v3550 = vpack.c.b16 %v3504, %v3503
        %v3551 = vpack.c.b16 %v3506, %v3505
        %v3552 = vpack.c.b16 %v3508, %v3507
        %v3553 = vpack.c.b16 %v3510, %v3509
        %v3554 = vpack.c.b16 %v3512, %v3511
        %v3555 = vpack.c.b16 %v3514, %v3513
        %v3556 = vpack.c.b16 %v3516, %v3515
        %v3557 = vpack.c.b16 %v3518, %v3517
        %v3558 = vpack.c.b16 %v3520, %v3519
        %v3559 = vpack.c.b16 %v3522, %v3521
        %v3560 = vpack.c.b16 %v3524, %v3523
        %v3561 = vpack.c.b16 %v3526, %v3525
        %v3562 = vpack.c.b16 %v3528, %v3527
        %v3563 = vpack.c.b16 %v3530, %v3529
        %v3564 = vpack.c.b16 %v3532, %v3531
        %3597 = vmatprep.subr.bf16.mxu0 0
        %3598 = vmatpush1.bf16.msra.mxu0 %v3533
        %3599 = vmatprep.subr.bf16.mxu0 0
        %3600 = vmatpush1.bf16.msra.mxu0 %v3534
        %3601 = vmatprep.subr.bf16.mxu0 0
        %3602 = vmatpush1.bf16.msra.mxu0 %v3535
        %3603 = vmatprep.subr.bf16.mxu0 0
        %3604 = vmatpush1.bf16.msra.mxu0 %v3536
        %3605 = vmatprep.subr.bf16.mxu0 0
        %3606 = vmatpush1.bf16.msra.mxu0 %v3537
        %3607 = vmatprep.subr.bf16.mxu0 0
        %3608 = vmatpush1.bf16.msra.mxu0 %v3538
        %3609 = vmatprep.subr.bf16.mxu0 0
        %3610 = vmatpush1.bf16.msra.mxu0 %v3539
        %3611 = vmatprep.subr.bf16.mxu0 0
        %3612 = vmatpush1.bf16.msra.mxu0 %v3540
        %3613 = vmatprep.subr.bf16.mxu0 0
        %3614 = vmatpush1.bf16.msra.mxu0 %v3541
        %3615 = vmatprep.subr.bf16.mxu0 0
        %3616 = vmatpush1.bf16.msra.mxu0 %v3542
        %3617 = vmatprep.subr.bf16.mxu0 0
        %3618 = vmatpush1.bf16.msra.mxu0 %v3543
        %3619 = vmatprep.subr.bf16.mxu0 0
        %3620 = vmatpush1.bf16.msra.mxu0 %v3544
        %3621 = vmatprep.subr.bf16.mxu0 0
        %3622 = vmatpush1.bf16.msra.mxu0 %v3545
        %3623 = vmatprep.subr.bf16.mxu0 0
        %3624 = vmatpush1.bf16.msra.mxu0 %v3546
        %3625 = vmatprep.subr.bf16.mxu0 0
        %3626 = vmatpush1.bf16.msra.mxu0 %v3547
        %3627 = vmatprep.subr.bf16.mxu0 0
        %3628 = vmatpush1.bf16.msra.mxu0 %v3548
        %3629 = vmatprep.mubr.bf16.mxu0 %v3338
        %3630 = vmatmul.mubr.bf16.gmra.mrb[0].mxu0 %v3337
        %v3631 = vpop.f32.mrb[0].mxu0
        %v3632 = vadd.f32 0.0, %v3631
        %v3633 = vpop.f32.mrb[0].mxu0
        %v3634 = vpop.f32.mrb[0].mxu0
        %v3635 = vadd.f32 0.0, %v3634
        %v3636 = vpop.f32.mrb[0].mxu0
        %3637 = vdwg.mxu0
        %3638 = vmatprep.subr.bf16.mxu0 0
        %3639 = vmatpush1.bf16.msra.mxu0 %v3549
        %3640 = vmatprep.subr.bf16.mxu0 0
        %3641 = vmatpush1.bf16.msra.mxu0 %v3550
        %3642 = vmatprep.subr.bf16.mxu0 0
        %3643 = vmatpush1.bf16.msra.mxu0 %v3551
        %3644 = vmatprep.subr.bf16.mxu0 0
        %3645 = vmatpush1.bf16.msra.mxu0 %v3552
        %3646 = vmatprep.subr.bf16.mxu0 0
        %3647 = vmatpush1.bf16.msra.mxu0 %v3553
        %3648 = vmatprep.subr.bf16.mxu0 0
        %3649 = vmatpush1.bf16.msra.mxu0 %v3554
        %3650 = vmatprep.subr.bf16.mxu0 0
        %3651 = vmatpush1.bf16.msra.mxu0 %v3555
        %3652 = vmatprep.subr.bf16.mxu0 0
        %3653 = vmatpush1.bf16.msra.mxu0 %v3556
        %3654 = vmatprep.subr.bf16.mxu0 0
        %3655 = vmatpush1.bf16.msra.mxu0 %v3557
        %3656 = vmatprep.subr.bf16.mxu0 0
        %3657 = vmatpush1.bf16.msra.mxu0 %v3558
        %3658 = vmatprep.subr.bf16.mxu0 0
        %3659 = vmatpush1.bf16.msra.mxu0 %v3559
        %3660 = vmatprep.subr.bf16.mxu0 0
        %3661 = vmatpush1.bf16.msra.mxu0 %v3560
        %3662 = vmatprep.subr.bf16.mxu0 0
        %3663 = vmatpush1.bf16.msra.mxu0 %v3561
        %3664 = vmatprep.subr.bf16.mxu0 0
        %3665 = vmatpush1.bf16.msra.mxu0 %v3562
        %3666 = vmatprep.subr.bf16.mxu0 0
        %3667 = vmatpush1.bf16.msra.mxu0 %v3563
        %3668 = vmatprep.subr.bf16.mxu0 0
        %3669 = vmatpush1.bf16.msra.mxu0 %v3564
        %3670 = vmatprep.mubr.bf16.mxu0 %v3340
        %3671 = vmatmul.mubr.bf16.gmra.mrb[0].mxu0 %v3339
        %v3672 = vpop.f32.mrb[0].mxu0
        %v3673 = vadd.f32 %v3632, %v3672
        %v3674 = vpop.f32.mrb[0].mxu0
        %v3675 = vpop.f32.mrb[0].mxu0
        %v3676 = vadd.f32 %v3635, %v3675
        %v3677 = vpop.f32.mrb[0].mxu0
        %3678 = vdwg.mxu0
        %v3679 = vadd.f32 %v3023, %v3673
        %v3680 = vadd.f32 %v3026, %v3676
        %v3681 = vld [vmem:[#allocation19 + $0x30] sm:$0xff]
        %v3682 = vld [vmem:[#allocation19 + $0x38] sm:$0xff]
        %v3683 = vld [vmem:[#allocation19 + $0x70] sm:$0xff]
        %v3684 = vld [vmem:[#allocation19 + $0x78] sm:$0xff]
        %v3685 = vld [vmem:[#allocation19 + $0xb0] sm:$0xff]
        %v3686 = vld [vmem:[#allocation19 + $0xb8] sm:$0xff]
        %v3687 = vld [vmem:[#allocation19 + $0xf0] sm:$0xff]
        %v3688 = vld [vmem:[#allocation19 + $0xf8] sm:$0xff]
        %v3689 = vld [vmem:[#allocation19 + $0x130] sm:$0xff]
        %v3690 = vld [vmem:[#allocation19 + $0x138] sm:$0xff]
        %v3691 = vld [vmem:[#allocation19 + $0x170] sm:$0xff]
        %v3692 = vld [vmem:[#allocation19 + $0x178] sm:$0xff]
        %v3693 = vld [vmem:[#allocation19 + $0x1b0] sm:$0xff]
        %v3694 = vld [vmem:[#allocation19 + $0x1b8] sm:$0xff]
        %v3695 = vld [vmem:[#allocation19 + $0x1f0] sm:$0xff]
        %v3696 = vld [vmem:[#allocation19 + $0x1f8] sm:$0xff]
        %v3697 = vld [vmem:[#allocation19 + $0x230] sm:$0xff]
        %v3698 = vld [vmem:[#allocation19 + $0x238] sm:$0xff]
        %v3699 = vld [vmem:[#allocation19 + $0x270] sm:$0xff]
        %v3700 = vld [vmem:[#allocation19 + $0x278] sm:$0xff]
        %v3701 = vld [vmem:[#allocation19 + $0x2b0] sm:$0xff]
        %v3702 = vld [vmem:[#allocation19 + $0x2b8] sm:$0xff]
        %v3703 = vld [vmem:[#allocation19 + $0x2f0] sm:$0xff]
        %v3704 = vld [vmem:[#allocation19 + $0x2f8] sm:$0xff]
        %v3705 = vld [vmem:[#allocation19 + $0x330] sm:$0xff]
        %v3706 = vld [vmem:[#allocation19 + $0x338] sm:$0xff]
        %v3707 = vld [vmem:[#allocation19 + $0x370] sm:$0xff]
        %v3708 = vld [vmem:[#allocation19 + $0x378] sm:$0xff]
        %v3709 = vld [vmem:[#allocation19 + $0x3b0] sm:$0xff]
        %v3710 = vld [vmem:[#allocation19 + $0x3b8] sm:$0xff]
        %v3711 = vld [vmem:[#allocation19 + $0x3f0] sm:$0xff]
        %v3712 = vld [vmem:[#allocation19 + $0x3f8] sm:$0xff]
        %v3713 = vld [vmem:[#allocation21 + $0xc] sm:$0xf]
        %v3715 = vlaneseq
        %v3716 = vshrl.u32 %v3715, 7
        %v3717 = vsub.s32 0, %v3716
        %v3718 = vrot.slane %v3713, %v3717
        %v3719 = vlaneseq
        %v3720 = vshrl.u32 %v3719, 7
        %v3721 = vsub.s32 1, %v3720
        %v3722 = vrot.slane %v3713, %v3721
        %v3723 = vlaneseq
        %v3724 = vshrl.u32 %v3723, 7
        %v3725 = vsub.s32 2, %v3724
        %v3726 = vrot.slane %v3713, %v3725
        %v3727 = vlaneseq
        %v3728 = vshrl.u32 %v3727, 7
        %v3729 = vsub.s32 3, %v3728
        %v3730 = vrot.slane %v3713, %v3729
        %v3767 = vunpack.c.l.b16 %v3681
        %v3768 = vunpack.c.h.b16 %v3681
        %v3769 = vunpack.c.l.b16 %v3682
        %v3770 = vunpack.c.h.b16 %v3682
        %v3771 = vunpack.c.l.b16 %v3683
        %v3772 = vunpack.c.h.b16 %v3683
        %v3773 = vunpack.c.l.b16 %v3684
        %v3774 = vunpack.c.h.b16 %v3684
        %v3775 = vunpack.c.l.b16 %v3685
        %v3776 = vunpack.c.h.b16 %v3685
        %v3777 = vunpack.c.l.b16 %v3686
        %v3778 = vunpack.c.h.b16 %v3686
        %v3779 = vunpack.c.l.b16 %v3687
        %v3780 = vunpack.c.h.b16 %v3687
        %v3781 = vunpack.c.l.b16 %v3688
        %v3782 = vunpack.c.h.b16 %v3688
        %v3783 = vunpack.c.l.b16 %v3689
        %v3784 = vunpack.c.h.b16 %v3689
        %v3785 = vunpack.c.l.b16 %v3690
        %v3786 = vunpack.c.h.b16 %v3690
        %v3787 = vunpack.c.l.b16 %v3691
        %v3788 = vunpack.c.h.b16 %v3691
        %v3789 = vunpack.c.l.b16 %v3692
        %v3790 = vunpack.c.h.b16 %v3692
        %v3791 = vunpack.c.l.b16 %v3693
        %v3792 = vunpack.c.h.b16 %v3693
        %v3793 = vunpack.c.l.b16 %v3694
        %v3794 = vunpack.c.h.b16 %v3694
        %v3795 = vunpack.c.l.b16 %v3695
        %v3796 = vunpack.c.h.b16 %v3695
        %v3797 = vunpack.c.l.b16 %v3696
        %v3798 = vunpack.c.h.b16 %v3696
        %v3799 = vunpack.c.l.b16 %v3697
        %v3800 = vunpack.c.h.b16 %v3697
        %v3801 = vunpack.c.l.b16 %v3698
        %v3802 = vunpack.c.h.b16 %v3698
        %v3803 = vunpack.c.l.b16 %v3699
        %v3804 = vunpack.c.h.b16 %v3699
        %v3805 = vunpack.c.l.b16 %v3700
        %v3806 = vunpack.c.h.b16 %v3700
        %v3807 = vunpack.c.l.b16 %v3701
        %v3808 = vunpack.c.h.b16 %v3701
        %v3809 = vunpack.c.l.b16 %v3702
        %v3810 = vunpack.c.h.b16 %v3702
        %v3811 = vunpack.c.l.b16 %v3703
        %v3812 = vunpack.c.h.b16 %v3703
        %v3813 = vunpack.c.l.b16 %v3704
        %v3814 = vunpack.c.h.b16 %v3704
        %v3815 = vunpack.c.l.b16 %v3705
        %v3816 = vunpack.c.h.b16 %v3705
        %v3817 = vunpack.c.l.b16 %v3706
        %v3818 = vunpack.c.h.b16 %v3706
        %v3819 = vunpack.c.l.b16 %v3707
        %v3820 = vunpack.c.h.b16 %v3707
        %v3821 = vunpack.c.l.b16 %v3708
        %v3822 = vunpack.c.h.b16 %v3708
        %v3823 = vunpack.c.l.b16 %v3709
        %v3824 = vunpack.c.h.b16 %v3709
        %v3825 = vunpack.c.l.b16 %v3710
        %v3826 = vunpack.c.h.b16 %v3710
        %v3827 = vunpack.c.l.b16 %v3711
        %v3828 = vunpack.c.h.b16 %v3711
        %v3829 = vunpack.c.l.b16 %v3712
        %v3830 = vunpack.c.h.b16 %v3712
        %v3831 = vpack.c.b16 %v3771, %v3767
        %v3832 = vpack.c.b16 %v3772, %v3768
        %v3833 = vpack.c.b16 %v3773, %v3769
        %v3834 = vpack.c.b16 %v3774, %v3770
        %v3835 = vpack.c.b16 %v3779, %v3775
        %v3836 = vpack.c.b16 %v3780, %v3776
        %v3837 = vpack.c.b16 %v3781, %v3777
        %v3838 = vpack.c.b16 %v3782, %v3778
        %v3839 = vpack.c.b16 %v3787, %v3783
        %v3840 = vpack.c.b16 %v3788, %v3784
        %v3841 = vpack.c.b16 %v3789, %v3785
        %v3842 = vpack.c.b16 %v3790, %v3786
        %v3843 = vpack.c.b16 %v3795, %v3791
        %v3844 = vpack.c.b16 %v3796, %v3792
        %v3845 = vpack.c.b16 %v3797, %v3793
        %v3846 = vpack.c.b16 %v3798, %v3794
        %v3847 = vpack.c.b16 %v3803, %v3799
        %v3848 = vpack.c.b16 %v3804, %v3800
        %v3849 = vpack.c.b16 %v3805, %v3801
        %v3850 = vpack.c.b16 %v3806, %v3802
        %v3851 = vpack.c.b16 %v3811, %v3807
        %v3852 = vpack.c.b16 %v3812, %v3808
        %v3853 = vpack.c.b16 %v3813, %v3809
        %v3854 = vpack.c.b16 %v3814, %v3810
        %v3855 = vpack.c.b16 %v3819, %v3815
        %v3856 = vpack.c.b16 %v3820, %v3816
        %v3857 = vpack.c.b16 %v3821, %v3817
        %v3858 = vpack.c.b16 %v3822, %v3818
        %v3859 = vpack.c.b16 %v3827, %v3823
        %v3860 = vpack.c.b16 %v3828, %v3824
        %v3861 = vpack.c.b16 %v3829, %v3825
        %v3862 = vpack.c.b16 %v3830, %v3826
        %3895 = vmatprep.subr.bf16.mxu0 %v3832
        %3896 = vmatpush1.bf16.msra.mxu0 %v3831
        %3897 = vmatprep.subr.bf16.mxu0 %v3836
        %3898 = vmatpush1.bf16.msra.mxu0 %v3835
        %3899 = vmatprep.subr.bf16.mxu0 %v3840
        %3900 = vmatpush1.bf16.msra.mxu0 %v3839
        %3901 = vmatprep.subr.bf16.mxu0 %v3844
        %3902 = vmatpush1.bf16.msra.mxu0 %v3843
        %3903 = vmatprep.subr.bf16.mxu0 %v3848
        %3904 = vmatpush1.bf16.msra.mxu0 %v3847
        %3905 = vmatprep.subr.bf16.mxu0 %v3852
        %3906 = vmatpush1.bf16.msra.mxu0 %v3851
        %3907 = vmatprep.subr.bf16.mxu0 %v3856
        %3908 = vmatpush1.bf16.msra.mxu0 %v3855
        %3909 = vmatprep.subr.bf16.mxu0 %v3860
        %3910 = vmatpush1.bf16.msra.mxu0 %v3859
        %3911 = vmatprep.subr.bf16.mxu0 0
        %3912 = vmatpush1.bf16.msra.mxu0 0
        %3913 = vmatprep.subr.bf16.mxu0 0
        %3914 = vmatpush1.bf16.msra.mxu0 0
        %3915 = vmatprep.subr.bf16.mxu0 0
        %3916 = vmatpush1.bf16.msra.mxu0 0
        %3917 = vmatprep.subr.bf16.mxu0 0
        %3918 = vmatpush1.bf16.msra.mxu0 0
        %3919 = vmatprep.subr.bf16.mxu0 0
        %3920 = vmatpush1.bf16.msra.mxu0 0
        %3921 = vmatprep.subr.bf16.mxu0 0
        %3922 = vmatpush1.bf16.msra.mxu0 0
        %3923 = vmatprep.subr.bf16.mxu0 0
        %3924 = vmatpush1.bf16.msra.mxu0 0
        %3925 = vmatprep.subr.bf16.mxu0 0
        %3926 = vmatpush1.bf16.msra.mxu0 0
        %3927 = vmatprep.mubr.bf16.mxu0 0
        %3928 = vmatmul.mubr.bf16.gmra.mrb[0].mxu0 %v1728
        %v3929 = vpop.f32.mrb[0].mxu0
        %v3930 = vadd.f32 %v3718, %v3929
        %v3931 = vpop.f32.mrb[0].mxu0
        %v3932 = vadd.f32 %v3722, %v3931
        %v3933 = vpop.f32.mrb[0].mxu0
        %v3934 = vadd.f32 %v3718, %v3933
        %v3935 = vpop.f32.mrb[0].mxu0
        %v3936 = vadd.f32 %v3722, %v3935
        %3937 = vdwg.mxu0
        %3938 = vmatprep.subr.bf16.mxu0 %v3834
        %3939 = vmatpush1.bf16.msra.mxu0 %v3833
        %3940 = vmatprep.subr.bf16.mxu0 %v3838
        %3941 = vmatpush1.bf16.msra.mxu0 %v3837
        %3942 = vmatprep.subr.bf16.mxu0 %v3842
        %3943 = vmatpush1.bf16.msra.mxu0 %v3841
        %3944 = vmatprep.subr.bf16.mxu0 %v3846
        %3945 = vmatpush1.bf16.msra.mxu0 %v3845
        %3946 = vmatprep.subr.bf16.mxu0 %v3850
        %3947 = vmatpush1.bf16.msra.mxu0 %v3849
        %3948 = vmatprep.subr.bf16.mxu0 %v3854
        %3949 = vmatpush1.bf16.msra.mxu0 %v3853
        %3950 = vmatprep.subr.bf16.mxu0 %v3858
        %3951 = vmatpush1.bf16.msra.mxu0 %v3857
        %3952 = vmatprep.subr.bf16.mxu0 %v3862
        %3953 = vmatpush1.bf16.msra.mxu0 %v3861
        %3954 = vmatprep.subr.bf16.mxu0 0
        %3955 = vmatpush1.bf16.msra.mxu0 0
        %3956 = vmatprep.subr.bf16.mxu0 0
        %3957 = vmatpush1.bf16.msra.mxu0 0
        %3958 = vmatprep.subr.bf16.mxu0 0
        %3959 = vmatpush1.bf16.msra.mxu0 0
        %3960 = vmatprep.subr.bf16.mxu0 0
        %3961 = vmatpush1.bf16.msra.mxu0 0
        %3962 = vmatprep.subr.bf16.mxu0 0
        %3963 = vmatpush1.bf16.msra.mxu0 0
        %3964 = vmatprep.subr.bf16.mxu0 0
        %3965 = vmatpush1.bf16.msra.mxu0 0
        %3966 = vmatprep.subr.bf16.mxu0 0
        %3967 = vmatpush1.bf16.msra.mxu0 0
        %3968 = vmatprep.subr.bf16.mxu0 0
        %3969 = vmatpush1.bf16.msra.mxu0 0
        %3970 = vmatprep.mubr.bf16.mxu0 0
        %3971 = vmatmul.mubr.bf16.gmra.mrb[0].mxu0 %v1728
        %v3972 = vpop.f32.mrb[0].mxu0
        %v3973 = vadd.f32 %v3726, %v3972
        %v3974 = vpop.f32.mrb[0].mxu0
        %v3975 = vadd.f32 %v3730, %v3974
        %v3976 = vpop.f32.mrb[0].mxu0
        %v3977 = vadd.f32 %v3726, %v3976
        %v3978 = vpop.f32.mrb[0].mxu0
        %v3979 = vadd.f32 %v3730, %v3978
        %3980 = vdwg.mxu0
        %v3981 = vmax.f32 %v3930, 0.0
        %v3982 = vmax.f32 %v3932, 0.0
        %v3983 = vmax.f32 %v3973, 0.0
        %v3984 = vmax.f32 %v3975, 0.0
        %v3985 = vmax.f32 %v3934, 0.0
        %v3986 = vmax.f32 %v3936, 0.0
        %v3987 = vmax.f32 %v3977, 0.0
        %v3988 = vmax.f32 %v3979, 0.0
        %v3989 = vpack.c.bf16 %v3985, %v3981
        %v3990 = vpack.c.bf16 %v3986, %v3982
        %v3991 = vpack.c.bf16 %v3987, %v3983
        %v3992 = vpack.c.bf16 %v3988, %v3984
        %v3993 = vld [vmem:[#allocation22 + $0x300] sm:$0xf]
        %v3994 = vld [vmem:[#allocation22 + $0x304] sm:$0xf]
        %v3995 = vld [vmem:[#allocation22 + $0x308] sm:$0xf]
        %v3996 = vld [vmem:[#allocation22 + $0x30c] sm:$0xf]
        %v3997 = vld [vmem:[#allocation22 + $0x310] sm:$0xf]
        %v3998 = vld [vmem:[#allocation22 + $0x314] sm:$0xf]
        %v3999 = vld [vmem:[#allocation22 + $0x318] sm:$0xf]
        %v4000 = vld [vmem:[#allocation22 + $0x31c] sm:$0xf]
        %v4001 = vld [vmem:[#allocation22 + $0x320] sm:$0xf]
        %v4002 = vld [vmem:[#allocation22 + $0x324] sm:$0xf]
        %v4003 = vld [vmem:[#allocation22 + $0x328] sm:$0xf]
        %v4004 = vld [vmem:[#allocation22 + $0x32c] sm:$0xf]
        %v4005 = vld [vmem:[#allocation22 + $0x330] sm:$0xf]
        %v4006 = vld [vmem:[#allocation22 + $0x334] sm:$0xf]
        %v4007 = vld [vmem:[#allocation22 + $0x338] sm:$0xf]
        %v4008 = vld [vmem:[#allocation22 + $0x33c] sm:$0xf]
        %v4009 = vld [vmem:[#allocation22 + $0x340] sm:$0xf]
        %v4010 = vld [vmem:[#allocation22 + $0x344] sm:$0xf]
        %v4011 = vld [vmem:[#allocation22 + $0x348] sm:$0xf]
        %v4012 = vld [vmem:[#allocation22 + $0x34c] sm:$0xf]
        %v4013 = vld [vmem:[#allocation22 + $0x350] sm:$0xf]
        %v4014 = vld [vmem:[#allocation22 + $0x354] sm:$0xf]
        %v4015 = vld [vmem:[#allocation22 + $0x358] sm:$0xf]
        %v4016 = vld [vmem:[#allocation22 + $0x35c] sm:$0xf]
        %v4017 = vld [vmem:[#allocation22 + $0x360] sm:$0xf]
        %v4018 = vld [vmem:[#allocation22 + $0x364] sm:$0xf]
        %v4019 = vld [vmem:[#allocation22 + $0x368] sm:$0xf]
        %v4020 = vld [vmem:[#allocation22 + $0x36c] sm:$0xf]
        %v4021 = vld [vmem:[#allocation22 + $0x370] sm:$0xf]
        %v4022 = vld [vmem:[#allocation22 + $0x374] sm:$0xf]
        %v4023 = vld [vmem:[#allocation22 + $0x378] sm:$0xf]
        %v4024 = vld [vmem:[#allocation22 + $0x37c] sm:$0xf]
        %v4025 = vld [vmem:[#allocation22 + $0x380] sm:$0xf]
        %v4026 = vld [vmem:[#allocation22 + $0x384] sm:$0xf]
        %v4027 = vld [vmem:[#allocation22 + $0x388] sm:$0xf]
        %v4028 = vld [vmem:[#allocation22 + $0x38c] sm:$0xf]
        %v4029 = vld [vmem:[#allocation22 + $0x390] sm:$0xf]
        %v4030 = vld [vmem:[#allocation22 + $0x394] sm:$0xf]
        %v4031 = vld [vmem:[#allocation22 + $0x398] sm:$0xf]
        %v4032 = vld [vmem:[#allocation22 + $0x39c] sm:$0xf]
        %v4033 = vld [vmem:[#allocation22 + $0x3a0] sm:$0xf]
        %v4034 = vld [vmem:[#allocation22 + $0x3a4] sm:$0xf]
        %v4035 = vld [vmem:[#allocation22 + $0x3a8] sm:$0xf]
        %v4036 = vld [vmem:[#allocation22 + $0x3ac] sm:$0xf]
        %v4037 = vld [vmem:[#allocation22 + $0x3b0] sm:$0xf]
        %v4038 = vld [vmem:[#allocation22 + $0x3b4] sm:$0xf]
        %v4039 = vld [vmem:[#allocation22 + $0x3b8] sm:$0xf]
        %v4040 = vld [vmem:[#allocation22 + $0x3bc] sm:$0xf]
        %v4041 = vld [vmem:[#allocation22 + $0x3c0] sm:$0xf]
        %v4042 = vld [vmem:[#allocation22 + $0x3c4] sm:$0xf]
        %v4043 = vld [vmem:[#allocation22 + $0x3c8] sm:$0xf]
        %v4044 = vld [vmem:[#allocation22 + $0x3cc] sm:$0xf]
        %v4045 = vld [vmem:[#allocation22 + $0x3d0] sm:$0xf]
        %v4046 = vld [vmem:[#allocation22 + $0x3d4] sm:$0xf]
        %v4047 = vld [vmem:[#allocation22 + $0x3d8] sm:$0xf]
        %v4048 = vld [vmem:[#allocation22 + $0x3dc] sm:$0xf]
        %v4049 = vld [vmem:[#allocation22 + $0x3e0] sm:$0xf]
        %v4050 = vld [vmem:[#allocation22 + $0x3e4] sm:$0xf]
        %v4051 = vld [vmem:[#allocation22 + $0x3e8] sm:$0xf]
        %v4052 = vld [vmem:[#allocation22 + $0x3ec] sm:$0xf]
        %v4053 = vld [vmem:[#allocation22 + $0x3f0] sm:$0xf]
        %v4054 = vld [vmem:[#allocation22 + $0x3f4] sm:$0xf]
        %v4055 = vld [vmem:[#allocation22 + $0x3f8] sm:$0xf]
        %v4056 = vld [vmem:[#allocation22 + $0x3fc] sm:$0xf]
        %v4121 = vunpack.c.l.b16 %v3993
        %v4122 = vunpack.c.l.b16 %v3994
        %v4123 = vunpack.c.l.b16 %v3995
        %v4124 = vunpack.c.l.b16 %v3996
        %v4125 = vunpack.c.l.b16 %v3997
        %v4126 = vunpack.c.l.b16 %v3998
        %v4127 = vunpack.c.l.b16 %v3999
        %v4128 = vunpack.c.l.b16 %v4000
        %v4129 = vunpack.c.l.b16 %v4001
        %v4130 = vunpack.c.l.b16 %v4002
        %v4131 = vunpack.c.l.b16 %v4003
        %v4132 = vunpack.c.l.b16 %v4004
        %v4133 = vunpack.c.l.b16 %v4005
        %v4134 = vunpack.c.l.b16 %v4006
        %v4135 = vunpack.c.l.b16 %v4007
        %v4136 = vunpack.c.l.b16 %v4008
        %v4137 = vunpack.c.l.b16 %v4009
        %v4138 = vunpack.c.l.b16 %v4010
        %v4139 = vunpack.c.l.b16 %v4011
        %v4140 = vunpack.c.l.b16 %v4012
        %v4141 = vunpack.c.l.b16 %v4013
        %v4142 = vunpack.c.l.b16 %v4014
        %v4143 = vunpack.c.l.b16 %v4015
        %v4144 = vunpack.c.l.b16 %v4016
        %v4145 = vunpack.c.l.b16 %v4017
        %v4146 = vunpack.c.l.b16 %v4018
        %v4147 = vunpack.c.l.b16 %v4019
        %v4148 = vunpack.c.l.b16 %v4020
        %v4149 = vunpack.c.l.b16 %v4021
        %v4150 = vunpack.c.l.b16 %v4022
        %v4151 = vunpack.c.l.b16 %v4023
        %v4152 = vunpack.c.l.b16 %v4024
        %v4153 = vunpack.c.l.b16 %v4025
        %v4154 = vunpack.c.l.b16 %v4026
        %v4155 = vunpack.c.l.b16 %v4027
        %v4156 = vunpack.c.l.b16 %v4028
        %v4157 = vunpack.c.l.b16 %v4029
        %v4158 = vunpack.c.l.b16 %v4030
        %v4159 = vunpack.c.l.b16 %v4031
        %v4160 = vunpack.c.l.b16 %v4032
        %v4161 = vunpack.c.l.b16 %v4033
        %v4162 = vunpack.c.l.b16 %v4034
        %v4163 = vunpack.c.l.b16 %v4035
        %v4164 = vunpack.c.l.b16 %v4036
        %v4165 = vunpack.c.l.b16 %v4037
        %v4166 = vunpack.c.l.b16 %v4038
        %v4167 = vunpack.c.l.b16 %v4039
        %v4168 = vunpack.c.l.b16 %v4040
        %v4169 = vunpack.c.l.b16 %v4041
        %v4170 = vunpack.c.l.b16 %v4042
        %v4171 = vunpack.c.l.b16 %v4043
        %v4172 = vunpack.c.l.b16 %v4044
        %v4173 = vunpack.c.l.b16 %v4045
        %v4174 = vunpack.c.l.b16 %v4046
        %v4175 = vunpack.c.l.b16 %v4047
        %v4176 = vunpack.c.l.b16 %v4048
        %v4177 = vunpack.c.l.b16 %v4049
        %v4178 = vunpack.c.l.b16 %v4050
        %v4179 = vunpack.c.l.b16 %v4051
        %v4180 = vunpack.c.l.b16 %v4052
        %v4181 = vunpack.c.l.b16 %v4053
        %v4182 = vunpack.c.l.b16 %v4054
        %v4183 = vunpack.c.l.b16 %v4055
        %v4184 = vunpack.c.l.b16 %v4056
        %v4185 = vpack.c.b16 %v4122, %v4121
        %v4186 = vpack.c.b16 %v4124, %v4123
        %v4187 = vpack.c.b16 %v4126, %v4125
        %v4188 = vpack.c.b16 %v4128, %v4127
        %v4189 = vpack.c.b16 %v4130, %v4129
        %v4190 = vpack.c.b16 %v4132, %v4131
        %v4191 = vpack.c.b16 %v4134, %v4133
        %v4192 = vpack.c.b16 %v4136, %v4135
        %v4193 = vpack.c.b16 %v4138, %v4137
        %v4194 = vpack.c.b16 %v4140, %v4139
        %v4195 = vpack.c.b16 %v4142, %v4141
        %v4196 = vpack.c.b16 %v4144, %v4143
        %v4197 = vpack.c.b16 %v4146, %v4145
        %v4198 = vpack.c.b16 %v4148, %v4147
        %v4199 = vpack.c.b16 %v4150, %v4149
        %v4200 = vpack.c.b16 %v4152, %v4151
        %v4201 = vpack.c.b16 %v4154, %v4153
        %v4202 = vpack.c.b16 %v4156, %v4155
        %v4203 = vpack.c.b16 %v4158, %v4157
        %v4204 = vpack.c.b16 %v4160, %v4159
        %v4205 = vpack.c.b16 %v4162, %v4161
        %v4206 = vpack.c.b16 %v4164, %v4163
        %v4207 = vpack.c.b16 %v4166, %v4165
        %v4208 = vpack.c.b16 %v4168, %v4167
        %v4209 = vpack.c.b16 %v4170, %v4169
        %v4210 = vpack.c.b16 %v4172, %v4171
        %v4211 = vpack.c.b16 %v4174, %v4173
        %v4212 = vpack.c.b16 %v4176, %v4175
        %v4213 = vpack.c.b16 %v4178, %v4177
        %v4214 = vpack.c.b16 %v4180, %v4179
        %v4215 = vpack.c.b16 %v4182, %v4181
        %v4216 = vpack.c.b16 %v4184, %v4183
        %4249 = vmatprep.subr.bf16.mxu0 0
        %4250 = vmatpush1.bf16.msra.mxu0 %v4185
        %4251 = vmatprep.subr.bf16.mxu0 0
        %4252 = vmatpush1.bf16.msra.mxu0 %v4186
        %4253 = vmatprep.subr.bf16.mxu0 0
        %4254 = vmatpush1.bf16.msra.mxu0 %v4187
        %4255 = vmatprep.subr.bf16.mxu0 0
        %4256 = vmatpush1.bf16.msra.mxu0 %v4188
        %4257 = vmatprep.subr.bf16.mxu0 0
        %4258 = vmatpush1.bf16.msra.mxu0 %v4189
        %4259 = vmatprep.subr.bf16.mxu0 0
        %4260 = vmatpush1.bf16.msra.mxu0 %v4190
        %4261 = vmatprep.subr.bf16.mxu0 0
        %4262 = vmatpush1.bf16.msra.mxu0 %v4191
        %4263 = vmatprep.subr.bf16.mxu0 0
        %4264 = vmatpush1.bf16.msra.mxu0 %v4192
        %4265 = vmatprep.subr.bf16.mxu0 0
        %4266 = vmatpush1.bf16.msra.mxu0 %v4193
        %4267 = vmatprep.subr.bf16.mxu0 0
        %4268 = vmatpush1.bf16.msra.mxu0 %v4194
        %4269 = vmatprep.subr.bf16.mxu0 0
        %4270 = vmatpush1.bf16.msra.mxu0 %v4195
        %4271 = vmatprep.subr.bf16.mxu0 0
        %4272 = vmatpush1.bf16.msra.mxu0 %v4196
        %4273 = vmatprep.subr.bf16.mxu0 0
        %4274 = vmatpush1.bf16.msra.mxu0 %v4197
        %4275 = vmatprep.subr.bf16.mxu0 0
        %4276 = vmatpush1.bf16.msra.mxu0 %v4198
        %4277 = vmatprep.subr.bf16.mxu0 0
        %4278 = vmatpush1.bf16.msra.mxu0 %v4199
        %4279 = vmatprep.subr.bf16.mxu0 0
        %4280 = vmatpush1.bf16.msra.mxu0 %v4200
        %4281 = vmatprep.mubr.bf16.mxu0 %v3990
        %4282 = vmatmul.mubr.bf16.gmra.mrb[0].mxu0 %v3989
        %v4283 = vpop.f32.mrb[0].mxu0
        %v4284 = vadd.f32 0.0, %v4283
        %v4285 = vpop.f32.mrb[0].mxu0
        %v4286 = vpop.f32.mrb[0].mxu0
        %v4287 = vadd.f32 0.0, %v4286
        %v4288 = vpop.f32.mrb[0].mxu0
        %4289 = vdwg.mxu0
        %4290 = vmatprep.subr.bf16.mxu0 0
        %4291 = vmatpush1.bf16.msra.mxu0 %v4201
        %4292 = vmatprep.subr.bf16.mxu0 0
        %4293 = vmatpush1.bf16.msra.mxu0 %v4202
        %4294 = vmatprep.subr.bf16.mxu0 0
        %4295 = vmatpush1.bf16.msra.mxu0 %v4203
        %4296 = vmatprep.subr.bf16.mxu0 0
        %4297 = vmatpush1.bf16.msra.mxu0 %v4204
        %4298 = vmatprep.subr.bf16.mxu0 0
        %4299 = vmatpush1.bf16.msra.mxu0 %v4205
        %4300 = vmatprep.subr.bf16.mxu0 0
        %4301 = vmatpush1.bf16.msra.mxu0 %v4206
        %4302 = vmatprep.subr.bf16.mxu0 0
        %4303 = vmatpush1.bf16.msra.mxu0 %v4207
        %4304 = vmatprep.subr.bf16.mxu0 0
        %4305 = vmatpush1.bf16.msra.mxu0 %v4208
        %4306 = vmatprep.subr.bf16.mxu0 0
        %4307 = vmatpush1.bf16.msra.mxu0 %v4209
        %4308 = vmatprep.subr.bf16.mxu0 0
        %4309 = vmatpush1.bf16.msra.mxu0 %v4210
        %4310 = vmatprep.subr.bf16.mxu0 0
        %4311 = vmatpush1.bf16.msra.mxu0 %v4211
        %4312 = vmatprep.subr.bf16.mxu0 0
        %4313 = vmatpush1.bf16.msra.mxu0 %v4212
        %4314 = vmatprep.subr.bf16.mxu0 0
        %4315 = vmatpush1.bf16.msra.mxu0 %v4213
        %4316 = vmatprep.subr.bf16.mxu0 0
        %4317 = vmatpush1.bf16.msra.mxu0 %v4214
        %4318 = vmatprep.subr.bf16.mxu0 0
        %4319 = vmatpush1.bf16.msra.mxu0 %v4215
        %4320 = vmatprep.subr.bf16.mxu0 0
        %4321 = vmatpush1.bf16.msra.mxu0 %v4216
        %4322 = vmatprep.mubr.bf16.mxu0 %v3992
        %4323 = vmatmul.mubr.bf16.gmra.mrb[0].mxu0 %v3991
        %v4324 = vpop.f32.mrb[0].mxu0
        %v4325 = vadd.f32 %v4284, %v4324
        %v4326 = vpop.f32.mrb[0].mxu0
        %v4327 = vpop.f32.mrb[0].mxu0
        %v4328 = vadd.f32 %v4287, %v4327
        %v4329 = vpop.f32.mrb[0].mxu0
        %4330 = vdwg.mxu0
        %v4331 = vadd.f32 %v3679, %v4325
        %v4332 = vadd.f32 %v3680, %v4328
        %v4333 = vld [vmem:[#allocation24] sm:$0x1]
        %v4335 = vlaneseq
        %v4336 = vshrl.u32 %v4335, 7
        %v4337 = vsub.s32 0, %v4336
        %v4338 = vrot.slane %v4333, %v4337
        %v4340 = vadd.f32 %v4331, %v4338
        %v4341 = vadd.f32 %v4332, %v4338
        %v4342 = vadd.f32 %v4340, %v1672
        %v4343 = vadd.f32 %v4341, %v1673
        %4344 = vst [vmem:[#allocation2] sm:$0xff] %v4342
        %4345 = vst [vmem:[#allocation2 + $0x8] sm:$0xff] %v4343
        %p4346 = scmp.eq.s32.totalorder %s45, 1
        // Predicated region
        $region129: #{tpu_custom_call.1} parent=71 // pred_check
          %p4347 = pneg %p4346
        $region130: #{tpu_custom_call.1} parent=71 // pred_check_branch
          %4349 = sbr.rel (%p4347) target = $region132
        $region131: #{tpu_custom_call.1} parent=71 // pred_region
          %v4350 = vld [vmem:[#allocation7] sm:$0x1]
          %v4351 = vld [vmem:[#allocation9] sm:$0x1]
          %4352 = vadd.xlane.f32.xlu0 %v4342
          %v4353 = vpop.xlane.xlu0 %4352
          %4354 = vadd.xlane.f32.xlu0 %v4343
          %v4355 = vpop.xlane.xlu0 %4354
          %v4356 = vmul.f32 %v4353, %v740
          %v4357 = vmul.f32 %v4355, %v740
          %v4358 = vsub.f32 %v4342, %v4356
          %v4359 = vsub.f32 %v4343, %v4357
          %v4360 = vmul.f32 %v4358, %v4358
          %v4361 = vmul.f32 %v4359, %v4359
          %4362 = vadd.xlane.f32.xlu0 %v4360
          %v4363 = vpop.xlane.xlu0 %4362
          %4364 = vadd.xlane.f32.xlu0 %v4361
          %v4365 = vpop.xlane.xlu0 %4364
          %v4366 = vmul.f32 %v4363, 0.007874016
          %v4367 = vmul.f32 %v4365, 0.007874016
          %v4368 = vrsqrt.pop %v4366
          %v4369 = vmul.f32 %v4366, %v4368
          %vm4370 = vcmp.eq.f32.partialorder %v4366, inf
          %v4371 = vsel %vm4370, %v4366, %v4369
          %vm4372 = vcmp.eq.f32.partialorder %v4366, 0.0
          %v4373 = vand.u32 %v4366, 2147483648
          %v4374 = vsel %vm4372, %v4373, %v4371
          %v4375 = vrsqrt.pop %v4367
          %v4376 = vmul.f32 %v4367, %v4375
          %vm4377 = vcmp.eq.f32.partialorder %v4367, inf
          %v4378 = vsel %vm4377, %v4367, %v4376
          %vm4379 = vcmp.eq.f32.partialorder %v4367, 0.0
          %v4380 = vand.u32 %v4367, 2147483648
          %v4381 = vsel %vm4379, %v4380, %v4378
          %v4382 = vadd.f32 %v4374, 1e-06
          %v4383 = vadd.f32 %v4381, 1e-06
          %v4384 = vrcp.pop %v4382
          %v4385 = vmul.f32 %v4358, %v4384
          %v4386 = vrcp.pop %v4383
          %v4387 = vmul.f32 %v4359, %v4386
          %v4389 = vlaneseq
          %v4390 = vshrl.u32 %v4389, 7
          %v4391 = vsub.s32 0, %v4390
          %v4392 = vrot.slane %v4350, %v4391
          %v4394 = vmul.f32 %v4385, %v4392
          %v4395 = vmul.f32 %v4387, %v4392
          %v4397 = vlaneseq
          %v4398 = vshrl.u32 %v4397, 7
          %v4399 = vsub.s32 0, %v4398
          %v4400 = vrot.slane %v4351, %v4399
          %v4402 = vadd.f32 %v4394, %v4400
          %v4403 = vadd.f32 %v4395, %v4400
          %4404 = vst [vmem:[%s720] sm:$0xff] %v4402
          %4405 = vst [vmem:[%s720 + $0x8] sm:$0xff] %v4403
        $region132: #{tpu_custom_call.1} parent=71 // pred_fallthru
          _
        %s4406 = sand.u32 %s358, 1
        %s4407 = scalar_lea.sflag [#allocation6], %s4406
        %s4408 = sand.u32 %s358, 1
        %s4409 = smul.addr %s4408, 16
        %s4410 = scalar_lea.vmem [#allocation25], %s4409
        // Predicated region
        $region133: #{tpu_custom_call.1} parent=71 // pred_check
          %p4411 = pneg %p368
        $region134: #{tpu_custom_call.1} parent=71 // pred_check_branch
          %4413 = sbr.rel (%p4411) target = $region136
        $region135: #{tpu_custom_call.1} parent=71 // pred_region
          %s4414 = smul.u32 2, %s44
          %s4416 = ssub.s32 256, 256
          %4417 = vsyncadd %s4407, %s4416
          %s4418 = smul.addr %s4414, 128
          %s4419 = scalar_lea.hbm %s13, %s4418
          %s4420 = sshll.u32 %s4410, 4
          %s4421 = int_to_ptr.vmem [resolvable:$true] %s4420
          %4426 = dma.vmem_to_hbm [thread:$0]  %s4421, 256, %s4419, %s4407, 128, 128, 8
        $region136: #{tpu_custom_call.1} parent=71 // pred_fallthru
          _
      $region72: #{tpu_custom_call.1} parent=5 // pred_fallthru
        _
      %p4427 = scmp.le.s32.totalorder 2, %s35
      // Predicated region
      $region137: #{tpu_custom_call.1} parent=5 // pred_check
        %p4428 = pneg %p4427
      $region138: #{tpu_custom_call.1} parent=5 // pred_check_branch
        %4430 = sbr.rel (%p4428) target = $region140
      $region139: #{tpu_custom_call.1} parent=5 // pred_region
        %s4431 = ssub.s32 %s35, 2
        // Predicated region
        $region141: #{tpu_custom_call.1} parent=139 // pred_check
          %p4432 = pneg %p374
        $region142: #{tpu_custom_call.1} parent=139 // pred_check_branch
          %4434 = sbr.rel (%p4432) target = $region144
        $region143: #{tpu_custom_call.1} parent=139 // pred_region
          %s4435 = sand.u32 %s359, 1
          %s4436 = scalar_lea.sflag [#allocation6], %s4435
          %s4437 = sand.u32 %s359, 1
          %s4438 = smul.addr %s4437, 16
          %s4439 = scalar_lea.vmem [#allocation25], %s4438
          %4440 = dma.done %s4436, 256
        $region144: #{tpu_custom_call.1} parent=139 // pred_fallthru
          _
      $region140: #{tpu_custom_call.1} parent=5 // pred_fallthru
        _
    $region6: #{tpu_custom_call.1} parent=1 // loop_footer
      %s39 = sadd.s32 1, %s35
    $region7: #{tpu_custom_call.1} parent=1 // loop_footer_branch
      %34 = sbr.rel target = $region3
    $region8: #{tpu_custom_call.1} parent=1 // loop_exit
      _
    %4441 = vsyncpa [#allocation5], 1
    %s4442 = scalar_lea.sflag [#allocation5], 1
    %4443 = vsyncpa %s4442, 1
    %4444 = vsyncpa [#allocation8], 1
    %4445 = vsyncpa [#allocation11], 1
    %s4446 = scalar_lea.sflag [#allocation11], 1
    %4447 = vsyncpa %s4446, 1
    %4448 = vsyncpa [#allocation14], 1
    %s4449 = scalar_lea.sflag [#allocation14], 1
    %4450 = vsyncpa %s4449, 1
    %4451 = vsyncpa [#allocation17], 1
    %4452 = vsyncpa [#allocation20], 1
    %4453 = vsyncpa [#allocation23], 1
    %4454 = vsyncpa [#allocation6], 1
    %s4455 = scalar_lea.sflag [#allocation6], 1
    %4456 = vsyncpa %s4455, 1

</llo_original>
